<compile_context>
chip_gen: v7x
topology: tpu7x:2x2x1
jax: 0.10.0
libtpu: 0.0.40
codegen_flags: <defaults>
</compile_context>

<pallas_src>
import functools

import numpy as np
import jax
import jax.numpy as jnp
from jax import lax
from jax.experimental import pallas as pl
from jax.experimental.pallas import tpu as pltpu

_SQRT_HALF = 0.7071067811865476


def _erf(z):
    # Abramowitz & Stegun 7.1.26 rational approximation (|err| < 1.5e-7).
    a1, a2, a3, a4, a5 = 0.254829592, -0.284496736, 1.421413741, -1.453152027, 1.061405429
    p = 0.3275911
    x = jnp.abs(z)
    t = 1.0 / (1.0 + p * x)
    poly = ((((a5 * t + a4) * t + a3) * t + a2) * t + a1) * t
    y = 1.0 - poly * jnp.exp(-x * x)
    return jnp.where(z < 0.0, -y, y)


def _gelu(x):
    # PyTorch nn.GELU() default = exact (erf) GELU.
    return 0.5 * x * (1.0 + _erf(x * _SQRT_HALF))


def _layernorm(x, g, b, eps=1e-5):
    mu = jnp.mean(x, axis=-1, keepdims=True)
    var = jnp.mean((x - mu) ** 2, axis=-1, keepdims=True)
    return (x - mu) / jnp.sqrt(var + eps) * g + b


def _encoder_kernel(Bb, T, C, K, E, H, R, cdt,
                    x_ref, wt_ref, ws_ref, wqkv_ref, w1_ref, w2_ref,
                    rel_ref, hm_ref, rce_ref, rr_ref,
                    o_ref,
                    q_scr, k_scr, v_scr, attn_scr):
    # rce_ref rows (width C*E): 0 bias1(C*E), 1 bias2, 2 ga, 3 bA, 4 g1, 5 b1, 6 bf1
    # rr_ref  rows (width RP) : 0 bf2, 1 g2, 2 b2, 3 valid-lane mask
    Nb = Bb * T
    inv_r = 1.0 / R

    # ---- in-kernel im2col: (Bb, T+K-1, C) -> (Nb, K*C), columns ordered (k, c) ----
    # Only static ref-slice loads + aligned sublane concats + one narrow lane concat.
    taps = jnp.concatenate(
        [jnp.concatenate([x_ref[b, k:k + T, :] for b in range(Bb)], axis=0)   # (Nb, C)
         for k in range(K)], axis=-1)                                          # (Nb, K*C)

    # temporal conv (1xK,'same') + BatchNorm1 + GELU  -> one matmul (bias/BN folded)
    t1 = _gelu(jnp.dot(taps.astype(cdt), wt_ref[...],
                       preferred_element_type=jnp.float32) + rce_ref[0:1, :])   # (Nb, C*E)

    # spatial conv (Cx1,'valid') + BatchNorm2 + GELU  -> one contraction-(C*E) matmul
    x2 = _gelu(jnp.dot(t1.astype(cdt), ws_ref[...],
                       preferred_element_type=jnp.float32) + rce_ref[1:2, :E])  # (Nb, E)

    # ---- Attention_Rel_Scl: fused QKV projection, per-batch attention loop ----
    qkv = jnp.dot(x2.astype(cdt), wqkv_ref[...],
                  preferred_element_type=jnp.float32)                           # (Nb, 3E)
    q_scr[...] = qkv[:, 0:E]            # 1/sqrt(E) folded into Wq in the wrapper
    k_scr[...] = qkv[:, E:2 * E]
    v_scr[...] = qkv[:, 2 * E:3 * E]

    # per-head column mask, expanded from the tiny (H, E) table (no big HBM input)
    hmask = jnp.concatenate(
        [jnp.broadcast_to(hm_ref[h:h + 1, :], (T, E)) for h in range(H)], axis=0)  # (H*T, E)
    rel = rel_ref[...].astype(jnp.float32)                                          # (H*T, T)

    def attn_body(b, carry):
        r0 = pl.multiple_of(b * T, T)
        qb = q_scr[pl.ds(r0, T), :]                                  # (T, E)
        kb = k_scr[pl.ds(r0, T), :]
        vb = v_scr[pl.ds(r0, T), :]
        # rows h*T+t hold head h's query t, masked to its D columns; scores for
        # ALL heads are one (H*T,E) x (T,E) contraction.
        q_stk = jnp.concatenate([qb] * H, axis=0) * hmask            # (H*T, E)
        # TODO(synk): at realistic T, hoist k^T out of this loop (one XLU
        # transpose per grid step) instead of contracting both lane dims here.
        s = jnp.einsum('qe,se->qs', q_stk.astype(cdt), kb.astype(cdt),
                       preferred_element_type=jnp.float32)           # (H*T, T)
        s = s - jnp.max(s, axis=-1, keepdims=True)
        ex = jnp.exp(s)
        p = ex * pl.reciprocal(jnp.sum(ex, axis=-1, keepdims=True), approx=True)
        p = p + rel                                                  # bias added AFTER softmax
        o_stk = jnp.dot(p.astype(cdt), vb.astype(cdt),
                        preferred_element_type=jnp.float32) * hmask  # (H*T, E)
        ob = o_stk[0:T, :]
        for h in range(1, H):                                        # merge lane-disjoint heads
            ob = ob + o_stk[h * T:(h + 1) * T, :]
        attn_scr[pl.ds(r0, T), :] = ob
        return carry

    lax.fori_loop(0, Bb, attn_body, 0, unroll=Bb <= 4)

    attn = _layernorm(attn_scr[...], rce_ref[2:3, :E], rce_ref[3:4, :E])   # to_out LN

    # ---- residual + LayerNorm1 + FeedForward(+ReLU) + LayerNorm2 ----
    att = _layernorm(x2 + attn, rce_ref[4:5, :E], rce_ref[5:6, :E])
    hdn = jnp.maximum(
        jnp.dot(att.astype(cdt), w1_ref[...],
                preferred_element_type=jnp.float32) + rce_ref[6:7, :E], 0.0)
    ff = jnp.dot(hdn.astype(cdt), w2_ref[...],
                 preferred_element_type=jnp.float32) + rr_ref[0:1, :]       # (Nb, RP)

    # LayerNorm2 over the first R (valid) lanes of the 128-lane-padded output.
    vmask = rr_ref[3:4, :]
    mu = jnp.sum(ff, axis=-1, keepdims=True) * inv_r       # padded lanes are exactly 0
    diff = (ff - mu) * vmask
    var = jnp.sum(diff * diff, axis=-1, keepdims=True) * inv_r
    o_ref[...] = diff * lax.rsqrt(var + 1e-5) * rr_ref[1:2, :] + rr_ref[2:3, :]


def conv_tarn_encoder(x, params, *, block_rows=512, compute_dtype=jnp.float32):
    """Fused ConvTarnEncoder forward (eval mode).

    compute_dtype: dtype fed to the MXU for every matmul (accumulation stays
    f32).  Use jnp.bfloat16 on v6e/v7x for ~2x MXU throughput and half the
    constant-weight DMA/VMEM; keep jnp.float32 for tight reference parity.
    """
    (wt, bt, g1bn, b1bn, m1, v1,
     ws, bs, g2bn, b2bn, m2, v2,
     wq, wk, wv, rel_table,
     ga, bA, g1, b1, w1, bf1, w2, bf2, g2, b2) = params

    B, C, T = x.shape
    K, E = wt.shape
    R = w2.shape[1]
    H = rel_table.shape[1]
    D = E // H
    eps = 1e-5
    assert E % H == 0
    assert T % 8 == 0, "seq_len must be a multiple of 8 (f32 sublane tiling)"

    Tp = T + K - 1
    CE = C * E
    RP = ((R + 127) // 128) * 128           # lane-dense output width

    # rows per grid step: target ~block_rows, but keep >= 2 grid steps when
    # B >= 2 so both v7x TensorCores get work ("parallel" batch grid axis).
    Bb = max(1, min(B, max(1, block_rows // T)))
    if B >= 2:
        Bb = min(Bb, (B + 1) // 2)
    B_pad = -(-B // Bb) * Bb
    Nb = Bb * T

    cdt = jnp.dtype(compute_dtype)

    # ---- raw input: 'same'-padded along time, (B_pad, T+K-1, C) layout ----
    pad_l = (K - 1) // 2
    x_pad = jnp.pad(x.astype(jnp.float32),
                    ((0, B_pad - B), (0, 0), (pad_l, K - 1 - pad_l)))
    x_t = jnp.transpose(x_pad, (0, 2, 1))                   # (B_pad, Tp, C)

    # ---- fold eval-mode BatchNorm2d (running stats) into the conv weights ----
    bn1s = g1bn / jnp.sqrt(v1 + eps)
    bn1b = b1bn - m1 * bn1s
    bn2s = g2bn / jnp.sqrt(v2 + eps)
    bn2b = b2bn - m2 * bn2s

    # temporal weight: block-diagonal over channels, rows ordered (k, c), BN1 folded
    wt_big = jnp.einsum('ke,cd->kcde', wt * bn1s[None, :],
                        jnp.eye(C, dtype=jnp.float32)).reshape(K * C, CE)
    bias1 = jnp.tile(bt * bn1s + bn1b, C)                   # (C*E,)

    # fused spatial weight (BN2 folded) + folded bias
    ws_flat = ws.reshape(CE, E) * bn2s[None, :]
    bias2 = bs * bn2s + bn2b

    # fused QKV weight (1/sqrt(E) folded into Wq); FF-W1 stays separate (uses `att`)
    wqkv = jnp.concatenate([wq * (E ** -0.5), wk, wv], axis=1)     # (E, 3E)

    # stacked relative-position bias: row h*T+t, col s -> table[t-s+T-1, h]
    idx = jnp.arange(T)[:, None] - jnp.arange(T)[None, :] + (T - 1)
    rel_stack = jnp.transpose(rel_table[idx], (2, 0, 1)).reshape(H * T, T)

    # tiny per-head column table (expanded to (H*T, E) inside the kernel)
    hm_small = (jnp.arange(E)[None, :] // D ==
                jnp.arange(H)[:, None]).astype(jnp.float32)        # (H, E)

    # remaining 1-D params packed into two small row matrices
    def pad_ce(a):
        return jnp.pad(a, (0, CE - a.shape[0]))

    rowsCE = jnp.zeros((8, CE), jnp.float32)
    rowsCE = rowsCE.at[0].set(bias1).at[1].set(pad_ce(bias2)).at[2].set(pad_ce(ga))
    rowsCE = rowsCE.at[3].set(pad_ce(bA)).at[4].set(pad_ce(g1))
    rowsCE = rowsCE.at[5].set(pad_ce(b1)).at[6].set(pad_ce(bf1))

    def pad_r(a):
        return jnp.pad(a, (0, RP - R))

    rowsR = jnp.zeros((8, RP), jnp.float32)
    rowsR = rowsR.at[0].set(pad_r(bf2)).at[1].set(pad_r(g2)).at[2].set(pad_r(b2))
    rowsR = rowsR.at[3].set(pad_r(jnp.ones((R,), jnp.float32)))

    w2_pad = jnp.zeros((E, RP), jnp.float32).at[:, :R].set(w2)     # lane-dense FF out

    # matmul weights travel in compute_dtype (halves DMA/VMEM when bf16)
    weights = [wt_big.astype(cdt), ws_flat.astype(cdt), wqkv.astype(cdt),
               w1.astype(cdt), w2_pad.astype(cdt), rel_stack.astype(cdt),
               hm_small, rowsCE, rowsR]

    def const_spec(a):
        # TODO(synk): pipeline_mode=pl.Buffered(1) here once confirmed stable,
        # to stop double-buffering grid-invariant constants (v7x 64 MiB VMEM).
        return pl.BlockSpec(a.shape, lambda i, _nd=a.ndim: (0,) * _nd)

    # explicit VMEM budget: double-buffered stream + constants + scratch + headroom
    const_bytes = sum(int(a.size) * a.dtype.itemsize for a in weights)
    stream_bytes = Bb * Tp * C * 4 + Nb * RP * 4
    scratch_bytes = 4 * Nb * E * 4
    headroom = 8 * Nb * max(CE, 3 * E, RP) * 4
    vmem_limit = int(min(max(2 * (const_bytes + stream_bytes)
                             + scratch_bytes + headroom, 16 << 20), 48 << 20))

    kernel = functools.partial(_encoder_kernel, Bb, T, C, K, E, H, R, cdt)
    out = pl.pallas_call(
        kernel,
        grid=(B_pad // Bb,),
        in_specs=[pl.BlockSpec((Bb, Tp, C), lambda i: (i, 0, 0))] +
                 [const_spec(a) for a in weights],
        out_specs=pl.BlockSpec((Nb, RP), lambda i: (i, 0)),
        out_shape=jax.ShapeDtypeStruct((B_pad * T, RP), jnp.float32),
        scratch_shapes=[pltpu.VMEM((Nb, E), jnp.float32) for _ in range(4)],
        compiler_params=pltpu.CompilerParams(
            dimension_semantics=("parallel",),
            vmem_limit_bytes=vmem_limit),
    )(x_t, *weights)

    out = out.reshape(B_pad, T, RP)[:B, :, :R]
    # PyTorch forward returns out.transpose(1, 2): (B, rep_size, seq_len).
    return jnp.transpose(out, (0, 2, 1))


def reference_forward(x, params):
    # Pure-JAX reference mirroring the PyTorch module (eval mode), for checking.
    (wt, bt, g1bn, b1bn, m1, v1,
     ws, bs, g2bn, b2bn, m2, v2,
     wq, wk, wv, rel_table,
     ga, bA, g1, b1, w1, bf1, w2, bf2, g2, b2) = params
    B, C, T = x.shape
    K, E = wt.shape
    H = rel_table.shape[1]
    D = E // H
    eps = 1e-5

    pad_l = (K - 1) // 2
    xp = jnp.pad(x, ((0, 0), (0, 0), (pad_l, K - 1 - pad_l)))
    taps = jnp.stack([xp[:, :, kk:kk + T] for kk in range(K)], axis=-1)   # (B,C,T,K)
    y = jnp.einsum('bctk,ke->bcte', taps, wt) + bt                        # temporal CNN
    y = (y - m1) / jnp.sqrt(v1 + eps) * g1bn + b1bn
    y = jax.nn.gelu(y, approximate=False)
    z = jnp.einsum('bcte,cef->btf', y, ws) + bs                           # spatial CNN
    z = (z - m2) / jnp.sqrt(v2 + eps) * g2bn + b2bn
    x2 = jax.nn.gelu(z, approximate=False)                                # (B,T,E)

    q = (x2 @ wq).reshape(B, T, H, D).transpose(0, 2, 1, 3)
    k = (x2 @ wk).reshape(B, T, H, D).transpose(0, 2, 1, 3)
    v = (x2 @ wv).reshape(B, T, H, D).transpose(0, 2, 1, 3)
    attn = jnp.einsum('bhtd,bhsd->bhts', q, k) * (E ** -0.5)
    attn = jax.nn.softmax(attn, axis=-1)
    idx = jnp.arange(T)[:, None] - jnp.arange(T)[None, :] + (T - 1)
    attn = attn + jnp.transpose(rel_table[idx], (2, 0, 1))[None]
    o = jnp.einsum('bhts,bhsd->bhtd', attn, v).transpose(0, 2, 1, 3).reshape(B, T, E)
    o = _layernorm(o, ga, bA)

    att = _layernorm(x2 + o, g1, b1)
    hdn = jnp.maximum(att @ w1 + bf1, 0.0)
    ff = hdn @ w2 + bf2
    out = _layernorm(ff, g2, b2)
    return jnp.transpose(out, (0, 2, 1))


if __name__ == "__main__":
    jax.config.update("jax_default_matmul_precision", "highest")

    # channel_size=4, seq_len=8, emb_size=32, rep_size=16, kernel_size=3,
    # num_heads=8 (hard-coded by the module), batch=4 (exercises Bb>1 and a
    # 2-step "parallel" grid for v7x's two TensorCores).
    B, C, T = 4, 4, 8
    E, R, K, H = 32, 16, 3, 8
    assert E % H == 0

    key = jax.random.PRNGKey(0)
    keys = jax.random.split(key, 32)

    def nrm(kk, shape, s=1.0):
        return (s * jax.random.normal(kk, shape)).astype(jnp.float32)

    params = tuple(p.astype(jnp.float32) for p in (
        nrm(keys[0], (K, E), (1.0 / K) ** 0.5),            # temporal conv W (K,E)  [= torch (E,1,1,K)^T]
        nrm(keys[1], (E,), 0.1),                           # temporal conv bias
        1.0 + 0.1 * jax.random.normal(keys[2], (E,)),      # BN1 gamma
        nrm(keys[3], (E,), 0.1),                           # BN1 beta
        nrm(keys[4], (E,), 0.1),                           # BN1 running mean
        0.5 + jnp.abs(jax.random.normal(keys[5], (E,))),   # BN1 running var
        nrm(keys[6], (C, E, E), (1.0 / (C * E)) ** 0.5),   # spatial conv W (C,Ein,Eout)
        nrm(keys[7], (E,), 0.1),                           # spatial conv bias
        1.0 + 0.1 * jax.random.normal(keys[8], (E,)),      # BN2 gamma
        nrm(keys[9], (E,), 0.1),                           # BN2 beta
        nrm(keys[10], (E,), 0.1),                          # BN2 running mean
        0.5 + jnp.abs(jax.random.normal(keys[11], (E,))),  # BN2 running var
        nrm(keys[12], (E, E), E ** -0.5),                  # Wq^T
        nrm(keys[13], (E, E), E ** -0.5),                  # Wk^T
        nrm(keys[14], (E, E), E ** -0.5),                  # Wv^T
        nrm(keys[15], (2 * T - 1, H), 0.05),               # relative_bias_table
        1.0 + 0.1 * jax.random.normal(keys[16], (E,)),     # to_out LN gamma
        nrm(keys[17], (E,), 0.1),                          # to_out LN beta
        1.0 + 0.1 * jax.random.normal(keys[18], (E,)),     # LayerNorm1 gamma
        nrm(keys[19], (E,), 0.1),                          # LayerNorm1 beta
        nrm(keys[20], (E, E), E ** -0.5),                  # FF W1^T
        nrm(keys[21], (E,), 0.1),                          # FF b1
        nrm(keys[22], (E, R), E ** -0.5),                  # FF W2^T
        nrm(keys[23], (R,), 0.1),                          # FF b2
        1.0 + 0.1 * jax.random.normal(keys[24], (R,)),     # LayerNorm2 gamma
        nrm(keys[25], (R,), 0.1),                          # LayerNorm2 beta
    ))
    x = jax.random.normal(keys[26], (B, C, T), dtype=jnp.float32)

    out = jax.block_until_ready(conv_tarn_encoder(x, params))
    ref = jax.block_until_ready(reference_forward(x, params))

    assert out.shape == (B, R, T), out.shape
    if np.allclose(np.asarray(out), np.asarray(ref), atol=3e-3, rtol=3e-3):
        print("KERNEL_OK")
    else:
        print("MISMATCH max abs diff:", float(jnp.max(jnp.abs(out - ref))))
</pallas_src>

<mosaic_0001>
module attributes {stable_mosaic.version = 11 : i64} {
  func.func @_encoder_kernel(%arg0: i32, %arg1: memref<2x10x4xf32, #tpu.memory_space<vmem>>, %arg2: memref<12x128xf32, #tpu.memory_space<vmem>>, %arg3: memref<128x32xf32, #tpu.memory_space<vmem>>, %arg4: memref<32x96xf32, #tpu.memory_space<vmem>>, %arg5: memref<32x32xf32, #tpu.memory_space<vmem>>, %arg6: memref<32x128xf32, #tpu.memory_space<vmem>>, %arg7: memref<64x8xf32, #tpu.memory_space<vmem>>, %arg8: memref<8x32xf32, #tpu.memory_space<vmem>>, %arg9: memref<8x128xf32, #tpu.memory_space<vmem>>, %arg10: memref<8x128xf32, #tpu.memory_space<vmem>>, %arg11: memref<16x128xf32, #tpu.memory_space<vmem>>, %arg12: memref<16x32xf32, #tpu.memory_space<vmem>>, %arg13: memref<16x32xf32, #tpu.memory_space<vmem>>, %arg14: memref<16x32xf32, #tpu.memory_space<vmem>>, %arg15: memref<16x32xf32, #tpu.memory_space<vmem>>) attributes {dimension_semantics = [#tpu.dimension_semantics<parallel>], iteration_bounds = array<i64: 2>, scalar_prefetch = 0 : i64, scratch_operands = 4 : i64, tpu.core_type = #tpu.core_type<tc>, window_params = [{transform_indices = @transform_0, window_bounds = array<i64: 2, 10, 4>}, {pipeline_mode = #tpu.pipeline_mode<synchronous>, transform_indices = @transform_1, window_bounds = array<i64: 12, 128>}, {pipeline_mode = #tpu.pipeline_mode<synchronous>, transform_indices = @transform_2, window_bounds = array<i64: 128, 32>}, {pipeline_mode = #tpu.pipeline_mode<synchronous>, transform_indices = @transform_3, window_bounds = array<i64: 32, 96>}, {pipeline_mode = #tpu.pipeline_mode<synchronous>, transform_indices = @transform_4, window_bounds = array<i64: 32, 32>}, {pipeline_mode = #tpu.pipeline_mode<synchronous>, transform_indices = @transform_5, window_bounds = array<i64: 32, 128>}, {pipeline_mode = #tpu.pipeline_mode<synchronous>, transform_indices = @transform_6, window_bounds = array<i64: 64, 8>}, {pipeline_mode = #tpu.pipeline_mode<synchronous>, transform_indices = @transform_7, window_bounds = array<i64: 8, 32>}, {pipeline_mode = #tpu.pipeline_mode<synchronous>, transform_indices = @transform_8, window_bounds = array<i64: 8, 128>}, {pipeline_mode = #tpu.pipeline_mode<synchronous>, transform_indices = @transform_9, window_bounds = array<i64: 8, 128>}, {transform_indices = @transform_10, window_bounds = array<i64: 16, 128>}]} {
    %c0 = arith.constant 0 : index
    %c0_0 = arith.constant 0 : index
    %c0_1 = arith.constant 0 : index
    %0 = vector.load %arg1[%c0, %c0_0, %c0_1] : memref<2x10x4xf32, #tpu.memory_space<vmem>>, vector<1x8x4xf32>
    %1 = vector.shape_cast %0 : vector<1x8x4xf32> to vector<8x4xf32>
    %c1 = arith.constant 1 : index
    %c0_2 = arith.constant 0 : index
    %c0_3 = arith.constant 0 : index
    %2 = vector.load %arg1[%c1, %c0_2, %c0_3] : memref<2x10x4xf32, #tpu.memory_space<vmem>>, vector<1x8x4xf32>
    %3 = vector.shape_cast %2 : vector<1x8x4xf32> to vector<8x4xf32>
    %4 = tpu.concatenate %1, %3 in 0 : vector<8x4xf32>, vector<8x4xf32> -> vector<16x4xf32>
    %c0_4 = arith.constant 0 : index
    %c1_5 = arith.constant 1 : index
    %c0_6 = arith.constant 0 : index
    %5 = vector.load %arg1[%c0_4, %c1_5, %c0_6] : memref<2x10x4xf32, #tpu.memory_space<vmem>>, vector<1x8x4xf32>
    %6 = vector.shape_cast %5 : vector<1x8x4xf32> to vector<8x4xf32>
    %c1_7 = arith.constant 1 : index
    %c1_8 = arith.constant 1 : index
    %c0_9 = arith.constant 0 : index
    %7 = vector.load %arg1[%c1_7, %c1_8, %c0_9] : memref<2x10x4xf32, #tpu.memory_space<vmem>>, vector<1x8x4xf32>
    %8 = vector.shape_cast %7 : vector<1x8x4xf32> to vector<8x4xf32>
    %9 = tpu.concatenate %6, %8 in 0 : vector<8x4xf32>, vector<8x4xf32> -> vector<16x4xf32>
    %c0_10 = arith.constant 0 : index
    %c2 = arith.constant 2 : index
    %c0_11 = arith.constant 0 : index
    %10 = vector.load %arg1[%c0_10, %c2, %c0_11] : memref<2x10x4xf32, #tpu.memory_space<vmem>>, vector<1x8x4xf32>
    %11 = vector.shape_cast %10 : vector<1x8x4xf32> to vector<8x4xf32>
    %c1_12 = arith.constant 1 : index
    %c2_13 = arith.constant 2 : index
    %c0_14 = arith.constant 0 : index
    %12 = vector.load %arg1[%c1_12, %c2_13, %c0_14] : memref<2x10x4xf32, #tpu.memory_space<vmem>>, vector<1x8x4xf32>
    %13 = vector.shape_cast %12 : vector<1x8x4xf32> to vector<8x4xf32>
    %14 = tpu.concatenate %11, %13 in 0 : vector<8x4xf32>, vector<8x4xf32> -> vector<16x4xf32>
    %15 = tpu.concatenate %4, %9, %14 in 1 : vector<16x4xf32>, vector<16x4xf32>, vector<16x4xf32> -> vector<16x12xf32>
    %c0_15 = arith.constant 0 : index
    %c0_16 = arith.constant 0 : index
    %16 = vector.load %arg2[%c0_15, %c0_16] : memref<12x128xf32, #tpu.memory_space<vmem>>, vector<12x128xf32>
    %cst = arith.constant dense<0.000000e+00> : vector<16x128xf32>
    %17 = tpu.matmul %15, %16, %cst {dimension_numbers = #tpu.dot_dimension_numbers<[1], [0], [0], [1], [0, 0, 1, 1], [], []>, precision = #tpu.contract_precision<fp32>} : vector<16x12xf32>, vector<12x128xf32>, vector<16x128xf32> -> vector<16x128xf32>
    %c0_17 = arith.constant 0 : index
    %c0_18 = arith.constant 0 : index
    %18 = vector.load %arg9[%c0_17, %c0_18] : memref<8x128xf32, #tpu.memory_space<vmem>>, vector<1x128xf32>
    %19 = vector.broadcast %18 : vector<1x128xf32> to vector<16x128xf32>
    %20 = arith.addf %17, %19 : vector<16x128xf32>
    %cst_19 = arith.constant 5.000000e-01 : f32
    %21 = vector.broadcast %cst_19 : f32 to vector<16x128xf32>
    %22 = arith.mulf %21, %20 : vector<16x128xf32>
    %cst_20 = arith.constant 0.707106769 : f32
    %23 = vector.broadcast %cst_20 : f32 to vector<16x128xf32>
    %24 = arith.mulf %20, %23 : vector<16x128xf32>
    %25 = math.absf %24 : vector<16x128xf32>
    %cst_21 = arith.constant 0.327591091 : f32
    %26 = vector.broadcast %cst_21 : f32 to vector<16x128xf32>
    %27 = arith.mulf %26, %25 : vector<16x128xf32>
    %cst_22 = arith.constant 1.000000e+00 : f32
    %28 = vector.broadcast %cst_22 : f32 to vector<16x128xf32>
    %29 = arith.addf %28, %27 : vector<16x128xf32>
    %cst_23 = arith.constant 1.000000e+00 : f32
    %30 = vector.broadcast %cst_23 : f32 to vector<16x128xf32>
    %31 = arith.divf %30, %29 : vector<16x128xf32>
    %cst_24 = arith.constant 1.06140542 : f32
    %32 = vector.broadcast %cst_24 : f32 to vector<16x128xf32>
    %33 = arith.mulf %32, %31 : vector<16x128xf32>
    %cst_25 = arith.constant -1.45315206 : f32
    %34 = vector.broadcast %cst_25 : f32 to vector<16x128xf32>
    %35 = arith.addf %33, %34 : vector<16x128xf32>
    %36 = arith.mulf %35, %31 : vector<16x128xf32>
    %cst_26 = arith.constant 1.42141378 : f32
    %37 = vector.broadcast %cst_26 : f32 to vector<16x128xf32>
    %38 = arith.addf %36, %37 : vector<16x128xf32>
    %39 = arith.mulf %38, %31 : vector<16x128xf32>
    %cst_27 = arith.constant -0.284496725 : f32
    %40 = vector.broadcast %cst_27 : f32 to vector<16x128xf32>
    %41 = arith.addf %39, %40 : vector<16x128xf32>
    %42 = arith.mulf %41, %31 : vector<16x128xf32>
    %cst_28 = arith.constant 0.254829586 : f32
    %43 = vector.broadcast %cst_28 : f32 to vector<16x128xf32>
    %44 = arith.addf %42, %43 : vector<16x128xf32>
    %45 = arith.mulf %44, %31 : vector<16x128xf32>
    %cst_29 = arith.constant 0.000000e+00 : f32
    %46 = vector.broadcast %cst_29 : f32 to vector<16x128xf32>
    %47 = arith.subf %46, %25 : vector<16x128xf32>
    %48 = arith.mulf %47, %25 : vector<16x128xf32>
    %49 = math.exp %48 : vector<16x128xf32>
    %50 = arith.mulf %45, %49 : vector<16x128xf32>
    %cst_30 = arith.constant 1.000000e+00 : f32
    %51 = vector.broadcast %cst_30 : f32 to vector<16x128xf32>
    %52 = arith.subf %51, %50 : vector<16x128xf32>
    %cst_31 = arith.constant 0.000000e+00 : f32
    %53 = vector.broadcast %cst_31 : f32 to vector<16x128xf32>
    %54 = arith.cmpf olt, %24, %53 : vector<16x128xf32>
    %cst_32 = arith.constant 0.000000e+00 : f32
    %55 = vector.broadcast %cst_32 : f32 to vector<16x128xf32>
    %56 = arith.subf %55, %52 : vector<16x128xf32>
    %57 = arith.select %54, %56, %52 : vector<16x128xi1>, vector<16x128xf32>
    %cst_33 = arith.constant 1.000000e+00 : f32
    %58 = vector.broadcast %cst_33 : f32 to vector<16x128xf32>
    %59 = arith.addf %58, %57 : vector<16x128xf32>
    %60 = arith.mulf %22, %59 : vector<16x128xf32>
    %c0_34 = arith.constant 0 : index
    %c0_35 = arith.constant 0 : index
    %61 = vector.load %arg3[%c0_34, %c0_35] : memref<128x32xf32, #tpu.memory_space<vmem>>, vector<128x32xf32>
    %cst_36 = arith.constant dense<0.000000e+00> : vector<16x32xf32>
    %62 = tpu.matmul %60, %61, %cst_36 {dimension_numbers = #tpu.dot_dimension_numbers<[1], [0], [0], [1], [0, 0, 1, 1], [], []>, precision = #tpu.contract_precision<fp32>} : vector<16x128xf32>, vector<128x32xf32>, vector<16x32xf32> -> vector<16x32xf32>
    %c1_37 = arith.constant 1 : index
    %c0_38 = arith.constant 0 : index
    %63 = vector.load %arg9[%c1_37, %c0_38] : memref<8x128xf32, #tpu.memory_space<vmem>>, vector<1x32xf32>
    %64 = vector.broadcast %63 : vector<1x32xf32> to vector<16x32xf32>
    %65 = arith.addf %62, %64 : vector<16x32xf32>
    %cst_39 = arith.constant 5.000000e-01 : f32
    %66 = vector.broadcast %cst_39 : f32 to vector<16x32xf32>
    %67 = arith.mulf %66, %65 : vector<16x32xf32>
    %cst_40 = arith.constant 0.707106769 : f32
    %68 = vector.broadcast %cst_40 : f32 to vector<16x32xf32>
    %69 = arith.mulf %65, %68 : vector<16x32xf32>
    %70 = math.absf %69 : vector<16x32xf32>
    %cst_41 = arith.constant 0.327591091 : f32
    %71 = vector.broadcast %cst_41 : f32 to vector<16x32xf32>
    %72 = arith.mulf %71, %70 : vector<16x32xf32>
    %cst_42 = arith.constant 1.000000e+00 : f32
    %73 = vector.broadcast %cst_42 : f32 to vector<16x32xf32>
    %74 = arith.addf %73, %72 : vector<16x32xf32>
    %cst_43 = arith.constant 1.000000e+00 : f32
    %75 = vector.broadcast %cst_43 : f32 to vector<16x32xf32>
    %76 = arith.divf %75, %74 : vector<16x32xf32>
    %cst_44 = arith.constant 1.06140542 : f32
    %77 = vector.broadcast %cst_44 : f32 to vector<16x32xf32>
    %78 = arith.mulf %77, %76 : vector<16x32xf32>
    %cst_45 = arith.constant -1.45315206 : f32
    %79 = vector.broadcast %cst_45 : f32 to vector<16x32xf32>
    %80 = arith.addf %78, %79 : vector<16x32xf32>
    %81 = arith.mulf %80, %76 : vector<16x32xf32>
    %cst_46 = arith.constant 1.42141378 : f32
    %82 = vector.broadcast %cst_46 : f32 to vector<16x32xf32>
    %83 = arith.addf %81, %82 : vector<16x32xf32>
    %84 = arith.mulf %83, %76 : vector<16x32xf32>
    %cst_47 = arith.constant -0.284496725 : f32
    %85 = vector.broadcast %cst_47 : f32 to vector<16x32xf32>
    %86 = arith.addf %84, %85 : vector<16x32xf32>
    %87 = arith.mulf %86, %76 : vector<16x32xf32>
    %cst_48 = arith.constant 0.254829586 : f32
    %88 = vector.broadcast %cst_48 : f32 to vector<16x32xf32>
    %89 = arith.addf %87, %88 : vector<16x32xf32>
    %90 = arith.mulf %89, %76 : vector<16x32xf32>
    %cst_49 = arith.constant 0.000000e+00 : f32
    %91 = vector.broadcast %cst_49 : f32 to vector<16x32xf32>
    %92 = arith.subf %91, %70 : vector<16x32xf32>
    %93 = arith.mulf %92, %70 : vector<16x32xf32>
    %94 = math.exp %93 : vector<16x32xf32>
    %95 = arith.mulf %90, %94 : vector<16x32xf32>
    %cst_50 = arith.constant 1.000000e+00 : f32
    %96 = vector.broadcast %cst_50 : f32 to vector<16x32xf32>
    %97 = arith.subf %96, %95 : vector<16x32xf32>
    %cst_51 = arith.constant 0.000000e+00 : f32
    %98 = vector.broadcast %cst_51 : f32 to vector<16x32xf32>
    %99 = arith.cmpf olt, %69, %98 : vector<16x32xf32>
    %cst_52 = arith.constant 0.000000e+00 : f32
    %100 = vector.broadcast %cst_52 : f32 to vector<16x32xf32>
    %101 = arith.subf %100, %97 : vector<16x32xf32>
    %102 = arith.select %99, %101, %97 : vector<16x32xi1>, vector<16x32xf32>
    %cst_53 = arith.constant 1.000000e+00 : f32
    %103 = vector.broadcast %cst_53 : f32 to vector<16x32xf32>
    %104 = arith.addf %103, %102 : vector<16x32xf32>
    %105 = arith.mulf %67, %104 : vector<16x32xf32>
    %c0_54 = arith.constant 0 : index
    %c0_55 = arith.constant 0 : index
    %106 = vector.load %arg4[%c0_54, %c0_55] : memref<32x96xf32, #tpu.memory_space<vmem>>, vector<32x96xf32>
    %cst_56 = arith.constant dense<0.000000e+00> : vector<16x96xf32>
    %107 = tpu.matmul %105, %106, %cst_56 {dimension_numbers = #tpu.dot_dimension_numbers<[1], [0], [0], [1], [0, 0, 1, 1], [], []>, precision = #tpu.contract_precision<fp32>} : vector<16x32xf32>, vector<32x96xf32>, vector<16x96xf32> -> vector<16x96xf32>
    %108 = vector.extract_strided_slice %107 {offsets = [0, 0], sizes = [16, 32], strides = [1, 1]} : vector<16x96xf32> to vector<16x32xf32>
    %c0_57 = arith.constant 0 : index
    %c0_58 = arith.constant 0 : index
    %109 = vector.load %arg12[%c0_57, %c0_58] : memref<16x32xf32, #tpu.memory_space<vmem>>, vector<16x32xf32>
    tpu.vector_store %arg12[%c0_57, %c0_58], %108 {strides = array<i32>} : memref<16x32xf32, #tpu.memory_space<vmem>>, vector<16x32xf32>,
    %110 = vector.extract_strided_slice %107 {offsets = [0, 32], sizes = [16, 32], strides = [1, 1]} : vector<16x96xf32> to vector<16x32xf32>
    %c0_59 = arith.constant 0 : index
    %c0_60 = arith.constant 0 : index
    %111 = vector.load %arg13[%c0_59, %c0_60] : memref<16x32xf32, #tpu.memory_space<vmem>>, vector<16x32xf32>
    tpu.vector_store %arg13[%c0_59, %c0_60], %110 {strides = array<i32>} : memref<16x32xf32, #tpu.memory_space<vmem>>, vector<16x32xf32>,
    %112 = vector.extract_strided_slice %107 {offsets = [0, 64], sizes = [16, 32], strides = [1, 1]} : vector<16x96xf32> to vector<16x32xf32>
    %c0_61 = arith.constant 0 : index
    %c0_62 = arith.constant 0 : index
    %113 = vector.load %arg14[%c0_61, %c0_62] : memref<16x32xf32, #tpu.memory_space<vmem>>, vector<16x32xf32>
    tpu.vector_store %arg14[%c0_61, %c0_62], %112 {strides = array<i32>} : memref<16x32xf32, #tpu.memory_space<vmem>>, vector<16x32xf32>,
    %c0_63 = arith.constant 0 : index
    %c0_64 = arith.constant 0 : index
    %114 = vector.load %arg8[%c0_63, %c0_64] : memref<8x32xf32, #tpu.memory_space<vmem>>, vector<1x32xf32>
    %115 = vector.shape_cast %114 : vector<1x32xf32> to vector<1x32xf32>
    %116 = vector.broadcast %115 : vector<1x32xf32> to vector<8x32xf32>
    %c1_65 = arith.constant 1 : index
    %c0_66 = arith.constant 0 : index
    %117 = vector.load %arg8[%c1_65, %c0_66] : memref<8x32xf32, #tpu.memory_space<vmem>>, vector<1x32xf32>
    %118 = vector.shape_cast %117 : vector<1x32xf32> to vector<1x32xf32>
    %119 = vector.broadcast %118 : vector<1x32xf32> to vector<8x32xf32>
    %c2_67 = arith.constant 2 : index
    %c0_68 = arith.constant 0 : index
    %120 = vector.load %arg8[%c2_67, %c0_68] : memref<8x32xf32, #tpu.memory_space<vmem>>, vector<1x32xf32>
    %121 = vector.shape_cast %120 : vector<1x32xf32> to vector<1x32xf32>
    %122 = vector.broadcast %121 : vector<1x32xf32> to vector<8x32xf32>
    %c3 = arith.constant 3 : index
    %c0_69 = arith.constant 0 : index
    %123 = vector.load %arg8[%c3, %c0_69] : memref<8x32xf32, #tpu.memory_space<vmem>>, vector<1x32xf32>
    %124 = vector.shape_cast %123 : vector<1x32xf32> to vector<1x32xf32>
    %125 = vector.broadcast %124 : vector<1x32xf32> to vector<8x32xf32>
    %c4 = arith.constant 4 : index
    %c0_70 = arith.constant 0 : index
    %126 = vector.load %arg8[%c4, %c0_70] : memref<8x32xf32, #tpu.memory_space<vmem>>, vector<1x32xf32>
    %127 = vector.shape_cast %126 : vector<1x32xf32> to vector<1x32xf32>
    %128 = vector.broadcast %127 : vector<1x32xf32> to vector<8x32xf32>
    %c5 = arith.constant 5 : index
    %c0_71 = arith.constant 0 : index
    %129 = vector.load %arg8[%c5, %c0_71] : memref<8x32xf32, #tpu.memory_space<vmem>>, vector<1x32xf32>
    %130 = vector.shape_cast %129 : vector<1x32xf32> to vector<1x32xf32>
    %131 = vector.broadcast %130 : vector<1x32xf32> to vector<8x32xf32>
    %c6 = arith.constant 6 : index
    %c0_72 = arith.constant 0 : index
    %132 = vector.load %arg8[%c6, %c0_72] : memref<8x32xf32, #tpu.memory_space<vmem>>, vector<1x32xf32>
    %133 = vector.shape_cast %132 : vector<1x32xf32> to vector<1x32xf32>
    %134 = vector.broadcast %133 : vector<1x32xf32> to vector<8x32xf32>
    %c7 = arith.constant 7 : index
    %c0_73 = arith.constant 0 : index
    %135 = vector.load %arg8[%c7, %c0_73] : memref<8x32xf32, #tpu.memory_space<vmem>>, vector<1x32xf32>
    %136 = vector.shape_cast %135 : vector<1x32xf32> to vector<1x32xf32>
    %137 = vector.broadcast %136 : vector<1x32xf32> to vector<8x32xf32>
    %138 = tpu.concatenate %116, %119, %122, %125, %128, %131, %134, %137 in 0 : vector<8x32xf32>, vector<8x32xf32>, vector<8x32xf32>, vector<8x32xf32>, vector<8x32xf32>, vector<8x32xf32>, vector<8x32xf32>, vector<8x32xf32> -> vector<64x32xf32>
    %c0_74 = arith.constant 0 : index
    %c0_75 = arith.constant 0 : index
    %139 = vector.load %arg7[%c0_74, %c0_75] : memref<64x8xf32, #tpu.memory_space<vmem>>, vector<64x8xf32>
    %c0_i32 = arith.constant 0 : i32
    %c8_i32 = arith.constant 8 : i32
    %140 = arith.muli %c0_i32, %c8_i32 : i32
    %141 = tpu.assume_multiple %140, 8 : i32
    %142 = arith.index_cast %141 : i32 to index
    %c0_76 = arith.constant 0 : index
    %143 = vector.load %arg12[%142, %c0_76] : memref<16x32xf32, #tpu.memory_space<vmem>>, vector<8x32xf32>
    %144 = arith.index_cast %141 : i32 to index
    %c0_77 = arith.constant 0 : index
    %145 = vector.load %arg13[%144, %c0_77] : memref<16x32xf32, #tpu.memory_space<vmem>>, vector<8x32xf32>
    %146 = arith.index_cast %141 : i32 to index
    %c0_78 = arith.constant 0 : index
    %147 = vector.load %arg14[%146, %c0_78] : memref<16x32xf32, #tpu.memory_space<vmem>>, vector<8x32xf32>
    %148 = tpu.concatenate %143, %143, %143, %143, %143, %143, %143, %143 in 0 : vector<8x32xf32>, vector<8x32xf32>, vector<8x32xf32>, vector<8x32xf32>, vector<8x32xf32>, vector<8x32xf32>, vector<8x32xf32>, vector<8x32xf32> -> vector<64x32xf32>
    %149 = arith.mulf %148, %138 : vector<64x32xf32>
    "tpu.trace_start"() <{level = 10 : i32, message = "qe,se->qs"}> : () -> ()
    %cst_79 = arith.constant dense<0.000000e+00> : vector<64x8xf32>
    %150 = tpu.matmul %149, %145, %cst_79 {dimension_numbers = #tpu.dot_dimension_numbers<[1], [1], [0], [0], [0, 0, 1, 0], [], []>, precision = #tpu.contract_precision<fp32>} : vector<64x32xf32>, vector<8x32xf32>, vector<64x8xf32> -> vector<64x8xf32>
    "tpu.trace_stop"() : () -> ()
    %cst_80 = arith.constant dense<0xFF800000> : vector<64xf32>
    %151 = vector.multi_reduction <maximumf>, %150, %cst_80 [1] : vector<64x8xf32> to vector<64xf32>
    %152 = vector.shape_cast %151 : vector<64xf32> to vector<64x1xf32>
    %153 = vector.broadcast %152 : vector<64x1xf32> to vector<64x8xf32>
    %154 = arith.subf %150, %153 : vector<64x8xf32>
    %155 = math.exp %154 : vector<64x8xf32>
    %cst_81 = arith.constant dense<0.000000e+00> : vector<64xf32>
    %156 = vector.multi_reduction <add>, %155, %cst_81 [1] : vector<64x8xf32> to vector<64xf32>
    %157 = vector.shape_cast %156 : vector<64xf32> to vector<64x1xf32>
    %158 = tpu.reciprocal %157 {approx = true} : vector<64x1xf32> -> vector<64x1xf32>
    %159 = vector.broadcast %158 : vector<64x1xf32> to vector<64x8xf32>
    %160 = arith.mulf %155, %159 : vector<64x8xf32>
    %161 = arith.addf %160, %139 : vector<64x8xf32>
    %cst_82 = arith.constant dense<0.000000e+00> : vector<64x32xf32>
    %162 = tpu.matmul %161, %147, %cst_82 {dimension_numbers = #tpu.dot_dimension_numbers<[1], [0], [0], [1], [0, 0, 1, 1], [], []>, precision = #tpu.contract_precision<fp32>} : vector<64x8xf32>, vector<8x32xf32>, vector<64x32xf32> -> vector<64x32xf32>
    %163 = arith.mulf %162, %138 : vector<64x32xf32>
    %164 = vector.extract_strided_slice %163 {offsets = [0, 0], sizes = [8, 32], strides = [1, 1]} : vector<64x32xf32> to vector<8x32xf32>
    %165 = vector.extract_strided_slice %163 {offsets = [8, 0], sizes = [8, 32], strides = [1, 1]} : vector<64x32xf32> to vector<8x32xf32>
    %166 = arith.addf %164, %165 : vector<8x32xf32>
    %167 = vector.extract_strided_slice %163 {offsets = [16, 0], sizes = [8, 32], strides = [1, 1]} : vector<64x32xf32> to vector<8x32xf32>
    %168 = arith.addf %166, %167 : vector<8x32xf32>
    %169 = vector.extract_strided_slice %163 {offsets = [24, 0], sizes = [8, 32], strides = [1, 1]} : vector<64x32xf32> to vector<8x32xf32>
    %170 = arith.addf %168, %169 : vector<8x32xf32>
    %171 = vector.extract_strided_slice %163 {offsets = [32, 0], sizes = [8, 32], strides = [1, 1]} : vector<64x32xf32> to vector<8x32xf32>
    %172 = arith.addf %170, %171 : vector<8x32xf32>
    %173 = vector.extract_strided_slice %163 {offsets = [40, 0], sizes = [8, 32], strides = [1, 1]} : vector<64x32xf32> to vector<8x32xf32>
    %174 = arith.addf %172, %173 : vector<8x32xf32>
    %175 = vector.extract_strided_slice %163 {offsets = [48, 0], sizes = [8, 32], strides = [1, 1]} : vector<64x32xf32> to vector<8x32xf32>
    %176 = arith.addf %174, %175 : vector<8x32xf32>
    %177 = vector.extract_strided_slice %163 {offsets = [56, 0], sizes = [8, 32], strides = [1, 1]} : vector<64x32xf32> to vector<8x32xf32>
    %178 = arith.addf %176, %177 : vector<8x32xf32>
    %179 = arith.index_cast %141 : i32 to index
    %c0_83 = arith.constant 0 : index
    %180 = vector.load %arg15[%179, %c0_83] : memref<16x32xf32, #tpu.memory_space<vmem>>, vector<8x32xf32>
    tpu.vector_store %arg15[%179, %c0_83], %178 {strides = array<i32>} : memref<16x32xf32, #tpu.memory_space<vmem>>, vector<8x32xf32>,
    %c1_i32 = arith.constant 1 : i32
    %c8_i32_84 = arith.constant 8 : i32
    %181 = arith.muli %c1_i32, %c8_i32_84 : i32
    %182 = tpu.assume_multiple %181, 8 : i32
    %183 = arith.index_cast %182 : i32 to index
    %c0_85 = arith.constant 0 : index
    %184 = vector.load %arg12[%183, %c0_85] : memref<16x32xf32, #tpu.memory_space<vmem>>, vector<8x32xf32>
    %185 = arith.index_cast %182 : i32 to index
    %c0_86 = arith.constant 0 : index
    %186 = vector.load %arg13[%185, %c0_86] : memref<16x32xf32, #tpu.memory_space<vmem>>, vector<8x32xf32>
    %187 = arith.index_cast %182 : i32 to index
    %c0_87 = arith.constant 0 : index
    %188 = vector.load %arg14[%187, %c0_87] : memref<16x32xf32, #tpu.memory_space<vmem>>, vector<8x32xf32>
    %189 = tpu.concatenate %184, %184, %184, %184, %184, %184, %184, %184 in 0 : vector<8x32xf32>, vector<8x32xf32>, vector<8x32xf32>, vector<8x32xf32>, vector<8x32xf32>, vector<8x32xf32>, vector<8x32xf32>, vector<8x32xf32> -> vector<64x32xf32>
    %190 = arith.mulf %189, %138 : vector<64x32xf32>
    "tpu.trace_start"() <{level = 10 : i32, message = "qe,se->qs"}> : () -> ()
    %cst_88 = arith.constant dense<0.000000e+00> : vector<64x8xf32>
    %191 = tpu.matmul %190, %186, %cst_88 {dimension_numbers = #tpu.dot_dimension_numbers<[1], [1], [0], [0], [0, 0, 1, 0], [], []>, precision = #tpu.contract_precision<fp32>} : vector<64x32xf32>, vector<8x32xf32>, vector<64x8xf32> -> vector<64x8xf32>
    "tpu.trace_stop"() : () -> ()
    %cst_89 = arith.constant dense<0xFF800000> : vector<64xf32>
    %192 = vector.multi_reduction <maximumf>, %191, %cst_89 [1] : vector<64x8xf32> to vector<64xf32>
    %193 = vector.shape_cast %192 : vector<64xf32> to vector<64x1xf32>
    %194 = vector.broadcast %193 : vector<64x1xf32> to vector<64x8xf32>
    %195 = arith.subf %191, %194 : vector<64x8xf32>
    %196 = math.exp %195 : vector<64x8xf32>
    %cst_90 = arith.constant dense<0.000000e+00> : vector<64xf32>
    %197 = vector.multi_reduction <add>, %196, %cst_90 [1] : vector<64x8xf32> to vector<64xf32>
    %198 = vector.shape_cast %197 : vector<64xf32> to vector<64x1xf32>
    %199 = tpu.reciprocal %198 {approx = true} : vector<64x1xf32> -> vector<64x1xf32>
    %200 = vector.broadcast %199 : vector<64x1xf32> to vector<64x8xf32>
    %201 = arith.mulf %196, %200 : vector<64x8xf32>
    %202 = arith.addf %201, %139 : vector<64x8xf32>
    %cst_91 = arith.constant dense<0.000000e+00> : vector<64x32xf32>
    %203 = tpu.matmul %202, %188, %cst_91 {dimension_numbers = #tpu.dot_dimension_numbers<[1], [0], [0], [1], [0, 0, 1, 1], [], []>, precision = #tpu.contract_precision<fp32>} : vector<64x8xf32>, vector<8x32xf32>, vector<64x32xf32> -> vector<64x32xf32>
    %204 = arith.mulf %203, %138 : vector<64x32xf32>
    %205 = vector.extract_strided_slice %204 {offsets = [0, 0], sizes = [8, 32], strides = [1, 1]} : vector<64x32xf32> to vector<8x32xf32>
    %206 = vector.extract_strided_slice %204 {offsets = [8, 0], sizes = [8, 32], strides = [1, 1]} : vector<64x32xf32> to vector<8x32xf32>
    %207 = arith.addf %205, %206 : vector<8x32xf32>
    %208 = vector.extract_strided_slice %204 {offsets = [16, 0], sizes = [8, 32], strides = [1, 1]} : vector<64x32xf32> to vector<8x32xf32>
    %209 = arith.addf %207, %208 : vector<8x32xf32>
    %210 = vector.extract_strided_slice %204 {offsets = [24, 0], sizes = [8, 32], strides = [1, 1]} : vector<64x32xf32> to vector<8x32xf32>
    %211 = arith.addf %209, %210 : vector<8x32xf32>
    %212 = vector.extract_strided_slice %204 {offsets = [32, 0], sizes = [8, 32], strides = [1, 1]} : vector<64x32xf32> to vector<8x32xf32>
    %213 = arith.addf %211, %212 : vector<8x32xf32>
    %214 = vector.extract_strided_slice %204 {offsets = [40, 0], sizes = [8, 32], strides = [1, 1]} : vector<64x32xf32> to vector<8x32xf32>
    %215 = arith.addf %213, %214 : vector<8x32xf32>
    %216 = vector.extract_strided_slice %204 {offsets = [48, 0], sizes = [8, 32], strides = [1, 1]} : vector<64x32xf32> to vector<8x32xf32>
    %217 = arith.addf %215, %216 : vector<8x32xf32>
    %218 = vector.extract_strided_slice %204 {offsets = [56, 0], sizes = [8, 32], strides = [1, 1]} : vector<64x32xf32> to vector<8x32xf32>
    %219 = arith.addf %217, %218 : vector<8x32xf32>
    %220 = arith.index_cast %182 : i32 to index
    %c0_92 = arith.constant 0 : index
    %221 = vector.load %arg15[%220, %c0_92] : memref<16x32xf32, #tpu.memory_space<vmem>>, vector<8x32xf32>
    tpu.vector_store %arg15[%220, %c0_92], %219 {strides = array<i32>} : memref<16x32xf32, #tpu.memory_space<vmem>>, vector<8x32xf32>,
    %c2_i32 = arith.constant 2 : i32
    %c0_93 = arith.constant 0 : index
    %c0_94 = arith.constant 0 : index
    %222 = vector.load %arg15[%c0_93, %c0_94] : memref<16x32xf32, #tpu.memory_space<vmem>>, vector<16x32xf32>
    %c2_95 = arith.constant 2 : index
    %c0_96 = arith.constant 0 : index
    %223 = vector.load %arg9[%c2_95, %c0_96] : memref<8x128xf32, #tpu.memory_space<vmem>>, vector<1x32xf32>
    %c3_97 = arith.constant 3 : index
    %c0_98 = arith.constant 0 : index
    %224 = vector.load %arg9[%c3_97, %c0_98] : memref<8x128xf32, #tpu.memory_space<vmem>>, vector<1x32xf32>
    %cst_99 = arith.constant dense<0.000000e+00> : vector<16xf32>
    %225 = vector.multi_reduction <add>, %222, %cst_99 [1] : vector<16x32xf32> to vector<16xf32>
    %226 = vector.shape_cast %225 : vector<16xf32> to vector<16x1xf32>
    %cst_100 = arith.constant 3.200000e+01 : f32
    %227 = vector.broadcast %cst_100 : f32 to vector<16x1xf32>
    %228 = arith.divf %226, %227 : vector<16x1xf32>
    %229 = vector.broadcast %228 : vector<16x1xf32> to vector<16x32xf32>
    %230 = arith.subf %222, %229 : vector<16x32xf32>
    %231 = arith.mulf %230, %230 : vector<16x32xf32>
    %cst_101 = arith.constant dense<0.000000e+00> : vector<16xf32>
    %232 = vector.multi_reduction <add>, %231, %cst_101 [1] : vector<16x32xf32> to vector<16xf32>
    %233 = vector.shape_cast %232 : vector<16xf32> to vector<16x1xf32>
    %cst_102 = arith.constant 3.200000e+01 : f32
    %234 = vector.broadcast %cst_102 : f32 to vector<16x1xf32>
    %235 = arith.divf %233, %234 : vector<16x1xf32>
    %236 = vector.broadcast %228 : vector<16x1xf32> to vector<16x32xf32>
    %237 = arith.subf %222, %236 : vector<16x32xf32>
    %cst_103 = arith.constant 9.99999974E-6 : f32
    %238 = vector.broadcast %cst_103 : f32 to vector<16x1xf32>
    %239 = arith.addf %235, %238 : vector<16x1xf32>
    %240 = math.sqrt %239 : vector<16x1xf32>
    %241 = vector.broadcast %240 : vector<16x1xf32> to vector<16x32xf32>
    %242 = arith.divf %237, %241 : vector<16x32xf32>
    %243 = vector.broadcast %223 : vector<1x32xf32> to vector<16x32xf32>
    %244 = arith.mulf %242, %243 : vector<16x32xf32>
    %245 = vector.broadcast %224 : vector<1x32xf32> to vector<16x32xf32>
    %246 = arith.addf %244, %245 : vector<16x32xf32>
    %247 = arith.addf %105, %246 : vector<16x32xf32>
    %c4_104 = arith.constant 4 : index
    %c0_105 = arith.constant 0 : index
    %248 = vector.load %arg9[%c4_104, %c0_105] : memref<8x128xf32, #tpu.memory_space<vmem>>, vector<1x32xf32>
    %c5_106 = arith.constant 5 : index
    %c0_107 = arith.constant 0 : index
    %249 = vector.load %arg9[%c5_106, %c0_107] : memref<8x128xf32, #tpu.memory_space<vmem>>, vector<1x32xf32>
    %cst_108 = arith.constant dense<0.000000e+00> : vector<16xf32>
    %250 = vector.multi_reduction <add>, %247, %cst_108 [1] : vector<16x32xf32> to vector<16xf32>
    %251 = vector.shape_cast %250 : vector<16xf32> to vector<16x1xf32>
    %cst_109 = arith.constant 3.200000e+01 : f32
    %252 = vector.broadcast %cst_109 : f32 to vector<16x1xf32>
    %253 = arith.divf %251, %252 : vector<16x1xf32>
    %254 = vector.broadcast %253 : vector<16x1xf32> to vector<16x32xf32>
    %255 = arith.subf %247, %254 : vector<16x32xf32>
    %256 = arith.mulf %255, %255 : vector<16x32xf32>
    %cst_110 = arith.constant dense<0.000000e+00> : vector<16xf32>
    %257 = vector.multi_reduction <add>, %256, %cst_110 [1] : vector<16x32xf32> to vector<16xf32>
    %258 = vector.shape_cast %257 : vector<16xf32> to vector<16x1xf32>
    %cst_111 = arith.constant 3.200000e+01 : f32
    %259 = vector.broadcast %cst_111 : f32 to vector<16x1xf32>
    %260 = arith.divf %258, %259 : vector<16x1xf32>
    %261 = vector.broadcast %253 : vector<16x1xf32> to vector<16x32xf32>
    %262 = arith.subf %247, %261 : vector<16x32xf32>
    %cst_112 = arith.constant 9.99999974E-6 : f32
    %263 = vector.broadcast %cst_112 : f32 to vector<16x1xf32>
    %264 = arith.addf %260, %263 : vector<16x1xf32>
    %265 = math.sqrt %264 : vector<16x1xf32>
    %266 = vector.broadcast %265 : vector<16x1xf32> to vector<16x32xf32>
    %267 = arith.divf %262, %266 : vector<16x32xf32>
    %268 = vector.broadcast %248 : vector<1x32xf32> to vector<16x32xf32>
    %269 = arith.mulf %267, %268 : vector<16x32xf32>
    %270 = vector.broadcast %249 : vector<1x32xf32> to vector<16x32xf32>
    %271 = arith.addf %269, %270 : vector<16x32xf32>
    %c0_113 = arith.constant 0 : index
    %c0_114 = arith.constant 0 : index
    %272 = vector.load %arg5[%c0_113, %c0_114] : memref<32x32xf32, #tpu.memory_space<vmem>>, vector<32x32xf32>
    %cst_115 = arith.constant dense<0.000000e+00> : vector<16x32xf32>
    %273 = tpu.matmul %271, %272, %cst_115 {dimension_numbers = #tpu.dot_dimension_numbers<[1], [0], [0], [1], [0, 0, 1, 1], [], []>, precision = #tpu.contract_precision<fp32>} : vector<16x32xf32>, vector<32x32xf32>, vector<16x32xf32> -> vector<16x32xf32>
    %c6_116 = arith.constant 6 : index
    %c0_117 = arith.constant 0 : index
    %274 = vector.load %arg9[%c6_116, %c0_117] : memref<8x128xf32, #tpu.memory_space<vmem>>, vector<1x32xf32>
    %275 = vector.broadcast %274 : vector<1x32xf32> to vector<16x32xf32>
    %276 = arith.addf %273, %275 : vector<16x32xf32>
    %cst_118 = arith.constant 0.000000e+00 : f32
    %277 = vector.broadcast %cst_118 : f32 to vector<16x32xf32>
    %278 = arith.maximumf %276, %277 : vector<16x32xf32>
    %c0_119 = arith.constant 0 : index
    %c0_120 = arith.constant 0 : index
    %279 = vector.load %arg6[%c0_119, %c0_120] : memref<32x128xf32, #tpu.memory_space<vmem>>, vector<32x128xf32>
    %cst_121 = arith.constant dense<0.000000e+00> : vector<16x128xf32>
    %280 = tpu.matmul %278, %279, %cst_121 {dimension_numbers = #tpu.dot_dimension_numbers<[1], [0], [0], [1], [0, 0, 1, 1], [], []>, precision = #tpu.contract_precision<fp32>} : vector<16x32xf32>, vector<32x128xf32>, vector<16x128xf32> -> vector<16x128xf32>
    %c0_122 = arith.constant 0 : index
    %c0_123 = arith.constant 0 : index
    %281 = vector.load %arg10[%c0_122, %c0_123] : memref<8x128xf32, #tpu.memory_space<vmem>>, vector<1x128xf32>
    %282 = vector.broadcast %281 : vector<1x128xf32> to vector<16x128xf32>
    %283 = arith.addf %280, %282 : vector<16x128xf32>
    %c3_124 = arith.constant 3 : index
    %c0_125 = arith.constant 0 : index
    %284 = vector.load %arg10[%c3_124, %c0_125] : memref<8x128xf32, #tpu.memory_space<vmem>>, vector<1x128xf32>
    %cst_126 = arith.constant dense<0.000000e+00> : vector<16xf32>
    %285 = vector.multi_reduction <add>, %283, %cst_126 [1] : vector<16x128xf32> to vector<16xf32>
    %286 = vector.shape_cast %285 : vector<16xf32> to vector<16x1xf32>
    %cst_127 = arith.constant 6.250000e-02 : f32
    %287 = vector.broadcast %cst_127 : f32 to vector<16x1xf32>
    %288 = arith.mulf %286, %287 : vector<16x1xf32>
    %289 = vector.broadcast %288 : vector<16x1xf32> to vector<16x128xf32>
    %290 = arith.subf %283, %289 : vector<16x128xf32>
    %291 = vector.broadcast %284 : vector<1x128xf32> to vector<16x128xf32>
    %292 = arith.mulf %290, %291 : vector<16x128xf32>
    %293 = arith.mulf %292, %292 : vector<16x128xf32>
    %cst_128 = arith.constant dense<0.000000e+00> : vector<16xf32>
    %294 = vector.multi_reduction <add>, %293, %cst_128 [1] : vector<16x128xf32> to vector<16xf32>
    %295 = vector.shape_cast %294 : vector<16xf32> to vector<16x1xf32>
    %cst_129 = arith.constant 6.250000e-02 : f32
    %296 = vector.broadcast %cst_129 : f32 to vector<16x1xf32>
    %297 = arith.mulf %295, %296 : vector<16x1xf32>
    %cst_130 = arith.constant 9.99999974E-6 : f32
    %298 = vector.broadcast %cst_130 : f32 to vector<16x1xf32>
    %299 = arith.addf %297, %298 : vector<16x1xf32>
    %300 = math.rsqrt %299 : vector<16x1xf32>
    %301 = vector.broadcast %300 : vector<16x1xf32> to vector<16x128xf32>
    %302 = arith.mulf %292, %301 : vector<16x128xf32>
    %c1_131 = arith.constant 1 : index
    %c0_132 = arith.constant 0 : index
    %303 = vector.load %arg10[%c1_131, %c0_132] : memref<8x128xf32, #tpu.memory_space<vmem>>, vector<1x128xf32>
    %304 = vector.broadcast %303 : vector<1x128xf32> to vector<16x128xf32>
    %305 = arith.mulf %302, %304 : vector<16x128xf32>
    %c2_133 = arith.constant 2 : index
    %c0_134 = arith.constant 0 : index
    %306 = vector.load %arg10[%c2_133, %c0_134] : memref<8x128xf32, #tpu.memory_space<vmem>>, vector<1x128xf32>
    %307 = vector.broadcast %306 : vector<1x128xf32> to vector<16x128xf32>
    %308 = arith.addf %305, %307 : vector<16x128xf32>
    %c0_135 = arith.constant 0 : index
    %c0_136 = arith.constant 0 : index
    %309 = vector.load %arg11[%c0_135, %c0_136] : memref<16x128xf32, #tpu.memory_space<vmem>>, vector<16x128xf32>
    tpu.vector_store %arg11[%c0_135, %c0_136], %308 {strides = array<i32>} : memref<16x128xf32, #tpu.memory_space<vmem>>, vector<16x128xf32>,
    return
  }
  func.func @transform_0(%arg0: i32) -> (i32, i32, i32) {
    %c0_i32 = arith.constant 0 : i32
    %c0_i32_0 = arith.constant 0 : i32
    %c0_i32_1 = arith.constant 0 : i32
    return %arg0, %c0_i32, %c0_i32_0 : i32, i32, i32
  }
  func.func @transform_1(%arg0: i32) -> (i32, i32) {
    %c0_i32 = arith.constant 0 : i32
    %c0_i32_0 = arith.constant 0 : i32
    %c0_i32_1 = arith.constant 0 : i32
    return %c0_i32, %c0_i32_0 : i32, i32
  }
  func.func @transform_2(%arg0: i32) -> (i32, i32) {
    %c0_i32 = arith.constant 0 : i32
    %c0_i32_0 = arith.constant 0 : i32
    %c0_i32_1 = arith.constant 0 : i32
    return %c0_i32, %c0_i32_0 : i32, i32
  }
  func.func @transform_3(%arg0: i32) -> (i32, i32) {
    %c0_i32 = arith.constant 0 : i32
    %c0_i32_0 = arith.constant 0 : i32
    %c0_i32_1 = arith.constant 0 : i32
    return %c0_i32, %c0_i32_0 : i32, i32
  }
  func.func @transform_4(%arg0: i32) -> (i32, i32) {
    %c0_i32 = arith.constant 0 : i32
    %c0_i32_0 = arith.constant 0 : i32
    %c0_i32_1 = arith.constant 0 : i32
    return %c0_i32, %c0_i32_0 : i32, i32
  }
  func.func @transform_5(%arg0: i32) -> (i32, i32) {
    %c0_i32 = arith.constant 0 : i32
    %c0_i32_0 = arith.constant 0 : i32
    %c0_i32_1 = arith.constant 0 : i32
    return %c0_i32, %c0_i32_0 : i32, i32
  }
  func.func @transform_6(%arg0: i32) -> (i32, i32) {
    %c0_i32 = arith.constant 0 : i32
    %c0_i32_0 = arith.constant 0 : i32
    %c0_i32_1 = arith.constant 0 : i32
    return %c0_i32, %c0_i32_0 : i32, i32
  }
  func.func @transform_7(%arg0: i32) -> (i32, i32) {
    %c0_i32 = arith.constant 0 : i32
    %c0_i32_0 = arith.constant 0 : i32
    %c0_i32_1 = arith.constant 0 : i32
    return %c0_i32, %c0_i32_0 : i32, i32
  }
  func.func @transform_8(%arg0: i32) -> (i32, i32) {
    %c0_i32 = arith.constant 0 : i32
    %c0_i32_0 = arith.constant 0 : i32
    %c0_i32_1 = arith.constant 0 : i32
    return %c0_i32, %c0_i32_0 : i32, i32
  }
  func.func @transform_9(%arg0: i32) -> (i32, i32) {
    %c0_i32 = arith.constant 0 : i32
    %c0_i32_0 = arith.constant 0 : i32
    %c0_i32_1 = arith.constant 0 : i32
    return %c0_i32, %c0_i32_0 : i32, i32
  }
  func.func @transform_10(%arg0: i32) -> (i32, i32) {
    %c0_i32 = arith.constant 0 : i32
    %c0_i32_0 = arith.constant 0 : i32
    return %arg0, %c0_i32 : i32, i32
  }
}

</mosaic_0001>

<llo_original>
// kernel: tpu_custom_call.1
$region0: #{tpu_custom_call.1}
  #allocation0 [shape = 'u32[]', space=smem, size = 0x4, offset = 0x4, fixed_abs, tag = 'smem constant byte address 0x4 - core index']
  #allocation1 [shape = 'u32[144,128]{1,0:T(1,128)}', space=vmem, size = 0x12000, scoped, tag = 'internal scratch']
  #allocation2 [shape = 'f32[16,32]{1,0:T(8,128)}', space=vmem, size = 0x2000, scoped, tag = 'scratch operand']
  #allocation3 [shape = 'f32[16,32]{1,0:T(8,128)}', space=vmem, size = 0x2000, scoped, tag = 'scratch operand']
  #allocation4 [shape = 'f32[16,32]{1,0:T(8,128)}', space=vmem, size = 0x2000, scoped, tag = 'scratch operand']
  #allocation5 [shape = 'f32[16,32]{1,0:T(8,128)}', space=vmem, size = 0x2000, scoped, tag = 'scratch operand']
  %s0 = inlined_call_operand.vmem [shape: f32[4,10,4], index: 0, kind: input, shape index: {}]
  %s1 = inlined_call_operand.vmem [shape: f32[12,128], index: 1, kind: input, shape index: {}]
  %s2 = inlined_call_operand.vmem [shape: f32[128,32], index: 2, kind: input, shape index: {}]
  %s3 = inlined_call_operand.vmem [shape: f32[32,96], index: 3, kind: input, shape index: {}]
  %s4 = inlined_call_operand.vmem [shape: f32[32,32], index: 4, kind: input, shape index: {}]
  %s5 = inlined_call_operand.vmem [shape: f32[32,128], index: 5, kind: input, shape index: {}]
  %s6 = inlined_call_operand.vmem [shape: f32[64,8], index: 6, kind: input, shape index: {}]
  %s7 = inlined_call_operand.vmem [shape: f32[8,32], index: 7, kind: input, shape index: {}]
  %s8 = inlined_call_operand.vmem [shape: f32[8,128], index: 8, kind: input, shape index: {}]
  %s9 = inlined_call_operand.vmem [shape: f32[8,128], index: 9, kind: input, shape index: {}]
  %s10 = inlined_call_operand.hbm [shape: f32[32,128], index: 10, kind: output, shape index: {}]
  %s11 = sld [smem:[#allocation0]]
  $region73: #{tpu_custom_call.1} parent=0
    _
  %s13 = ssub.s32 1, %s11
  %s14 = scalar_select 0, %s13, %s11
  $region1: #{tpu_custom_call.1} parent=0
    #allocation6 [shape = 'u8[16384]{0}', space=vmem, size = 0x4000, scoped, tag = 'output window, operand 0']
    #allocation7 [shape = 's32[2]{0}', space=sflag, size = 0x8, scoped, tag = 'scoped memory for tpu_custom_call.1']
    %15 = vsyncpa [#allocation7], 0
    %s16 = scalar_lea.sflag [#allocation7], 1
    %17 = vsyncpa %s16, 0
    loop: start=0, step=1, limit=4
    $region2: #{tpu_custom_call.1} parent=1 // loop_pre_header
      _
    $region3: #{tpu_custom_call.1} parent=1 // loop_header
      %s19 = sphi 0, %s23
      %p20 = scmp.ge.s32.totalorder %s19, 4
      %s29 = sphi 0, %s31
      %s32 = sphi 0, %s29
      %s33 = sphi 0, %s32
      %s49 = sphi 0, %s33
      %s53 = sphi 0, %s53
      %s55 = sphi 0, %s53
      %s56 = sphi 0, %s55
      %s70 = sphi 0, %s56
      %s74 = sphi 0, %s74
      %s76 = sphi 0, %s74
      %s77 = sphi 0, %s76
      %s91 = sphi 0, %s77
      %s95 = sphi 0, %s95
      %s97 = sphi 0, %s95
      %s98 = sphi 0, %s97
      %s112 = sphi 0, %s98
      %s116 = sphi 0, %s116
      %s118 = sphi 0, %s116
      %s119 = sphi 0, %s118
      %s133 = sphi 0, %s119
      %s137 = sphi 0, %s137
      %s139 = sphi 0, %s137
      %s140 = sphi 0, %s139
      %s154 = sphi 0, %s140
      %s158 = sphi 0, %s158
      %s160 = sphi 0, %s158
      %s161 = sphi 0, %s160
      %s175 = sphi 0, %s161
      %s179 = sphi 0, %s179
      %s181 = sphi 0, %s179
      %s182 = sphi 0, %s181
      %s196 = sphi 0, %s182
      %s200 = sphi 0, %s200
      %s202 = sphi 0, %s200
      %s203 = sphi 0, %s202
      %s217 = sphi 0, %s203
      %s221 = sphi 0, %s221
      %s223 = sphi 0, %s221
      %s224 = sphi 0, %s223
      %s238 = sphi 0, %s224
      %s244 = sphi 0, %s246
      %s247 = sphi 0, %s244
      %s248 = sphi 0, %s247
      %s264 = sphi 0, %s248
    $region4: #{tpu_custom_call.1} parent=1 // loop_header_branch
      %22 = sbr.rel (%p20) target = $region8
    $region5: #{tpu_custom_call.1} parent=1 // loop_body
      %s24 = ssub.s32 %s19, 1
      %s25 = ssub.s32 %s19, 2
      %s26 = sadd.s32 %s19, 1
      %s27 = ssub.s32 %s19, %s26
      %p28 = scmp.eq.s32.totalorder %s27, 0
      %s30 = sadd.s32 %s29, 1
      %s31 = scalar_select %p28, %s29, %s30
      %p34 = pneg %p28
      %p35 = scmp.eq.s32.totalorder %s19, 1
      %p36 = por %p34, %p35
      %p37 = scmp.ne.s32.totalorder %s29, %s32
      %p38 = scmp.eq.s32.totalorder %s19, 0
      %p39 = por %p37, %p38
      %p40 = scmp.ne.s32.totalorder %s29, %s32
      %p41 = scmp.eq.s32.totalorder %s24, 1
      %p42 = por %p40, %p41
      %p43 = scmp.ne.s32.totalorder %s32, %s33
      %p44 = scmp.eq.s32.totalorder %s24, 0
      %p45 = por %p43, %p44
      %p46 = scmp.ne.s32.totalorder %s32, %s33
      %p47 = scmp.eq.s32.totalorder %s25, 1
      %p48 = por %p46, %p47
      %p50 = scmp.ne.s32.totalorder %s33, %s49
      %p51 = scmp.eq.s32.totalorder %s25, 0
      %p52 = por %p50, %p51
      %s54 = sadd.s32 %s53, 1
      %p57 = scmp.eq.s32.totalorder %s19, 1
      %p58 = scmp.ne.s32.totalorder %s53, %s55
      %p59 = scmp.eq.s32.totalorder %s19, 0
      %p60 = por %p58, %p59
      %p61 = scmp.ne.s32.totalorder %s53, %s55
      %p62 = scmp.eq.s32.totalorder %s24, 1
      %p63 = por %p61, %p62
      %p64 = scmp.ne.s32.totalorder %s55, %s56
      %p65 = scmp.eq.s32.totalorder %s24, 0
      %p66 = por %p64, %p65
      %p67 = scmp.ne.s32.totalorder %s55, %s56
      %p68 = scmp.eq.s32.totalorder %s25, 1
      %p69 = por %p67, %p68
      %p71 = scmp.ne.s32.totalorder %s56, %s70
      %p72 = scmp.eq.s32.totalorder %s25, 0
      %p73 = por %p71, %p72
      %s75 = sadd.s32 %s74, 1
      %p78 = scmp.eq.s32.totalorder %s19, 1
      %p79 = scmp.ne.s32.totalorder %s74, %s76
      %p80 = scmp.eq.s32.totalorder %s19, 0
      %p81 = por %p79, %p80
      %p82 = scmp.ne.s32.totalorder %s74, %s76
      %p83 = scmp.eq.s32.totalorder %s24, 1
      %p84 = por %p82, %p83
      %p85 = scmp.ne.s32.totalorder %s76, %s77
      %p86 = scmp.eq.s32.totalorder %s24, 0
      %p87 = por %p85, %p86
      %p88 = scmp.ne.s32.totalorder %s76, %s77
      %p89 = scmp.eq.s32.totalorder %s25, 1
      %p90 = por %p88, %p89
      %p92 = scmp.ne.s32.totalorder %s77, %s91
      %p93 = scmp.eq.s32.totalorder %s25, 0
      %p94 = por %p92, %p93
      %s96 = sadd.s32 %s95, 1
      %p99 = scmp.eq.s32.totalorder %s19, 1
      %p100 = scmp.ne.s32.totalorder %s95, %s97
      %p101 = scmp.eq.s32.totalorder %s19, 0
      %p102 = por %p100, %p101
      %p103 = scmp.ne.s32.totalorder %s95, %s97
      %p104 = scmp.eq.s32.totalorder %s24, 1
      %p105 = por %p103, %p104
      %p106 = scmp.ne.s32.totalorder %s97, %s98
      %p107 = scmp.eq.s32.totalorder %s24, 0
      %p108 = por %p106, %p107
      %p109 = scmp.ne.s32.totalorder %s97, %s98
      %p110 = scmp.eq.s32.totalorder %s25, 1
      %p111 = por %p109, %p110
      %p113 = scmp.ne.s32.totalorder %s98, %s112
      %p114 = scmp.eq.s32.totalorder %s25, 0
      %p115 = por %p113, %p114
      %s117 = sadd.s32 %s116, 1
      %p120 = scmp.eq.s32.totalorder %s19, 1
      %p121 = scmp.ne.s32.totalorder %s116, %s118
      %p122 = scmp.eq.s32.totalorder %s19, 0
      %p123 = por %p121, %p122
      %p124 = scmp.ne.s32.totalorder %s116, %s118
      %p125 = scmp.eq.s32.totalorder %s24, 1
      %p126 = por %p124, %p125
      %p127 = scmp.ne.s32.totalorder %s118, %s119
      %p128 = scmp.eq.s32.totalorder %s24, 0
      %p129 = por %p127, %p128
      %p130 = scmp.ne.s32.totalorder %s118, %s119
      %p131 = scmp.eq.s32.totalorder %s25, 1
      %p132 = por %p130, %p131
      %p134 = scmp.ne.s32.totalorder %s119, %s133
      %p135 = scmp.eq.s32.totalorder %s25, 0
      %p136 = por %p134, %p135
      %s138 = sadd.s32 %s137, 1
      %p141 = scmp.eq.s32.totalorder %s19, 1
      %p142 = scmp.ne.s32.totalorder %s137, %s139
      %p143 = scmp.eq.s32.totalorder %s19, 0
      %p144 = por %p142, %p143
      %p145 = scmp.ne.s32.totalorder %s137, %s139
      %p146 = scmp.eq.s32.totalorder %s24, 1
      %p147 = por %p145, %p146
      %p148 = scmp.ne.s32.totalorder %s139, %s140
      %p149 = scmp.eq.s32.totalorder %s24, 0
      %p150 = por %p148, %p149
      %p151 = scmp.ne.s32.totalorder %s139, %s140
      %p152 = scmp.eq.s32.totalorder %s25, 1
      %p153 = por %p151, %p152
      %p155 = scmp.ne.s32.totalorder %s140, %s154
      %p156 = scmp.eq.s32.totalorder %s25, 0
      %p157 = por %p155, %p156
      %s159 = sadd.s32 %s158, 1
      %p162 = scmp.eq.s32.totalorder %s19, 1
      %p163 = scmp.ne.s32.totalorder %s158, %s160
      %p164 = scmp.eq.s32.totalorder %s19, 0
      %p165 = por %p163, %p164
      %p166 = scmp.ne.s32.totalorder %s158, %s160
      %p167 = scmp.eq.s32.totalorder %s24, 1
      %p168 = por %p166, %p167
      %p169 = scmp.ne.s32.totalorder %s160, %s161
      %p170 = scmp.eq.s32.totalorder %s24, 0
      %p171 = por %p169, %p170
      %p172 = scmp.ne.s32.totalorder %s160, %s161
      %p173 = scmp.eq.s32.totalorder %s25, 1
      %p174 = por %p172, %p173
      %p176 = scmp.ne.s32.totalorder %s161, %s175
      %p177 = scmp.eq.s32.totalorder %s25, 0
      %p178 = por %p176, %p177
      %s180 = sadd.s32 %s179, 1
      %p183 = scmp.eq.s32.totalorder %s19, 1
      %p184 = scmp.ne.s32.totalorder %s179, %s181
      %p185 = scmp.eq.s32.totalorder %s19, 0
      %p186 = por %p184, %p185
      %p187 = scmp.ne.s32.totalorder %s179, %s181
      %p188 = scmp.eq.s32.totalorder %s24, 1
      %p189 = por %p187, %p188
      %p190 = scmp.ne.s32.totalorder %s181, %s182
      %p191 = scmp.eq.s32.totalorder %s24, 0
      %p192 = por %p190, %p191
      %p193 = scmp.ne.s32.totalorder %s181, %s182
      %p194 = scmp.eq.s32.totalorder %s25, 1
      %p195 = por %p193, %p194
      %p197 = scmp.ne.s32.totalorder %s182, %s196
      %p198 = scmp.eq.s32.totalorder %s25, 0
      %p199 = por %p197, %p198
      %s201 = sadd.s32 %s200, 1
      %p204 = scmp.eq.s32.totalorder %s19, 1
      %p205 = scmp.ne.s32.totalorder %s200, %s202
      %p206 = scmp.eq.s32.totalorder %s19, 0
      %p207 = por %p205, %p206
      %p208 = scmp.ne.s32.totalorder %s200, %s202
      %p209 = scmp.eq.s32.totalorder %s24, 1
      %p210 = por %p208, %p209
      %p211 = scmp.ne.s32.totalorder %s202, %s203
      %p212 = scmp.eq.s32.totalorder %s24, 0
      %p213 = por %p211, %p212
      %p214 = scmp.ne.s32.totalorder %s202, %s203
      %p215 = scmp.eq.s32.totalorder %s25, 1
      %p216 = por %p214, %p215
      %p218 = scmp.ne.s32.totalorder %s203, %s217
      %p219 = scmp.eq.s32.totalorder %s25, 0
      %p220 = por %p218, %p219
      %s222 = sadd.s32 %s221, 1
      %p225 = scmp.eq.s32.totalorder %s19, 1
      %p226 = scmp.ne.s32.totalorder %s221, %s223
      %p227 = scmp.eq.s32.totalorder %s19, 0
      %p228 = por %p226, %p227
      %p229 = scmp.ne.s32.totalorder %s221, %s223
      %p230 = scmp.eq.s32.totalorder %s24, 1
      %p231 = por %p229, %p230
      %p232 = scmp.ne.s32.totalorder %s223, %s224
      %p233 = scmp.eq.s32.totalorder %s24, 0
      %p234 = por %p232, %p233
      %p235 = scmp.ne.s32.totalorder %s223, %s224
      %p236 = scmp.eq.s32.totalorder %s25, 1
      %p237 = por %p235, %p236
      %p239 = scmp.ne.s32.totalorder %s224, %s238
      %p240 = scmp.eq.s32.totalorder %s25, 0
      %p241 = por %p239, %p240
      %s242 = ssub.s32 %s19, %s26
      %p243 = scmp.eq.s32.totalorder %s242, 0
      %s245 = sadd.s32 %s244, 1
      %s246 = scalar_select %p243, %s244, %s245
      %p249 = pneg %p243
      %p250 = scmp.eq.s32.totalorder %s19, 1
      %p251 = por %p249, %p250
      %p252 = scmp.ne.s32.totalorder %s244, %s247
      %p253 = scmp.eq.s32.totalorder %s19, 0
      %p254 = por %p252, %p253
      %p255 = scmp.ne.s32.totalorder %s244, %s247
      %p256 = scmp.eq.s32.totalorder %s24, 1
      %p257 = por %p255, %p256
      %p258 = scmp.ne.s32.totalorder %s247, %s248
      %p259 = scmp.eq.s32.totalorder %s24, 0
      %p260 = por %p258, %p259
      %p261 = scmp.ne.s32.totalorder %s247, %s248
      %p262 = scmp.eq.s32.totalorder %s25, 1
      %p263 = por %p261, %p262
      %p265 = scmp.ne.s32.totalorder %s248, %s264
      %p266 = scmp.eq.s32.totalorder %s25, 0
      %p267 = por %p265, %p266
      %p268 = scmp.le.s32.totalorder 1, %s19
      %p269 = scmp.lt.s32.totalorder %s19, 3
      %p270 = pnand %p268, %p269
      %p271 = pneg %p270
      // Predicated region
      $region9: #{tpu_custom_call.1} parent=5 // pred_check
        _
      $region10: #{tpu_custom_call.1} parent=5 // pred_check_branch
        %273 = sbr.rel (%p270) target = $region12
      $region11: #{tpu_custom_call.1} parent=5 // pred_region
        %s274 = ssub.s32 %s19, 1
        // Predicated region
        $region13: #{tpu_custom_call.1} parent=11 // pred_check
          %p275 = pneg %p66
        $region14: #{tpu_custom_call.1} parent=11 // pred_check_branch
          %277 = sbr.rel (%p275) target = $region16
        $region15: #{tpu_custom_call.1} parent=11 // pred_region
          _
        $region16: #{tpu_custom_call.1} parent=11 // pred_fallthru
          _
        // Predicated region
        $region17: #{tpu_custom_call.1} parent=11 // pred_check
          %p278 = pneg %p87
        $region18: #{tpu_custom_call.1} parent=11 // pred_check_branch
          %280 = sbr.rel (%p278) target = $region20
        $region19: #{tpu_custom_call.1} parent=11 // pred_region
          _
        $region20: #{tpu_custom_call.1} parent=11 // pred_fallthru
          _
        // Predicated region
        $region21: #{tpu_custom_call.1} parent=11 // pred_check
          %p281 = pneg %p108
        $region22: #{tpu_custom_call.1} parent=11 // pred_check_branch
          %283 = sbr.rel (%p281) target = $region24
        $region23: #{tpu_custom_call.1} parent=11 // pred_region
          _
        $region24: #{tpu_custom_call.1} parent=11 // pred_fallthru
          _
        // Predicated region
        $region25: #{tpu_custom_call.1} parent=11 // pred_check
          %p284 = pneg %p129
        $region26: #{tpu_custom_call.1} parent=11 // pred_check_branch
          %286 = sbr.rel (%p284) target = $region28
        $region27: #{tpu_custom_call.1} parent=11 // pred_region
          _
        $region28: #{tpu_custom_call.1} parent=11 // pred_fallthru
          _
        // Predicated region
        $region29: #{tpu_custom_call.1} parent=11 // pred_check
          %p287 = pneg %p150
        $region30: #{tpu_custom_call.1} parent=11 // pred_check_branch
          %289 = sbr.rel (%p287) target = $region32
        $region31: #{tpu_custom_call.1} parent=11 // pred_region
          _
        $region32: #{tpu_custom_call.1} parent=11 // pred_fallthru
          _
        // Predicated region
        $region33: #{tpu_custom_call.1} parent=11 // pred_check
          %p290 = pneg %p171
        $region34: #{tpu_custom_call.1} parent=11 // pred_check_branch
          %292 = sbr.rel (%p290) target = $region36
        $region35: #{tpu_custom_call.1} parent=11 // pred_region
          _
        $region36: #{tpu_custom_call.1} parent=11 // pred_fallthru
          _
        // Predicated region
        $region37: #{tpu_custom_call.1} parent=11 // pred_check
          %p293 = pneg %p192
        $region38: #{tpu_custom_call.1} parent=11 // pred_check_branch
          %295 = sbr.rel (%p293) target = $region40
        $region39: #{tpu_custom_call.1} parent=11 // pred_region
          _
        $region40: #{tpu_custom_call.1} parent=11 // pred_fallthru
          _
        // Predicated region
        $region41: #{tpu_custom_call.1} parent=11 // pred_check
          %p296 = pneg %p213
        $region42: #{tpu_custom_call.1} parent=11 // pred_check_branch
          %298 = sbr.rel (%p296) target = $region44
        $region43: #{tpu_custom_call.1} parent=11 // pred_region
          _
        $region44: #{tpu_custom_call.1} parent=11 // pred_fallthru
          _
        // Predicated region
        $region45: #{tpu_custom_call.1} parent=11 // pred_check
          %p299 = pneg %p234
        $region46: #{tpu_custom_call.1} parent=11 // pred_check_branch
          %301 = sbr.rel (%p299) target = $region48
        $region47: #{tpu_custom_call.1} parent=11 // pred_region
          _
        $region48: #{tpu_custom_call.1} parent=11 // pred_fallthru
          _
      $region12: #{tpu_custom_call.1} parent=5 // pred_fallthru
        _
      %p302 = scmp.lt.s32.totalorder %s19, 2
      // Predicated region
      $region49: #{tpu_custom_call.1} parent=5 // pred_check
        %p303 = pneg %p302
      $region50: #{tpu_custom_call.1} parent=5 // pred_check_branch
        %305 = sbr.rel (%p303) target = $region52
      $region51: #{tpu_custom_call.1} parent=5 // pred_region
        // Predicated region
        $region53: #{tpu_custom_call.1} parent=51 // pred_check
          %p306 = pneg %p39
        $region54: #{tpu_custom_call.1} parent=51 // pred_check_branch
          %308 = sbr.rel (%p306) target = $region56
        $region55: #{tpu_custom_call.1} parent=51 // pred_region
          %s309 = smul.u32 2, %s19
          %p310 = scmp.lt.s32.totalorder %s309, 3
          %s311 = scalar_select %p310, %s309, 3
          %s312 = smul.addr %s311, 2
          %s313 = smul.addr %s312, 8
          %s314 = scalar_lea.vmem %s0, %s313
          %s315 = smul.u32 2, %s19
        $region56: #{tpu_custom_call.1} parent=51 // pred_fallthru
          _
      $region52: #{tpu_custom_call.1} parent=5 // pred_fallthru
        _
      %p316 = scmp.le.s32.totalorder 1, %s19
      %p317 = scmp.lt.s32.totalorder %s19, 3
      %p318 = pnand %p316, %p317
      %p319 = pneg %p318
      // Predicated region
      $region57: #{tpu_custom_call.1} parent=5 // pred_check
        _
      $region58: #{tpu_custom_call.1} parent=5 // pred_check_branch
        %321 = sbr.rel (%p318) target = $region60
      $region59: #{tpu_custom_call.1} parent=5 // pred_region
        %s322 = ssub.s32 %s19, 1
        %s323 = smul.u32 2, %s24
        %p324 = scmp.lt.s32.totalorder %s323, 3
        %s325 = scalar_select %p324, %s323, 3
        %s326 = smul.addr %s325, 2
        %s327 = smul.addr %s326, 8
        %s328 = scalar_lea.vmem %s0, %s327
        %p329 = pneg %p45
        %p330 = pneg %p42
        %p331 = pneg %p66
        %p332 = pneg %p63
        %p333 = pneg %p87
        %p334 = pneg %p84
        %p335 = pneg %p108
        %p336 = pneg %p105
        %p337 = pneg %p129
        %p338 = pneg %p126
        %p339 = pneg %p150
        %p340 = pneg %p147
        %p341 = pneg %p171
        %p342 = pneg %p168
        %p343 = pneg %p192
        %p344 = pneg %p189
        %p345 = pneg %p213
        %p346 = pneg %p210
        %p347 = pneg %p234
        %p348 = pneg %p231
        %p349 = pneg %p260
        %p350 = pneg %p257
        %s351 = sand.u32 %s247, 1
        %s352 = scalar_lea.sflag [#allocation7], %s351
        %s353 = sand.u32 %s247, 1
        %s354 = smul.addr %s353, 16
        %s355 = scalar_lea.vmem [#allocation6], %s354
        %s356 = smul.u32 2, %s24
        %p357 = scmp.lt.s32.totalorder %s356, 3
        %s358 = scalar_select %p357, %s356, 3
        %s359 = smul.addr %s358, 2
        %s360 = smul.addr %s359, 8
        %s361 = scalar_lea.vmem %s0, %s360
        %s362 = smul.u32 2, %s24
        %s363 = smul.u32 2, %s24
        %v364 = vld [vmem:[%s361] sm:$0xff]
        %s365 = scalar_lea.vmem %s361, 16
        %v366 = vld [vmem:[%s365] sm:$0xff]
        %v367 = vld [vmem:[%s361 + $0x1] sm:$0xff]
        %v368 = vld [vmem:[%s365 + $0x1] sm:$0xff]
        %v369 = vld [vmem:[%s361 + $0x2] sm:$0xff]
        %v370 = vld [vmem:[%s365 + $0x2] sm:$0xff]
        %373 = vrot.lane.b32.xlu0 %v367, 4
        %v374 = vpop.permute.xlu0 %373
        %375 = vrot.lane.b32.xlu0 %v368, 4
        %v376 = vpop.permute.xlu0 %375
        %381 = vrot.lane.b32.xlu0 %v369, 8
        %v382 = vpop.permute.xlu0 %381
        %383 = vrot.lane.b32.xlu0 %v370, 8
        %v384 = vpop.permute.xlu0 %383
        %vm387 = vcmask 31744
        %v388 = vsel %vm387, %v364, %v374
        %v389 = vsel %vm387, %v366, %v376
        %vm390 = vcmask 64512
        %v391 = vsel %vm390, %v388, %v382
        %v392 = vsel %vm390, %v389, %v384
        %v393 = vld [vmem:[%s1] sm:$0xff]
        %v394 = vld [vmem:[%s1 + $0x8] sm:$0xf]
        %v395 = vld [vmem:[%s8] sm:$0x1]
        %v396 = vlaneseq
        %v397 = vshrl.u32 %v396, 7
        %v398 = vsub.s32 0, %v397
        %v399 = vrot.slane %v395, %v398
        %vm400 = vcmask 97280
        %v402 = vsel %vm400, %v391, 0
        %v405 = vsel %vm400, %v392, 0
        %vm407 = vcmask 1043456
        %v409 = vsel %vm407, %v394, 0
        %411 = vmatprep.subr.mxu0 0.0
        %v412 = vand.u32 %v393, 4294901760
        %413 = vmatpush1.msra.mxu0 %v412
        %414 = vmatprep.subr.mxu0 0.0
        %v415 = vand.u32 %v409, 4294901760
        %416 = vmatpush1.msra.mxu0 %v415
        %417 = vmatprep.subr.mxu0 0.0
        %418 = vmatpush1.msra.mxu0 0.0
        %419 = vmatprep.subr.mxu0 0.0
        %420 = vmatpush1.msra.mxu0 0.0
        %421 = vmatprep.subr.mxu0 0.0
        %422 = vmatpush1.msra.mxu0 0.0
        %423 = vmatprep.subr.mxu0 0.0
        %424 = vmatpush1.msra.mxu0 0.0
        %425 = vmatprep.subr.mxu0 0.0
        %426 = vmatpush1.msra.mxu0 0.0
        %427 = vmatprep.subr.mxu0 0.0
        %428 = vmatpush1.msra.mxu0 0.0
        %429 = vmatprep.subr.mxu0 0.0
        %430 = vmatpush1.msra.mxu0 0.0
        %431 = vmatprep.subr.mxu0 0.0
        %432 = vmatpush1.msra.mxu0 0.0
        %433 = vmatprep.subr.mxu0 0.0
        %434 = vmatpush1.msra.mxu0 0.0
        %435 = vmatprep.subr.mxu0 0.0
        %436 = vmatpush1.msra.mxu0 0.0
        %437 = vmatprep.subr.mxu0 0.0
        %438 = vmatpush1.msra.mxu0 0.0
        %439 = vmatprep.subr.mxu0 0.0
        %440 = vmatpush1.msra.mxu0 0.0
        %441 = vmatprep.subr.mxu0 0.0
        %442 = vmatpush1.msra.mxu0 0.0
        %443 = vmatprep.subr.mxu0 0.0
        %444 = vmatpush1.msra.mxu0 0.0
        %445 = vmatprep.subr.mxu0 0.0
        %446 = vmatpush1.msra.mxu0 0.0
        %447 = vmatprep.subr.mxu0 0.0
        %448 = vmatpush1.msra.mxu0 0.0
        %449 = vmatprep.subr.mxu0 0.0
        %450 = vmatpush1.msra.mxu0 0.0
        %451 = vmatprep.subr.mxu0 0.0
        %452 = vmatpush1.msra.mxu0 0.0
        %453 = vmatprep.subr.mxu0 0.0
        %454 = vmatpush1.msra.mxu0 0.0
        %455 = vmatprep.subr.mxu0 0.0
        %456 = vmatpush1.msra.mxu0 0.0
        %457 = vmatprep.subr.mxu0 0.0
        %458 = vmatpush1.msra.mxu0 0.0
        %459 = vmatprep.subr.mxu0 0.0
        %460 = vmatpush1.msra.mxu0 0.0
        %461 = vmatprep.subr.mxu0 0.0
        %462 = vmatpush1.msra.mxu0 0.0
        %463 = vmatprep.subr.mxu0 0.0
        %464 = vmatpush1.msra.mxu0 0.0
        %465 = vmatprep.subr.mxu0 0.0
        %466 = vmatpush1.msra.mxu0 0.0
        %467 = vmatprep.subr.mxu0 0.0
        %468 = vmatpush1.msra.mxu0 0.0
        %469 = vmatprep.subr.mxu0 0.0
        %470 = vmatpush1.msra.mxu0 0.0
        %471 = vmatprep.subr.mxu0 0.0
        %472 = vmatpush1.msra.mxu0 0.0
        %473 = vmatprep.subr.mxu0 0.0
        %474 = vmatpush1.msra.mxu0 0.0
        %475 = vmatprep.subr.mxu0 0.0
        %476 = vmatpush1.msra.mxu0 0.0
        %477 = vmatprep.mubr.f32.mxu0 0.0
        %v478 = vand.u32 %v402, 4294901760
        %v479 = vsub.f32 %v402, %v478
        %v480 = vand.u32 %v479, 4294901760
        %v481 = vsub.f32 %v479, %v480
        %v482 = vand.u32 %v481, 4294901760
        %483 = vmatmul.mubr.f32.gmra.mrb[0].mxu0 %v482
        %v484 = vpop.f32.mrb[0].mxu0
        %v485 = vadd.f32 %v399, %v484
        %v486 = vpop.f32.mrb[0].mxu0
        %487 = vmatprep.mubr.f32.mxu0 0.0
        %v488 = vand.u32 %v405, 4294901760
        %v489 = vsub.f32 %v405, %v488
        %v490 = vand.u32 %v489, 4294901760
        %v491 = vsub.f32 %v489, %v490
        %v492 = vand.u32 %v491, 4294901760
        %493 = vmatmul.mubr.f32.gmra.mrb[0].mxu0 %v492
        %v494 = vpop.f32.mrb[0].mxu0
        %v495 = vadd.f32 %v399, %v494
        %v496 = vpop.f32.mrb[0].mxu0
        %497 = vdwg.mxu0
        %498 = vmatprep.subr.mxu0 0.0
        %v499 = vand.u32 %v393, 4294901760
        %v500 = vsub.f32 %v393, %v499
        %v501 = vand.u32 %v500, 4294901760
        %v502 = vsub.f32 %v500, %v501
        %v503 = vand.u32 %v502, 4294901760
        %504 = vmatpush1.msra.mxu0 %v503
        %505 = vmatprep.subr.mxu0 0.0
        %v506 = vand.u32 %v409, 4294901760
        %v507 = vsub.f32 %v409, %v506
        %v508 = vand.u32 %v507, 4294901760
        %v509 = vsub.f32 %v507, %v508
        %v510 = vand.u32 %v509, 4294901760
        %511 = vmatpush1.msra.mxu0 %v510
        %512 = vmatprep.subr.mxu0 0.0
        %513 = vmatpush1.msra.mxu0 0.0
        %514 = vmatprep.subr.mxu0 0.0
        %515 = vmatpush1.msra.mxu0 0.0
        %516 = vmatprep.subr.mxu0 0.0
        %517 = vmatpush1.msra.mxu0 0.0
        %518 = vmatprep.subr.mxu0 0.0
        %519 = vmatpush1.msra.mxu0 0.0
        %520 = vmatprep.subr.mxu0 0.0
        %521 = vmatpush1.msra.mxu0 0.0
        %522 = vmatprep.subr.mxu0 0.0
        %523 = vmatpush1.msra.mxu0 0.0
        %524 = vmatprep.subr.mxu0 0.0
        %525 = vmatpush1.msra.mxu0 0.0
        %526 = vmatprep.subr.mxu0 0.0
        %527 = vmatpush1.msra.mxu0 0.0
        %528 = vmatprep.subr.mxu0 0.0
        %529 = vmatpush1.msra.mxu0 0.0
        %530 = vmatprep.subr.mxu0 0.0
        %531 = vmatpush1.msra.mxu0 0.0
        %532 = vmatprep.subr.mxu0 0.0
        %533 = vmatpush1.msra.mxu0 0.0
        %534 = vmatprep.subr.mxu0 0.0
        %535 = vmatpush1.msra.mxu0 0.0
        %536 = vmatprep.subr.mxu0 0.0
        %537 = vmatpush1.msra.mxu0 0.0
        %538 = vmatprep.subr.mxu0 0.0
        %539 = vmatpush1.msra.mxu0 0.0
        %540 = vmatprep.subr.mxu0 0.0
        %541 = vmatpush1.msra.mxu0 0.0
        %542 = vmatprep.subr.mxu0 0.0
        %543 = vmatpush1.msra.mxu0 0.0
        %544 = vmatprep.subr.mxu0 0.0
        %545 = vmatpush1.msra.mxu0 0.0
        %546 = vmatprep.subr.mxu0 0.0
        %547 = vmatpush1.msra.mxu0 0.0
        %548 = vmatprep.subr.mxu0 0.0
        %549 = vmatpush1.msra.mxu0 0.0
        %550 = vmatprep.subr.mxu0 0.0
        %551 = vmatpush1.msra.mxu0 0.0
        %552 = vmatprep.subr.mxu0 0.0
        %553 = vmatpush1.msra.mxu0 0.0
        %554 = vmatprep.subr.mxu0 0.0
        %555 = vmatpush1.msra.mxu0 0.0
        %556 = vmatprep.subr.mxu0 0.0
        %557 = vmatpush1.msra.mxu0 0.0
        %558 = vmatprep.subr.mxu0 0.0
        %559 = vmatpush1.msra.mxu0 0.0
        %560 = vmatprep.subr.mxu0 0.0
        %561 = vmatpush1.msra.mxu0 0.0
        %562 = vmatprep.subr.mxu0 0.0
        %563 = vmatpush1.msra.mxu0 0.0
        %564 = vmatprep.subr.mxu0 0.0
        %565 = vmatpush1.msra.mxu0 0.0
        %566 = vmatprep.subr.mxu0 0.0
        %567 = vmatpush1.msra.mxu0 0.0
        %568 = vmatprep.subr.mxu0 0.0
        %569 = vmatpush1.msra.mxu0 0.0
        %570 = vmatprep.subr.mxu0 0.0
        %571 = vmatpush1.msra.mxu0 0.0
        %572 = vmatprep.mubr.f32.mxu0 0.0
        %v573 = vand.u32 %v402, 4294901760
        %574 = vmatmul.mubr.f32.gmra.mrb[0].mxu0 %v573
        %v575 = vpop.f32.mrb[0].mxu0
        %v576 = vadd.f32 %v485, %v575
        %v577 = vpop.f32.mrb[0].mxu0
        %578 = vmatprep.mubr.f32.mxu0 0.0
        %v579 = vand.u32 %v405, 4294901760
        %580 = vmatmul.mubr.f32.gmra.mrb[0].mxu0 %v579
        %v581 = vpop.f32.mrb[0].mxu0
        %v582 = vadd.f32 %v495, %v581
        %v583 = vpop.f32.mrb[0].mxu0
        %584 = vdwg.mxu0
        %585 = vmatprep.subr.mxu0 0.0
        %v586 = vand.u32 %v393, 4294901760
        %v587 = vsub.f32 %v393, %v586
        %588 = vmatpush1.msra.mxu0 %v587
        %589 = vmatprep.subr.mxu0 0.0
        %v590 = vand.u32 %v409, 4294901760
        %v591 = vsub.f32 %v409, %v590
        %592 = vmatpush1.msra.mxu0 %v591
        %593 = vmatprep.subr.mxu0 0.0
        %594 = vmatpush1.msra.mxu0 0.0
        %595 = vmatprep.subr.mxu0 0.0
        %596 = vmatpush1.msra.mxu0 0.0
        %597 = vmatprep.subr.mxu0 0.0
        %598 = vmatpush1.msra.mxu0 0.0
        %599 = vmatprep.subr.mxu0 0.0
        %600 = vmatpush1.msra.mxu0 0.0
        %601 = vmatprep.subr.mxu0 0.0
        %602 = vmatpush1.msra.mxu0 0.0
        %603 = vmatprep.subr.mxu0 0.0
        %604 = vmatpush1.msra.mxu0 0.0
        %605 = vmatprep.subr.mxu0 0.0
        %606 = vmatpush1.msra.mxu0 0.0
        %607 = vmatprep.subr.mxu0 0.0
        %608 = vmatpush1.msra.mxu0 0.0
        %609 = vmatprep.subr.mxu0 0.0
        %610 = vmatpush1.msra.mxu0 0.0
        %611 = vmatprep.subr.mxu0 0.0
        %612 = vmatpush1.msra.mxu0 0.0
        %613 = vmatprep.subr.mxu0 0.0
        %614 = vmatpush1.msra.mxu0 0.0
        %615 = vmatprep.subr.mxu0 0.0
        %616 = vmatpush1.msra.mxu0 0.0
        %617 = vmatprep.subr.mxu0 0.0
        %618 = vmatpush1.msra.mxu0 0.0
        %619 = vmatprep.subr.mxu0 0.0
        %620 = vmatpush1.msra.mxu0 0.0
        %621 = vmatprep.subr.mxu0 0.0
        %622 = vmatpush1.msra.mxu0 0.0
        %623 = vmatprep.subr.mxu0 0.0
        %624 = vmatpush1.msra.mxu0 0.0
        %625 = vmatprep.subr.mxu0 0.0
        %626 = vmatpush1.msra.mxu0 0.0
        %627 = vmatprep.subr.mxu0 0.0
        %628 = vmatpush1.msra.mxu0 0.0
        %629 = vmatprep.subr.mxu0 0.0
        %630 = vmatpush1.msra.mxu0 0.0
        %631 = vmatprep.subr.mxu0 0.0
        %632 = vmatpush1.msra.mxu0 0.0
        %633 = vmatprep.subr.mxu0 0.0
        %634 = vmatpush1.msra.mxu0 0.0
        %635 = vmatprep.subr.mxu0 0.0
        %636 = vmatpush1.msra.mxu0 0.0
        %637 = vmatprep.subr.mxu0 0.0
        %638 = vmatpush1.msra.mxu0 0.0
        %639 = vmatprep.subr.mxu0 0.0
        %640 = vmatpush1.msra.mxu0 0.0
        %641 = vmatprep.subr.mxu0 0.0
        %642 = vmatpush1.msra.mxu0 0.0
        %643 = vmatprep.subr.mxu0 0.0
        %644 = vmatpush1.msra.mxu0 0.0
        %645 = vmatprep.subr.mxu0 0.0
        %646 = vmatpush1.msra.mxu0 0.0
        %647 = vmatprep.subr.mxu0 0.0
        %648 = vmatpush1.msra.mxu0 0.0
        %649 = vmatprep.subr.mxu0 0.0
        %650 = vmatpush1.msra.mxu0 0.0
        %651 = vmatprep.subr.mxu0 0.0
        %652 = vmatpush1.msra.mxu0 0.0
        %653 = vmatprep.mubr.f32.mxu0 0.0
        %v654 = vand.u32 %v402, 4294901760
        %v655 = vsub.f32 %v402, %v654
        %656 = vmatmul.mubr.f32.gmra.mrb[0].mxu0 %v655
        %v657 = vpop.f32.mrb[0].mxu0
        %v658 = vadd.f32 %v576, %v657
        %v659 = vpop.f32.mrb[0].mxu0
        %660 = vmatprep.mubr.f32.mxu0 0.0
        %v661 = vand.u32 %v405, 4294901760
        %v662 = vsub.f32 %v405, %v661
        %663 = vmatmul.mubr.f32.gmra.mrb[0].mxu0 %v662
        %v664 = vpop.f32.mrb[0].mxu0
        %v665 = vadd.f32 %v582, %v664
        %v666 = vpop.f32.mrb[0].mxu0
        %667 = vdwg.mxu0
        %668 = vmatprep.subr.mxu0 0.0
        %v669 = vand.u32 %v393, 4294901760
        %670 = vmatpush1.msra.mxu0 %v669
        %671 = vmatprep.subr.mxu0 0.0
        %v672 = vand.u32 %v409, 4294901760
        %673 = vmatpush1.msra.mxu0 %v672
        %674 = vmatprep.subr.mxu0 0.0
        %675 = vmatpush1.msra.mxu0 0.0
        %676 = vmatprep.subr.mxu0 0.0
        %677 = vmatpush1.msra.mxu0 0.0
        %678 = vmatprep.subr.mxu0 0.0
        %679 = vmatpush1.msra.mxu0 0.0
        %680 = vmatprep.subr.mxu0 0.0
        %681 = vmatpush1.msra.mxu0 0.0
        %682 = vmatprep.subr.mxu0 0.0
        %683 = vmatpush1.msra.mxu0 0.0
        %684 = vmatprep.subr.mxu0 0.0
        %685 = vmatpush1.msra.mxu0 0.0
        %686 = vmatprep.subr.mxu0 0.0
        %687 = vmatpush1.msra.mxu0 0.0
        %688 = vmatprep.subr.mxu0 0.0
        %689 = vmatpush1.msra.mxu0 0.0
        %690 = vmatprep.subr.mxu0 0.0
        %691 = vmatpush1.msra.mxu0 0.0
        %692 = vmatprep.subr.mxu0 0.0
        %693 = vmatpush1.msra.mxu0 0.0
        %694 = vmatprep.subr.mxu0 0.0
        %695 = vmatpush1.msra.mxu0 0.0
        %696 = vmatprep.subr.mxu0 0.0
        %697 = vmatpush1.msra.mxu0 0.0
        %698 = vmatprep.subr.mxu0 0.0
        %699 = vmatpush1.msra.mxu0 0.0
        %700 = vmatprep.subr.mxu0 0.0
        %701 = vmatpush1.msra.mxu0 0.0
        %702 = vmatprep.subr.mxu0 0.0
        %703 = vmatpush1.msra.mxu0 0.0
        %704 = vmatprep.subr.mxu0 0.0
        %705 = vmatpush1.msra.mxu0 0.0
        %706 = vmatprep.subr.mxu0 0.0
        %707 = vmatpush1.msra.mxu0 0.0
        %708 = vmatprep.subr.mxu0 0.0
        %709 = vmatpush1.msra.mxu0 0.0
        %710 = vmatprep.subr.mxu0 0.0
        %711 = vmatpush1.msra.mxu0 0.0
        %712 = vmatprep.subr.mxu0 0.0
        %713 = vmatpush1.msra.mxu0 0.0
        %714 = vmatprep.subr.mxu0 0.0
        %715 = vmatpush1.msra.mxu0 0.0
        %716 = vmatprep.subr.mxu0 0.0
        %717 = vmatpush1.msra.mxu0 0.0
        %718 = vmatprep.subr.mxu0 0.0
        %719 = vmatpush1.msra.mxu0 0.0
        %720 = vmatprep.subr.mxu0 0.0
        %721 = vmatpush1.msra.mxu0 0.0
        %722 = vmatprep.subr.mxu0 0.0
        %723 = vmatpush1.msra.mxu0 0.0
        %724 = vmatprep.subr.mxu0 0.0
        %725 = vmatpush1.msra.mxu0 0.0
        %726 = vmatprep.subr.mxu0 0.0
        %727 = vmatpush1.msra.mxu0 0.0
        %728 = vmatprep.subr.mxu0 0.0
        %729 = vmatpush1.msra.mxu0 0.0
        %730 = vmatprep.subr.mxu0 0.0
        %731 = vmatpush1.msra.mxu0 0.0
        %732 = vmatprep.subr.mxu0 0.0
        %733 = vmatpush1.msra.mxu0 0.0
        %734 = vmatprep.mubr.f32.mxu0 0.0
        %v735 = vand.u32 %v402, 4294901760
        %v736 = vsub.f32 %v402, %v735
        %v737 = vand.u32 %v736, 4294901760
        %738 = vmatmul.mubr.f32.gmra.mrb[0].mxu0 %v737
        %v739 = vpop.f32.mrb[0].mxu0
        %v740 = vadd.f32 %v658, %v739
        %v741 = vpop.f32.mrb[0].mxu0
        %742 = vmatprep.mubr.f32.mxu0 0.0
        %v743 = vand.u32 %v405, 4294901760
        %v744 = vsub.f32 %v405, %v743
        %v745 = vand.u32 %v744, 4294901760
        %746 = vmatmul.mubr.f32.gmra.mrb[0].mxu0 %v745
        %v747 = vpop.f32.mrb[0].mxu0
        %v748 = vadd.f32 %v665, %v747
        %v749 = vpop.f32.mrb[0].mxu0
        %750 = vdwg.mxu0
        %751 = vmatprep.subr.mxu0 0.0
        %v752 = vand.u32 %v393, 4294901760
        %v753 = vsub.f32 %v393, %v752
        %v754 = vand.u32 %v753, 4294901760
        %755 = vmatpush1.msra.mxu0 %v754
        %756 = vmatprep.subr.mxu0 0.0
        %v757 = vand.u32 %v409, 4294901760
        %v758 = vsub.f32 %v409, %v757
        %v759 = vand.u32 %v758, 4294901760
        %760 = vmatpush1.msra.mxu0 %v759
        %761 = vmatprep.subr.mxu0 0.0
        %762 = vmatpush1.msra.mxu0 0.0
        %763 = vmatprep.subr.mxu0 0.0
        %764 = vmatpush1.msra.mxu0 0.0
        %765 = vmatprep.subr.mxu0 0.0
        %766 = vmatpush1.msra.mxu0 0.0
        %767 = vmatprep.subr.mxu0 0.0
        %768 = vmatpush1.msra.mxu0 0.0
        %769 = vmatprep.subr.mxu0 0.0
        %770 = vmatpush1.msra.mxu0 0.0
        %771 = vmatprep.subr.mxu0 0.0
        %772 = vmatpush1.msra.mxu0 0.0
        %773 = vmatprep.subr.mxu0 0.0
        %774 = vmatpush1.msra.mxu0 0.0
        %775 = vmatprep.subr.mxu0 0.0
        %776 = vmatpush1.msra.mxu0 0.0
        %777 = vmatprep.subr.mxu0 0.0
        %778 = vmatpush1.msra.mxu0 0.0
        %779 = vmatprep.subr.mxu0 0.0
        %780 = vmatpush1.msra.mxu0 0.0
        %781 = vmatprep.subr.mxu0 0.0
        %782 = vmatpush1.msra.mxu0 0.0
        %783 = vmatprep.subr.mxu0 0.0
        %784 = vmatpush1.msra.mxu0 0.0
        %785 = vmatprep.subr.mxu0 0.0
        %786 = vmatpush1.msra.mxu0 0.0
        %787 = vmatprep.subr.mxu0 0.0
        %788 = vmatpush1.msra.mxu0 0.0
        %789 = vmatprep.subr.mxu0 0.0
        %790 = vmatpush1.msra.mxu0 0.0
        %791 = vmatprep.subr.mxu0 0.0
        %792 = vmatpush1.msra.mxu0 0.0
        %793 = vmatprep.subr.mxu0 0.0
        %794 = vmatpush1.msra.mxu0 0.0
        %795 = vmatprep.subr.mxu0 0.0
        %796 = vmatpush1.msra.mxu0 0.0
        %797 = vmatprep.subr.mxu0 0.0
        %798 = vmatpush1.msra.mxu0 0.0
        %799 = vmatprep.subr.mxu0 0.0
        %800 = vmatpush1.msra.mxu0 0.0
        %801 = vmatprep.subr.mxu0 0.0
        %802 = vmatpush1.msra.mxu0 0.0
        %803 = vmatprep.subr.mxu0 0.0
        %804 = vmatpush1.msra.mxu0 0.0
        %805 = vmatprep.subr.mxu0 0.0
        %806 = vmatpush1.msra.mxu0 0.0
        %807 = vmatprep.subr.mxu0 0.0
        %808 = vmatpush1.msra.mxu0 0.0
        %809 = vmatprep.subr.mxu0 0.0
        %810 = vmatpush1.msra.mxu0 0.0
        %811 = vmatprep.subr.mxu0 0.0
        %812 = vmatpush1.msra.mxu0 0.0
        %813 = vmatprep.subr.mxu0 0.0
        %814 = vmatpush1.msra.mxu0 0.0
        %815 = vmatprep.subr.mxu0 0.0
        %816 = vmatpush1.msra.mxu0 0.0
        %817 = vmatprep.subr.mxu0 0.0
        %818 = vmatpush1.msra.mxu0 0.0
        %819 = vmatprep.subr.mxu0 0.0
        %820 = vmatpush1.msra.mxu0 0.0
        %821 = vmatprep.mubr.f32.mxu0 0.0
        %v822 = vand.u32 %v402, 4294901760
        %823 = vmatmul.mubr.f32.gmra.mrb[0].mxu0 %v822
        %v824 = vpop.f32.mrb[0].mxu0
        %v825 = vadd.f32 %v740, %v824
        %v826 = vpop.f32.mrb[0].mxu0
        %827 = vmatprep.mubr.f32.mxu0 0.0
        %v828 = vand.u32 %v405, 4294901760
        %829 = vmatmul.mubr.f32.gmra.mrb[0].mxu0 %v828
        %v830 = vpop.f32.mrb[0].mxu0
        %v831 = vadd.f32 %v748, %v830
        %v832 = vpop.f32.mrb[0].mxu0
        %833 = vdwg.mxu0
        %834 = vmatprep.subr.mxu0 0.0
        %v835 = vand.u32 %v393, 4294901760
        %836 = vmatpush1.msra.mxu0 %v835
        %837 = vmatprep.subr.mxu0 0.0
        %v838 = vand.u32 %v409, 4294901760
        %839 = vmatpush1.msra.mxu0 %v838
        %840 = vmatprep.subr.mxu0 0.0
        %841 = vmatpush1.msra.mxu0 0.0
        %842 = vmatprep.subr.mxu0 0.0
        %843 = vmatpush1.msra.mxu0 0.0
        %844 = vmatprep.subr.mxu0 0.0
        %845 = vmatpush1.msra.mxu0 0.0
        %846 = vmatprep.subr.mxu0 0.0
        %847 = vmatpush1.msra.mxu0 0.0
        %848 = vmatprep.subr.mxu0 0.0
        %849 = vmatpush1.msra.mxu0 0.0
        %850 = vmatprep.subr.mxu0 0.0
        %851 = vmatpush1.msra.mxu0 0.0
        %852 = vmatprep.subr.mxu0 0.0
        %853 = vmatpush1.msra.mxu0 0.0
        %854 = vmatprep.subr.mxu0 0.0
        %855 = vmatpush1.msra.mxu0 0.0
        %856 = vmatprep.subr.mxu0 0.0
        %857 = vmatpush1.msra.mxu0 0.0
        %858 = vmatprep.subr.mxu0 0.0
        %859 = vmatpush1.msra.mxu0 0.0
        %860 = vmatprep.subr.mxu0 0.0
        %861 = vmatpush1.msra.mxu0 0.0
        %862 = vmatprep.subr.mxu0 0.0
        %863 = vmatpush1.msra.mxu0 0.0
        %864 = vmatprep.subr.mxu0 0.0
        %865 = vmatpush1.msra.mxu0 0.0
        %866 = vmatprep.subr.mxu0 0.0
        %867 = vmatpush1.msra.mxu0 0.0
        %868 = vmatprep.subr.mxu0 0.0
        %869 = vmatpush1.msra.mxu0 0.0
        %870 = vmatprep.subr.mxu0 0.0
        %871 = vmatpush1.msra.mxu0 0.0
        %872 = vmatprep.subr.mxu0 0.0
        %873 = vmatpush1.msra.mxu0 0.0
        %874 = vmatprep.subr.mxu0 0.0
        %875 = vmatpush1.msra.mxu0 0.0
        %876 = vmatprep.subr.mxu0 0.0
        %877 = vmatpush1.msra.mxu0 0.0
        %878 = vmatprep.subr.mxu0 0.0
        %879 = vmatpush1.msra.mxu0 0.0
        %880 = vmatprep.subr.mxu0 0.0
        %881 = vmatpush1.msra.mxu0 0.0
        %882 = vmatprep.subr.mxu0 0.0
        %883 = vmatpush1.msra.mxu0 0.0
        %884 = vmatprep.subr.mxu0 0.0
        %885 = vmatpush1.msra.mxu0 0.0
        %886 = vmatprep.subr.mxu0 0.0
        %887 = vmatpush1.msra.mxu0 0.0
        %888 = vmatprep.subr.mxu0 0.0
        %889 = vmatpush1.msra.mxu0 0.0
        %890 = vmatprep.subr.mxu0 0.0
        %891 = vmatpush1.msra.mxu0 0.0
        %892 = vmatprep.subr.mxu0 0.0
        %893 = vmatpush1.msra.mxu0 0.0
        %894 = vmatprep.subr.mxu0 0.0
        %895 = vmatpush1.msra.mxu0 0.0
        %896 = vmatprep.subr.mxu0 0.0
        %897 = vmatpush1.msra.mxu0 0.0
        %898 = vmatprep.subr.mxu0 0.0
        %899 = vmatpush1.msra.mxu0 0.0
        %900 = vmatprep.mubr.f32.mxu0 0.0
        %v901 = vand.u32 %v402, 4294901760
        %902 = vmatmul.mubr.f32.gmra.mrb[0].mxu0 %v901
        %v903 = vpop.f32.mrb[0].mxu0
        %v904 = vadd.f32 %v825, %v903
        %v905 = vpop.f32.mrb[0].mxu0
        %906 = vmatprep.mubr.f32.mxu0 0.0
        %v907 = vand.u32 %v405, 4294901760
        %908 = vmatmul.mubr.f32.gmra.mrb[0].mxu0 %v907
        %v909 = vpop.f32.mrb[0].mxu0
        %v910 = vadd.f32 %v831, %v909
        %v911 = vpop.f32.mrb[0].mxu0
        %912 = vdwg.mxu0
        %v913 = vmul.f32 %v904, 0.5
        %v914 = vmul.f32 %v910, 0.5
        %v915 = vmul.f32 %v904, 0.70710677
        %v916 = vmul.f32 %v910, 0.70710677
        %v917 = vand.u32 2147483647, %v915
        %v918 = vand.u32 2147483647, %v916
        %v919 = vmul.f32 %v917, 0.3275911
        %v920 = vmul.f32 %v918, 0.3275911
        %v921 = vadd.f32 %v919, 1.0
        %v922 = vadd.f32 %v920, 1.0
        %v923 = vrcp.pop %v921
        %v924 = vmul.f32 1.0, %v923
        %v925 = vrcp.pop %v922
        %v926 = vmul.f32 1.0, %v925
        %v927 = vmul.f32 %v924, 1.0614054
        %v928 = vmul.f32 %v926, 1.0614054
        %v929 = vadd.f32 %v927, -1.4531521
        %v930 = vadd.f32 %v928, -1.4531521
        %v931 = vmul.f32 %v929, %v924
        %v932 = vmul.f32 %v930, %v926
        %v933 = vadd.f32 %v931, 1.4214138
        %v934 = vadd.f32 %v932, 1.4214138
        %v935 = vmul.f32 %v933, %v924
        %v936 = vmul.f32 %v934, %v926
        %v937 = vadd.f32 %v935, -0.28449672
        %v938 = vadd.f32 %v936, -0.28449672
        %v939 = vmul.f32 %v937, %v924
        %v940 = vmul.f32 %v938, %v926
        %v941 = vadd.f32 %v939, 0.2548296
        %v942 = vadd.f32 %v940, 0.2548296
        %v943 = vmul.f32 %v941, %v924
        %v944 = vmul.f32 %v942, %v926
        %v945 = vsub.f32 0.0, %v917
        %v946 = vsub.f32 0.0, %v918
        %v947 = vmul.f32 %v945, %v917
        %v948 = vmul.f32 %v946, %v918
        %v949 = vmul.f32 %v947, 1.442695
        %v950 = vpow.pop %v949
        %v951 = vmul.f32 %v948, 1.442695
        %v952 = vpow.pop %v951
        %v953 = vmul.f32 %v943, %v950
        %v954 = vmul.f32 %v944, %v952
        %v955 = vsub.f32 1.0, %v953
        %v956 = vsub.f32 1.0, %v954
        %vm957 = vcmp.lt.f32.partialorder %v915, 0.0
        %vm958 = vcmp.lt.f32.partialorder %v916, 0.0
        %v959 = vsub.f32 0.0, %v955
        %v960 = vsub.f32 0.0, %v956
        %v961 = vsel %vm957, %v959, %v955
        %v962 = vsel %vm958, %v960, %v956
        %v963 = vadd.f32 %v961, 1.0
        %v964 = vadd.f32 %v962, 1.0
        %v965 = vmul.f32 %v913, %v963
        %v966 = vmul.f32 %v914, %v964
        %v967 = vld [vmem:[%s2] sm:$0xff]
        %v968 = vld [vmem:[%s2 + $0x8] sm:$0xff]
        %v969 = vld [vmem:[%s2 + $0x10] sm:$0xff]
        %v970 = vld [vmem:[%s2 + $0x18] sm:$0xff]
        %v971 = vld [vmem:[%s2 + $0x20] sm:$0xff]
        %v972 = vld [vmem:[%s2 + $0x28] sm:$0xff]
        %v973 = vld [vmem:[%s2 + $0x30] sm:$0xff]
        %v974 = vld [vmem:[%s2 + $0x38] sm:$0xff]
        %v975 = vld [vmem:[%s2 + $0x40] sm:$0xff]
        %v976 = vld [vmem:[%s2 + $0x48] sm:$0xff]
        %v977 = vld [vmem:[%s2 + $0x50] sm:$0xff]
        %v978 = vld [vmem:[%s2 + $0x58] sm:$0xff]
        %v979 = vld [vmem:[%s2 + $0x60] sm:$0xff]
        %v980 = vld [vmem:[%s2 + $0x68] sm:$0xff]
        %v981 = vld [vmem:[%s2 + $0x70] sm:$0xff]
        %v982 = vld [vmem:[%s2 + $0x78] sm:$0xff]
        %v983 = vld [vmem:[%s8 + $0x1] sm:$0x1]
        %v984 = vlaneseq
        %v985 = vshrl.u32 %v984, 7
        %v986 = vsub.s32 0, %v985
        %v987 = vrot.slane %v983, %v986
        %988 = vmatprep.subr.mxu0 0.0
        %v989 = vand.u32 %v967, 4294901760
        %990 = vmatpush1.msra.mxu0 %v989
        %991 = vmatprep.subr.mxu0 0.0
        %v992 = vand.u32 %v968, 4294901760
        %993 = vmatpush1.msra.mxu0 %v992
        %994 = vmatprep.subr.mxu0 0.0
        %v995 = vand.u32 %v969, 4294901760
        %996 = vmatpush1.msra.mxu0 %v995
        %997 = vmatprep.subr.mxu0 0.0
        %v998 = vand.u32 %v970, 4294901760
        %999 = vmatpush1.msra.mxu0 %v998
        %1000 = vmatprep.subr.mxu0 0.0
        %v1001 = vand.u32 %v971, 4294901760
        %1002 = vmatpush1.msra.mxu0 %v1001
        %1003 = vmatprep.subr.mxu0 0.0
        %v1004 = vand.u32 %v972, 4294901760
        %1005 = vmatpush1.msra.mxu0 %v1004
        %1006 = vmatprep.subr.mxu0 0.0
        %v1007 = vand.u32 %v973, 4294901760
        %1008 = vmatpush1.msra.mxu0 %v1007
        %1009 = vmatprep.subr.mxu0 0.0
        %v1010 = vand.u32 %v974, 4294901760
        %1011 = vmatpush1.msra.mxu0 %v1010
        %1012 = vmatprep.subr.mxu0 0.0
        %v1013 = vand.u32 %v975, 4294901760
        %1014 = vmatpush1.msra.mxu0 %v1013
        %1015 = vmatprep.subr.mxu0 0.0
        %v1016 = vand.u32 %v976, 4294901760
        %1017 = vmatpush1.msra.mxu0 %v1016
        %1018 = vmatprep.subr.mxu0 0.0
        %v1019 = vand.u32 %v977, 4294901760
        %1020 = vmatpush1.msra.mxu0 %v1019
        %1021 = vmatprep.subr.mxu0 0.0
        %v1022 = vand.u32 %v978, 4294901760
        %1023 = vmatpush1.msra.mxu0 %v1022
        %1024 = vmatprep.subr.mxu0 0.0
        %v1025 = vand.u32 %v979, 4294901760
        %1026 = vmatpush1.msra.mxu0 %v1025
        %1027 = vmatprep.subr.mxu0 0.0
        %v1028 = vand.u32 %v980, 4294901760
        %1029 = vmatpush1.msra.mxu0 %v1028
        %1030 = vmatprep.subr.mxu0 0.0
        %v1031 = vand.u32 %v981, 4294901760
        %1032 = vmatpush1.msra.mxu0 %v1031
        %1033 = vmatprep.subr.mxu0 0.0
        %v1034 = vand.u32 %v982, 4294901760
        %1035 = vmatpush1.msra.mxu0 %v1034
        %1036 = vmatprep.subr.mxu0 0.0
        %1037 = vmatpush1.msra.mxu0 0.0
        %1038 = vmatprep.subr.mxu0 0.0
        %1039 = vmatpush1.msra.mxu0 0.0
        %1040 = vmatprep.subr.mxu0 0.0
        %1041 = vmatpush1.msra.mxu0 0.0
        %1042 = vmatprep.subr.mxu0 0.0
        %1043 = vmatpush1.msra.mxu0 0.0
        %1044 = vmatprep.subr.mxu0 0.0
        %1045 = vmatpush1.msra.mxu0 0.0
        %1046 = vmatprep.subr.mxu0 0.0
        %1047 = vmatpush1.msra.mxu0 0.0
        %1048 = vmatprep.subr.mxu0 0.0
        %1049 = vmatpush1.msra.mxu0 0.0
        %1050 = vmatprep.subr.mxu0 0.0
        %1051 = vmatpush1.msra.mxu0 0.0
        %1052 = vmatprep.subr.mxu0 0.0
        %1053 = vmatpush1.msra.mxu0 0.0
        %1054 = vmatprep.subr.mxu0 0.0
        %1055 = vmatpush1.msra.mxu0 0.0
        %1056 = vmatprep.subr.mxu0 0.0
        %1057 = vmatpush1.msra.mxu0 0.0
        %1058 = vmatprep.subr.mxu0 0.0
        %1059 = vmatpush1.msra.mxu0 0.0
        %1060 = vmatprep.subr.mxu0 0.0
        %1061 = vmatpush1.msra.mxu0 0.0
        %1062 = vmatprep.subr.mxu0 0.0
        %1063 = vmatpush1.msra.mxu0 0.0
        %1064 = vmatprep.subr.mxu0 0.0
        %1065 = vmatpush1.msra.mxu0 0.0
        %1066 = vmatprep.subr.mxu0 0.0
        %1067 = vmatpush1.msra.mxu0 0.0
        %1068 = vmatprep.mubr.f32.mxu0 0.0
        %v1069 = vand.u32 %v965, 4294901760
        %v1070 = vsub.f32 %v965, %v1069
        %v1071 = vand.u32 %v1070, 4294901760
        %v1072 = vsub.f32 %v1070, %v1071
        %v1073 = vand.u32 %v1072, 4294901760
        %1074 = vmatmul.mubr.f32.gmra.mrb[0].mxu0 %v1073
        %v1075 = vpop.f32.mrb[0].mxu0
        %v1076 = vadd.f32 %v987, %v1075
        %v1077 = vpop.f32.mrb[0].mxu0
        %1078 = vmatprep.mubr.f32.mxu0 0.0
        %v1079 = vand.u32 %v966, 4294901760
        %v1080 = vsub.f32 %v966, %v1079
        %v1081 = vand.u32 %v1080, 4294901760
        %v1082 = vsub.f32 %v1080, %v1081
        %v1083 = vand.u32 %v1082, 4294901760
        %1084 = vmatmul.mubr.f32.gmra.mrb[0].mxu0 %v1083
        %v1085 = vpop.f32.mrb[0].mxu0
        %v1086 = vadd.f32 %v987, %v1085
        %v1087 = vpop.f32.mrb[0].mxu0
        %1088 = vdwg.mxu0
        %1089 = vmatprep.subr.mxu0 0.0
        %v1090 = vand.u32 %v967, 4294901760
        %v1091 = vsub.f32 %v967, %v1090
        %v1092 = vand.u32 %v1091, 4294901760
        %v1093 = vsub.f32 %v1091, %v1092
        %v1094 = vand.u32 %v1093, 4294901760
        %1095 = vmatpush1.msra.mxu0 %v1094
        %1096 = vmatprep.subr.mxu0 0.0
        %v1097 = vand.u32 %v968, 4294901760
        %v1098 = vsub.f32 %v968, %v1097
        %v1099 = vand.u32 %v1098, 4294901760
        %v1100 = vsub.f32 %v1098, %v1099
        %v1101 = vand.u32 %v1100, 4294901760
        %1102 = vmatpush1.msra.mxu0 %v1101
        %1103 = vmatprep.subr.mxu0 0.0
        %v1104 = vand.u32 %v969, 4294901760
        %v1105 = vsub.f32 %v969, %v1104
        %v1106 = vand.u32 %v1105, 4294901760
        %v1107 = vsub.f32 %v1105, %v1106
        %v1108 = vand.u32 %v1107, 4294901760
        %1109 = vmatpush1.msra.mxu0 %v1108
        %1110 = vmatprep.subr.mxu0 0.0
        %v1111 = vand.u32 %v970, 4294901760
        %v1112 = vsub.f32 %v970, %v1111
        %v1113 = vand.u32 %v1112, 4294901760
        %v1114 = vsub.f32 %v1112, %v1113
        %v1115 = vand.u32 %v1114, 4294901760
        %1116 = vmatpush1.msra.mxu0 %v1115
        %1117 = vmatprep.subr.mxu0 0.0
        %v1118 = vand.u32 %v971, 4294901760
        %v1119 = vsub.f32 %v971, %v1118
        %v1120 = vand.u32 %v1119, 4294901760
        %v1121 = vsub.f32 %v1119, %v1120
        %v1122 = vand.u32 %v1121, 4294901760
        %1123 = vmatpush1.msra.mxu0 %v1122
        %1124 = vmatprep.subr.mxu0 0.0
        %v1125 = vand.u32 %v972, 4294901760
        %v1126 = vsub.f32 %v972, %v1125
        %v1127 = vand.u32 %v1126, 4294901760
        %v1128 = vsub.f32 %v1126, %v1127
        %v1129 = vand.u32 %v1128, 4294901760
        %1130 = vmatpush1.msra.mxu0 %v1129
        %1131 = vmatprep.subr.mxu0 0.0
        %v1132 = vand.u32 %v973, 4294901760
        %v1133 = vsub.f32 %v973, %v1132
        %v1134 = vand.u32 %v1133, 4294901760
        %v1135 = vsub.f32 %v1133, %v1134
        %v1136 = vand.u32 %v1135, 4294901760
        %1137 = vmatpush1.msra.mxu0 %v1136
        %1138 = vmatprep.subr.mxu0 0.0
        %v1139 = vand.u32 %v974, 4294901760
        %v1140 = vsub.f32 %v974, %v1139
        %v1141 = vand.u32 %v1140, 4294901760
        %v1142 = vsub.f32 %v1140, %v1141
        %v1143 = vand.u32 %v1142, 4294901760
        %1144 = vmatpush1.msra.mxu0 %v1143
        %1145 = vmatprep.subr.mxu0 0.0
        %v1146 = vand.u32 %v975, 4294901760
        %v1147 = vsub.f32 %v975, %v1146
        %v1148 = vand.u32 %v1147, 4294901760
        %v1149 = vsub.f32 %v1147, %v1148
        %v1150 = vand.u32 %v1149, 4294901760
        %1151 = vmatpush1.msra.mxu0 %v1150
        %1152 = vmatprep.subr.mxu0 0.0
        %v1153 = vand.u32 %v976, 4294901760
        %v1154 = vsub.f32 %v976, %v1153
        %v1155 = vand.u32 %v1154, 4294901760
        %v1156 = vsub.f32 %v1154, %v1155
        %v1157 = vand.u32 %v1156, 4294901760
        %1158 = vmatpush1.msra.mxu0 %v1157
        %1159 = vmatprep.subr.mxu0 0.0
        %v1160 = vand.u32 %v977, 4294901760
        %v1161 = vsub.f32 %v977, %v1160
        %v1162 = vand.u32 %v1161, 4294901760
        %v1163 = vsub.f32 %v1161, %v1162
        %v1164 = vand.u32 %v1163, 4294901760
        %1165 = vmatpush1.msra.mxu0 %v1164
        %1166 = vmatprep.subr.mxu0 0.0
        %v1167 = vand.u32 %v978, 4294901760
        %v1168 = vsub.f32 %v978, %v1167
        %v1169 = vand.u32 %v1168, 4294901760
        %v1170 = vsub.f32 %v1168, %v1169
        %v1171 = vand.u32 %v1170, 4294901760
        %1172 = vmatpush1.msra.mxu0 %v1171
        %1173 = vmatprep.subr.mxu0 0.0
        %v1174 = vand.u32 %v979, 4294901760
        %v1175 = vsub.f32 %v979, %v1174
        %v1176 = vand.u32 %v1175, 4294901760
        %v1177 = vsub.f32 %v1175, %v1176
        %v1178 = vand.u32 %v1177, 4294901760
        %1179 = vmatpush1.msra.mxu0 %v1178
        %1180 = vmatprep.subr.mxu0 0.0
        %v1181 = vand.u32 %v980, 4294901760
        %v1182 = vsub.f32 %v980, %v1181
        %v1183 = vand.u32 %v1182, 4294901760
        %v1184 = vsub.f32 %v1182, %v1183
        %v1185 = vand.u32 %v1184, 4294901760
        %1186 = vmatpush1.msra.mxu0 %v1185
        %1187 = vmatprep.subr.mxu0 0.0
        %v1188 = vand.u32 %v981, 4294901760
        %v1189 = vsub.f32 %v981, %v1188
        %v1190 = vand.u32 %v1189, 4294901760
        %v1191 = vsub.f32 %v1189, %v1190
        %v1192 = vand.u32 %v1191, 4294901760
        %1193 = vmatpush1.msra.mxu0 %v1192
        %1194 = vmatprep.subr.mxu0 0.0
        %v1195 = vand.u32 %v982, 4294901760
        %v1196 = vsub.f32 %v982, %v1195
        %v1197 = vand.u32 %v1196, 4294901760
        %v1198 = vsub.f32 %v1196, %v1197
        %v1199 = vand.u32 %v1198, 4294901760
        %1200 = vmatpush1.msra.mxu0 %v1199
        %1201 = vmatprep.subr.mxu0 0.0
        %1202 = vmatpush1.msra.mxu0 0.0
        %1203 = vmatprep.subr.mxu0 0.0
        %1204 = vmatpush1.msra.mxu0 0.0
        %1205 = vmatprep.subr.mxu0 0.0
        %1206 = vmatpush1.msra.mxu0 0.0
        %1207 = vmatprep.subr.mxu0 0.0
        %1208 = vmatpush1.msra.mxu0 0.0
        %1209 = vmatprep.subr.mxu0 0.0
        %1210 = vmatpush1.msra.mxu0 0.0
        %1211 = vmatprep.subr.mxu0 0.0
        %1212 = vmatpush1.msra.mxu0 0.0
        %1213 = vmatprep.subr.mxu0 0.0
        %1214 = vmatpush1.msra.mxu0 0.0
        %1215 = vmatprep.subr.mxu0 0.0
        %1216 = vmatpush1.msra.mxu0 0.0
        %1217 = vmatprep.subr.mxu0 0.0
        %1218 = vmatpush1.msra.mxu0 0.0
        %1219 = vmatprep.subr.mxu0 0.0
        %1220 = vmatpush1.msra.mxu0 0.0
        %1221 = vmatprep.subr.mxu0 0.0
        %1222 = vmatpush1.msra.mxu0 0.0
        %1223 = vmatprep.subr.mxu0 0.0
        %1224 = vmatpush1.msra.mxu0 0.0
        %1225 = vmatprep.subr.mxu0 0.0
        %1226 = vmatpush1.msra.mxu0 0.0
        %1227 = vmatprep.subr.mxu0 0.0
        %1228 = vmatpush1.msra.mxu0 0.0
        %1229 = vmatprep.subr.mxu0 0.0
        %1230 = vmatpush1.msra.mxu0 0.0
        %1231 = vmatprep.subr.mxu0 0.0
        %1232 = vmatpush1.msra.mxu0 0.0
        %1233 = vmatprep.mubr.f32.mxu0 0.0
        %v1234 = vand.u32 %v965, 4294901760
        %1235 = vmatmul.mubr.f32.gmra.mrb[0].mxu0 %v1234
        %v1236 = vpop.f32.mrb[0].mxu0
        %v1237 = vadd.f32 %v1076, %v1236
        %v1238 = vpop.f32.mrb[0].mxu0
        %1239 = vmatprep.mubr.f32.mxu0 0.0
        %v1240 = vand.u32 %v966, 4294901760
        %1241 = vmatmul.mubr.f32.gmra.mrb[0].mxu0 %v1240
        %v1242 = vpop.f32.mrb[0].mxu0
        %v1243 = vadd.f32 %v1086, %v1242
        %v1244 = vpop.f32.mrb[0].mxu0
        %1245 = vdwg.mxu0
        %1246 = vmatprep.subr.mxu0 0.0
        %v1247 = vand.u32 %v967, 4294901760
        %v1248 = vsub.f32 %v967, %v1247
        %1249 = vmatpush1.msra.mxu0 %v1248
        %1250 = vmatprep.subr.mxu0 0.0
        %v1251 = vand.u32 %v968, 4294901760
        %v1252 = vsub.f32 %v968, %v1251
        %1253 = vmatpush1.msra.mxu0 %v1252
        %1254 = vmatprep.subr.mxu0 0.0
        %v1255 = vand.u32 %v969, 4294901760
        %v1256 = vsub.f32 %v969, %v1255
        %1257 = vmatpush1.msra.mxu0 %v1256
        %1258 = vmatprep.subr.mxu0 0.0
        %v1259 = vand.u32 %v970, 4294901760
        %v1260 = vsub.f32 %v970, %v1259
        %1261 = vmatpush1.msra.mxu0 %v1260
        %1262 = vmatprep.subr.mxu0 0.0
        %v1263 = vand.u32 %v971, 4294901760
        %v1264 = vsub.f32 %v971, %v1263
        %1265 = vmatpush1.msra.mxu0 %v1264
        %1266 = vmatprep.subr.mxu0 0.0
        %v1267 = vand.u32 %v972, 4294901760
        %v1268 = vsub.f32 %v972, %v1267
        %1269 = vmatpush1.msra.mxu0 %v1268
        %1270 = vmatprep.subr.mxu0 0.0
        %v1271 = vand.u32 %v973, 4294901760
        %v1272 = vsub.f32 %v973, %v1271
        %1273 = vmatpush1.msra.mxu0 %v1272
        %1274 = vmatprep.subr.mxu0 0.0
        %v1275 = vand.u32 %v974, 4294901760
        %v1276 = vsub.f32 %v974, %v1275
        %1277 = vmatpush1.msra.mxu0 %v1276
        %1278 = vmatprep.subr.mxu0 0.0
        %v1279 = vand.u32 %v975, 4294901760
        %v1280 = vsub.f32 %v975, %v1279
        %1281 = vmatpush1.msra.mxu0 %v1280
        %1282 = vmatprep.subr.mxu0 0.0
        %v1283 = vand.u32 %v976, 4294901760
        %v1284 = vsub.f32 %v976, %v1283
        %1285 = vmatpush1.msra.mxu0 %v1284
        %1286 = vmatprep.subr.mxu0 0.0
        %v1287 = vand.u32 %v977, 4294901760
        %v1288 = vsub.f32 %v977, %v1287
        %1289 = vmatpush1.msra.mxu0 %v1288
        %1290 = vmatprep.subr.mxu0 0.0
        %v1291 = vand.u32 %v978, 4294901760
        %v1292 = vsub.f32 %v978, %v1291
        %1293 = vmatpush1.msra.mxu0 %v1292
        %1294 = vmatprep.subr.mxu0 0.0
        %v1295 = vand.u32 %v979, 4294901760
        %v1296 = vsub.f32 %v979, %v1295
        %1297 = vmatpush1.msra.mxu0 %v1296
        %1298 = vmatprep.subr.mxu0 0.0
        %v1299 = vand.u32 %v980, 4294901760
        %v1300 = vsub.f32 %v980, %v1299
        %1301 = vmatpush1.msra.mxu0 %v1300
        %1302 = vmatprep.subr.mxu0 0.0
        %v1303 = vand.u32 %v981, 4294901760
        %v1304 = vsub.f32 %v981, %v1303
        %1305 = vmatpush1.msra.mxu0 %v1304
        %1306 = vmatprep.subr.mxu0 0.0
        %v1307 = vand.u32 %v982, 4294901760
        %v1308 = vsub.f32 %v982, %v1307
        %1309 = vmatpush1.msra.mxu0 %v1308
        %1310 = vmatprep.subr.mxu0 0.0
        %1311 = vmatpush1.msra.mxu0 0.0
        %1312 = vmatprep.subr.mxu0 0.0
        %1313 = vmatpush1.msra.mxu0 0.0
        %1314 = vmatprep.subr.mxu0 0.0
        %1315 = vmatpush1.msra.mxu0 0.0
        %1316 = vmatprep.subr.mxu0 0.0
        %1317 = vmatpush1.msra.mxu0 0.0
        %1318 = vmatprep.subr.mxu0 0.0
        %1319 = vmatpush1.msra.mxu0 0.0
        %1320 = vmatprep.subr.mxu0 0.0
        %1321 = vmatpush1.msra.mxu0 0.0
        %1322 = vmatprep.subr.mxu0 0.0
        %1323 = vmatpush1.msra.mxu0 0.0
        %1324 = vmatprep.subr.mxu0 0.0
        %1325 = vmatpush1.msra.mxu0 0.0
        %1326 = vmatprep.subr.mxu0 0.0
        %1327 = vmatpush1.msra.mxu0 0.0
        %1328 = vmatprep.subr.mxu0 0.0
        %1329 = vmatpush1.msra.mxu0 0.0
        %1330 = vmatprep.subr.mxu0 0.0
        %1331 = vmatpush1.msra.mxu0 0.0
        %1332 = vmatprep.subr.mxu0 0.0
        %1333 = vmatpush1.msra.mxu0 0.0
        %1334 = vmatprep.subr.mxu0 0.0
        %1335 = vmatpush1.msra.mxu0 0.0
        %1336 = vmatprep.subr.mxu0 0.0
        %1337 = vmatpush1.msra.mxu0 0.0
        %1338 = vmatprep.subr.mxu0 0.0
        %1339 = vmatpush1.msra.mxu0 0.0
        %1340 = vmatprep.subr.mxu0 0.0
        %1341 = vmatpush1.msra.mxu0 0.0
        %1342 = vmatprep.mubr.f32.mxu0 0.0
        %v1343 = vand.u32 %v965, 4294901760
        %v1344 = vsub.f32 %v965, %v1343
        %1345 = vmatmul.mubr.f32.gmra.mrb[0].mxu0 %v1344
        %v1346 = vpop.f32.mrb[0].mxu0
        %v1347 = vadd.f32 %v1237, %v1346
        %v1348 = vpop.f32.mrb[0].mxu0
        %1349 = vmatprep.mubr.f32.mxu0 0.0
        %v1350 = vand.u32 %v966, 4294901760
        %v1351 = vsub.f32 %v966, %v1350
        %1352 = vmatmul.mubr.f32.gmra.mrb[0].mxu0 %v1351
        %v1353 = vpop.f32.mrb[0].mxu0
        %v1354 = vadd.f32 %v1243, %v1353
        %v1355 = vpop.f32.mrb[0].mxu0
        %1356 = vdwg.mxu0
        %1357 = vmatprep.subr.mxu0 0.0
        %v1358 = vand.u32 %v967, 4294901760
        %1359 = vmatpush1.msra.mxu0 %v1358
        %1360 = vmatprep.subr.mxu0 0.0
        %v1361 = vand.u32 %v968, 4294901760
        %1362 = vmatpush1.msra.mxu0 %v1361
        %1363 = vmatprep.subr.mxu0 0.0
        %v1364 = vand.u32 %v969, 4294901760
        %1365 = vmatpush1.msra.mxu0 %v1364
        %1366 = vmatprep.subr.mxu0 0.0
        %v1367 = vand.u32 %v970, 4294901760
        %1368 = vmatpush1.msra.mxu0 %v1367
        %1369 = vmatprep.subr.mxu0 0.0
        %v1370 = vand.u32 %v971, 4294901760
        %1371 = vmatpush1.msra.mxu0 %v1370
        %1372 = vmatprep.subr.mxu0 0.0
        %v1373 = vand.u32 %v972, 4294901760
        %1374 = vmatpush1.msra.mxu0 %v1373
        %1375 = vmatprep.subr.mxu0 0.0
        %v1376 = vand.u32 %v973, 4294901760
        %1377 = vmatpush1.msra.mxu0 %v1376
        %1378 = vmatprep.subr.mxu0 0.0
        %v1379 = vand.u32 %v974, 4294901760
        %1380 = vmatpush1.msra.mxu0 %v1379
        %1381 = vmatprep.subr.mxu0 0.0
        %v1382 = vand.u32 %v975, 4294901760
        %1383 = vmatpush1.msra.mxu0 %v1382
        %1384 = vmatprep.subr.mxu0 0.0
        %v1385 = vand.u32 %v976, 4294901760
        %1386 = vmatpush1.msra.mxu0 %v1385
        %1387 = vmatprep.subr.mxu0 0.0
        %v1388 = vand.u32 %v977, 4294901760
        %1389 = vmatpush1.msra.mxu0 %v1388
        %1390 = vmatprep.subr.mxu0 0.0
        %v1391 = vand.u32 %v978, 4294901760
        %1392 = vmatpush1.msra.mxu0 %v1391
        %1393 = vmatprep.subr.mxu0 0.0
        %v1394 = vand.u32 %v979, 4294901760
        %1395 = vmatpush1.msra.mxu0 %v1394
        %1396 = vmatprep.subr.mxu0 0.0
        %v1397 = vand.u32 %v980, 4294901760
        %1398 = vmatpush1.msra.mxu0 %v1397
        %1399 = vmatprep.subr.mxu0 0.0
        %v1400 = vand.u32 %v981, 4294901760
        %1401 = vmatpush1.msra.mxu0 %v1400
        %1402 = vmatprep.subr.mxu0 0.0
        %v1403 = vand.u32 %v982, 4294901760
        %1404 = vmatpush1.msra.mxu0 %v1403
        %1405 = vmatprep.subr.mxu0 0.0
        %1406 = vmatpush1.msra.mxu0 0.0
        %1407 = vmatprep.subr.mxu0 0.0
        %1408 = vmatpush1.msra.mxu0 0.0
        %1409 = vmatprep.subr.mxu0 0.0
        %1410 = vmatpush1.msra.mxu0 0.0
        %1411 = vmatprep.subr.mxu0 0.0
        %1412 = vmatpush1.msra.mxu0 0.0
        %1413 = vmatprep.subr.mxu0 0.0
        %1414 = vmatpush1.msra.mxu0 0.0
        %1415 = vmatprep.subr.mxu0 0.0
        %1416 = vmatpush1.msra.mxu0 0.0
        %1417 = vmatprep.subr.mxu0 0.0
        %1418 = vmatpush1.msra.mxu0 0.0
        %1419 = vmatprep.subr.mxu0 0.0
        %1420 = vmatpush1.msra.mxu0 0.0
        %1421 = vmatprep.subr.mxu0 0.0
        %1422 = vmatpush1.msra.mxu0 0.0
        %1423 = vmatprep.subr.mxu0 0.0
        %1424 = vmatpush1.msra.mxu0 0.0
        %1425 = vmatprep.subr.mxu0 0.0
        %1426 = vmatpush1.msra.mxu0 0.0
        %1427 = vmatprep.subr.mxu0 0.0
        %1428 = vmatpush1.msra.mxu0 0.0
        %1429 = vmatprep.subr.mxu0 0.0
        %1430 = vmatpush1.msra.mxu0 0.0
        %1431 = vmatprep.subr.mxu0 0.0
        %1432 = vmatpush1.msra.mxu0 0.0
        %1433 = vmatprep.subr.mxu0 0.0
        %1434 = vmatpush1.msra.mxu0 0.0
        %1435 = vmatprep.subr.mxu0 0.0
        %1436 = vmatpush1.msra.mxu0 0.0
        %1437 = vmatprep.mubr.f32.mxu0 0.0
        %v1438 = vand.u32 %v965, 4294901760
        %v1439 = vsub.f32 %v965, %v1438
        %v1440 = vand.u32 %v1439, 4294901760
        %1441 = vmatmul.mubr.f32.gmra.mrb[0].mxu0 %v1440
        %v1442 = vpop.f32.mrb[0].mxu0
        %v1443 = vadd.f32 %v1347, %v1442
        %v1444 = vpop.f32.mrb[0].mxu0
        %1445 = vmatprep.mubr.f32.mxu0 0.0
        %v1446 = vand.u32 %v966, 4294901760
        %v1447 = vsub.f32 %v966, %v1446
        %v1448 = vand.u32 %v1447, 4294901760
        %1449 = vmatmul.mubr.f32.gmra.mrb[0].mxu0 %v1448
        %v1450 = vpop.f32.mrb[0].mxu0
        %v1451 = vadd.f32 %v1354, %v1450
        %v1452 = vpop.f32.mrb[0].mxu0
        %1453 = vdwg.mxu0
        %1454 = vmatprep.subr.mxu0 0.0
        %v1455 = vand.u32 %v967, 4294901760
        %v1456 = vsub.f32 %v967, %v1455
        %v1457 = vand.u32 %v1456, 4294901760
        %1458 = vmatpush1.msra.mxu0 %v1457
        %1459 = vmatprep.subr.mxu0 0.0
        %v1460 = vand.u32 %v968, 4294901760
        %v1461 = vsub.f32 %v968, %v1460
        %v1462 = vand.u32 %v1461, 4294901760
        %1463 = vmatpush1.msra.mxu0 %v1462
        %1464 = vmatprep.subr.mxu0 0.0
        %v1465 = vand.u32 %v969, 4294901760
        %v1466 = vsub.f32 %v969, %v1465
        %v1467 = vand.u32 %v1466, 4294901760
        %1468 = vmatpush1.msra.mxu0 %v1467
        %1469 = vmatprep.subr.mxu0 0.0
        %v1470 = vand.u32 %v970, 4294901760
        %v1471 = vsub.f32 %v970, %v1470
        %v1472 = vand.u32 %v1471, 4294901760
        %1473 = vmatpush1.msra.mxu0 %v1472
        %1474 = vmatprep.subr.mxu0 0.0
        %v1475 = vand.u32 %v971, 4294901760
        %v1476 = vsub.f32 %v971, %v1475
        %v1477 = vand.u32 %v1476, 4294901760
        %1478 = vmatpush1.msra.mxu0 %v1477
        %1479 = vmatprep.subr.mxu0 0.0
        %v1480 = vand.u32 %v972, 4294901760
        %v1481 = vsub.f32 %v972, %v1480
        %v1482 = vand.u32 %v1481, 4294901760
        %1483 = vmatpush1.msra.mxu0 %v1482
        %1484 = vmatprep.subr.mxu0 0.0
        %v1485 = vand.u32 %v973, 4294901760
        %v1486 = vsub.f32 %v973, %v1485
        %v1487 = vand.u32 %v1486, 4294901760
        %1488 = vmatpush1.msra.mxu0 %v1487
        %1489 = vmatprep.subr.mxu0 0.0
        %v1490 = vand.u32 %v974, 4294901760
        %v1491 = vsub.f32 %v974, %v1490
        %v1492 = vand.u32 %v1491, 4294901760
        %1493 = vmatpush1.msra.mxu0 %v1492
        %1494 = vmatprep.subr.mxu0 0.0
        %v1495 = vand.u32 %v975, 4294901760
        %v1496 = vsub.f32 %v975, %v1495
        %v1497 = vand.u32 %v1496, 4294901760
        %1498 = vmatpush1.msra.mxu0 %v1497
        %1499 = vmatprep.subr.mxu0 0.0
        %v1500 = vand.u32 %v976, 4294901760
        %v1501 = vsub.f32 %v976, %v1500
        %v1502 = vand.u32 %v1501, 4294901760
        %1503 = vmatpush1.msra.mxu0 %v1502
        %1504 = vmatprep.subr.mxu0 0.0
        %v1505 = vand.u32 %v977, 4294901760
        %v1506 = vsub.f32 %v977, %v1505
        %v1507 = vand.u32 %v1506, 4294901760
        %1508 = vmatpush1.msra.mxu0 %v1507
        %1509 = vmatprep.subr.mxu0 0.0
        %v1510 = vand.u32 %v978, 4294901760
        %v1511 = vsub.f32 %v978, %v1510
        %v1512 = vand.u32 %v1511, 4294901760
        %1513 = vmatpush1.msra.mxu0 %v1512
        %1514 = vmatprep.subr.mxu0 0.0
        %v1515 = vand.u32 %v979, 4294901760
        %v1516 = vsub.f32 %v979, %v1515
        %v1517 = vand.u32 %v1516, 4294901760
        %1518 = vmatpush1.msra.mxu0 %v1517
        %1519 = vmatprep.subr.mxu0 0.0
        %v1520 = vand.u32 %v980, 4294901760
        %v1521 = vsub.f32 %v980, %v1520
        %v1522 = vand.u32 %v1521, 4294901760
        %1523 = vmatpush1.msra.mxu0 %v1522
        %1524 = vmatprep.subr.mxu0 0.0
        %v1525 = vand.u32 %v981, 4294901760
        %v1526 = vsub.f32 %v981, %v1525
        %v1527 = vand.u32 %v1526, 4294901760
        %1528 = vmatpush1.msra.mxu0 %v1527
        %1529 = vmatprep.subr.mxu0 0.0
        %v1530 = vand.u32 %v982, 4294901760
        %v1531 = vsub.f32 %v982, %v1530
        %v1532 = vand.u32 %v1531, 4294901760
        %1533 = vmatpush1.msra.mxu0 %v1532
        %1534 = vmatprep.subr.mxu0 0.0
        %1535 = vmatpush1.msra.mxu0 0.0
        %1536 = vmatprep.subr.mxu0 0.0
        %1537 = vmatpush1.msra.mxu0 0.0
        %1538 = vmatprep.subr.mxu0 0.0
        %1539 = vmatpush1.msra.mxu0 0.0
        %1540 = vmatprep.subr.mxu0 0.0
        %1541 = vmatpush1.msra.mxu0 0.0
        %1542 = vmatprep.subr.mxu0 0.0
        %1543 = vmatpush1.msra.mxu0 0.0
        %1544 = vmatprep.subr.mxu0 0.0
        %1545 = vmatpush1.msra.mxu0 0.0
        %1546 = vmatprep.subr.mxu0 0.0
        %1547 = vmatpush1.msra.mxu0 0.0
        %1548 = vmatprep.subr.mxu0 0.0
        %1549 = vmatpush1.msra.mxu0 0.0
        %1550 = vmatprep.subr.mxu0 0.0
        %1551 = vmatpush1.msra.mxu0 0.0
        %1552 = vmatprep.subr.mxu0 0.0
        %1553 = vmatpush1.msra.mxu0 0.0
        %1554 = vmatprep.subr.mxu0 0.0
        %1555 = vmatpush1.msra.mxu0 0.0
        %1556 = vmatprep.subr.mxu0 0.0
        %1557 = vmatpush1.msra.mxu0 0.0
        %1558 = vmatprep.subr.mxu0 0.0
        %1559 = vmatpush1.msra.mxu0 0.0
        %1560 = vmatprep.subr.mxu0 0.0
        %1561 = vmatpush1.msra.mxu0 0.0
        %1562 = vmatprep.subr.mxu0 0.0
        %1563 = vmatpush1.msra.mxu0 0.0
        %1564 = vmatprep.subr.mxu0 0.0
        %1565 = vmatpush1.msra.mxu0 0.0
        %1566 = vmatprep.mubr.f32.mxu0 0.0
        %v1567 = vand.u32 %v965, 4294901760
        %1568 = vmatmul.mubr.f32.gmra.mrb[0].mxu0 %v1567
        %v1569 = vpop.f32.mrb[0].mxu0
        %v1570 = vadd.f32 %v1443, %v1569
        %v1571 = vpop.f32.mrb[0].mxu0
        %1572 = vmatprep.mubr.f32.mxu0 0.0
        %v1573 = vand.u32 %v966, 4294901760
        %1574 = vmatmul.mubr.f32.gmra.mrb[0].mxu0 %v1573
        %v1575 = vpop.f32.mrb[0].mxu0
        %v1576 = vadd.f32 %v1451, %v1575
        %v1577 = vpop.f32.mrb[0].mxu0
        %1578 = vdwg.mxu0
        %1579 = vmatprep.subr.mxu0 0.0
        %v1580 = vand.u32 %v967, 4294901760
        %1581 = vmatpush1.msra.mxu0 %v1580
        %1582 = vmatprep.subr.mxu0 0.0
        %v1583 = vand.u32 %v968, 4294901760
        %1584 = vmatpush1.msra.mxu0 %v1583
        %1585 = vmatprep.subr.mxu0 0.0
        %v1586 = vand.u32 %v969, 4294901760
        %1587 = vmatpush1.msra.mxu0 %v1586
        %1588 = vmatprep.subr.mxu0 0.0
        %v1589 = vand.u32 %v970, 4294901760
        %1590 = vmatpush1.msra.mxu0 %v1589
        %1591 = vmatprep.subr.mxu0 0.0
        %v1592 = vand.u32 %v971, 4294901760
        %1593 = vmatpush1.msra.mxu0 %v1592
        %1594 = vmatprep.subr.mxu0 0.0
        %v1595 = vand.u32 %v972, 4294901760
        %1596 = vmatpush1.msra.mxu0 %v1595
        %1597 = vmatprep.subr.mxu0 0.0
        %v1598 = vand.u32 %v973, 4294901760
        %1599 = vmatpush1.msra.mxu0 %v1598
        %1600 = vmatprep.subr.mxu0 0.0
        %v1601 = vand.u32 %v974, 4294901760
        %1602 = vmatpush1.msra.mxu0 %v1601
        %1603 = vmatprep.subr.mxu0 0.0
        %v1604 = vand.u32 %v975, 4294901760
        %1605 = vmatpush1.msra.mxu0 %v1604
        %1606 = vmatprep.subr.mxu0 0.0
        %v1607 = vand.u32 %v976, 4294901760
        %1608 = vmatpush1.msra.mxu0 %v1607
        %1609 = vmatprep.subr.mxu0 0.0
        %v1610 = vand.u32 %v977, 4294901760
        %1611 = vmatpush1.msra.mxu0 %v1610
        %1612 = vmatprep.subr.mxu0 0.0
        %v1613 = vand.u32 %v978, 4294901760
        %1614 = vmatpush1.msra.mxu0 %v1613
        %1615 = vmatprep.subr.mxu0 0.0
        %v1616 = vand.u32 %v979, 4294901760
        %1617 = vmatpush1.msra.mxu0 %v1616
        %1618 = vmatprep.subr.mxu0 0.0
        %v1619 = vand.u32 %v980, 4294901760
        %1620 = vmatpush1.msra.mxu0 %v1619
        %1621 = vmatprep.subr.mxu0 0.0
        %v1622 = vand.u32 %v981, 4294901760
        %1623 = vmatpush1.msra.mxu0 %v1622
        %1624 = vmatprep.subr.mxu0 0.0
        %v1625 = vand.u32 %v982, 4294901760
        %1626 = vmatpush1.msra.mxu0 %v1625
        %1627 = vmatprep.subr.mxu0 0.0
        %1628 = vmatpush1.msra.mxu0 0.0
        %1629 = vmatprep.subr.mxu0 0.0
        %1630 = vmatpush1.msra.mxu0 0.0
        %1631 = vmatprep.subr.mxu0 0.0
        %1632 = vmatpush1.msra.mxu0 0.0
        %1633 = vmatprep.subr.mxu0 0.0
        %1634 = vmatpush1.msra.mxu0 0.0
        %1635 = vmatprep.subr.mxu0 0.0
        %1636 = vmatpush1.msra.mxu0 0.0
        %1637 = vmatprep.subr.mxu0 0.0
        %1638 = vmatpush1.msra.mxu0 0.0
        %1639 = vmatprep.subr.mxu0 0.0
        %1640 = vmatpush1.msra.mxu0 0.0
        %1641 = vmatprep.subr.mxu0 0.0
        %1642 = vmatpush1.msra.mxu0 0.0
        %1643 = vmatprep.subr.mxu0 0.0
        %1644 = vmatpush1.msra.mxu0 0.0
        %1645 = vmatprep.subr.mxu0 0.0
        %1646 = vmatpush1.msra.mxu0 0.0
        %1647 = vmatprep.subr.mxu0 0.0
        %1648 = vmatpush1.msra.mxu0 0.0
        %1649 = vmatprep.subr.mxu0 0.0
        %1650 = vmatpush1.msra.mxu0 0.0
        %1651 = vmatprep.subr.mxu0 0.0
        %1652 = vmatpush1.msra.mxu0 0.0
        %1653 = vmatprep.subr.mxu0 0.0
        %1654 = vmatpush1.msra.mxu0 0.0
        %1655 = vmatprep.subr.mxu0 0.0
        %1656 = vmatpush1.msra.mxu0 0.0
        %1657 = vmatprep.subr.mxu0 0.0
        %1658 = vmatpush1.msra.mxu0 0.0
        %1659 = vmatprep.mubr.f32.mxu0 0.0
        %v1660 = vand.u32 %v965, 4294901760
        %1661 = vmatmul.mubr.f32.gmra.mrb[0].mxu0 %v1660
        %v1662 = vpop.f32.mrb[0].mxu0
        %v1663 = vadd.f32 %v1570, %v1662
        %v1664 = vpop.f32.mrb[0].mxu0
        %1665 = vmatprep.mubr.f32.mxu0 0.0
        %v1666 = vand.u32 %v966, 4294901760
        %1667 = vmatmul.mubr.f32.gmra.mrb[0].mxu0 %v1666
        %v1668 = vpop.f32.mrb[0].mxu0
        %v1669 = vadd.f32 %v1576, %v1668
        %v1670 = vpop.f32.mrb[0].mxu0
        %1671 = vdwg.mxu0
        %v1672 = vmul.f32 %v1663, 0.5
        %v1673 = vmul.f32 %v1669, 0.5
        %v1674 = vmul.f32 %v1663, 0.70710677
        %v1675 = vmul.f32 %v1669, 0.70710677
        %v1676 = vand.u32 2147483647, %v1674
        %v1677 = vand.u32 2147483647, %v1675
        %v1678 = vmul.f32 %v1676, 0.3275911
        %v1679 = vmul.f32 %v1677, 0.3275911
        %v1680 = vadd.f32 %v1678, 1.0
        %v1681 = vadd.f32 %v1679, 1.0
        %v1682 = vrcp.pop %v1680
        %v1683 = vmul.f32 1.0, %v1682
        %v1684 = vrcp.pop %v1681
        %v1685 = vmul.f32 1.0, %v1684
        %v1686 = vmul.f32 %v1683, 1.0614054
        %v1687 = vmul.f32 %v1685, 1.0614054
        %v1688 = vadd.f32 %v1686, -1.4531521
        %v1689 = vadd.f32 %v1687, -1.4531521
        %v1690 = vmul.f32 %v1688, %v1683
        %v1691 = vmul.f32 %v1689, %v1685
        %v1692 = vadd.f32 %v1690, 1.4214138
        %v1693 = vadd.f32 %v1691, 1.4214138
        %v1694 = vmul.f32 %v1692, %v1683
        %v1695 = vmul.f32 %v1693, %v1685
        %v1696 = vadd.f32 %v1694, -0.28449672
        %v1697 = vadd.f32 %v1695, -0.28449672
        %v1698 = vmul.f32 %v1696, %v1683
        %v1699 = vmul.f32 %v1697, %v1685
        %v1700 = vadd.f32 %v1698, 0.2548296
        %v1701 = vadd.f32 %v1699, 0.2548296
        %v1702 = vmul.f32 %v1700, %v1683
        %v1703 = vmul.f32 %v1701, %v1685
        %v1704 = vsub.f32 0.0, %v1676
        %v1705 = vsub.f32 0.0, %v1677
        %v1706 = vmul.f32 %v1704, %v1676
        %v1707 = vmul.f32 %v1705, %v1677
        %v1708 = vmul.f32 %v1706, 1.442695
        %v1709 = vpow.pop %v1708
        %v1710 = vmul.f32 %v1707, 1.442695
        %v1711 = vpow.pop %v1710
        %v1712 = vmul.f32 %v1702, %v1709
        %v1713 = vmul.f32 %v1703, %v1711
        %v1714 = vsub.f32 1.0, %v1712
        %v1715 = vsub.f32 1.0, %v1713
        %vm1716 = vcmp.lt.f32.partialorder %v1674, 0.0
        %vm1717 = vcmp.lt.f32.partialorder %v1675, 0.0
        %v1718 = vsub.f32 0.0, %v1714
        %v1719 = vsub.f32 0.0, %v1715
        %v1720 = vsel %vm1716, %v1718, %v1714
        %v1721 = vsel %vm1717, %v1719, %v1715
        %v1722 = vadd.f32 %v1720, 1.0
        %v1723 = vadd.f32 %v1721, 1.0
        %v1724 = vmul.f32 %v1672, %v1722
        %v1725 = vmul.f32 %v1673, %v1723
        %v1726 = vld [vmem:[%s3] sm:$0xff]
        %v1727 = vld [vmem:[%s3 + $0x8] sm:$0xff]
        %v1728 = vld [vmem:[%s3 + $0x10] sm:$0xff]
        %v1729 = vld [vmem:[%s3 + $0x18] sm:$0xff]
        %vm1730 = vcmask 261120
        %v1732 = vsel %vm1730, %v1724, 0
        %v1735 = vsel %vm1730, %v1725, 0
        %1737 = vmatprep.subr.mxu0 0.0
        %v1738 = vand.u32 %v1726, 4294901760
        %1739 = vmatpush1.msra.mxu0 %v1738
        %1740 = vmatprep.subr.mxu0 0.0
        %v1741 = vand.u32 %v1727, 4294901760
        %1742 = vmatpush1.msra.mxu0 %v1741
        %1743 = vmatprep.subr.mxu0 0.0
        %v1744 = vand.u32 %v1728, 4294901760
        %1745 = vmatpush1.msra.mxu0 %v1744
        %1746 = vmatprep.subr.mxu0 0.0
        %v1747 = vand.u32 %v1729, 4294901760
        %1748 = vmatpush1.msra.mxu0 %v1747
        %1749 = vmatprep.subr.mxu0 0.0
        %1750 = vmatpush1.msra.mxu0 0.0
        %1751 = vmatprep.subr.mxu0 0.0
        %1752 = vmatpush1.msra.mxu0 0.0
        %1753 = vmatprep.subr.mxu0 0.0
        %1754 = vmatpush1.msra.mxu0 0.0
        %1755 = vmatprep.subr.mxu0 0.0
        %1756 = vmatpush1.msra.mxu0 0.0
        %1757 = vmatprep.subr.mxu0 0.0
        %1758 = vmatpush1.msra.mxu0 0.0
        %1759 = vmatprep.subr.mxu0 0.0
        %1760 = vmatpush1.msra.mxu0 0.0
        %1761 = vmatprep.subr.mxu0 0.0
        %1762 = vmatpush1.msra.mxu0 0.0
        %1763 = vmatprep.subr.mxu0 0.0
        %1764 = vmatpush1.msra.mxu0 0.0
        %1765 = vmatprep.subr.mxu0 0.0
        %1766 = vmatpush1.msra.mxu0 0.0
        %1767 = vmatprep.subr.mxu0 0.0
        %1768 = vmatpush1.msra.mxu0 0.0
        %1769 = vmatprep.subr.mxu0 0.0
        %1770 = vmatpush1.msra.mxu0 0.0
        %1771 = vmatprep.subr.mxu0 0.0
        %1772 = vmatpush1.msra.mxu0 0.0
        %1773 = vmatprep.subr.mxu0 0.0
        %1774 = vmatpush1.msra.mxu0 0.0
        %1775 = vmatprep.subr.mxu0 0.0
        %1776 = vmatpush1.msra.mxu0 0.0
        %1777 = vmatprep.subr.mxu0 0.0
        %1778 = vmatpush1.msra.mxu0 0.0
        %1779 = vmatprep.subr.mxu0 0.0
        %1780 = vmatpush1.msra.mxu0 0.0
        %1781 = vmatprep.subr.mxu0 0.0
        %1782 = vmatpush1.msra.mxu0 0.0
        %1783 = vmatprep.subr.mxu0 0.0
        %1784 = vmatpush1.msra.mxu0 0.0
        %1785 = vmatprep.subr.mxu0 0.0
        %1786 = vmatpush1.msra.mxu0 0.0
        %1787 = vmatprep.subr.mxu0 0.0
        %1788 = vmatpush1.msra.mxu0 0.0
        %1789 = vmatprep.subr.mxu0 0.0
        %1790 = vmatpush1.msra.mxu0 0.0
        %1791 = vmatprep.subr.mxu0 0.0
        %1792 = vmatpush1.msra.mxu0 0.0
        %1793 = vmatprep.subr.mxu0 0.0
        %1794 = vmatpush1.msra.mxu0 0.0
        %1795 = vmatprep.subr.mxu0 0.0
        %1796 = vmatpush1.msra.mxu0 0.0
        %1797 = vmatprep.subr.mxu0 0.0
        %1798 = vmatpush1.msra.mxu0 0.0
        %1799 = vmatprep.subr.mxu0 0.0
        %1800 = vmatpush1.msra.mxu0 0.0
        %1801 = vmatprep.subr.mxu0 0.0
        %1802 = vmatpush1.msra.mxu0 0.0
        %1803 = vmatprep.subr.mxu0 0.0
        %1804 = vmatpush1.msra.mxu0 0.0
        %1805 = vmatprep.mubr.f32.mxu0 0.0
        %v1806 = vand.u32 %v1732, 4294901760
        %v1807 = vsub.f32 %v1732, %v1806
        %v1808 = vand.u32 %v1807, 4294901760
        %v1809 = vsub.f32 %v1807, %v1808
        %v1810 = vand.u32 %v1809, 4294901760
        %1811 = vmatmul.mubr.f32.gmra.mrb[0].mxu0 %v1810
        %v1812 = vpop.f32.mrb[0].mxu0
        %v1813 = vadd.f32 0.0, %v1812
        %v1814 = vpop.f32.mrb[0].mxu0
        %1815 = vmatprep.mubr.f32.mxu0 0.0
        %v1816 = vand.u32 %v1735, 4294901760
        %v1817 = vsub.f32 %v1735, %v1816
        %v1818 = vand.u32 %v1817, 4294901760
        %v1819 = vsub.f32 %v1817, %v1818
        %v1820 = vand.u32 %v1819, 4294901760
        %1821 = vmatmul.mubr.f32.gmra.mrb[0].mxu0 %v1820
        %v1822 = vpop.f32.mrb[0].mxu0
        %v1823 = vadd.f32 0.0, %v1822
        %v1824 = vpop.f32.mrb[0].mxu0
        %1825 = vdwg.mxu0
        %1826 = vmatprep.subr.mxu0 0.0
        %v1827 = vand.u32 %v1726, 4294901760
        %v1828 = vsub.f32 %v1726, %v1827
        %v1829 = vand.u32 %v1828, 4294901760
        %v1830 = vsub.f32 %v1828, %v1829
        %v1831 = vand.u32 %v1830, 4294901760
        %1832 = vmatpush1.msra.mxu0 %v1831
        %1833 = vmatprep.subr.mxu0 0.0
        %v1834 = vand.u32 %v1727, 4294901760
        %v1835 = vsub.f32 %v1727, %v1834
        %v1836 = vand.u32 %v1835, 4294901760
        %v1837 = vsub.f32 %v1835, %v1836
        %v1838 = vand.u32 %v1837, 4294901760
        %1839 = vmatpush1.msra.mxu0 %v1838
        %1840 = vmatprep.subr.mxu0 0.0
        %v1841 = vand.u32 %v1728, 4294901760
        %v1842 = vsub.f32 %v1728, %v1841
        %v1843 = vand.u32 %v1842, 4294901760
        %v1844 = vsub.f32 %v1842, %v1843
        %v1845 = vand.u32 %v1844, 4294901760
        %1846 = vmatpush1.msra.mxu0 %v1845
        %1847 = vmatprep.subr.mxu0 0.0
        %v1848 = vand.u32 %v1729, 4294901760
        %v1849 = vsub.f32 %v1729, %v1848
        %v1850 = vand.u32 %v1849, 4294901760
        %v1851 = vsub.f32 %v1849, %v1850
        %v1852 = vand.u32 %v1851, 4294901760
        %1853 = vmatpush1.msra.mxu0 %v1852
        %1854 = vmatprep.subr.mxu0 0.0
        %1855 = vmatpush1.msra.mxu0 0.0
        %1856 = vmatprep.subr.mxu0 0.0
        %1857 = vmatpush1.msra.mxu0 0.0
        %1858 = vmatprep.subr.mxu0 0.0
        %1859 = vmatpush1.msra.mxu0 0.0
        %1860 = vmatprep.subr.mxu0 0.0
        %1861 = vmatpush1.msra.mxu0 0.0
        %1862 = vmatprep.subr.mxu0 0.0
        %1863 = vmatpush1.msra.mxu0 0.0
        %1864 = vmatprep.subr.mxu0 0.0
        %1865 = vmatpush1.msra.mxu0 0.0
        %1866 = vmatprep.subr.mxu0 0.0
        %1867 = vmatpush1.msra.mxu0 0.0
        %1868 = vmatprep.subr.mxu0 0.0
        %1869 = vmatpush1.msra.mxu0 0.0
        %1870 = vmatprep.subr.mxu0 0.0
        %1871 = vmatpush1.msra.mxu0 0.0
        %1872 = vmatprep.subr.mxu0 0.0
        %1873 = vmatpush1.msra.mxu0 0.0
        %1874 = vmatprep.subr.mxu0 0.0
        %1875 = vmatpush1.msra.mxu0 0.0
        %1876 = vmatprep.subr.mxu0 0.0
        %1877 = vmatpush1.msra.mxu0 0.0
        %1878 = vmatprep.subr.mxu0 0.0
        %1879 = vmatpush1.msra.mxu0 0.0
        %1880 = vmatprep.subr.mxu0 0.0
        %1881 = vmatpush1.msra.mxu0 0.0
        %1882 = vmatprep.subr.mxu0 0.0
        %1883 = vmatpush1.msra.mxu0 0.0
        %1884 = vmatprep.subr.mxu0 0.0
        %1885 = vmatpush1.msra.mxu0 0.0
        %1886 = vmatprep.subr.mxu0 0.0
        %1887 = vmatpush1.msra.mxu0 0.0
        %1888 = vmatprep.subr.mxu0 0.0
        %1889 = vmatpush1.msra.mxu0 0.0
        %1890 = vmatprep.subr.mxu0 0.0
        %1891 = vmatpush1.msra.mxu0 0.0
        %1892 = vmatprep.subr.mxu0 0.0
        %1893 = vmatpush1.msra.mxu0 0.0
        %1894 = vmatprep.subr.mxu0 0.0
        %1895 = vmatpush1.msra.mxu0 0.0
        %1896 = vmatprep.subr.mxu0 0.0
        %1897 = vmatpush1.msra.mxu0 0.0
        %1898 = vmatprep.subr.mxu0 0.0
        %1899 = vmatpush1.msra.mxu0 0.0
        %1900 = vmatprep.subr.mxu0 0.0
        %1901 = vmatpush1.msra.mxu0 0.0
        %1902 = vmatprep.subr.mxu0 0.0
        %1903 = vmatpush1.msra.mxu0 0.0
        %1904 = vmatprep.subr.mxu0 0.0
        %1905 = vmatpush1.msra.mxu0 0.0
        %1906 = vmatprep.subr.mxu0 0.0
        %1907 = vmatpush1.msra.mxu0 0.0
        %1908 = vmatprep.subr.mxu0 0.0
        %1909 = vmatpush1.msra.mxu0 0.0
        %1910 = vmatprep.mubr.f32.mxu0 0.0
        %v1911 = vand.u32 %v1732, 4294901760
        %1912 = vmatmul.mubr.f32.gmra.mrb[0].mxu0 %v1911
        %v1913 = vpop.f32.mrb[0].mxu0
        %v1914 = vadd.f32 %v1813, %v1913
        %v1915 = vpop.f32.mrb[0].mxu0
        %1916 = vmatprep.mubr.f32.mxu0 0.0
        %v1917 = vand.u32 %v1735, 4294901760
        %1918 = vmatmul.mubr.f32.gmra.mrb[0].mxu0 %v1917
        %v1919 = vpop.f32.mrb[0].mxu0
        %v1920 = vadd.f32 %v1823, %v1919
        %v1921 = vpop.f32.mrb[0].mxu0
        %1922 = vdwg.mxu0
        %1923 = vmatprep.subr.mxu0 0.0
        %v1924 = vand.u32 %v1726, 4294901760
        %v1925 = vsub.f32 %v1726, %v1924
        %1926 = vmatpush1.msra.mxu0 %v1925
        %1927 = vmatprep.subr.mxu0 0.0
        %v1928 = vand.u32 %v1727, 4294901760
        %v1929 = vsub.f32 %v1727, %v1928
        %1930 = vmatpush1.msra.mxu0 %v1929
        %1931 = vmatprep.subr.mxu0 0.0
        %v1932 = vand.u32 %v1728, 4294901760
        %v1933 = vsub.f32 %v1728, %v1932
        %1934 = vmatpush1.msra.mxu0 %v1933
        %1935 = vmatprep.subr.mxu0 0.0
        %v1936 = vand.u32 %v1729, 4294901760
        %v1937 = vsub.f32 %v1729, %v1936
        %1938 = vmatpush1.msra.mxu0 %v1937
        %1939 = vmatprep.subr.mxu0 0.0
        %1940 = vmatpush1.msra.mxu0 0.0
        %1941 = vmatprep.subr.mxu0 0.0
        %1942 = vmatpush1.msra.mxu0 0.0
        %1943 = vmatprep.subr.mxu0 0.0
        %1944 = vmatpush1.msra.mxu0 0.0
        %1945 = vmatprep.subr.mxu0 0.0
        %1946 = vmatpush1.msra.mxu0 0.0
        %1947 = vmatprep.subr.mxu0 0.0
        %1948 = vmatpush1.msra.mxu0 0.0
        %1949 = vmatprep.subr.mxu0 0.0
        %1950 = vmatpush1.msra.mxu0 0.0
        %1951 = vmatprep.subr.mxu0 0.0
        %1952 = vmatpush1.msra.mxu0 0.0
        %1953 = vmatprep.subr.mxu0 0.0
        %1954 = vmatpush1.msra.mxu0 0.0
        %1955 = vmatprep.subr.mxu0 0.0
        %1956 = vmatpush1.msra.mxu0 0.0
        %1957 = vmatprep.subr.mxu0 0.0
        %1958 = vmatpush1.msra.mxu0 0.0
        %1959 = vmatprep.subr.mxu0 0.0
        %1960 = vmatpush1.msra.mxu0 0.0
        %1961 = vmatprep.subr.mxu0 0.0
        %1962 = vmatpush1.msra.mxu0 0.0
        %1963 = vmatprep.subr.mxu0 0.0
        %1964 = vmatpush1.msra.mxu0 0.0
        %1965 = vmatprep.subr.mxu0 0.0
        %1966 = vmatpush1.msra.mxu0 0.0
        %1967 = vmatprep.subr.mxu0 0.0
        %1968 = vmatpush1.msra.mxu0 0.0
        %1969 = vmatprep.subr.mxu0 0.0
        %1970 = vmatpush1.msra.mxu0 0.0
        %1971 = vmatprep.subr.mxu0 0.0
        %1972 = vmatpush1.msra.mxu0 0.0
        %1973 = vmatprep.subr.mxu0 0.0
        %1974 = vmatpush1.msra.mxu0 0.0
        %1975 = vmatprep.subr.mxu0 0.0
        %1976 = vmatpush1.msra.mxu0 0.0
        %1977 = vmatprep.subr.mxu0 0.0
        %1978 = vmatpush1.msra.mxu0 0.0
        %1979 = vmatprep.subr.mxu0 0.0
        %1980 = vmatpush1.msra.mxu0 0.0
        %1981 = vmatprep.subr.mxu0 0.0
        %1982 = vmatpush1.msra.mxu0 0.0
        %1983 = vmatprep.subr.mxu0 0.0
        %1984 = vmatpush1.msra.mxu0 0.0
        %1985 = vmatprep.subr.mxu0 0.0
        %1986 = vmatpush1.msra.mxu0 0.0
        %1987 = vmatprep.subr.mxu0 0.0
        %1988 = vmatpush1.msra.mxu0 0.0
        %1989 = vmatprep.subr.mxu0 0.0
        %1990 = vmatpush1.msra.mxu0 0.0
        %1991 = vmatprep.subr.mxu0 0.0
        %1992 = vmatpush1.msra.mxu0 0.0
        %1993 = vmatprep.subr.mxu0 0.0
        %1994 = vmatpush1.msra.mxu0 0.0
        %1995 = vmatprep.mubr.f32.mxu0 0.0
        %v1996 = vand.u32 %v1732, 4294901760
        %v1997 = vsub.f32 %v1732, %v1996
        %1998 = vmatmul.mubr.f32.gmra.mrb[0].mxu0 %v1997
        %v1999 = vpop.f32.mrb[0].mxu0
        %v2000 = vadd.f32 %v1914, %v1999
        %v2001 = vpop.f32.mrb[0].mxu0
        %2002 = vmatprep.mubr.f32.mxu0 0.0
        %v2003 = vand.u32 %v1735, 4294901760
        %v2004 = vsub.f32 %v1735, %v2003
        %2005 = vmatmul.mubr.f32.gmra.mrb[0].mxu0 %v2004
        %v2006 = vpop.f32.mrb[0].mxu0
        %v2007 = vadd.f32 %v1920, %v2006
        %v2008 = vpop.f32.mrb[0].mxu0
        %2009 = vdwg.mxu0
        %2010 = vmatprep.subr.mxu0 0.0
        %v2011 = vand.u32 %v1726, 4294901760
        %2012 = vmatpush1.msra.mxu0 %v2011
        %2013 = vmatprep.subr.mxu0 0.0
        %v2014 = vand.u32 %v1727, 4294901760
        %2015 = vmatpush1.msra.mxu0 %v2014
        %2016 = vmatprep.subr.mxu0 0.0
        %v2017 = vand.u32 %v1728, 4294901760
        %2018 = vmatpush1.msra.mxu0 %v2017
        %2019 = vmatprep.subr.mxu0 0.0
        %v2020 = vand.u32 %v1729, 4294901760
        %2021 = vmatpush1.msra.mxu0 %v2020
        %2022 = vmatprep.subr.mxu0 0.0
        %2023 = vmatpush1.msra.mxu0 0.0
        %2024 = vmatprep.subr.mxu0 0.0
        %2025 = vmatpush1.msra.mxu0 0.0
        %2026 = vmatprep.subr.mxu0 0.0
        %2027 = vmatpush1.msra.mxu0 0.0
        %2028 = vmatprep.subr.mxu0 0.0
        %2029 = vmatpush1.msra.mxu0 0.0
        %2030 = vmatprep.subr.mxu0 0.0
        %2031 = vmatpush1.msra.mxu0 0.0
        %2032 = vmatprep.subr.mxu0 0.0
        %2033 = vmatpush1.msra.mxu0 0.0
        %2034 = vmatprep.subr.mxu0 0.0
        %2035 = vmatpush1.msra.mxu0 0.0
        %2036 = vmatprep.subr.mxu0 0.0
        %2037 = vmatpush1.msra.mxu0 0.0
        %2038 = vmatprep.subr.mxu0 0.0
        %2039 = vmatpush1.msra.mxu0 0.0
        %2040 = vmatprep.subr.mxu0 0.0
        %2041 = vmatpush1.msra.mxu0 0.0
        %2042 = vmatprep.subr.mxu0 0.0
        %2043 = vmatpush1.msra.mxu0 0.0
        %2044 = vmatprep.subr.mxu0 0.0
        %2045 = vmatpush1.msra.mxu0 0.0
        %2046 = vmatprep.subr.mxu0 0.0
        %2047 = vmatpush1.msra.mxu0 0.0
        %2048 = vmatprep.subr.mxu0 0.0
        %2049 = vmatpush1.msra.mxu0 0.0
        %2050 = vmatprep.subr.mxu0 0.0
        %2051 = vmatpush1.msra.mxu0 0.0
        %2052 = vmatprep.subr.mxu0 0.0
        %2053 = vmatpush1.msra.mxu0 0.0
        %2054 = vmatprep.subr.mxu0 0.0
        %2055 = vmatpush1.msra.mxu0 0.0
        %2056 = vmatprep.subr.mxu0 0.0
        %2057 = vmatpush1.msra.mxu0 0.0
        %2058 = vmatprep.subr.mxu0 0.0
        %2059 = vmatpush1.msra.mxu0 0.0
        %2060 = vmatprep.subr.mxu0 0.0
        %2061 = vmatpush1.msra.mxu0 0.0
        %2062 = vmatprep.subr.mxu0 0.0
        %2063 = vmatpush1.msra.mxu0 0.0
        %2064 = vmatprep.subr.mxu0 0.0
        %2065 = vmatpush1.msra.mxu0 0.0
        %2066 = vmatprep.subr.mxu0 0.0
        %2067 = vmatpush1.msra.mxu0 0.0
        %2068 = vmatprep.subr.mxu0 0.0
        %2069 = vmatpush1.msra.mxu0 0.0
        %2070 = vmatprep.subr.mxu0 0.0
        %2071 = vmatpush1.msra.mxu0 0.0
        %2072 = vmatprep.subr.mxu0 0.0
        %2073 = vmatpush1.msra.mxu0 0.0
        %2074 = vmatprep.subr.mxu0 0.0
        %2075 = vmatpush1.msra.mxu0 0.0
        %2076 = vmatprep.subr.mxu0 0.0
        %2077 = vmatpush1.msra.mxu0 0.0
        %2078 = vmatprep.mubr.f32.mxu0 0.0
        %v2079 = vand.u32 %v1732, 4294901760
        %v2080 = vsub.f32 %v1732, %v2079
        %v2081 = vand.u32 %v2080, 4294901760
        %2082 = vmatmul.mubr.f32.gmra.mrb[0].mxu0 %v2081
        %v2083 = vpop.f32.mrb[0].mxu0
        %v2084 = vadd.f32 %v2000, %v2083
        %v2085 = vpop.f32.mrb[0].mxu0
        %2086 = vmatprep.mubr.f32.mxu0 0.0
        %v2087 = vand.u32 %v1735, 4294901760
        %v2088 = vsub.f32 %v1735, %v2087
        %v2089 = vand.u32 %v2088, 4294901760
        %2090 = vmatmul.mubr.f32.gmra.mrb[0].mxu0 %v2089
        %v2091 = vpop.f32.mrb[0].mxu0
        %v2092 = vadd.f32 %v2007, %v2091
        %v2093 = vpop.f32.mrb[0].mxu0
        %2094 = vdwg.mxu0
        %2095 = vmatprep.subr.mxu0 0.0
        %v2096 = vand.u32 %v1726, 4294901760
        %v2097 = vsub.f32 %v1726, %v2096
        %v2098 = vand.u32 %v2097, 4294901760
        %2099 = vmatpush1.msra.mxu0 %v2098
        %2100 = vmatprep.subr.mxu0 0.0
        %v2101 = vand.u32 %v1727, 4294901760
        %v2102 = vsub.f32 %v1727, %v2101
        %v2103 = vand.u32 %v2102, 4294901760
        %2104 = vmatpush1.msra.mxu0 %v2103
        %2105 = vmatprep.subr.mxu0 0.0
        %v2106 = vand.u32 %v1728, 4294901760
        %v2107 = vsub.f32 %v1728, %v2106
        %v2108 = vand.u32 %v2107, 4294901760
        %2109 = vmatpush1.msra.mxu0 %v2108
        %2110 = vmatprep.subr.mxu0 0.0
        %v2111 = vand.u32 %v1729, 4294901760
        %v2112 = vsub.f32 %v1729, %v2111
        %v2113 = vand.u32 %v2112, 4294901760
        %2114 = vmatpush1.msra.mxu0 %v2113
        %2115 = vmatprep.subr.mxu0 0.0
        %2116 = vmatpush1.msra.mxu0 0.0
        %2117 = vmatprep.subr.mxu0 0.0
        %2118 = vmatpush1.msra.mxu0 0.0
        %2119 = vmatprep.subr.mxu0 0.0
        %2120 = vmatpush1.msra.mxu0 0.0
        %2121 = vmatprep.subr.mxu0 0.0
        %2122 = vmatpush1.msra.mxu0 0.0
        %2123 = vmatprep.subr.mxu0 0.0
        %2124 = vmatpush1.msra.mxu0 0.0
        %2125 = vmatprep.subr.mxu0 0.0
        %2126 = vmatpush1.msra.mxu0 0.0
        %2127 = vmatprep.subr.mxu0 0.0
        %2128 = vmatpush1.msra.mxu0 0.0
        %2129 = vmatprep.subr.mxu0 0.0
        %2130 = vmatpush1.msra.mxu0 0.0
        %2131 = vmatprep.subr.mxu0 0.0
        %2132 = vmatpush1.msra.mxu0 0.0
        %2133 = vmatprep.subr.mxu0 0.0
        %2134 = vmatpush1.msra.mxu0 0.0
        %2135 = vmatprep.subr.mxu0 0.0
        %2136 = vmatpush1.msra.mxu0 0.0
        %2137 = vmatprep.subr.mxu0 0.0
        %2138 = vmatpush1.msra.mxu0 0.0
        %2139 = vmatprep.subr.mxu0 0.0
        %2140 = vmatpush1.msra.mxu0 0.0
        %2141 = vmatprep.subr.mxu0 0.0
        %2142 = vmatpush1.msra.mxu0 0.0
        %2143 = vmatprep.subr.mxu0 0.0
        %2144 = vmatpush1.msra.mxu0 0.0
        %2145 = vmatprep.subr.mxu0 0.0
        %2146 = vmatpush1.msra.mxu0 0.0
        %2147 = vmatprep.subr.mxu0 0.0
        %2148 = vmatpush1.msra.mxu0 0.0
        %2149 = vmatprep.subr.mxu0 0.0
        %2150 = vmatpush1.msra.mxu0 0.0
        %2151 = vmatprep.subr.mxu0 0.0
        %2152 = vmatpush1.msra.mxu0 0.0
        %2153 = vmatprep.subr.mxu0 0.0
        %2154 = vmatpush1.msra.mxu0 0.0
        %2155 = vmatprep.subr.mxu0 0.0
        %2156 = vmatpush1.msra.mxu0 0.0
        %2157 = vmatprep.subr.mxu0 0.0
        %2158 = vmatpush1.msra.mxu0 0.0
        %2159 = vmatprep.subr.mxu0 0.0
        %2160 = vmatpush1.msra.mxu0 0.0
        %2161 = vmatprep.subr.mxu0 0.0
        %2162 = vmatpush1.msra.mxu0 0.0
        %2163 = vmatprep.subr.mxu0 0.0
        %2164 = vmatpush1.msra.mxu0 0.0
        %2165 = vmatprep.subr.mxu0 0.0
        %2166 = vmatpush1.msra.mxu0 0.0
        %2167 = vmatprep.subr.mxu0 0.0
        %2168 = vmatpush1.msra.mxu0 0.0
        %2169 = vmatprep.subr.mxu0 0.0
        %2170 = vmatpush1.msra.mxu0 0.0
        %2171 = vmatprep.mubr.f32.mxu0 0.0
        %v2172 = vand.u32 %v1732, 4294901760
        %2173 = vmatmul.mubr.f32.gmra.mrb[0].mxu0 %v2172
        %v2174 = vpop.f32.mrb[0].mxu0
        %v2175 = vadd.f32 %v2084, %v2174
        %v2176 = vpop.f32.mrb[0].mxu0
        %2177 = vmatprep.mubr.f32.mxu0 0.0
        %v2178 = vand.u32 %v1735, 4294901760
        %2179 = vmatmul.mubr.f32.gmra.mrb[0].mxu0 %v2178
        %v2180 = vpop.f32.mrb[0].mxu0
        %v2181 = vadd.f32 %v2092, %v2180
        %v2182 = vpop.f32.mrb[0].mxu0
        %2183 = vdwg.mxu0
        %2184 = vmatprep.subr.mxu0 0.0
        %v2185 = vand.u32 %v1726, 4294901760
        %2186 = vmatpush1.msra.mxu0 %v2185
        %2187 = vmatprep.subr.mxu0 0.0
        %v2188 = vand.u32 %v1727, 4294901760
        %2189 = vmatpush1.msra.mxu0 %v2188
        %2190 = vmatprep.subr.mxu0 0.0
        %v2191 = vand.u32 %v1728, 4294901760
        %2192 = vmatpush1.msra.mxu0 %v2191
        %2193 = vmatprep.subr.mxu0 0.0
        %v2194 = vand.u32 %v1729, 4294901760
        %2195 = vmatpush1.msra.mxu0 %v2194
        %2196 = vmatprep.subr.mxu0 0.0
        %2197 = vmatpush1.msra.mxu0 0.0
        %2198 = vmatprep.subr.mxu0 0.0
        %2199 = vmatpush1.msra.mxu0 0.0
        %2200 = vmatprep.subr.mxu0 0.0
        %2201 = vmatpush1.msra.mxu0 0.0
        %2202 = vmatprep.subr.mxu0 0.0
        %2203 = vmatpush1.msra.mxu0 0.0
        %2204 = vmatprep.subr.mxu0 0.0
        %2205 = vmatpush1.msra.mxu0 0.0
        %2206 = vmatprep.subr.mxu0 0.0
        %2207 = vmatpush1.msra.mxu0 0.0
        %2208 = vmatprep.subr.mxu0 0.0
        %2209 = vmatpush1.msra.mxu0 0.0
        %2210 = vmatprep.subr.mxu0 0.0
        %2211 = vmatpush1.msra.mxu0 0.0
        %2212 = vmatprep.subr.mxu0 0.0
        %2213 = vmatpush1.msra.mxu0 0.0
        %2214 = vmatprep.subr.mxu0 0.0
        %2215 = vmatpush1.msra.mxu0 0.0
        %2216 = vmatprep.subr.mxu0 0.0
        %2217 = vmatpush1.msra.mxu0 0.0
        %2218 = vmatprep.subr.mxu0 0.0
        %2219 = vmatpush1.msra.mxu0 0.0
        %2220 = vmatprep.subr.mxu0 0.0
        %2221 = vmatpush1.msra.mxu0 0.0
        %2222 = vmatprep.subr.mxu0 0.0
        %2223 = vmatpush1.msra.mxu0 0.0
        %2224 = vmatprep.subr.mxu0 0.0
        %2225 = vmatpush1.msra.mxu0 0.0
        %2226 = vmatprep.subr.mxu0 0.0
        %2227 = vmatpush1.msra.mxu0 0.0
        %2228 = vmatprep.subr.mxu0 0.0
        %2229 = vmatpush1.msra.mxu0 0.0
        %2230 = vmatprep.subr.mxu0 0.0
        %2231 = vmatpush1.msra.mxu0 0.0
        %2232 = vmatprep.subr.mxu0 0.0
        %2233 = vmatpush1.msra.mxu0 0.0
        %2234 = vmatprep.subr.mxu0 0.0
        %2235 = vmatpush1.msra.mxu0 0.0
        %2236 = vmatprep.subr.mxu0 0.0
        %2237 = vmatpush1.msra.mxu0 0.0
        %2238 = vmatprep.subr.mxu0 0.0
        %2239 = vmatpush1.msra.mxu0 0.0
        %2240 = vmatprep.subr.mxu0 0.0
        %2241 = vmatpush1.msra.mxu0 0.0
        %2242 = vmatprep.subr.mxu0 0.0
        %2243 = vmatpush1.msra.mxu0 0.0
        %2244 = vmatprep.subr.mxu0 0.0
        %2245 = vmatpush1.msra.mxu0 0.0
        %2246 = vmatprep.subr.mxu0 0.0
        %2247 = vmatpush1.msra.mxu0 0.0
        %2248 = vmatprep.subr.mxu0 0.0
        %2249 = vmatpush1.msra.mxu0 0.0
        %2250 = vmatprep.subr.mxu0 0.0
        %2251 = vmatpush1.msra.mxu0 0.0
        %2252 = vmatprep.mubr.f32.mxu0 0.0
        %v2253 = vand.u32 %v1732, 4294901760
        %2254 = vmatmul.mubr.f32.gmra.mrb[0].mxu0 %v2253
        %v2255 = vpop.f32.mrb[0].mxu0
        %v2256 = vadd.f32 %v2175, %v2255
        %v2257 = vpop.f32.mrb[0].mxu0
        %2258 = vmatprep.mubr.f32.mxu0 0.0
        %v2259 = vand.u32 %v1735, 4294901760
        %2260 = vmatmul.mubr.f32.gmra.mrb[0].mxu0 %v2259
        %v2261 = vpop.f32.mrb[0].mxu0
        %v2262 = vadd.f32 %v2181, %v2261
        %v2263 = vpop.f32.mrb[0].mxu0
        %2264 = vdwg.mxu0
        %2265 = vst.msk [vmem:[#allocation2] sm:$0xff] %vm1730, %v2256
        %2266 = vst.msk [vmem:[#allocation2 + $0x8] sm:$0xff] %vm1730, %v2262
        %2269 = vrot.lane.b32.xlu0 %v2256, 96
        %v2270 = vpop.permute.xlu0 %2269
        %2271 = vrot.lane.b32.xlu0 %v2262, 96
        %v2272 = vpop.permute.xlu0 %2271
        %2275 = vst.msk [vmem:[#allocation3] sm:$0xff] %vm1730, %v2270
        %2276 = vst.msk [vmem:[#allocation3 + $0x8] sm:$0xff] %vm1730, %v2272
        %2277 = vrot.lane.b32.xlu0 %v2256, 64
        %v2278 = vpop.permute.xlu0 %2277
        %2279 = vrot.lane.b32.xlu0 %v2262, 64
        %v2280 = vpop.permute.xlu0 %2279
        %2283 = vst.msk [vmem:[#allocation4] sm:$0xff] %vm1730, %v2278
        %2284 = vst.msk [vmem:[#allocation4 + $0x8] sm:$0xff] %vm1730, %v2280
        %v2285 = vld [vmem:[%s7] sm:$0x1]
        %v2286 = vlaneseq
        %v2287 = vshrl.u32 %v2286, 7
        %v2288 = vsub.s32 0, %v2287
        %v2289 = vrot.slane %v2285, %v2288
        %v2290 = vld [vmem:[%s7 + $0x1] sm:$0x1]
        %v2291 = vlaneseq
        %v2292 = vshrl.u32 %v2291, 7
        %v2293 = vsub.s32 0, %v2292
        %v2294 = vrot.slane %v2290, %v2293
        %v2295 = vld [vmem:[%s7 + $0x2] sm:$0x1]
        %v2296 = vlaneseq
        %v2297 = vshrl.u32 %v2296, 7
        %v2298 = vsub.s32 0, %v2297
        %v2299 = vrot.slane %v2295, %v2298
        %v2300 = vld [vmem:[%s7 + $0x3] sm:$0x1]
        %v2301 = vlaneseq
        %v2302 = vshrl.u32 %v2301, 7
        %v2303 = vsub.s32 0, %v2302
        %v2304 = vrot.slane %v2300, %v2303
        %v2305 = vld [vmem:[%s7 + $0x4] sm:$0x1]
        %v2306 = vlaneseq
        %v2307 = vshrl.u32 %v2306, 7
        %v2308 = vsub.s32 0, %v2307
        %v2309 = vrot.slane %v2305, %v2308
        %v2310 = vld [vmem:[%s7 + $0x5] sm:$0x1]
        %v2311 = vlaneseq
        %v2312 = vshrl.u32 %v2311, 7
        %v2313 = vsub.s32 0, %v2312
        %v2314 = vrot.slane %v2310, %v2313
        %v2315 = vld [vmem:[%s7 + $0x6] sm:$0x1]
        %v2316 = vlaneseq
        %v2317 = vshrl.u32 %v2316, 7
        %v2318 = vsub.s32 0, %v2317
        %v2319 = vrot.slane %v2315, %v2318
        %v2320 = vld [vmem:[%s7 + $0x7] sm:$0x1]
        %v2321 = vlaneseq
        %v2322 = vshrl.u32 %v2321, 7
        %v2323 = vsub.s32 0, %v2322
        %v2324 = vrot.slane %v2320, %v2323
        %v2325 = vld [vmem:[%s6] sm:$0xff]
        %v2326 = vld [vmem:[%s6 + $0x8] sm:$0xff]
        %v2327 = vld [vmem:[%s6 + $0x10] sm:$0xff]
        %v2328 = vld [vmem:[%s6 + $0x18] sm:$0xff]
        %v2329 = vld [vmem:[%s6 + $0x20] sm:$0xff]
        %v2330 = vld [vmem:[%s6 + $0x28] sm:$0xff]
        %v2331 = vld [vmem:[%s6 + $0x30] sm:$0xff]
        %v2332 = vld [vmem:[%s6 + $0x38] sm:$0xff]
        %v2333 = vld [vmem:[#allocation2] sm:$0xff]
        %v2334 = vld [vmem:[#allocation3] sm:$0xff]
        %v2335 = vld [vmem:[#allocation4] sm:$0xff]
        %v2336 = vmul.f32 %v2333, %v2289
        %v2337 = vmul.f32 %v2333, %v2294
        %v2338 = vmul.f32 %v2333, %v2299
        %v2339 = vmul.f32 %v2333, %v2304
        %v2340 = vmul.f32 %v2333, %v2309
        %v2341 = vmul.f32 %v2333, %v2314
        %v2342 = vmul.f32 %v2333, %v2319
        %v2343 = vmul.f32 %v2333, %v2324
        %v2345 = vsel %vm1730, %v2336, 0
        %v2348 = vsel %vm1730, %v2337, 0
        %v2351 = vsel %vm1730, %v2338, 0
        %v2354 = vsel %vm1730, %v2339, 0
        %v2357 = vsel %vm1730, %v2340, 0
        %v2360 = vsel %vm1730, %v2341, 0
        %v2363 = vsel %vm1730, %v2342, 0
        %v2366 = vsel %vm1730, %v2343, 0
        %v2369 = vsel %vm1730, %v2334, 0
        %2371 = vmatprep.subr.mxu0 0.0
        %v2372 = vand.u32 %v2369, 4294901760
        %2373 = vmatpush1.xpose.msra.mxu0 %v2372
        %2374 = vmatprep.subr.mxu0 0.0
        %2375 = vmatpush1.xpose.msra.mxu0 0.0
        %2376 = vmatprep.subr.mxu0 0.0
        %2377 = vmatpush1.xpose.msra.mxu0 0.0
        %2378 = vmatprep.subr.mxu0 0.0
        %2379 = vmatpush1.xpose.msra.mxu0 0.0
        %2380 = vmatprep.subr.mxu0 0.0
        %2381 = vmatpush1.xpose.msra.mxu0 0.0
        %2382 = vmatprep.subr.mxu0 0.0
        %2383 = vmatpush1.xpose.msra.mxu0 0.0
        %2384 = vmatprep.subr.mxu0 0.0
        %2385 = vmatpush1.xpose.msra.mxu0 0.0
        %2386 = vmatprep.subr.mxu0 0.0
        %2387 = vmatpush1.xpose.msra.mxu0 0.0
        %2388 = vmatprep.subr.mxu0 0.0
        %2389 = vmatpush1.xpose.msra.mxu0 0.0
        %2390 = vmatprep.subr.mxu0 0.0
        %2391 = vmatpush1.xpose.msra.mxu0 0.0
        %2392 = vmatprep.subr.mxu0 0.0
        %2393 = vmatpush1.xpose.msra.mxu0 0.0
        %2394 = vmatprep.subr.mxu0 0.0
        %2395 = vmatpush1.xpose.msra.mxu0 0.0
        %2396 = vmatprep.subr.mxu0 0.0
        %2397 = vmatpush1.xpose.msra.mxu0 0.0
        %2398 = vmatprep.subr.mxu0 0.0
        %2399 = vmatpush1.xpose.msra.mxu0 0.0
        %2400 = vmatprep.subr.mxu0 0.0
        %2401 = vmatpush1.xpose.msra.mxu0 0.0
        %2402 = vmatprep.subr.mxu0 0.0
        %2403 = vmatpush1.xpose.msra.mxu0 0.0
        %2404 = vmatprep.subr.mxu0 0.0
        %2405 = vmatpush1.xpose.msra.mxu0 0.0
        %2406 = vmatprep.subr.mxu0 0.0
        %2407 = vmatpush1.xpose.msra.mxu0 0.0
        %2408 = vmatprep.subr.mxu0 0.0
        %2409 = vmatpush1.xpose.msra.mxu0 0.0
        %2410 = vmatprep.subr.mxu0 0.0
        %2411 = vmatpush1.xpose.msra.mxu0 0.0
        %2412 = vmatprep.subr.mxu0 0.0
        %2413 = vmatpush1.xpose.msra.mxu0 0.0
        %2414 = vmatprep.subr.mxu0 0.0
        %2415 = vmatpush1.xpose.msra.mxu0 0.0
        %2416 = vmatprep.subr.mxu0 0.0
        %2417 = vmatpush1.xpose.msra.mxu0 0.0
        %2418 = vmatprep.subr.mxu0 0.0
        %2419 = vmatpush1.xpose.msra.mxu0 0.0
        %2420 = vmatprep.subr.mxu0 0.0
        %2421 = vmatpush1.xpose.msra.mxu0 0.0
        %2422 = vmatprep.subr.mxu0 0.0
        %2423 = vmatpush1.xpose.msra.mxu0 0.0
        %2424 = vmatprep.subr.mxu0 0.0
        %2425 = vmatpush1.xpose.msra.mxu0 0.0
        %2426 = vmatprep.subr.mxu0 0.0
        %2427 = vmatpush1.xpose.msra.mxu0 0.0
        %2428 = vmatprep.subr.mxu0 0.0
        %2429 = vmatpush1.xpose.msra.mxu0 0.0
        %2430 = vmatprep.subr.mxu0 0.0
        %2431 = vmatpush1.xpose.msra.mxu0 0.0
        %2432 = vmatprep.subr.mxu0 0.0
        %2433 = vmatpush1.xpose.msra.mxu0 0.0
        %2434 = vmatprep.subr.mxu0 0.0
        %2435 = vmatpush1.xpose.msra.mxu0 0.0
        %2436 = vmatprep.mubr.f32.mxu0 0.0
        %v2437 = vand.u32 %v2345, 4294901760
        %v2438 = vsub.f32 %v2345, %v2437
        %v2439 = vand.u32 %v2438, 4294901760
        %v2440 = vsub.f32 %v2438, %v2439
        %v2441 = vand.u32 %v2440, 4294901760
        %2442 = vmatmul.mubr.f32.gmra.mrb[0].mxu0 %v2441
        %v2443 = vpop.f32.mrb[0].mxu0
        %v2444 = vadd.f32 0.0, %v2443
        %v2445 = vpop.f32.mrb[0].mxu0
        %2446 = vmatprep.mubr.f32.mxu0 0.0
        %v2447 = vand.u32 %v2348, 4294901760
        %v2448 = vsub.f32 %v2348, %v2447
        %v2449 = vand.u32 %v2448, 4294901760
        %v2450 = vsub.f32 %v2448, %v2449
        %v2451 = vand.u32 %v2450, 4294901760
        %2452 = vmatmul.mubr.f32.gmra.mrb[0].mxu0 %v2451
        %v2453 = vpop.f32.mrb[0].mxu0
        %v2454 = vadd.f32 0.0, %v2453
        %v2455 = vpop.f32.mrb[0].mxu0
        %2456 = vmatprep.mubr.f32.mxu0 0.0
        %v2457 = vand.u32 %v2351, 4294901760
        %v2458 = vsub.f32 %v2351, %v2457
        %v2459 = vand.u32 %v2458, 4294901760
        %v2460 = vsub.f32 %v2458, %v2459
        %v2461 = vand.u32 %v2460, 4294901760
        %2462 = vmatmul.mubr.f32.gmra.mrb[0].mxu0 %v2461
        %v2463 = vpop.f32.mrb[0].mxu0
        %v2464 = vadd.f32 0.0, %v2463
        %v2465 = vpop.f32.mrb[0].mxu0
        %2466 = vmatprep.mubr.f32.mxu0 0.0
        %v2467 = vand.u32 %v2354, 4294901760
        %v2468 = vsub.f32 %v2354, %v2467
        %v2469 = vand.u32 %v2468, 4294901760
        %v2470 = vsub.f32 %v2468, %v2469
        %v2471 = vand.u32 %v2470, 4294901760
        %2472 = vmatmul.mubr.f32.gmra.mrb[0].mxu0 %v2471
        %v2473 = vpop.f32.mrb[0].mxu0
        %v2474 = vadd.f32 0.0, %v2473
        %v2475 = vpop.f32.mrb[0].mxu0
        %2476 = vmatprep.mubr.f32.mxu0 0.0
        %v2477 = vand.u32 %v2357, 4294901760
        %v2478 = vsub.f32 %v2357, %v2477
        %v2479 = vand.u32 %v2478, 4294901760
        %v2480 = vsub.f32 %v2478, %v2479
        %v2481 = vand.u32 %v2480, 4294901760
        %2482 = vmatmul.mubr.f32.gmra.mrb[0].mxu0 %v2481
        %v2483 = vpop.f32.mrb[0].mxu0
        %v2484 = vadd.f32 0.0, %v2483
        %v2485 = vpop.f32.mrb[0].mxu0
        %2486 = vmatprep.mubr.f32.mxu0 0.0
        %v2487 = vand.u32 %v2360, 4294901760
        %v2488 = vsub.f32 %v2360, %v2487
        %v2489 = vand.u32 %v2488, 4294901760
        %v2490 = vsub.f32 %v2488, %v2489
        %v2491 = vand.u32 %v2490, 4294901760
        %2492 = vmatmul.mubr.f32.gmra.mrb[0].mxu0 %v2491
        %v2493 = vpop.f32.mrb[0].mxu0
        %v2494 = vadd.f32 0.0, %v2493
        %v2495 = vpop.f32.mrb[0].mxu0
        %2496 = vmatprep.mubr.f32.mxu0 0.0
        %v2497 = vand.u32 %v2363, 4294901760
        %v2498 = vsub.f32 %v2363, %v2497
        %v2499 = vand.u32 %v2498, 4294901760
        %v2500 = vsub.f32 %v2498, %v2499
        %v2501 = vand.u32 %v2500, 4294901760
        %2502 = vmatmul.mubr.f32.gmra.mrb[0].mxu0 %v2501
        %v2503 = vpop.f32.mrb[0].mxu0
        %v2504 = vadd.f32 0.0, %v2503
        %v2505 = vpop.f32.mrb[0].mxu0
        %2506 = vmatprep.mubr.f32.mxu0 0.0
        %v2507 = vand.u32 %v2366, 4294901760
        %v2508 = vsub.f32 %v2366, %v2507
        %v2509 = vand.u32 %v2508, 4294901760
        %v2510 = vsub.f32 %v2508, %v2509
        %v2511 = vand.u32 %v2510, 4294901760
        %2512 = vmatmul.mubr.f32.gmra.mrb[0].mxu0 %v2511
        %v2513 = vpop.f32.mrb[0].mxu0
        %v2514 = vadd.f32 0.0, %v2513
        %v2515 = vpop.f32.mrb[0].mxu0
        %2516 = vdwg.mxu0
        %2517 = vmatprep.subr.mxu0 0.0
        %v2518 = vand.u32 %v2369, 4294901760
        %v2519 = vsub.f32 %v2369, %v2518
        %v2520 = vand.u32 %v2519, 4294901760
        %v2521 = vsub.f32 %v2519, %v2520
        %v2522 = vand.u32 %v2521, 4294901760
        %2523 = vmatpush1.xpose.msra.mxu0 %v2522
        %2524 = vmatprep.subr.mxu0 0.0
        %2525 = vmatpush1.xpose.msra.mxu0 0.0
        %2526 = vmatprep.subr.mxu0 0.0
        %2527 = vmatpush1.xpose.msra.mxu0 0.0
        %2528 = vmatprep.subr.mxu0 0.0
        %2529 = vmatpush1.xpose.msra.mxu0 0.0
        %2530 = vmatprep.subr.mxu0 0.0
        %2531 = vmatpush1.xpose.msra.mxu0 0.0
        %2532 = vmatprep.subr.mxu0 0.0
        %2533 = vmatpush1.xpose.msra.mxu0 0.0
        %2534 = vmatprep.subr.mxu0 0.0
        %2535 = vmatpush1.xpose.msra.mxu0 0.0
        %2536 = vmatprep.subr.mxu0 0.0
        %2537 = vmatpush1.xpose.msra.mxu0 0.0
        %2538 = vmatprep.subr.mxu0 0.0
        %2539 = vmatpush1.xpose.msra.mxu0 0.0
        %2540 = vmatprep.subr.mxu0 0.0
        %2541 = vmatpush1.xpose.msra.mxu0 0.0
        %2542 = vmatprep.subr.mxu0 0.0
        %2543 = vmatpush1.xpose.msra.mxu0 0.0
        %2544 = vmatprep.subr.mxu0 0.0
        %2545 = vmatpush1.xpose.msra.mxu0 0.0
        %2546 = vmatprep.subr.mxu0 0.0
        %2547 = vmatpush1.xpose.msra.mxu0 0.0
        %2548 = vmatprep.subr.mxu0 0.0
        %2549 = vmatpush1.xpose.msra.mxu0 0.0
        %2550 = vmatprep.subr.mxu0 0.0
        %2551 = vmatpush1.xpose.msra.mxu0 0.0
        %2552 = vmatprep.subr.mxu0 0.0
        %2553 = vmatpush1.xpose.msra.mxu0 0.0
        %2554 = vmatprep.subr.mxu0 0.0
        %2555 = vmatpush1.xpose.msra.mxu0 0.0
        %2556 = vmatprep.subr.mxu0 0.0
        %2557 = vmatpush1.xpose.msra.mxu0 0.0
        %2558 = vmatprep.subr.mxu0 0.0
        %2559 = vmatpush1.xpose.msra.mxu0 0.0
        %2560 = vmatprep.subr.mxu0 0.0
        %2561 = vmatpush1.xpose.msra.mxu0 0.0
        %2562 = vmatprep.subr.mxu0 0.0
        %2563 = vmatpush1.xpose.msra.mxu0 0.0
        %2564 = vmatprep.subr.mxu0 0.0
        %2565 = vmatpush1.xpose.msra.mxu0 0.0
        %2566 = vmatprep.subr.mxu0 0.0
        %2567 = vmatpush1.xpose.msra.mxu0 0.0
        %2568 = vmatprep.subr.mxu0 0.0
        %2569 = vmatpush1.xpose.msra.mxu0 0.0
        %2570 = vmatprep.subr.mxu0 0.0
        %2571 = vmatpush1.xpose.msra.mxu0 0.0
        %2572 = vmatprep.subr.mxu0 0.0
        %2573 = vmatpush1.xpose.msra.mxu0 0.0
        %2574 = vmatprep.subr.mxu0 0.0
        %2575 = vmatpush1.xpose.msra.mxu0 0.0
        %2576 = vmatprep.subr.mxu0 0.0
        %2577 = vmatpush1.xpose.msra.mxu0 0.0
        %2578 = vmatprep.subr.mxu0 0.0
        %2579 = vmatpush1.xpose.msra.mxu0 0.0
        %2580 = vmatprep.subr.mxu0 0.0
        %2581 = vmatpush1.xpose.msra.mxu0 0.0
        %2582 = vmatprep.subr.mxu0 0.0
        %2583 = vmatpush1.xpose.msra.mxu0 0.0
        %2584 = vmatprep.subr.mxu0 0.0
        %2585 = vmatpush1.xpose.msra.mxu0 0.0
        %2586 = vmatprep.mubr.f32.mxu0 0.0
        %v2587 = vand.u32 %v2345, 4294901760
        %2588 = vmatmul.mubr.f32.gmra.mrb[0].mxu0 %v2587
        %v2589 = vpop.f32.mrb[0].mxu0
        %v2590 = vadd.f32 %v2444, %v2589
        %v2591 = vpop.f32.mrb[0].mxu0
        %2592 = vmatprep.mubr.f32.mxu0 0.0
        %v2593 = vand.u32 %v2348, 4294901760
        %2594 = vmatmul.mubr.f32.gmra.mrb[0].mxu0 %v2593
        %v2595 = vpop.f32.mrb[0].mxu0
        %v2596 = vadd.f32 %v2454, %v2595
        %v2597 = vpop.f32.mrb[0].mxu0
        %2598 = vmatprep.mubr.f32.mxu0 0.0
        %v2599 = vand.u32 %v2351, 4294901760
        %2600 = vmatmul.mubr.f32.gmra.mrb[0].mxu0 %v2599
        %v2601 = vpop.f32.mrb[0].mxu0
        %v2602 = vadd.f32 %v2464, %v2601
        %v2603 = vpop.f32.mrb[0].mxu0
        %2604 = vmatprep.mubr.f32.mxu0 0.0
        %v2605 = vand.u32 %v2354, 4294901760
        %2606 = vmatmul.mubr.f32.gmra.mrb[0].mxu0 %v2605
        %v2607 = vpop.f32.mrb[0].mxu0
        %v2608 = vadd.f32 %v2474, %v2607
        %v2609 = vpop.f32.mrb[0].mxu0
        %2610 = vmatprep.mubr.f32.mxu0 0.0
        %v2611 = vand.u32 %v2357, 4294901760
        %2612 = vmatmul.mubr.f32.gmra.mrb[0].mxu0 %v2611
        %v2613 = vpop.f32.mrb[0].mxu0
        %v2614 = vadd.f32 %v2484, %v2613
        %v2615 = vpop.f32.mrb[0].mxu0
        %2616 = vmatprep.mubr.f32.mxu0 0.0
        %v2617 = vand.u32 %v2360, 4294901760
        %2618 = vmatmul.mubr.f32.gmra.mrb[0].mxu0 %v2617
        %v2619 = vpop.f32.mrb[0].mxu0
        %v2620 = vadd.f32 %v2494, %v2619
        %v2621 = vpop.f32.mrb[0].mxu0
        %2622 = vmatprep.mubr.f32.mxu0 0.0
        %v2623 = vand.u32 %v2363, 4294901760
        %2624 = vmatmul.mubr.f32.gmra.mrb[0].mxu0 %v2623
        %v2625 = vpop.f32.mrb[0].mxu0
        %v2626 = vadd.f32 %v2504, %v2625
        %v2627 = vpop.f32.mrb[0].mxu0
        %2628 = vmatprep.mubr.f32.mxu0 0.0
        %v2629 = vand.u32 %v2366, 4294901760
        %2630 = vmatmul.mubr.f32.gmra.mrb[0].mxu0 %v2629
        %v2631 = vpop.f32.mrb[0].mxu0
        %v2632 = vadd.f32 %v2514, %v2631
        %v2633 = vpop.f32.mrb[0].mxu0
        %2634 = vdwg.mxu0
        %2635 = vmatprep.subr.mxu0 0.0
        %v2636 = vand.u32 %v2369, 4294901760
        %v2637 = vsub.f32 %v2369, %v2636
        %2638 = vmatpush1.xpose.msra.mxu0 %v2637
        %2639 = vmatprep.subr.mxu0 0.0
        %2640 = vmatpush1.xpose.msra.mxu0 0.0
        %2641 = vmatprep.subr.mxu0 0.0
        %2642 = vmatpush1.xpose.msra.mxu0 0.0
        %2643 = vmatprep.subr.mxu0 0.0
        %2644 = vmatpush1.xpose.msra.mxu0 0.0
        %2645 = vmatprep.subr.mxu0 0.0
        %2646 = vmatpush1.xpose.msra.mxu0 0.0
        %2647 = vmatprep.subr.mxu0 0.0
        %2648 = vmatpush1.xpose.msra.mxu0 0.0
        %2649 = vmatprep.subr.mxu0 0.0
        %2650 = vmatpush1.xpose.msra.mxu0 0.0
        %2651 = vmatprep.subr.mxu0 0.0
        %2652 = vmatpush1.xpose.msra.mxu0 0.0
        %2653 = vmatprep.subr.mxu0 0.0
        %2654 = vmatpush1.xpose.msra.mxu0 0.0
        %2655 = vmatprep.subr.mxu0 0.0
        %2656 = vmatpush1.xpose.msra.mxu0 0.0
        %2657 = vmatprep.subr.mxu0 0.0
        %2658 = vmatpush1.xpose.msra.mxu0 0.0
        %2659 = vmatprep.subr.mxu0 0.0
        %2660 = vmatpush1.xpose.msra.mxu0 0.0
        %2661 = vmatprep.subr.mxu0 0.0
        %2662 = vmatpush1.xpose.msra.mxu0 0.0
        %2663 = vmatprep.subr.mxu0 0.0
        %2664 = vmatpush1.xpose.msra.mxu0 0.0
        %2665 = vmatprep.subr.mxu0 0.0
        %2666 = vmatpush1.xpose.msra.mxu0 0.0
        %2667 = vmatprep.subr.mxu0 0.0
        %2668 = vmatpush1.xpose.msra.mxu0 0.0
        %2669 = vmatprep.subr.mxu0 0.0
        %2670 = vmatpush1.xpose.msra.mxu0 0.0
        %2671 = vmatprep.subr.mxu0 0.0
        %2672 = vmatpush1.xpose.msra.mxu0 0.0
        %2673 = vmatprep.subr.mxu0 0.0
        %2674 = vmatpush1.xpose.msra.mxu0 0.0
        %2675 = vmatprep.subr.mxu0 0.0
        %2676 = vmatpush1.xpose.msra.mxu0 0.0
        %2677 = vmatprep.subr.mxu0 0.0
        %2678 = vmatpush1.xpose.msra.mxu0 0.0
        %2679 = vmatprep.subr.mxu0 0.0
        %2680 = vmatpush1.xpose.msra.mxu0 0.0
        %2681 = vmatprep.subr.mxu0 0.0
        %2682 = vmatpush1.xpose.msra.mxu0 0.0
        %2683 = vmatprep.subr.mxu0 0.0
        %2684 = vmatpush1.xpose.msra.mxu0 0.0
        %2685 = vmatprep.subr.mxu0 0.0
        %2686 = vmatpush1.xpose.msra.mxu0 0.0
        %2687 = vmatprep.subr.mxu0 0.0
        %2688 = vmatpush1.xpose.msra.mxu0 0.0
        %2689 = vmatprep.subr.mxu0 0.0
        %2690 = vmatpush1.xpose.msra.mxu0 0.0
        %2691 = vmatprep.subr.mxu0 0.0
        %2692 = vmatpush1.xpose.msra.mxu0 0.0
        %2693 = vmatprep.subr.mxu0 0.0
        %2694 = vmatpush1.xpose.msra.mxu0 0.0
        %2695 = vmatprep.subr.mxu0 0.0
        %2696 = vmatpush1.xpose.msra.mxu0 0.0
        %2697 = vmatprep.subr.mxu0 0.0
        %2698 = vmatpush1.xpose.msra.mxu0 0.0
        %2699 = vmatprep.subr.mxu0 0.0
        %2700 = vmatpush1.xpose.msra.mxu0 0.0
        %2701 = vmatprep.mubr.f32.mxu0 0.0
        %v2702 = vand.u32 %v2345, 4294901760
        %v2703 = vsub.f32 %v2345, %v2702
        %2704 = vmatmul.mubr.f32.gmra.mrb[0].mxu0 %v2703
        %v2705 = vpop.f32.mrb[0].mxu0
        %v2706 = vadd.f32 %v2590, %v2705
        %v2707 = vpop.f32.mrb[0].mxu0
        %2708 = vmatprep.mubr.f32.mxu0 0.0
        %v2709 = vand.u32 %v2348, 4294901760
        %v2710 = vsub.f32 %v2348, %v2709
        %2711 = vmatmul.mubr.f32.gmra.mrb[0].mxu0 %v2710
        %v2712 = vpop.f32.mrb[0].mxu0
        %v2713 = vadd.f32 %v2596, %v2712
        %v2714 = vpop.f32.mrb[0].mxu0
        %2715 = vmatprep.mubr.f32.mxu0 0.0
        %v2716 = vand.u32 %v2351, 4294901760
        %v2717 = vsub.f32 %v2351, %v2716
        %2718 = vmatmul.mubr.f32.gmra.mrb[0].mxu0 %v2717
        %v2719 = vpop.f32.mrb[0].mxu0
        %v2720 = vadd.f32 %v2602, %v2719
        %v2721 = vpop.f32.mrb[0].mxu0
        %2722 = vmatprep.mubr.f32.mxu0 0.0
        %v2723 = vand.u32 %v2354, 4294901760
        %v2724 = vsub.f32 %v2354, %v2723
        %2725 = vmatmul.mubr.f32.gmra.mrb[0].mxu0 %v2724
        %v2726 = vpop.f32.mrb[0].mxu0
        %v2727 = vadd.f32 %v2608, %v2726
        %v2728 = vpop.f32.mrb[0].mxu0
        %2729 = vmatprep.mubr.f32.mxu0 0.0
        %v2730 = vand.u32 %v2357, 4294901760
        %v2731 = vsub.f32 %v2357, %v2730
        %2732 = vmatmul.mubr.f32.gmra.mrb[0].mxu0 %v2731
        %v2733 = vpop.f32.mrb[0].mxu0
        %v2734 = vadd.f32 %v2614, %v2733
        %v2735 = vpop.f32.mrb[0].mxu0
        %2736 = vmatprep.mubr.f32.mxu0 0.0
        %v2737 = vand.u32 %v2360, 4294901760
        %v2738 = vsub.f32 %v2360, %v2737
        %2739 = vmatmul.mubr.f32.gmra.mrb[0].mxu0 %v2738
        %v2740 = vpop.f32.mrb[0].mxu0
        %v2741 = vadd.f32 %v2620, %v2740
        %v2742 = vpop.f32.mrb[0].mxu0
        %2743 = vmatprep.mubr.f32.mxu0 0.0
        %v2744 = vand.u32 %v2363, 4294901760
        %v2745 = vsub.f32 %v2363, %v2744
        %2746 = vmatmul.mubr.f32.gmra.mrb[0].mxu0 %v2745
        %v2747 = vpop.f32.mrb[0].mxu0
        %v2748 = vadd.f32 %v2626, %v2747
        %v2749 = vpop.f32.mrb[0].mxu0
        %2750 = vmatprep.mubr.f32.mxu0 0.0
        %v2751 = vand.u32 %v2366, 4294901760
        %v2752 = vsub.f32 %v2366, %v2751
        %2753 = vmatmul.mubr.f32.gmra.mrb[0].mxu0 %v2752
        %v2754 = vpop.f32.mrb[0].mxu0
        %v2755 = vadd.f32 %v2632, %v2754
        %v2756 = vpop.f32.mrb[0].mxu0
        %2757 = vdwg.mxu0
        %2758 = vmatprep.subr.mxu0 0.0
        %v2759 = vand.u32 %v2369, 4294901760
        %2760 = vmatpush1.xpose.msra.mxu0 %v2759
        %2761 = vmatprep.subr.mxu0 0.0
        %2762 = vmatpush1.xpose.msra.mxu0 0.0
        %2763 = vmatprep.subr.mxu0 0.0
        %2764 = vmatpush1.xpose.msra.mxu0 0.0
        %2765 = vmatprep.subr.mxu0 0.0
        %2766 = vmatpush1.xpose.msra.mxu0 0.0
        %2767 = vmatprep.subr.mxu0 0.0
        %2768 = vmatpush1.xpose.msra.mxu0 0.0
        %2769 = vmatprep.subr.mxu0 0.0
        %2770 = vmatpush1.xpose.msra.mxu0 0.0
        %2771 = vmatprep.subr.mxu0 0.0
        %2772 = vmatpush1.xpose.msra.mxu0 0.0
        %2773 = vmatprep.subr.mxu0 0.0
        %2774 = vmatpush1.xpose.msra.mxu0 0.0
        %2775 = vmatprep.subr.mxu0 0.0
        %2776 = vmatpush1.xpose.msra.mxu0 0.0
        %2777 = vmatprep.subr.mxu0 0.0
        %2778 = vmatpush1.xpose.msra.mxu0 0.0
        %2779 = vmatprep.subr.mxu0 0.0
        %2780 = vmatpush1.xpose.msra.mxu0 0.0
        %2781 = vmatprep.subr.mxu0 0.0
        %2782 = vmatpush1.xpose.msra.mxu0 0.0
        %2783 = vmatprep.subr.mxu0 0.0
        %2784 = vmatpush1.xpose.msra.mxu0 0.0
        %2785 = vmatprep.subr.mxu0 0.0
        %2786 = vmatpush1.xpose.msra.mxu0 0.0
        %2787 = vmatprep.subr.mxu0 0.0
        %2788 = vmatpush1.xpose.msra.mxu0 0.0
        %2789 = vmatprep.subr.mxu0 0.0
        %2790 = vmatpush1.xpose.msra.mxu0 0.0
        %2791 = vmatprep.subr.mxu0 0.0
        %2792 = vmatpush1.xpose.msra.mxu0 0.0
        %2793 = vmatprep.subr.mxu0 0.0
        %2794 = vmatpush1.xpose.msra.mxu0 0.0
        %2795 = vmatprep.subr.mxu0 0.0
        %2796 = vmatpush1.xpose.msra.mxu0 0.0
        %2797 = vmatprep.subr.mxu0 0.0
        %2798 = vmatpush1.xpose.msra.mxu0 0.0
        %2799 = vmatprep.subr.mxu0 0.0
        %2800 = vmatpush1.xpose.msra.mxu0 0.0
        %2801 = vmatprep.subr.mxu0 0.0
        %2802 = vmatpush1.xpose.msra.mxu0 0.0
        %2803 = vmatprep.subr.mxu0 0.0
        %2804 = vmatpush1.xpose.msra.mxu0 0.0
        %2805 = vmatprep.subr.mxu0 0.0
        %2806 = vmatpush1.xpose.msra.mxu0 0.0
        %2807 = vmatprep.subr.mxu0 0.0
        %2808 = vmatpush1.xpose.msra.mxu0 0.0
        %2809 = vmatprep.subr.mxu0 0.0
        %2810 = vmatpush1.xpose.msra.mxu0 0.0
        %2811 = vmatprep.subr.mxu0 0.0
        %2812 = vmatpush1.xpose.msra.mxu0 0.0
        %2813 = vmatprep.subr.mxu0 0.0
        %2814 = vmatpush1.xpose.msra.mxu0 0.0
        %2815 = vmatprep.subr.mxu0 0.0
        %2816 = vmatpush1.xpose.msra.mxu0 0.0
        %2817 = vmatprep.subr.mxu0 0.0
        %2818 = vmatpush1.xpose.msra.mxu0 0.0
        %2819 = vmatprep.subr.mxu0 0.0
        %2820 = vmatpush1.xpose.msra.mxu0 0.0
        %2821 = vmatprep.subr.mxu0 0.0
        %2822 = vmatpush1.xpose.msra.mxu0 0.0
        %2823 = vmatprep.mubr.f32.mxu0 0.0
        %v2824 = vand.u32 %v2345, 4294901760
        %v2825 = vsub.f32 %v2345, %v2824
        %v2826 = vand.u32 %v2825, 4294901760
        %2827 = vmatmul.mubr.f32.gmra.mrb[0].mxu0 %v2826
        %v2828 = vpop.f32.mrb[0].mxu0
        %v2829 = vadd.f32 %v2706, %v2828
        %v2830 = vpop.f32.mrb[0].mxu0
        %2831 = vmatprep.mubr.f32.mxu0 0.0
        %v2832 = vand.u32 %v2348, 4294901760
        %v2833 = vsub.f32 %v2348, %v2832
        %v2834 = vand.u32 %v2833, 4294901760
        %2835 = vmatmul.mubr.f32.gmra.mrb[0].mxu0 %v2834
        %v2836 = vpop.f32.mrb[0].mxu0
        %v2837 = vadd.f32 %v2713, %v2836
        %v2838 = vpop.f32.mrb[0].mxu0
        %2839 = vmatprep.mubr.f32.mxu0 0.0
        %v2840 = vand.u32 %v2351, 4294901760
        %v2841 = vsub.f32 %v2351, %v2840
        %v2842 = vand.u32 %v2841, 4294901760
        %2843 = vmatmul.mubr.f32.gmra.mrb[0].mxu0 %v2842
        %v2844 = vpop.f32.mrb[0].mxu0
        %v2845 = vadd.f32 %v2720, %v2844
        %v2846 = vpop.f32.mrb[0].mxu0
        %2847 = vmatprep.mubr.f32.mxu0 0.0
        %v2848 = vand.u32 %v2354, 4294901760
        %v2849 = vsub.f32 %v2354, %v2848
        %v2850 = vand.u32 %v2849, 4294901760
        %2851 = vmatmul.mubr.f32.gmra.mrb[0].mxu0 %v2850
        %v2852 = vpop.f32.mrb[0].mxu0
        %v2853 = vadd.f32 %v2727, %v2852
        %v2854 = vpop.f32.mrb[0].mxu0
        %2855 = vmatprep.mubr.f32.mxu0 0.0
        %v2856 = vand.u32 %v2357, 4294901760
        %v2857 = vsub.f32 %v2357, %v2856
        %v2858 = vand.u32 %v2857, 4294901760
        %2859 = vmatmul.mubr.f32.gmra.mrb[0].mxu0 %v2858
        %v2860 = vpop.f32.mrb[0].mxu0
        %v2861 = vadd.f32 %v2734, %v2860
        %v2862 = vpop.f32.mrb[0].mxu0
        %2863 = vmatprep.mubr.f32.mxu0 0.0
        %v2864 = vand.u32 %v2360, 4294901760
        %v2865 = vsub.f32 %v2360, %v2864
        %v2866 = vand.u32 %v2865, 4294901760
        %2867 = vmatmul.mubr.f32.gmra.mrb[0].mxu0 %v2866
        %v2868 = vpop.f32.mrb[0].mxu0
        %v2869 = vadd.f32 %v2741, %v2868
        %v2870 = vpop.f32.mrb[0].mxu0
        %2871 = vmatprep.mubr.f32.mxu0 0.0
        %v2872 = vand.u32 %v2363, 4294901760
        %v2873 = vsub.f32 %v2363, %v2872
        %v2874 = vand.u32 %v2873, 4294901760
        %2875 = vmatmul.mubr.f32.gmra.mrb[0].mxu0 %v2874
        %v2876 = vpop.f32.mrb[0].mxu0
        %v2877 = vadd.f32 %v2748, %v2876
        %v2878 = vpop.f32.mrb[0].mxu0
        %2879 = vmatprep.mubr.f32.mxu0 0.0
        %v2880 = vand.u32 %v2366, 4294901760
        %v2881 = vsub.f32 %v2366, %v2880
        %v2882 = vand.u32 %v2881, 4294901760
        %2883 = vmatmul.mubr.f32.gmra.mrb[0].mxu0 %v2882
        %v2884 = vpop.f32.mrb[0].mxu0
        %v2885 = vadd.f32 %v2755, %v2884
        %v2886 = vpop.f32.mrb[0].mxu0
        %2887 = vdwg.mxu0
        %2888 = vmatprep.subr.mxu0 0.0
        %v2889 = vand.u32 %v2369, 4294901760
        %v2890 = vsub.f32 %v2369, %v2889
        %v2891 = vand.u32 %v2890, 4294901760
        %2892 = vmatpush1.xpose.msra.mxu0 %v2891
        %2893 = vmatprep.subr.mxu0 0.0
        %2894 = vmatpush1.xpose.msra.mxu0 0.0
        %2895 = vmatprep.subr.mxu0 0.0
        %2896 = vmatpush1.xpose.msra.mxu0 0.0
        %2897 = vmatprep.subr.mxu0 0.0
        %2898 = vmatpush1.xpose.msra.mxu0 0.0
        %2899 = vmatprep.subr.mxu0 0.0
        %2900 = vmatpush1.xpose.msra.mxu0 0.0
        %2901 = vmatprep.subr.mxu0 0.0
        %2902 = vmatpush1.xpose.msra.mxu0 0.0
        %2903 = vmatprep.subr.mxu0 0.0
        %2904 = vmatpush1.xpose.msra.mxu0 0.0
        %2905 = vmatprep.subr.mxu0 0.0
        %2906 = vmatpush1.xpose.msra.mxu0 0.0
        %2907 = vmatprep.subr.mxu0 0.0
        %2908 = vmatpush1.xpose.msra.mxu0 0.0
        %2909 = vmatprep.subr.mxu0 0.0
        %2910 = vmatpush1.xpose.msra.mxu0 0.0
        %2911 = vmatprep.subr.mxu0 0.0
        %2912 = vmatpush1.xpose.msra.mxu0 0.0
        %2913 = vmatprep.subr.mxu0 0.0
        %2914 = vmatpush1.xpose.msra.mxu0 0.0
        %2915 = vmatprep.subr.mxu0 0.0
        %2916 = vmatpush1.xpose.msra.mxu0 0.0
        %2917 = vmatprep.subr.mxu0 0.0
        %2918 = vmatpush1.xpose.msra.mxu0 0.0
        %2919 = vmatprep.subr.mxu0 0.0
        %2920 = vmatpush1.xpose.msra.mxu0 0.0
        %2921 = vmatprep.subr.mxu0 0.0
        %2922 = vmatpush1.xpose.msra.mxu0 0.0
        %2923 = vmatprep.subr.mxu0 0.0
        %2924 = vmatpush1.xpose.msra.mxu0 0.0
        %2925 = vmatprep.subr.mxu0 0.0
        %2926 = vmatpush1.xpose.msra.mxu0 0.0
        %2927 = vmatprep.subr.mxu0 0.0
        %2928 = vmatpush1.xpose.msra.mxu0 0.0
        %2929 = vmatprep.subr.mxu0 0.0
        %2930 = vmatpush1.xpose.msra.mxu0 0.0
        %2931 = vmatprep.subr.mxu0 0.0
        %2932 = vmatpush1.xpose.msra.mxu0 0.0
        %2933 = vmatprep.subr.mxu0 0.0
        %2934 = vmatpush1.xpose.msra.mxu0 0.0
        %2935 = vmatprep.subr.mxu0 0.0
        %2936 = vmatpush1.xpose.msra.mxu0 0.0
        %2937 = vmatprep.subr.mxu0 0.0
        %2938 = vmatpush1.xpose.msra.mxu0 0.0
        %2939 = vmatprep.subr.mxu0 0.0
        %2940 = vmatpush1.xpose.msra.mxu0 0.0
        %2941 = vmatprep.subr.mxu0 0.0
        %2942 = vmatpush1.xpose.msra.mxu0 0.0
        %2943 = vmatprep.subr.mxu0 0.0
        %2944 = vmatpush1.xpose.msra.mxu0 0.0
        %2945 = vmatprep.subr.mxu0 0.0
        %2946 = vmatpush1.xpose.msra.mxu0 0.0
        %2947 = vmatprep.subr.mxu0 0.0
        %2948 = vmatpush1.xpose.msra.mxu0 0.0
        %2949 = vmatprep.subr.mxu0 0.0
        %2950 = vmatpush1.xpose.msra.mxu0 0.0
        %2951 = vmatprep.subr.mxu0 0.0
        %2952 = vmatpush1.xpose.msra.mxu0 0.0
        %2953 = vmatprep.subr.mxu0 0.0
        %2954 = vmatpush1.xpose.msra.mxu0 0.0
        %2955 = vmatprep.mubr.f32.mxu0 0.0
        %v2956 = vand.u32 %v2345, 4294901760
        %2957 = vmatmul.mubr.f32.gmra.mrb[0].mxu0 %v2956
        %v2958 = vpop.f32.mrb[0].mxu0
        %v2959 = vadd.f32 %v2829, %v2958
        %v2960 = vpop.f32.mrb[0].mxu0
        %2961 = vmatprep.mubr.f32.mxu0 0.0
        %v2962 = vand.u32 %v2348, 4294901760
        %2963 = vmatmul.mubr.f32.gmra.mrb[0].mxu0 %v2962
        %v2964 = vpop.f32.mrb[0].mxu0
        %v2965 = vadd.f32 %v2837, %v2964
        %v2966 = vpop.f32.mrb[0].mxu0
        %2967 = vmatprep.mubr.f32.mxu0 0.0
        %v2968 = vand.u32 %v2351, 4294901760
        %2969 = vmatmul.mubr.f32.gmra.mrb[0].mxu0 %v2968
        %v2970 = vpop.f32.mrb[0].mxu0
        %v2971 = vadd.f32 %v2845, %v2970
        %v2972 = vpop.f32.mrb[0].mxu0
        %2973 = vmatprep.mubr.f32.mxu0 0.0
        %v2974 = vand.u32 %v2354, 4294901760
        %2975 = vmatmul.mubr.f32.gmra.mrb[0].mxu0 %v2974
        %v2976 = vpop.f32.mrb[0].mxu0
        %v2977 = vadd.f32 %v2853, %v2976
        %v2978 = vpop.f32.mrb[0].mxu0
        %2979 = vmatprep.mubr.f32.mxu0 0.0
        %v2980 = vand.u32 %v2357, 4294901760
        %2981 = vmatmul.mubr.f32.gmra.mrb[0].mxu0 %v2980
        %v2982 = vpop.f32.mrb[0].mxu0
        %v2983 = vadd.f32 %v2861, %v2982
        %v2984 = vpop.f32.mrb[0].mxu0
        %2985 = vmatprep.mubr.f32.mxu0 0.0
        %v2986 = vand.u32 %v2360, 4294901760
        %2987 = vmatmul.mubr.f32.gmra.mrb[0].mxu0 %v2986
        %v2988 = vpop.f32.mrb[0].mxu0
        %v2989 = vadd.f32 %v2869, %v2988
        %v2990 = vpop.f32.mrb[0].mxu0
        %2991 = vmatprep.mubr.f32.mxu0 0.0
        %v2992 = vand.u32 %v2363, 4294901760
        %2993 = vmatmul.mubr.f32.gmra.mrb[0].mxu0 %v2992
        %v2994 = vpop.f32.mrb[0].mxu0
        %v2995 = vadd.f32 %v2877, %v2994
        %v2996 = vpop.f32.mrb[0].mxu0
        %2997 = vmatprep.mubr.f32.mxu0 0.0
        %v2998 = vand.u32 %v2366, 4294901760
        %2999 = vmatmul.mubr.f32.gmra.mrb[0].mxu0 %v2998
        %v3000 = vpop.f32.mrb[0].mxu0
        %v3001 = vadd.f32 %v2885, %v3000
        %v3002 = vpop.f32.mrb[0].mxu0
        %3003 = vdwg.mxu0
        %3004 = vmatprep.subr.mxu0 0.0
        %v3005 = vand.u32 %v2369, 4294901760
        %3006 = vmatpush1.xpose.msra.mxu0 %v3005
        %3007 = vmatprep.subr.mxu0 0.0
        %3008 = vmatpush1.xpose.msra.mxu0 0.0
        %3009 = vmatprep.subr.mxu0 0.0
        %3010 = vmatpush1.xpose.msra.mxu0 0.0
        %3011 = vmatprep.subr.mxu0 0.0
        %3012 = vmatpush1.xpose.msra.mxu0 0.0
        %3013 = vmatprep.subr.mxu0 0.0
        %3014 = vmatpush1.xpose.msra.mxu0 0.0
        %3015 = vmatprep.subr.mxu0 0.0
        %3016 = vmatpush1.xpose.msra.mxu0 0.0
        %3017 = vmatprep.subr.mxu0 0.0
        %3018 = vmatpush1.xpose.msra.mxu0 0.0
        %3019 = vmatprep.subr.mxu0 0.0
        %3020 = vmatpush1.xpose.msra.mxu0 0.0
        %3021 = vmatprep.subr.mxu0 0.0
        %3022 = vmatpush1.xpose.msra.mxu0 0.0
        %3023 = vmatprep.subr.mxu0 0.0
        %3024 = vmatpush1.xpose.msra.mxu0 0.0
        %3025 = vmatprep.subr.mxu0 0.0
        %3026 = vmatpush1.xpose.msra.mxu0 0.0
        %3027 = vmatprep.subr.mxu0 0.0
        %3028 = vmatpush1.xpose.msra.mxu0 0.0
        %3029 = vmatprep.subr.mxu0 0.0
        %3030 = vmatpush1.xpose.msra.mxu0 0.0
        %3031 = vmatprep.subr.mxu0 0.0
        %3032 = vmatpush1.xpose.msra.mxu0 0.0
        %3033 = vmatprep.subr.mxu0 0.0
        %3034 = vmatpush1.xpose.msra.mxu0 0.0
        %3035 = vmatprep.subr.mxu0 0.0
        %3036 = vmatpush1.xpose.msra.mxu0 0.0
        %3037 = vmatprep.subr.mxu0 0.0
        %3038 = vmatpush1.xpose.msra.mxu0 0.0
        %3039 = vmatprep.subr.mxu0 0.0
        %3040 = vmatpush1.xpose.msra.mxu0 0.0
        %3041 = vmatprep.subr.mxu0 0.0
        %3042 = vmatpush1.xpose.msra.mxu0 0.0
        %3043 = vmatprep.subr.mxu0 0.0
        %3044 = vmatpush1.xpose.msra.mxu0 0.0
        %3045 = vmatprep.subr.mxu0 0.0
        %3046 = vmatpush1.xpose.msra.mxu0 0.0
        %3047 = vmatprep.subr.mxu0 0.0
        %3048 = vmatpush1.xpose.msra.mxu0 0.0
        %3049 = vmatprep.subr.mxu0 0.0
        %3050 = vmatpush1.xpose.msra.mxu0 0.0
        %3051 = vmatprep.subr.mxu0 0.0
        %3052 = vmatpush1.xpose.msra.mxu0 0.0
        %3053 = vmatprep.subr.mxu0 0.0
        %3054 = vmatpush1.xpose.msra.mxu0 0.0
        %3055 = vmatprep.subr.mxu0 0.0
        %3056 = vmatpush1.xpose.msra.mxu0 0.0
        %3057 = vmatprep.subr.mxu0 0.0
        %3058 = vmatpush1.xpose.msra.mxu0 0.0
        %3059 = vmatprep.subr.mxu0 0.0
        %3060 = vmatpush1.xpose.msra.mxu0 0.0
        %3061 = vmatprep.subr.mxu0 0.0
        %3062 = vmatpush1.xpose.msra.mxu0 0.0
        %3063 = vmatprep.subr.mxu0 0.0
        %3064 = vmatpush1.xpose.msra.mxu0 0.0
        %3065 = vmatprep.subr.mxu0 0.0
        %3066 = vmatpush1.xpose.msra.mxu0 0.0
        %3067 = vmatprep.subr.mxu0 0.0
        %3068 = vmatpush1.xpose.msra.mxu0 0.0
        %3069 = vmatprep.mubr.f32.mxu0 0.0
        %v3070 = vand.u32 %v2345, 4294901760
        %3071 = vmatmul.mubr.f32.gmra.mrb[0].mxu0 %v3070
        %v3072 = vpop.f32.mrb[0].mxu0
        %v3073 = vadd.f32 %v2959, %v3072
        %v3074 = vpop.f32.mrb[0].mxu0
        %3075 = vmatprep.mubr.f32.mxu0 0.0
        %v3076 = vand.u32 %v2348, 4294901760
        %3077 = vmatmul.mubr.f32.gmra.mrb[0].mxu0 %v3076
        %v3078 = vpop.f32.mrb[0].mxu0
        %v3079 = vadd.f32 %v2965, %v3078
        %v3080 = vpop.f32.mrb[0].mxu0
        %3081 = vmatprep.mubr.f32.mxu0 0.0
        %v3082 = vand.u32 %v2351, 4294901760
        %3083 = vmatmul.mubr.f32.gmra.mrb[0].mxu0 %v3082
        %v3084 = vpop.f32.mrb[0].mxu0
        %v3085 = vadd.f32 %v2971, %v3084
        %v3086 = vpop.f32.mrb[0].mxu0
        %3087 = vmatprep.mubr.f32.mxu0 0.0
        %v3088 = vand.u32 %v2354, 4294901760
        %3089 = vmatmul.mubr.f32.gmra.mrb[0].mxu0 %v3088
        %v3090 = vpop.f32.mrb[0].mxu0
        %v3091 = vadd.f32 %v2977, %v3090
        %v3092 = vpop.f32.mrb[0].mxu0
        %3093 = vmatprep.mubr.f32.mxu0 0.0
        %v3094 = vand.u32 %v2357, 4294901760
        %3095 = vmatmul.mubr.f32.gmra.mrb[0].mxu0 %v3094
        %v3096 = vpop.f32.mrb[0].mxu0
        %v3097 = vadd.f32 %v2983, %v3096
        %v3098 = vpop.f32.mrb[0].mxu0
        %3099 = vmatprep.mubr.f32.mxu0 0.0
        %v3100 = vand.u32 %v2360, 4294901760
        %3101 = vmatmul.mubr.f32.gmra.mrb[0].mxu0 %v3100
        %v3102 = vpop.f32.mrb[0].mxu0
        %v3103 = vadd.f32 %v2989, %v3102
        %v3104 = vpop.f32.mrb[0].mxu0
        %3105 = vmatprep.mubr.f32.mxu0 0.0
        %v3106 = vand.u32 %v2363, 4294901760
        %3107 = vmatmul.mubr.f32.gmra.mrb[0].mxu0 %v3106
        %v3108 = vpop.f32.mrb[0].mxu0
        %v3109 = vadd.f32 %v2995, %v3108
        %v3110 = vpop.f32.mrb[0].mxu0
        %3111 = vmatprep.mubr.f32.mxu0 0.0
        %v3112 = vand.u32 %v2366, 4294901760
        %3113 = vmatmul.mubr.f32.gmra.mrb[0].mxu0 %v3112
        %v3114 = vpop.f32.mrb[0].mxu0
        %v3115 = vadd.f32 %v3001, %v3114
        %v3116 = vpop.f32.mrb[0].mxu0
        %3117 = vdwg.mxu0
        %v3118 = vsel %vm390, %v3073, -inf
        %3119 = vmax.xlane.f32.xlu0 %v3118
        %v3120 = vpop.xlane.xlu0 %3119
        %v3121 = vsel %vm390, %v3079, -inf
        %3122 = vmax.xlane.f32.xlu0 %v3121
        %v3123 = vpop.xlane.xlu0 %3122
        %v3124 = vsel %vm390, %v3085, -inf
        %3125 = vmax.xlane.f32.xlu0 %v3124
        %v3126 = vpop.xlane.xlu0 %3125
        %v3127 = vsel %vm390, %v3091, -inf
        %3128 = vmax.xlane.f32.xlu0 %v3127
        %v3129 = vpop.xlane.xlu0 %3128
        %v3130 = vsel %vm390, %v3097, -inf
        %3131 = vmax.xlane.f32.xlu0 %v3130
        %v3132 = vpop.xlane.xlu0 %3131
        %v3133 = vsel %vm390, %v3103, -inf
        %3134 = vmax.xlane.f32.xlu0 %v3133
        %v3135 = vpop.xlane.xlu0 %3134
        %v3136 = vsel %vm390, %v3109, -inf
        %3137 = vmax.xlane.f32.xlu0 %v3136
        %v3138 = vpop.xlane.xlu0 %3137
        %v3139 = vsel %vm390, %v3115, -inf
        %3140 = vmax.xlane.f32.xlu0 %v3139
        %v3141 = vpop.xlane.xlu0 %3140
        %v3142 = vsub.f32 %v3073, %v3120
        %v3143 = vsub.f32 %v3079, %v3123
        %v3144 = vsub.f32 %v3085, %v3126
        %v3145 = vsub.f32 %v3091, %v3129
        %v3146 = vsub.f32 %v3097, %v3132
        %v3147 = vsub.f32 %v3103, %v3135
        %v3148 = vsub.f32 %v3109, %v3138
        %v3149 = vsub.f32 %v3115, %v3141
        %v3150 = vmul.f32 %v3142, 1.442695
        %v3151 = vpow.pop %v3150
        %v3152 = vmul.f32 %v3143, 1.442695
        %v3153 = vpow.pop %v3152
        %v3154 = vmul.f32 %v3144, 1.442695
        %v3155 = vpow.pop %v3154
        %v3156 = vmul.f32 %v3145, 1.442695
        %v3157 = vpow.pop %v3156
        %v3158 = vmul.f32 %v3146, 1.442695
        %v3159 = vpow.pop %v3158
        %v3160 = vmul.f32 %v3147, 1.442695
        %v3161 = vpow.pop %v3160
        %v3162 = vmul.f32 %v3148, 1.442695
        %v3163 = vpow.pop %v3162
        %v3164 = vmul.f32 %v3149, 1.442695
        %v3165 = vpow.pop %v3164
        %v3166 = vsel %vm390, %v3151, 0.0
        %3167 = vadd.xlane.f32.xlu0 %v3166
        %v3168 = vpop.xlane.xlu0 %3167
        %v3169 = vsel %vm390, %v3153, 0.0
        %3170 = vadd.xlane.f32.xlu0 %v3169
        %v3171 = vpop.xlane.xlu0 %3170
        %v3172 = vsel %vm390, %v3155, 0.0
        %3173 = vadd.xlane.f32.xlu0 %v3172
        %v3174 = vpop.xlane.xlu0 %3173
        %v3175 = vsel %vm390, %v3157, 0.0
        %3176 = vadd.xlane.f32.xlu0 %v3175
        %v3177 = vpop.xlane.xlu0 %3176
        %v3178 = vsel %vm390, %v3159, 0.0
        %3179 = vadd.xlane.f32.xlu0 %v3178
        %v3180 = vpop.xlane.xlu0 %3179
        %v3181 = vsel %vm390, %v3161, 0.0
        %3182 = vadd.xlane.f32.xlu0 %v3181
        %v3183 = vpop.xlane.xlu0 %3182
        %v3184 = vsel %vm390, %v3163, 0.0
        %3185 = vadd.xlane.f32.xlu0 %v3184
        %v3186 = vpop.xlane.xlu0 %3185
        %v3187 = vsel %vm390, %v3165, 0.0
        %3188 = vadd.xlane.f32.xlu0 %v3187
        %v3189 = vpop.xlane.xlu0 %3188
        %v3190 = vrcp.pop %v3168
        %v3191 = vrcp.pop %v3171
        %v3192 = vrcp.pop %v3174
        %v3193 = vrcp.pop %v3177
        %v3194 = vrcp.pop %v3180
        %v3195 = vrcp.pop %v3183
        %v3196 = vrcp.pop %v3186
        %v3197 = vrcp.pop %v3189
        %v3198 = vmul.f32 %v3151, %v3190
        %v3199 = vmul.f32 %v3153, %v3191
        %v3200 = vmul.f32 %v3155, %v3192
        %v3201 = vmul.f32 %v3157, %v3193
        %v3202 = vmul.f32 %v3159, %v3194
        %v3203 = vmul.f32 %v3161, %v3195
        %v3204 = vmul.f32 %v3163, %v3196
        %v3205 = vmul.f32 %v3165, %v3197
        %v3206 = vadd.f32 %v3198, %v2325
        %v3207 = vadd.f32 %v3199, %v2326
        %v3208 = vadd.f32 %v3200, %v2327
        %v3209 = vadd.f32 %v3201, %v2328
        %v3210 = vadd.f32 %v3202, %v2329
        %v3211 = vadd.f32 %v3203, %v2330
        %v3212 = vadd.f32 %v3204, %v2331
        %v3213 = vadd.f32 %v3205, %v2332
        %v3215 = vsel %vm390, %v3206, 0
        %v3218 = vsel %vm390, %v3207, 0
        %v3221 = vsel %vm390, %v3208, 0
        %v3224 = vsel %vm390, %v3209, 0
        %v3227 = vsel %vm390, %v3210, 0
        %v3230 = vsel %vm390, %v3211, 0
        %v3233 = vsel %vm390, %v3212, 0
        %v3236 = vsel %vm390, %v3213, 0
        %3238 = vmatprep.subr.mxu0 0.0
        %v3239 = vand.u32 %v2335, 4294901760
        %3240 = vmatpush1.msra.mxu0 %v3239
        %3241 = vmatprep.subr.mxu0 0.0
        %3242 = vmatpush1.msra.mxu0 0.0
        %3243 = vmatprep.subr.mxu0 0.0
        %3244 = vmatpush1.msra.mxu0 0.0
        %3245 = vmatprep.subr.mxu0 0.0
        %3246 = vmatpush1.msra.mxu0 0.0
        %3247 = vmatprep.subr.mxu0 0.0
        %3248 = vmatpush1.msra.mxu0 0.0
        %3249 = vmatprep.subr.mxu0 0.0
        %3250 = vmatpush1.msra.mxu0 0.0
        %3251 = vmatprep.subr.mxu0 0.0
        %3252 = vmatpush1.msra.mxu0 0.0
        %3253 = vmatprep.subr.mxu0 0.0
        %3254 = vmatpush1.msra.mxu0 0.0
        %3255 = vmatprep.subr.mxu0 0.0
        %3256 = vmatpush1.msra.mxu0 0.0
        %3257 = vmatprep.subr.mxu0 0.0
        %3258 = vmatpush1.msra.mxu0 0.0
        %3259 = vmatprep.subr.mxu0 0.0
        %3260 = vmatpush1.msra.mxu0 0.0
        %3261 = vmatprep.subr.mxu0 0.0
        %3262 = vmatpush1.msra.mxu0 0.0
        %3263 = vmatprep.subr.mxu0 0.0
        %3264 = vmatpush1.msra.mxu0 0.0
        %3265 = vmatprep.subr.mxu0 0.0
        %3266 = vmatpush1.msra.mxu0 0.0
        %3267 = vmatprep.subr.mxu0 0.0
        %3268 = vmatpush1.msra.mxu0 0.0
        %3269 = vmatprep.subr.mxu0 0.0
        %3270 = vmatpush1.msra.mxu0 0.0
        %3271 = vmatprep.subr.mxu0 0.0
        %3272 = vmatpush1.msra.mxu0 0.0
        %3273 = vmatprep.subr.mxu0 0.0
        %3274 = vmatpush1.msra.mxu0 0.0
        %3275 = vmatprep.subr.mxu0 0.0
        %3276 = vmatpush1.msra.mxu0 0.0
        %3277 = vmatprep.subr.mxu0 0.0
        %3278 = vmatpush1.msra.mxu0 0.0
        %3279 = vmatprep.subr.mxu0 0.0
        %3280 = vmatpush1.msra.mxu0 0.0
        %3281 = vmatprep.subr.mxu0 0.0
        %3282 = vmatpush1.msra.mxu0 0.0
        %3283 = vmatprep.subr.mxu0 0.0
        %3284 = vmatpush1.msra.mxu0 0.0
        %3285 = vmatprep.subr.mxu0 0.0
        %3286 = vmatpush1.msra.mxu0 0.0
        %3287 = vmatprep.subr.mxu0 0.0
        %3288 = vmatpush1.msra.mxu0 0.0
        %3289 = vmatprep.subr.mxu0 0.0
        %3290 = vmatpush1.msra.mxu0 0.0
        %3291 = vmatprep.subr.mxu0 0.0
        %3292 = vmatpush1.msra.mxu0 0.0
        %3293 = vmatprep.subr.mxu0 0.0
        %3294 = vmatpush1.msra.mxu0 0.0
        %3295 = vmatprep.subr.mxu0 0.0
        %3296 = vmatpush1.msra.mxu0 0.0
        %3297 = vmatprep.subr.mxu0 0.0
        %3298 = vmatpush1.msra.mxu0 0.0
        %3299 = vmatprep.subr.mxu0 0.0
        %3300 = vmatpush1.msra.mxu0 0.0
        %3301 = vmatprep.subr.mxu0 0.0
        %3302 = vmatpush1.msra.mxu0 0.0
        %3303 = vmatprep.mubr.f32.mxu0 0.0
        %v3304 = vand.u32 %v3215, 4294901760
        %v3305 = vsub.f32 %v3215, %v3304
        %v3306 = vand.u32 %v3305, 4294901760
        %v3307 = vsub.f32 %v3305, %v3306
        %v3308 = vand.u32 %v3307, 4294901760
        %3309 = vmatmul.mubr.f32.gmra.mrb[0].mxu0 %v3308
        %v3310 = vpop.f32.mrb[0].mxu0
        %v3311 = vadd.f32 0.0, %v3310
        %v3312 = vpop.f32.mrb[0].mxu0
        %3313 = vmatprep.mubr.f32.mxu0 0.0
        %v3314 = vand.u32 %v3218, 4294901760
        %v3315 = vsub.f32 %v3218, %v3314
        %v3316 = vand.u32 %v3315, 4294901760
        %v3317 = vsub.f32 %v3315, %v3316
        %v3318 = vand.u32 %v3317, 4294901760
        %3319 = vmatmul.mubr.f32.gmra.mrb[0].mxu0 %v3318
        %v3320 = vpop.f32.mrb[0].mxu0
        %v3321 = vadd.f32 0.0, %v3320
        %v3322 = vpop.f32.mrb[0].mxu0
        %3323 = vmatprep.mubr.f32.mxu0 0.0
        %v3324 = vand.u32 %v3221, 4294901760
        %v3325 = vsub.f32 %v3221, %v3324
        %v3326 = vand.u32 %v3325, 4294901760
        %v3327 = vsub.f32 %v3325, %v3326
        %v3328 = vand.u32 %v3327, 4294901760
        %3329 = vmatmul.mubr.f32.gmra.mrb[0].mxu0 %v3328
        %v3330 = vpop.f32.mrb[0].mxu0
        %v3331 = vadd.f32 0.0, %v3330
        %v3332 = vpop.f32.mrb[0].mxu0
        %3333 = vmatprep.mubr.f32.mxu0 0.0
        %v3334 = vand.u32 %v3224, 4294901760
        %v3335 = vsub.f32 %v3224, %v3334
        %v3336 = vand.u32 %v3335, 4294901760
        %v3337 = vsub.f32 %v3335, %v3336
        %v3338 = vand.u32 %v3337, 4294901760
        %3339 = vmatmul.mubr.f32.gmra.mrb[0].mxu0 %v3338
        %v3340 = vpop.f32.mrb[0].mxu0
        %v3341 = vadd.f32 0.0, %v3340
        %v3342 = vpop.f32.mrb[0].mxu0
        %3343 = vmatprep.mubr.f32.mxu0 0.0
        %v3344 = vand.u32 %v3227, 4294901760
        %v3345 = vsub.f32 %v3227, %v3344
        %v3346 = vand.u32 %v3345, 4294901760
        %v3347 = vsub.f32 %v3345, %v3346
        %v3348 = vand.u32 %v3347, 4294901760
        %3349 = vmatmul.mubr.f32.gmra.mrb[0].mxu0 %v3348
        %v3350 = vpop.f32.mrb[0].mxu0
        %v3351 = vadd.f32 0.0, %v3350
        %v3352 = vpop.f32.mrb[0].mxu0
        %3353 = vmatprep.mubr.f32.mxu0 0.0
        %v3354 = vand.u32 %v3230, 4294901760
        %v3355 = vsub.f32 %v3230, %v3354
        %v3356 = vand.u32 %v3355, 4294901760
        %v3357 = vsub.f32 %v3355, %v3356
        %v3358 = vand.u32 %v3357, 4294901760
        %3359 = vmatmul.mubr.f32.gmra.mrb[0].mxu0 %v3358
        %v3360 = vpop.f32.mrb[0].mxu0
        %v3361 = vadd.f32 0.0, %v3360
        %v3362 = vpop.f32.mrb[0].mxu0
        %3363 = vmatprep.mubr.f32.mxu0 0.0
        %v3364 = vand.u32 %v3233, 4294901760
        %v3365 = vsub.f32 %v3233, %v3364
        %v3366 = vand.u32 %v3365, 4294901760
        %v3367 = vsub.f32 %v3365, %v3366
        %v3368 = vand.u32 %v3367, 4294901760
        %3369 = vmatmul.mubr.f32.gmra.mrb[0].mxu0 %v3368
        %v3370 = vpop.f32.mrb[0].mxu0
        %v3371 = vadd.f32 0.0, %v3370
        %v3372 = vpop.f32.mrb[0].mxu0
        %3373 = vmatprep.mubr.f32.mxu0 0.0
        %v3374 = vand.u32 %v3236, 4294901760
        %v3375 = vsub.f32 %v3236, %v3374
        %v3376 = vand.u32 %v3375, 4294901760
        %v3377 = vsub.f32 %v3375, %v3376
        %v3378 = vand.u32 %v3377, 4294901760
        %3379 = vmatmul.mubr.f32.gmra.mrb[0].mxu0 %v3378
        %v3380 = vpop.f32.mrb[0].mxu0
        %v3381 = vadd.f32 0.0, %v3380
        %v3382 = vpop.f32.mrb[0].mxu0
        %3383 = vdwg.mxu0
        %3384 = vmatprep.subr.mxu0 0.0
        %v3385 = vand.u32 %v2335, 4294901760
        %v3386 = vsub.f32 %v2335, %v3385
        %v3387 = vand.u32 %v3386, 4294901760
        %v3388 = vsub.f32 %v3386, %v3387
        %v3389 = vand.u32 %v3388, 4294901760
        %3390 = vmatpush1.msra.mxu0 %v3389
        %3391 = vmatprep.subr.mxu0 0.0
        %3392 = vmatpush1.msra.mxu0 0.0
        %3393 = vmatprep.subr.mxu0 0.0
        %3394 = vmatpush1.msra.mxu0 0.0
        %3395 = vmatprep.subr.mxu0 0.0
        %3396 = vmatpush1.msra.mxu0 0.0
        %3397 = vmatprep.subr.mxu0 0.0
        %3398 = vmatpush1.msra.mxu0 0.0
        %3399 = vmatprep.subr.mxu0 0.0
        %3400 = vmatpush1.msra.mxu0 0.0
        %3401 = vmatprep.subr.mxu0 0.0
        %3402 = vmatpush1.msra.mxu0 0.0
        %3403 = vmatprep.subr.mxu0 0.0
        %3404 = vmatpush1.msra.mxu0 0.0
        %3405 = vmatprep.subr.mxu0 0.0
        %3406 = vmatpush1.msra.mxu0 0.0
        %3407 = vmatprep.subr.mxu0 0.0
        %3408 = vmatpush1.msra.mxu0 0.0
        %3409 = vmatprep.subr.mxu0 0.0
        %3410 = vmatpush1.msra.mxu0 0.0
        %3411 = vmatprep.subr.mxu0 0.0
        %3412 = vmatpush1.msra.mxu0 0.0
        %3413 = vmatprep.subr.mxu0 0.0
        %3414 = vmatpush1.msra.mxu0 0.0
        %3415 = vmatprep.subr.mxu0 0.0
        %3416 = vmatpush1.msra.mxu0 0.0
        %3417 = vmatprep.subr.mxu0 0.0
        %3418 = vmatpush1.msra.mxu0 0.0
        %3419 = vmatprep.subr.mxu0 0.0
        %3420 = vmatpush1.msra.mxu0 0.0
        %3421 = vmatprep.subr.mxu0 0.0
        %3422 = vmatpush1.msra.mxu0 0.0
        %3423 = vmatprep.subr.mxu0 0.0
        %3424 = vmatpush1.msra.mxu0 0.0
        %3425 = vmatprep.subr.mxu0 0.0
        %3426 = vmatpush1.msra.mxu0 0.0
        %3427 = vmatprep.subr.mxu0 0.0
        %3428 = vmatpush1.msra.mxu0 0.0
        %3429 = vmatprep.subr.mxu0 0.0
        %3430 = vmatpush1.msra.mxu0 0.0
        %3431 = vmatprep.subr.mxu0 0.0
        %3432 = vmatpush1.msra.mxu0 0.0
        %3433 = vmatprep.subr.mxu0 0.0
        %3434 = vmatpush1.msra.mxu0 0.0
        %3435 = vmatprep.subr.mxu0 0.0
        %3436 = vmatpush1.msra.mxu0 0.0
        %3437 = vmatprep.subr.mxu0 0.0
        %3438 = vmatpush1.msra.mxu0 0.0
        %3439 = vmatprep.subr.mxu0 0.0
        %3440 = vmatpush1.msra.mxu0 0.0
        %3441 = vmatprep.subr.mxu0 0.0
        %3442 = vmatpush1.msra.mxu0 0.0
        %3443 = vmatprep.subr.mxu0 0.0
        %3444 = vmatpush1.msra.mxu0 0.0
        %3445 = vmatprep.subr.mxu0 0.0
        %3446 = vmatpush1.msra.mxu0 0.0
        %3447 = vmatprep.subr.mxu0 0.0
        %3448 = vmatpush1.msra.mxu0 0.0
        %3449 = vmatprep.subr.mxu0 0.0
        %3450 = vmatpush1.msra.mxu0 0.0
        %3451 = vmatprep.subr.mxu0 0.0
        %3452 = vmatpush1.msra.mxu0 0.0
        %3453 = vmatprep.mubr.f32.mxu0 0.0
        %v3454 = vand.u32 %v3215, 4294901760
        %3455 = vmatmul.mubr.f32.gmra.mrb[0].mxu0 %v3454
        %v3456 = vpop.f32.mrb[0].mxu0
        %v3457 = vadd.f32 %v3311, %v3456
        %v3458 = vpop.f32.mrb[0].mxu0
        %3459 = vmatprep.mubr.f32.mxu0 0.0
        %v3460 = vand.u32 %v3218, 4294901760
        %3461 = vmatmul.mubr.f32.gmra.mrb[0].mxu0 %v3460
        %v3462 = vpop.f32.mrb[0].mxu0
        %v3463 = vadd.f32 %v3321, %v3462
        %v3464 = vpop.f32.mrb[0].mxu0
        %3465 = vmatprep.mubr.f32.mxu0 0.0
        %v3466 = vand.u32 %v3221, 4294901760
        %3467 = vmatmul.mubr.f32.gmra.mrb[0].mxu0 %v3466
        %v3468 = vpop.f32.mrb[0].mxu0
        %v3469 = vadd.f32 %v3331, %v3468
        %v3470 = vpop.f32.mrb[0].mxu0
        %3471 = vmatprep.mubr.f32.mxu0 0.0
        %v3472 = vand.u32 %v3224, 4294901760
        %3473 = vmatmul.mubr.f32.gmra.mrb[0].mxu0 %v3472
        %v3474 = vpop.f32.mrb[0].mxu0
        %v3475 = vadd.f32 %v3341, %v3474
        %v3476 = vpop.f32.mrb[0].mxu0
        %3477 = vmatprep.mubr.f32.mxu0 0.0
        %v3478 = vand.u32 %v3227, 4294901760
        %3479 = vmatmul.mubr.f32.gmra.mrb[0].mxu0 %v3478
        %v3480 = vpop.f32.mrb[0].mxu0
        %v3481 = vadd.f32 %v3351, %v3480
        %v3482 = vpop.f32.mrb[0].mxu0
        %3483 = vmatprep.mubr.f32.mxu0 0.0
        %v3484 = vand.u32 %v3230, 4294901760
        %3485 = vmatmul.mubr.f32.gmra.mrb[0].mxu0 %v3484
        %v3486 = vpop.f32.mrb[0].mxu0
        %v3487 = vadd.f32 %v3361, %v3486
        %v3488 = vpop.f32.mrb[0].mxu0
        %3489 = vmatprep.mubr.f32.mxu0 0.0
        %v3490 = vand.u32 %v3233, 4294901760
        %3491 = vmatmul.mubr.f32.gmra.mrb[0].mxu0 %v3490
        %v3492 = vpop.f32.mrb[0].mxu0
        %v3493 = vadd.f32 %v3371, %v3492
        %v3494 = vpop.f32.mrb[0].mxu0
        %3495 = vmatprep.mubr.f32.mxu0 0.0
        %v3496 = vand.u32 %v3236, 4294901760
        %3497 = vmatmul.mubr.f32.gmra.mrb[0].mxu0 %v3496
        %v3498 = vpop.f32.mrb[0].mxu0
        %v3499 = vadd.f32 %v3381, %v3498
        %v3500 = vpop.f32.mrb[0].mxu0
        %3501 = vdwg.mxu0
        %3502 = vmatprep.subr.mxu0 0.0
        %v3503 = vand.u32 %v2335, 4294901760
        %v3504 = vsub.f32 %v2335, %v3503
        %3505 = vmatpush1.msra.mxu0 %v3504
        %3506 = vmatprep.subr.mxu0 0.0
        %3507 = vmatpush1.msra.mxu0 0.0
        %3508 = vmatprep.subr.mxu0 0.0
        %3509 = vmatpush1.msra.mxu0 0.0
        %3510 = vmatprep.subr.mxu0 0.0
        %3511 = vmatpush1.msra.mxu0 0.0
        %3512 = vmatprep.subr.mxu0 0.0
        %3513 = vmatpush1.msra.mxu0 0.0
        %3514 = vmatprep.subr.mxu0 0.0
        %3515 = vmatpush1.msra.mxu0 0.0
        %3516 = vmatprep.subr.mxu0 0.0
        %3517 = vmatpush1.msra.mxu0 0.0
        %3518 = vmatprep.subr.mxu0 0.0
        %3519 = vmatpush1.msra.mxu0 0.0
        %3520 = vmatprep.subr.mxu0 0.0
        %3521 = vmatpush1.msra.mxu0 0.0
        %3522 = vmatprep.subr.mxu0 0.0
        %3523 = vmatpush1.msra.mxu0 0.0
        %3524 = vmatprep.subr.mxu0 0.0
        %3525 = vmatpush1.msra.mxu0 0.0
        %3526 = vmatprep.subr.mxu0 0.0
        %3527 = vmatpush1.msra.mxu0 0.0
        %3528 = vmatprep.subr.mxu0 0.0
        %3529 = vmatpush1.msra.mxu0 0.0
        %3530 = vmatprep.subr.mxu0 0.0
        %3531 = vmatpush1.msra.mxu0 0.0
        %3532 = vmatprep.subr.mxu0 0.0
        %3533 = vmatpush1.msra.mxu0 0.0
        %3534 = vmatprep.subr.mxu0 0.0
        %3535 = vmatpush1.msra.mxu0 0.0
        %3536 = vmatprep.subr.mxu0 0.0
        %3537 = vmatpush1.msra.mxu0 0.0
        %3538 = vmatprep.subr.mxu0 0.0
        %3539 = vmatpush1.msra.mxu0 0.0
        %3540 = vmatprep.subr.mxu0 0.0
        %3541 = vmatpush1.msra.mxu0 0.0
        %3542 = vmatprep.subr.mxu0 0.0
        %3543 = vmatpush1.msra.mxu0 0.0
        %3544 = vmatprep.subr.mxu0 0.0
        %3545 = vmatpush1.msra.mxu0 0.0
        %3546 = vmatprep.subr.mxu0 0.0
        %3547 = vmatpush1.msra.mxu0 0.0
        %3548 = vmatprep.subr.mxu0 0.0
        %3549 = vmatpush1.msra.mxu0 0.0
        %3550 = vmatprep.subr.mxu0 0.0
        %3551 = vmatpush1.msra.mxu0 0.0
        %3552 = vmatprep.subr.mxu0 0.0
        %3553 = vmatpush1.msra.mxu0 0.0
        %3554 = vmatprep.subr.mxu0 0.0
        %3555 = vmatpush1.msra.mxu0 0.0
        %3556 = vmatprep.subr.mxu0 0.0
        %3557 = vmatpush1.msra.mxu0 0.0
        %3558 = vmatprep.subr.mxu0 0.0
        %3559 = vmatpush1.msra.mxu0 0.0
        %3560 = vmatprep.subr.mxu0 0.0
        %3561 = vmatpush1.msra.mxu0 0.0
        %3562 = vmatprep.subr.mxu0 0.0
        %3563 = vmatpush1.msra.mxu0 0.0
        %3564 = vmatprep.subr.mxu0 0.0
        %3565 = vmatpush1.msra.mxu0 0.0
        %3566 = vmatprep.subr.mxu0 0.0
        %3567 = vmatpush1.msra.mxu0 0.0
        %3568 = vmatprep.mubr.f32.mxu0 0.0
        %v3569 = vand.u32 %v3215, 4294901760
        %v3570 = vsub.f32 %v3215, %v3569
        %3571 = vmatmul.mubr.f32.gmra.mrb[0].mxu0 %v3570
        %v3572 = vpop.f32.mrb[0].mxu0
        %v3573 = vadd.f32 %v3457, %v3572
        %v3574 = vpop.f32.mrb[0].mxu0
        %3575 = vmatprep.mubr.f32.mxu0 0.0
        %v3576 = vand.u32 %v3218, 4294901760
        %v3577 = vsub.f32 %v3218, %v3576
        %3578 = vmatmul.mubr.f32.gmra.mrb[0].mxu0 %v3577
        %v3579 = vpop.f32.mrb[0].mxu0
        %v3580 = vadd.f32 %v3463, %v3579
        %v3581 = vpop.f32.mrb[0].mxu0
        %3582 = vmatprep.mubr.f32.mxu0 0.0
        %v3583 = vand.u32 %v3221, 4294901760
        %v3584 = vsub.f32 %v3221, %v3583
        %3585 = vmatmul.mubr.f32.gmra.mrb[0].mxu0 %v3584
        %v3586 = vpop.f32.mrb[0].mxu0
        %v3587 = vadd.f32 %v3469, %v3586
        %v3588 = vpop.f32.mrb[0].mxu0
        %3589 = vmatprep.mubr.f32.mxu0 0.0
        %v3590 = vand.u32 %v3224, 4294901760
        %v3591 = vsub.f32 %v3224, %v3590
        %3592 = vmatmul.mubr.f32.gmra.mrb[0].mxu0 %v3591
        %v3593 = vpop.f32.mrb[0].mxu0
        %v3594 = vadd.f32 %v3475, %v3593
        %v3595 = vpop.f32.mrb[0].mxu0
        %3596 = vmatprep.mubr.f32.mxu0 0.0
        %v3597 = vand.u32 %v3227, 4294901760
        %v3598 = vsub.f32 %v3227, %v3597
        %3599 = vmatmul.mubr.f32.gmra.mrb[0].mxu0 %v3598
        %v3600 = vpop.f32.mrb[0].mxu0
        %v3601 = vadd.f32 %v3481, %v3600
        %v3602 = vpop.f32.mrb[0].mxu0
        %3603 = vmatprep.mubr.f32.mxu0 0.0
        %v3604 = vand.u32 %v3230, 4294901760
        %v3605 = vsub.f32 %v3230, %v3604
        %3606 = vmatmul.mubr.f32.gmra.mrb[0].mxu0 %v3605
        %v3607 = vpop.f32.mrb[0].mxu0
        %v3608 = vadd.f32 %v3487, %v3607
        %v3609 = vpop.f32.mrb[0].mxu0
        %3610 = vmatprep.mubr.f32.mxu0 0.0
        %v3611 = vand.u32 %v3233, 4294901760
        %v3612 = vsub.f32 %v3233, %v3611
        %3613 = vmatmul.mubr.f32.gmra.mrb[0].mxu0 %v3612
        %v3614 = vpop.f32.mrb[0].mxu0
        %v3615 = vadd.f32 %v3493, %v3614
        %v3616 = vpop.f32.mrb[0].mxu0
        %3617 = vmatprep.mubr.f32.mxu0 0.0
        %v3618 = vand.u32 %v3236, 4294901760
        %v3619 = vsub.f32 %v3236, %v3618
        %3620 = vmatmul.mubr.f32.gmra.mrb[0].mxu0 %v3619
        %v3621 = vpop.f32.mrb[0].mxu0
        %v3622 = vadd.f32 %v3499, %v3621
        %v3623 = vpop.f32.mrb[0].mxu0
        %3624 = vdwg.mxu0
        %3625 = vmatprep.subr.mxu0 0.0
        %v3626 = vand.u32 %v2335, 4294901760
        %3627 = vmatpush1.msra.mxu0 %v3626
        %3628 = vmatprep.subr.mxu0 0.0
        %3629 = vmatpush1.msra.mxu0 0.0
        %3630 = vmatprep.subr.mxu0 0.0
        %3631 = vmatpush1.msra.mxu0 0.0
        %3632 = vmatprep.subr.mxu0 0.0
        %3633 = vmatpush1.msra.mxu0 0.0
        %3634 = vmatprep.subr.mxu0 0.0
        %3635 = vmatpush1.msra.mxu0 0.0
        %3636 = vmatprep.subr.mxu0 0.0
        %3637 = vmatpush1.msra.mxu0 0.0
        %3638 = vmatprep.subr.mxu0 0.0
        %3639 = vmatpush1.msra.mxu0 0.0
        %3640 = vmatprep.subr.mxu0 0.0
        %3641 = vmatpush1.msra.mxu0 0.0
        %3642 = vmatprep.subr.mxu0 0.0
        %3643 = vmatpush1.msra.mxu0 0.0
        %3644 = vmatprep.subr.mxu0 0.0
        %3645 = vmatpush1.msra.mxu0 0.0
        %3646 = vmatprep.subr.mxu0 0.0
        %3647 = vmatpush1.msra.mxu0 0.0
        %3648 = vmatprep.subr.mxu0 0.0
        %3649 = vmatpush1.msra.mxu0 0.0
        %3650 = vmatprep.subr.mxu0 0.0
        %3651 = vmatpush1.msra.mxu0 0.0
        %3652 = vmatprep.subr.mxu0 0.0
        %3653 = vmatpush1.msra.mxu0 0.0
        %3654 = vmatprep.subr.mxu0 0.0
        %3655 = vmatpush1.msra.mxu0 0.0
        %3656 = vmatprep.subr.mxu0 0.0
        %3657 = vmatpush1.msra.mxu0 0.0
        %3658 = vmatprep.subr.mxu0 0.0
        %3659 = vmatpush1.msra.mxu0 0.0
        %3660 = vmatprep.subr.mxu0 0.0
        %3661 = vmatpush1.msra.mxu0 0.0
        %3662 = vmatprep.subr.mxu0 0.0
        %3663 = vmatpush1.msra.mxu0 0.0
        %3664 = vmatprep.subr.mxu0 0.0
        %3665 = vmatpush1.msra.mxu0 0.0
        %3666 = vmatprep.subr.mxu0 0.0
        %3667 = vmatpush1.msra.mxu0 0.0
        %3668 = vmatprep.subr.mxu0 0.0
        %3669 = vmatpush1.msra.mxu0 0.0
        %3670 = vmatprep.subr.mxu0 0.0
        %3671 = vmatpush1.msra.mxu0 0.0
        %3672 = vmatprep.subr.mxu0 0.0
        %3673 = vmatpush1.msra.mxu0 0.0
        %3674 = vmatprep.subr.mxu0 0.0
        %3675 = vmatpush1.msra.mxu0 0.0
        %3676 = vmatprep.subr.mxu0 0.0
        %3677 = vmatpush1.msra.mxu0 0.0
        %3678 = vmatprep.subr.mxu0 0.0
        %3679 = vmatpush1.msra.mxu0 0.0
        %3680 = vmatprep.subr.mxu0 0.0
        %3681 = vmatpush1.msra.mxu0 0.0
        %3682 = vmatprep.subr.mxu0 0.0
        %3683 = vmatpush1.msra.mxu0 0.0
        %3684 = vmatprep.subr.mxu0 0.0
        %3685 = vmatpush1.msra.mxu0 0.0
        %3686 = vmatprep.subr.mxu0 0.0
        %3687 = vmatpush1.msra.mxu0 0.0
        %3688 = vmatprep.subr.mxu0 0.0
        %3689 = vmatpush1.msra.mxu0 0.0
        %3690 = vmatprep.mubr.f32.mxu0 0.0
        %v3691 = vand.u32 %v3215, 4294901760
        %v3692 = vsub.f32 %v3215, %v3691
        %v3693 = vand.u32 %v3692, 4294901760
        %3694 = vmatmul.mubr.f32.gmra.mrb[0].mxu0 %v3693
        %v3695 = vpop.f32.mrb[0].mxu0
        %v3696 = vadd.f32 %v3573, %v3695
        %v3697 = vpop.f32.mrb[0].mxu0
        %3698 = vmatprep.mubr.f32.mxu0 0.0
        %v3699 = vand.u32 %v3218, 4294901760
        %v3700 = vsub.f32 %v3218, %v3699
        %v3701 = vand.u32 %v3700, 4294901760
        %3702 = vmatmul.mubr.f32.gmra.mrb[0].mxu0 %v3701
        %v3703 = vpop.f32.mrb[0].mxu0
        %v3704 = vadd.f32 %v3580, %v3703
        %v3705 = vpop.f32.mrb[0].mxu0
        %3706 = vmatprep.mubr.f32.mxu0 0.0
        %v3707 = vand.u32 %v3221, 4294901760
        %v3708 = vsub.f32 %v3221, %v3707
        %v3709 = vand.u32 %v3708, 4294901760
        %3710 = vmatmul.mubr.f32.gmra.mrb[0].mxu0 %v3709
        %v3711 = vpop.f32.mrb[0].mxu0
        %v3712 = vadd.f32 %v3587, %v3711
        %v3713 = vpop.f32.mrb[0].mxu0
        %3714 = vmatprep.mubr.f32.mxu0 0.0
        %v3715 = vand.u32 %v3224, 4294901760
        %v3716 = vsub.f32 %v3224, %v3715
        %v3717 = vand.u32 %v3716, 4294901760
        %3718 = vmatmul.mubr.f32.gmra.mrb[0].mxu0 %v3717
        %v3719 = vpop.f32.mrb[0].mxu0
        %v3720 = vadd.f32 %v3594, %v3719
        %v3721 = vpop.f32.mrb[0].mxu0
        %3722 = vmatprep.mubr.f32.mxu0 0.0
        %v3723 = vand.u32 %v3227, 4294901760
        %v3724 = vsub.f32 %v3227, %v3723
        %v3725 = vand.u32 %v3724, 4294901760
        %3726 = vmatmul.mubr.f32.gmra.mrb[0].mxu0 %v3725
        %v3727 = vpop.f32.mrb[0].mxu0
        %v3728 = vadd.f32 %v3601, %v3727
        %v3729 = vpop.f32.mrb[0].mxu0
        %3730 = vmatprep.mubr.f32.mxu0 0.0
        %v3731 = vand.u32 %v3230, 4294901760
        %v3732 = vsub.f32 %v3230, %v3731
        %v3733 = vand.u32 %v3732, 4294901760
        %3734 = vmatmul.mubr.f32.gmra.mrb[0].mxu0 %v3733
        %v3735 = vpop.f32.mrb[0].mxu0
        %v3736 = vadd.f32 %v3608, %v3735
        %v3737 = vpop.f32.mrb[0].mxu0
        %3738 = vmatprep.mubr.f32.mxu0 0.0
        %v3739 = vand.u32 %v3233, 4294901760
        %v3740 = vsub.f32 %v3233, %v3739
        %v3741 = vand.u32 %v3740, 4294901760
        %3742 = vmatmul.mubr.f32.gmra.mrb[0].mxu0 %v3741
        %v3743 = vpop.f32.mrb[0].mxu0
        %v3744 = vadd.f32 %v3615, %v3743
        %v3745 = vpop.f32.mrb[0].mxu0
        %3746 = vmatprep.mubr.f32.mxu0 0.0
        %v3747 = vand.u32 %v3236, 4294901760
        %v3748 = vsub.f32 %v3236, %v3747
        %v3749 = vand.u32 %v3748, 4294901760
        %3750 = vmatmul.mubr.f32.gmra.mrb[0].mxu0 %v3749
        %v3751 = vpop.f32.mrb[0].mxu0
        %v3752 = vadd.f32 %v3622, %v3751
        %v3753 = vpop.f32.mrb[0].mxu0
        %3754 = vdwg.mxu0
        %3755 = vmatprep.subr.mxu0 0.0
        %v3756 = vand.u32 %v2335, 4294901760
        %v3757 = vsub.f32 %v2335, %v3756
        %v3758 = vand.u32 %v3757, 4294901760
        %3759 = vmatpush1.msra.mxu0 %v3758
        %3760 = vmatprep.subr.mxu0 0.0
        %3761 = vmatpush1.msra.mxu0 0.0
        %3762 = vmatprep.subr.mxu0 0.0
        %3763 = vmatpush1.msra.mxu0 0.0
        %3764 = vmatprep.subr.mxu0 0.0
        %3765 = vmatpush1.msra.mxu0 0.0
        %3766 = vmatprep.subr.mxu0 0.0
        %3767 = vmatpush1.msra.mxu0 0.0
        %3768 = vmatprep.subr.mxu0 0.0
        %3769 = vmatpush1.msra.mxu0 0.0
        %3770 = vmatprep.subr.mxu0 0.0
        %3771 = vmatpush1.msra.mxu0 0.0
        %3772 = vmatprep.subr.mxu0 0.0
        %3773 = vmatpush1.msra.mxu0 0.0
        %3774 = vmatprep.subr.mxu0 0.0
        %3775 = vmatpush1.msra.mxu0 0.0
        %3776 = vmatprep.subr.mxu0 0.0
        %3777 = vmatpush1.msra.mxu0 0.0
        %3778 = vmatprep.subr.mxu0 0.0
        %3779 = vmatpush1.msra.mxu0 0.0
        %3780 = vmatprep.subr.mxu0 0.0
        %3781 = vmatpush1.msra.mxu0 0.0
        %3782 = vmatprep.subr.mxu0 0.0
        %3783 = vmatpush1.msra.mxu0 0.0
        %3784 = vmatprep.subr.mxu0 0.0
        %3785 = vmatpush1.msra.mxu0 0.0
        %3786 = vmatprep.subr.mxu0 0.0
        %3787 = vmatpush1.msra.mxu0 0.0
        %3788 = vmatprep.subr.mxu0 0.0
        %3789 = vmatpush1.msra.mxu0 0.0
        %3790 = vmatprep.subr.mxu0 0.0
        %3791 = vmatpush1.msra.mxu0 0.0
        %3792 = vmatprep.subr.mxu0 0.0
        %3793 = vmatpush1.msra.mxu0 0.0
        %3794 = vmatprep.subr.mxu0 0.0
        %3795 = vmatpush1.msra.mxu0 0.0
        %3796 = vmatprep.subr.mxu0 0.0
        %3797 = vmatpush1.msra.mxu0 0.0
        %3798 = vmatprep.subr.mxu0 0.0
        %3799 = vmatpush1.msra.mxu0 0.0
        %3800 = vmatprep.subr.mxu0 0.0
        %3801 = vmatpush1.msra.mxu0 0.0
        %3802 = vmatprep.subr.mxu0 0.0
        %3803 = vmatpush1.msra.mxu0 0.0
        %3804 = vmatprep.subr.mxu0 0.0
        %3805 = vmatpush1.msra.mxu0 0.0
        %3806 = vmatprep.subr.mxu0 0.0
        %3807 = vmatpush1.msra.mxu0 0.0
        %3808 = vmatprep.subr.mxu0 0.0
        %3809 = vmatpush1.msra.mxu0 0.0
        %3810 = vmatprep.subr.mxu0 0.0
        %3811 = vmatpush1.msra.mxu0 0.0
        %3812 = vmatprep.subr.mxu0 0.0
        %3813 = vmatpush1.msra.mxu0 0.0
        %3814 = vmatprep.subr.mxu0 0.0
        %3815 = vmatpush1.msra.mxu0 0.0
        %3816 = vmatprep.subr.mxu0 0.0
        %3817 = vmatpush1.msra.mxu0 0.0
        %3818 = vmatprep.subr.mxu0 0.0
        %3819 = vmatpush1.msra.mxu0 0.0
        %3820 = vmatprep.subr.mxu0 0.0
        %3821 = vmatpush1.msra.mxu0 0.0
        %3822 = vmatprep.mubr.f32.mxu0 0.0
        %v3823 = vand.u32 %v3215, 4294901760
        %3824 = vmatmul.mubr.f32.gmra.mrb[0].mxu0 %v3823
        %v3825 = vpop.f32.mrb[0].mxu0
        %v3826 = vadd.f32 %v3696, %v3825
        %v3827 = vpop.f32.mrb[0].mxu0
        %3828 = vmatprep.mubr.f32.mxu0 0.0
        %v3829 = vand.u32 %v3218, 4294901760
        %3830 = vmatmul.mubr.f32.gmra.mrb[0].mxu0 %v3829
        %v3831 = vpop.f32.mrb[0].mxu0
        %v3832 = vadd.f32 %v3704, %v3831
        %v3833 = vpop.f32.mrb[0].mxu0
        %3834 = vmatprep.mubr.f32.mxu0 0.0
        %v3835 = vand.u32 %v3221, 4294901760
        %3836 = vmatmul.mubr.f32.gmra.mrb[0].mxu0 %v3835
        %v3837 = vpop.f32.mrb[0].mxu0
        %v3838 = vadd.f32 %v3712, %v3837
        %v3839 = vpop.f32.mrb[0].mxu0
        %3840 = vmatprep.mubr.f32.mxu0 0.0
        %v3841 = vand.u32 %v3224, 4294901760
        %3842 = vmatmul.mubr.f32.gmra.mrb[0].mxu0 %v3841
        %v3843 = vpop.f32.mrb[0].mxu0
        %v3844 = vadd.f32 %v3720, %v3843
        %v3845 = vpop.f32.mrb[0].mxu0
        %3846 = vmatprep.mubr.f32.mxu0 0.0
        %v3847 = vand.u32 %v3227, 4294901760
        %3848 = vmatmul.mubr.f32.gmra.mrb[0].mxu0 %v3847
        %v3849 = vpop.f32.mrb[0].mxu0
        %v3850 = vadd.f32 %v3728, %v3849
        %v3851 = vpop.f32.mrb[0].mxu0
        %3852 = vmatprep.mubr.f32.mxu0 0.0
        %v3853 = vand.u32 %v3230, 4294901760
        %3854 = vmatmul.mubr.f32.gmra.mrb[0].mxu0 %v3853
        %v3855 = vpop.f32.mrb[0].mxu0
        %v3856 = vadd.f32 %v3736, %v3855
        %v3857 = vpop.f32.mrb[0].mxu0
        %3858 = vmatprep.mubr.f32.mxu0 0.0
        %v3859 = vand.u32 %v3233, 4294901760
        %3860 = vmatmul.mubr.f32.gmra.mrb[0].mxu0 %v3859
        %v3861 = vpop.f32.mrb[0].mxu0
        %v3862 = vadd.f32 %v3744, %v3861
        %v3863 = vpop.f32.mrb[0].mxu0
        %3864 = vmatprep.mubr.f32.mxu0 0.0
        %v3865 = vand.u32 %v3236, 4294901760
        %3866 = vmatmul.mubr.f32.gmra.mrb[0].mxu0 %v3865
        %v3867 = vpop.f32.mrb[0].mxu0
        %v3868 = vadd.f32 %v3752, %v3867
        %v3869 = vpop.f32.mrb[0].mxu0
        %3870 = vdwg.mxu0
        %3871 = vmatprep.subr.mxu0 0.0
        %v3872 = vand.u32 %v2335, 4294901760
        %3873 = vmatpush1.msra.mxu0 %v3872
        %3874 = vmatprep.subr.mxu0 0.0
        %3875 = vmatpush1.msra.mxu0 0.0
        %3876 = vmatprep.subr.mxu0 0.0
        %3877 = vmatpush1.msra.mxu0 0.0
        %3878 = vmatprep.subr.mxu0 0.0
        %3879 = vmatpush1.msra.mxu0 0.0
        %3880 = vmatprep.subr.mxu0 0.0
        %3881 = vmatpush1.msra.mxu0 0.0
        %3882 = vmatprep.subr.mxu0 0.0
        %3883 = vmatpush1.msra.mxu0 0.0
        %3884 = vmatprep.subr.mxu0 0.0
        %3885 = vmatpush1.msra.mxu0 0.0
        %3886 = vmatprep.subr.mxu0 0.0
        %3887 = vmatpush1.msra.mxu0 0.0
        %3888 = vmatprep.subr.mxu0 0.0
        %3889 = vmatpush1.msra.mxu0 0.0
        %3890 = vmatprep.subr.mxu0 0.0
        %3891 = vmatpush1.msra.mxu0 0.0
        %3892 = vmatprep.subr.mxu0 0.0
        %3893 = vmatpush1.msra.mxu0 0.0
        %3894 = vmatprep.subr.mxu0 0.0
        %3895 = vmatpush1.msra.mxu0 0.0
        %3896 = vmatprep.subr.mxu0 0.0
        %3897 = vmatpush1.msra.mxu0 0.0
        %3898 = vmatprep.subr.mxu0 0.0
        %3899 = vmatpush1.msra.mxu0 0.0
        %3900 = vmatprep.subr.mxu0 0.0
        %3901 = vmatpush1.msra.mxu0 0.0
        %3902 = vmatprep.subr.mxu0 0.0
        %3903 = vmatpush1.msra.mxu0 0.0
        %3904 = vmatprep.subr.mxu0 0.0
        %3905 = vmatpush1.msra.mxu0 0.0
        %3906 = vmatprep.subr.mxu0 0.0
        %3907 = vmatpush1.msra.mxu0 0.0
        %3908 = vmatprep.subr.mxu0 0.0
        %3909 = vmatpush1.msra.mxu0 0.0
        %3910 = vmatprep.subr.mxu0 0.0
        %3911 = vmatpush1.msra.mxu0 0.0
        %3912 = vmatprep.subr.mxu0 0.0
        %3913 = vmatpush1.msra.mxu0 0.0
        %3914 = vmatprep.subr.mxu0 0.0
        %3915 = vmatpush1.msra.mxu0 0.0
        %3916 = vmatprep.subr.mxu0 0.0
        %3917 = vmatpush1.msra.mxu0 0.0
        %3918 = vmatprep.subr.mxu0 0.0
        %3919 = vmatpush1.msra.mxu0 0.0
        %3920 = vmatprep.subr.mxu0 0.0
        %3921 = vmatpush1.msra.mxu0 0.0
        %3922 = vmatprep.subr.mxu0 0.0
        %3923 = vmatpush1.msra.mxu0 0.0
        %3924 = vmatprep.subr.mxu0 0.0
        %3925 = vmatpush1.msra.mxu0 0.0
        %3926 = vmatprep.subr.mxu0 0.0
        %3927 = vmatpush1.msra.mxu0 0.0
        %3928 = vmatprep.subr.mxu0 0.0
        %3929 = vmatpush1.msra.mxu0 0.0
        %3930 = vmatprep.subr.mxu0 0.0
        %3931 = vmatpush1.msra.mxu0 0.0
        %3932 = vmatprep.subr.mxu0 0.0
        %3933 = vmatpush1.msra.mxu0 0.0
        %3934 = vmatprep.subr.mxu0 0.0
        %3935 = vmatpush1.msra.mxu0 0.0
        %3936 = vmatprep.mubr.f32.mxu0 0.0
        %v3937 = vand.u32 %v3215, 4294901760
        %3938 = vmatmul.mubr.f32.gmra.mrb[0].mxu0 %v3937
        %v3939 = vpop.f32.mrb[0].mxu0
        %v3940 = vadd.f32 %v3826, %v3939
        %v3941 = vpop.f32.mrb[0].mxu0
        %3942 = vmatprep.mubr.f32.mxu0 0.0
        %v3943 = vand.u32 %v3218, 4294901760
        %3944 = vmatmul.mubr.f32.gmra.mrb[0].mxu0 %v3943
        %v3945 = vpop.f32.mrb[0].mxu0
        %v3946 = vadd.f32 %v3832, %v3945
        %v3947 = vpop.f32.mrb[0].mxu0
        %3948 = vmatprep.mubr.f32.mxu0 0.0
        %v3949 = vand.u32 %v3221, 4294901760
        %3950 = vmatmul.mubr.f32.gmra.mrb[0].mxu0 %v3949
        %v3951 = vpop.f32.mrb[0].mxu0
        %v3952 = vadd.f32 %v3838, %v3951
        %v3953 = vpop.f32.mrb[0].mxu0
        %3954 = vmatprep.mubr.f32.mxu0 0.0
        %v3955 = vand.u32 %v3224, 4294901760
        %3956 = vmatmul.mubr.f32.gmra.mrb[0].mxu0 %v3955
        %v3957 = vpop.f32.mrb[0].mxu0
        %v3958 = vadd.f32 %v3844, %v3957
        %v3959 = vpop.f32.mrb[0].mxu0
        %3960 = vmatprep.mubr.f32.mxu0 0.0
        %v3961 = vand.u32 %v3227, 4294901760
        %3962 = vmatmul.mubr.f32.gmra.mrb[0].mxu0 %v3961
        %v3963 = vpop.f32.mrb[0].mxu0
        %v3964 = vadd.f32 %v3850, %v3963
        %v3965 = vpop.f32.mrb[0].mxu0
        %3966 = vmatprep.mubr.f32.mxu0 0.0
        %v3967 = vand.u32 %v3230, 4294901760
        %3968 = vmatmul.mubr.f32.gmra.mrb[0].mxu0 %v3967
        %v3969 = vpop.f32.mrb[0].mxu0
        %v3970 = vadd.f32 %v3856, %v3969
        %v3971 = vpop.f32.mrb[0].mxu0
        %3972 = vmatprep.mubr.f32.mxu0 0.0
        %v3973 = vand.u32 %v3233, 4294901760
        %3974 = vmatmul.mubr.f32.gmra.mrb[0].mxu0 %v3973
        %v3975 = vpop.f32.mrb[0].mxu0
        %v3976 = vadd.f32 %v3862, %v3975
        %v3977 = vpop.f32.mrb[0].mxu0
        %3978 = vmatprep.mubr.f32.mxu0 0.0
        %v3979 = vand.u32 %v3236, 4294901760
        %3980 = vmatmul.mubr.f32.gmra.mrb[0].mxu0 %v3979
        %v3981 = vpop.f32.mrb[0].mxu0
        %v3982 = vadd.f32 %v3868, %v3981
        %v3983 = vpop.f32.mrb[0].mxu0
        %3984 = vdwg.mxu0
        %v3985 = vmul.f32 %v3940, %v2289
        %v3986 = vmul.f32 %v3946, %v2294
        %v3987 = vmul.f32 %v3952, %v2299
        %v3988 = vmul.f32 %v3958, %v2304
        %v3989 = vmul.f32 %v3964, %v2309
        %v3990 = vmul.f32 %v3970, %v2314
        %v3991 = vmul.f32 %v3976, %v2319
        %v3992 = vmul.f32 %v3982, %v2324
        %v3993 = vadd.f32 %v3985, %v3986
        %v3994 = vadd.f32 %v3993, %v3987
        %v3995 = vadd.f32 %v3994, %v3988
        %v3996 = vadd.f32 %v3995, %v3989
        %v3997 = vadd.f32 %v3996, %v3990
        %v3998 = vadd.f32 %v3997, %v3991
        %v3999 = vadd.f32 %v3998, %v3992
        %4000 = vst.msk [vmem:[#allocation5] sm:$0xff] %vm1730, %v3999
        %s4001 = scalar_lea.vmem [#allocation2], 8
        %v4002 = vld [vmem:[%s4001] sm:$0xff]
        %s4003 = scalar_lea.vmem [#allocation3], 8
        %v4004 = vld [vmem:[%s4003] sm:$0xff]
        %s4005 = scalar_lea.vmem [#allocation4], 8
        %v4006 = vld [vmem:[%s4005] sm:$0xff]
        %v4007 = vmul.f32 %v4002, %v2289
        %v4008 = vmul.f32 %v4002, %v2294
        %v4009 = vmul.f32 %v4002, %v2299
        %v4010 = vmul.f32 %v4002, %v2304
        %v4011 = vmul.f32 %v4002, %v2309
        %v4012 = vmul.f32 %v4002, %v2314
        %v4013 = vmul.f32 %v4002, %v2319
        %v4014 = vmul.f32 %v4002, %v2324
        %v4016 = vsel %vm1730, %v4007, 0
        %v4019 = vsel %vm1730, %v4008, 0
        %v4022 = vsel %vm1730, %v4009, 0
        %v4025 = vsel %vm1730, %v4010, 0
        %v4028 = vsel %vm1730, %v4011, 0
        %v4031 = vsel %vm1730, %v4012, 0
        %v4034 = vsel %vm1730, %v4013, 0
        %v4037 = vsel %vm1730, %v4014, 0
        %v4040 = vsel %vm1730, %v4004, 0
        %4042 = vmatprep.subr.mxu0 0.0
        %v4043 = vand.u32 %v4040, 4294901760
        %4044 = vmatpush1.xpose.msra.mxu0 %v4043
        %4045 = vmatprep.subr.mxu0 0.0
        %4046 = vmatpush1.xpose.msra.mxu0 0.0
        %4047 = vmatprep.subr.mxu0 0.0
        %4048 = vmatpush1.xpose.msra.mxu0 0.0
        %4049 = vmatprep.subr.mxu0 0.0
        %4050 = vmatpush1.xpose.msra.mxu0 0.0
        %4051 = vmatprep.subr.mxu0 0.0
        %4052 = vmatpush1.xpose.msra.mxu0 0.0
        %4053 = vmatprep.subr.mxu0 0.0
        %4054 = vmatpush1.xpose.msra.mxu0 0.0
        %4055 = vmatprep.subr.mxu0 0.0
        %4056 = vmatpush1.xpose.msra.mxu0 0.0
        %4057 = vmatprep.subr.mxu0 0.0
        %4058 = vmatpush1.xpose.msra.mxu0 0.0
        %4059 = vmatprep.subr.mxu0 0.0
        %4060 = vmatpush1.xpose.msra.mxu0 0.0
        %4061 = vmatprep.subr.mxu0 0.0
        %4062 = vmatpush1.xpose.msra.mxu0 0.0
        %4063 = vmatprep.subr.mxu0 0.0
        %4064 = vmatpush1.xpose.msra.mxu0 0.0
        %4065 = vmatprep.subr.mxu0 0.0
        %4066 = vmatpush1.xpose.msra.mxu0 0.0
        %4067 = vmatprep.subr.mxu0 0.0
        %4068 = vmatpush1.xpose.msra.mxu0 0.0
        %4069 = vmatprep.subr.mxu0 0.0
        %4070 = vmatpush1.xpose.msra.mxu0 0.0
        %4071 = vmatprep.subr.mxu0 0.0
        %4072 = vmatpush1.xpose.msra.mxu0 0.0
        %4073 = vmatprep.subr.mxu0 0.0
        %4074 = vmatpush1.xpose.msra.mxu0 0.0
        %4075 = vmatprep.subr.mxu0 0.0
        %4076 = vmatpush1.xpose.msra.mxu0 0.0
        %4077 = vmatprep.subr.mxu0 0.0
        %4078 = vmatpush1.xpose.msra.mxu0 0.0
        %4079 = vmatprep.subr.mxu0 0.0
        %4080 = vmatpush1.xpose.msra.mxu0 0.0
        %4081 = vmatprep.subr.mxu0 0.0
        %4082 = vmatpush1.xpose.msra.mxu0 0.0
        %4083 = vmatprep.subr.mxu0 0.0
        %4084 = vmatpush1.xpose.msra.mxu0 0.0
        %4085 = vmatprep.subr.mxu0 0.0
        %4086 = vmatpush1.xpose.msra.mxu0 0.0
        %4087 = vmatprep.subr.mxu0 0.0
        %4088 = vmatpush1.xpose.msra.mxu0 0.0
        %4089 = vmatprep.subr.mxu0 0.0
        %4090 = vmatpush1.xpose.msra.mxu0 0.0
        %4091 = vmatprep.subr.mxu0 0.0
        %4092 = vmatpush1.xpose.msra.mxu0 0.0
        %4093 = vmatprep.subr.mxu0 0.0
        %4094 = vmatpush1.xpose.msra.mxu0 0.0
        %4095 = vmatprep.subr.mxu0 0.0
        %4096 = vmatpush1.xpose.msra.mxu0 0.0
        %4097 = vmatprep.subr.mxu0 0.0
        %4098 = vmatpush1.xpose.msra.mxu0 0.0
        %4099 = vmatprep.subr.mxu0 0.0
        %4100 = vmatpush1.xpose.msra.mxu0 0.0
        %4101 = vmatprep.subr.mxu0 0.0
        %4102 = vmatpush1.xpose.msra.mxu0 0.0
        %4103 = vmatprep.subr.mxu0 0.0
        %4104 = vmatpush1.xpose.msra.mxu0 0.0
        %4105 = vmatprep.subr.mxu0 0.0
        %4106 = vmatpush1.xpose.msra.mxu0 0.0
        %4107 = vmatprep.mubr.f32.mxu0 0.0
        %v4108 = vand.u32 %v4016, 4294901760
        %v4109 = vsub.f32 %v4016, %v4108
        %v4110 = vand.u32 %v4109, 4294901760
        %v4111 = vsub.f32 %v4109, %v4110
        %v4112 = vand.u32 %v4111, 4294901760
        %4113 = vmatmul.mubr.f32.gmra.mrb[0].mxu0 %v4112
        %v4114 = vpop.f32.mrb[0].mxu0
        %v4115 = vadd.f32 0.0, %v4114
        %v4116 = vpop.f32.mrb[0].mxu0
        %4117 = vmatprep.mubr.f32.mxu0 0.0
        %v4118 = vand.u32 %v4019, 4294901760
        %v4119 = vsub.f32 %v4019, %v4118
        %v4120 = vand.u32 %v4119, 4294901760
        %v4121 = vsub.f32 %v4119, %v4120
        %v4122 = vand.u32 %v4121, 4294901760
        %4123 = vmatmul.mubr.f32.gmra.mrb[0].mxu0 %v4122
        %v4124 = vpop.f32.mrb[0].mxu0
        %v4125 = vadd.f32 0.0, %v4124
        %v4126 = vpop.f32.mrb[0].mxu0
        %4127 = vmatprep.mubr.f32.mxu0 0.0
        %v4128 = vand.u32 %v4022, 4294901760
        %v4129 = vsub.f32 %v4022, %v4128
        %v4130 = vand.u32 %v4129, 4294901760
        %v4131 = vsub.f32 %v4129, %v4130
        %v4132 = vand.u32 %v4131, 4294901760
        %4133 = vmatmul.mubr.f32.gmra.mrb[0].mxu0 %v4132
        %v4134 = vpop.f32.mrb[0].mxu0
        %v4135 = vadd.f32 0.0, %v4134
        %v4136 = vpop.f32.mrb[0].mxu0
        %4137 = vmatprep.mubr.f32.mxu0 0.0
        %v4138 = vand.u32 %v4025, 4294901760
        %v4139 = vsub.f32 %v4025, %v4138
        %v4140 = vand.u32 %v4139, 4294901760
        %v4141 = vsub.f32 %v4139, %v4140
        %v4142 = vand.u32 %v4141, 4294901760
        %4143 = vmatmul.mubr.f32.gmra.mrb[0].mxu0 %v4142
        %v4144 = vpop.f32.mrb[0].mxu0
        %v4145 = vadd.f32 0.0, %v4144
        %v4146 = vpop.f32.mrb[0].mxu0
        %4147 = vmatprep.mubr.f32.mxu0 0.0
        %v4148 = vand.u32 %v4028, 4294901760
        %v4149 = vsub.f32 %v4028, %v4148
        %v4150 = vand.u32 %v4149, 4294901760
        %v4151 = vsub.f32 %v4149, %v4150
        %v4152 = vand.u32 %v4151, 4294901760
        %4153 = vmatmul.mubr.f32.gmra.mrb[0].mxu0 %v4152
        %v4154 = vpop.f32.mrb[0].mxu0
        %v4155 = vadd.f32 0.0, %v4154
        %v4156 = vpop.f32.mrb[0].mxu0
        %4157 = vmatprep.mubr.f32.mxu0 0.0
        %v4158 = vand.u32 %v4031, 4294901760
        %v4159 = vsub.f32 %v4031, %v4158
        %v4160 = vand.u32 %v4159, 4294901760
        %v4161 = vsub.f32 %v4159, %v4160
        %v4162 = vand.u32 %v4161, 4294901760
        %4163 = vmatmul.mubr.f32.gmra.mrb[0].mxu0 %v4162
        %v4164 = vpop.f32.mrb[0].mxu0
        %v4165 = vadd.f32 0.0, %v4164
        %v4166 = vpop.f32.mrb[0].mxu0
        %4167 = vmatprep.mubr.f32.mxu0 0.0
        %v4168 = vand.u32 %v4034, 4294901760
        %v4169 = vsub.f32 %v4034, %v4168
        %v4170 = vand.u32 %v4169, 4294901760
        %v4171 = vsub.f32 %v4169, %v4170
        %v4172 = vand.u32 %v4171, 4294901760
        %4173 = vmatmul.mubr.f32.gmra.mrb[0].mxu0 %v4172
        %v4174 = vpop.f32.mrb[0].mxu0
        %v4175 = vadd.f32 0.0, %v4174
        %v4176 = vpop.f32.mrb[0].mxu0
        %4177 = vmatprep.mubr.f32.mxu0 0.0
        %v4178 = vand.u32 %v4037, 4294901760
        %v4179 = vsub.f32 %v4037, %v4178
        %v4180 = vand.u32 %v4179, 4294901760
        %v4181 = vsub.f32 %v4179, %v4180
        %v4182 = vand.u32 %v4181, 4294901760
        %4183 = vmatmul.mubr.f32.gmra.mrb[0].mxu0 %v4182
        %v4184 = vpop.f32.mrb[0].mxu0
        %v4185 = vadd.f32 0.0, %v4184
        %v4186 = vpop.f32.mrb[0].mxu0
        %4187 = vdwg.mxu0
        %4188 = vmatprep.subr.mxu0 0.0
        %v4189 = vand.u32 %v4040, 4294901760
        %v4190 = vsub.f32 %v4040, %v4189
        %v4191 = vand.u32 %v4190, 4294901760
        %v4192 = vsub.f32 %v4190, %v4191
        %v4193 = vand.u32 %v4192, 4294901760
        %4194 = vmatpush1.xpose.msra.mxu0 %v4193
        %4195 = vmatprep.subr.mxu0 0.0
        %4196 = vmatpush1.xpose.msra.mxu0 0.0
        %4197 = vmatprep.subr.mxu0 0.0
        %4198 = vmatpush1.xpose.msra.mxu0 0.0
        %4199 = vmatprep.subr.mxu0 0.0
        %4200 = vmatpush1.xpose.msra.mxu0 0.0
        %4201 = vmatprep.subr.mxu0 0.0
        %4202 = vmatpush1.xpose.msra.mxu0 0.0
        %4203 = vmatprep.subr.mxu0 0.0
        %4204 = vmatpush1.xpose.msra.mxu0 0.0
        %4205 = vmatprep.subr.mxu0 0.0
        %4206 = vmatpush1.xpose.msra.mxu0 0.0
        %4207 = vmatprep.subr.mxu0 0.0
        %4208 = vmatpush1.xpose.msra.mxu0 0.0
        %4209 = vmatprep.subr.mxu0 0.0
        %4210 = vmatpush1.xpose.msra.mxu0 0.0
        %4211 = vmatprep.subr.mxu0 0.0
        %4212 = vmatpush1.xpose.msra.mxu0 0.0
        %4213 = vmatprep.subr.mxu0 0.0
        %4214 = vmatpush1.xpose.msra.mxu0 0.0
        %4215 = vmatprep.subr.mxu0 0.0
        %4216 = vmatpush1.xpose.msra.mxu0 0.0
        %4217 = vmatprep.subr.mxu0 0.0
        %4218 = vmatpush1.xpose.msra.mxu0 0.0
        %4219 = vmatprep.subr.mxu0 0.0
        %4220 = vmatpush1.xpose.msra.mxu0 0.0
        %4221 = vmatprep.subr.mxu0 0.0
        %4222 = vmatpush1.xpose.msra.mxu0 0.0
        %4223 = vmatprep.subr.mxu0 0.0
        %4224 = vmatpush1.xpose.msra.mxu0 0.0
        %4225 = vmatprep.subr.mxu0 0.0
        %4226 = vmatpush1.xpose.msra.mxu0 0.0
        %4227 = vmatprep.subr.mxu0 0.0
        %4228 = vmatpush1.xpose.msra.mxu0 0.0
        %4229 = vmatprep.subr.mxu0 0.0
        %4230 = vmatpush1.xpose.msra.mxu0 0.0
        %4231 = vmatprep.subr.mxu0 0.0
        %4232 = vmatpush1.xpose.msra.mxu0 0.0
        %4233 = vmatprep.subr.mxu0 0.0
        %4234 = vmatpush1.xpose.msra.mxu0 0.0
        %4235 = vmatprep.subr.mxu0 0.0
        %4236 = vmatpush1.xpose.msra.mxu0 0.0
        %4237 = vmatprep.subr.mxu0 0.0
        %4238 = vmatpush1.xpose.msra.mxu0 0.0
        %4239 = vmatprep.subr.mxu0 0.0
        %4240 = vmatpush1.xpose.msra.mxu0 0.0
        %4241 = vmatprep.subr.mxu0 0.0
        %4242 = vmatpush1.xpose.msra.mxu0 0.0
        %4243 = vmatprep.subr.mxu0 0.0
        %4244 = vmatpush1.xpose.msra.mxu0 0.0
        %4245 = vmatprep.subr.mxu0 0.0
        %4246 = vmatpush1.xpose.msra.mxu0 0.0
        %4247 = vmatprep.subr.mxu0 0.0
        %4248 = vmatpush1.xpose.msra.mxu0 0.0
        %4249 = vmatprep.subr.mxu0 0.0
        %4250 = vmatpush1.xpose.msra.mxu0 0.0
        %4251 = vmatprep.subr.mxu0 0.0
        %4252 = vmatpush1.xpose.msra.mxu0 0.0
        %4253 = vmatprep.subr.mxu0 0.0
        %4254 = vmatpush1.xpose.msra.mxu0 0.0
        %4255 = vmatprep.subr.mxu0 0.0
        %4256 = vmatpush1.xpose.msra.mxu0 0.0
        %4257 = vmatprep.mubr.f32.mxu0 0.0
        %v4258 = vand.u32 %v4016, 4294901760
        %4259 = vmatmul.mubr.f32.gmra.mrb[0].mxu0 %v4258
        %v4260 = vpop.f32.mrb[0].mxu0
        %v4261 = vadd.f32 %v4115, %v4260
        %v4262 = vpop.f32.mrb[0].mxu0
        %4263 = vmatprep.mubr.f32.mxu0 0.0
        %v4264 = vand.u32 %v4019, 4294901760
        %4265 = vmatmul.mubr.f32.gmra.mrb[0].mxu0 %v4264
        %v4266 = vpop.f32.mrb[0].mxu0
        %v4267 = vadd.f32 %v4125, %v4266
        %v4268 = vpop.f32.mrb[0].mxu0
        %4269 = vmatprep.mubr.f32.mxu0 0.0
        %v4270 = vand.u32 %v4022, 4294901760
        %4271 = vmatmul.mubr.f32.gmra.mrb[0].mxu0 %v4270
        %v4272 = vpop.f32.mrb[0].mxu0
        %v4273 = vadd.f32 %v4135, %v4272
        %v4274 = vpop.f32.mrb[0].mxu0
        %4275 = vmatprep.mubr.f32.mxu0 0.0
        %v4276 = vand.u32 %v4025, 4294901760
        %4277 = vmatmul.mubr.f32.gmra.mrb[0].mxu0 %v4276
        %v4278 = vpop.f32.mrb[0].mxu0
        %v4279 = vadd.f32 %v4145, %v4278
        %v4280 = vpop.f32.mrb[0].mxu0
        %4281 = vmatprep.mubr.f32.mxu0 0.0
        %v4282 = vand.u32 %v4028, 4294901760
        %4283 = vmatmul.mubr.f32.gmra.mrb[0].mxu0 %v4282
        %v4284 = vpop.f32.mrb[0].mxu0
        %v4285 = vadd.f32 %v4155, %v4284
        %v4286 = vpop.f32.mrb[0].mxu0
        %4287 = vmatprep.mubr.f32.mxu0 0.0
        %v4288 = vand.u32 %v4031, 4294901760
        %4289 = vmatmul.mubr.f32.gmra.mrb[0].mxu0 %v4288
        %v4290 = vpop.f32.mrb[0].mxu0
        %v4291 = vadd.f32 %v4165, %v4290
        %v4292 = vpop.f32.mrb[0].mxu0
        %4293 = vmatprep.mubr.f32.mxu0 0.0
        %v4294 = vand.u32 %v4034, 4294901760
        %4295 = vmatmul.mubr.f32.gmra.mrb[0].mxu0 %v4294
        %v4296 = vpop.f32.mrb[0].mxu0
        %v4297 = vadd.f32 %v4175, %v4296
        %v4298 = vpop.f32.mrb[0].mxu0
        %4299 = vmatprep.mubr.f32.mxu0 0.0
        %v4300 = vand.u32 %v4037, 4294901760
        %4301 = vmatmul.mubr.f32.gmra.mrb[0].mxu0 %v4300
        %v4302 = vpop.f32.mrb[0].mxu0
        %v4303 = vadd.f32 %v4185, %v4302
        %v4304 = vpop.f32.mrb[0].mxu0
        %4305 = vdwg.mxu0
        %4306 = vmatprep.subr.mxu0 0.0
        %v4307 = vand.u32 %v4040, 4294901760
        %v4308 = vsub.f32 %v4040, %v4307
        %4309 = vmatpush1.xpose.msra.mxu0 %v4308
        %4310 = vmatprep.subr.mxu0 0.0
        %4311 = vmatpush1.xpose.msra.mxu0 0.0
        %4312 = vmatprep.subr.mxu0 0.0
        %4313 = vmatpush1.xpose.msra.mxu0 0.0
        %4314 = vmatprep.subr.mxu0 0.0
        %4315 = vmatpush1.xpose.msra.mxu0 0.0
        %4316 = vmatprep.subr.mxu0 0.0
        %4317 = vmatpush1.xpose.msra.mxu0 0.0
        %4318 = vmatprep.subr.mxu0 0.0
        %4319 = vmatpush1.xpose.msra.mxu0 0.0
        %4320 = vmatprep.subr.mxu0 0.0
        %4321 = vmatpush1.xpose.msra.mxu0 0.0
        %4322 = vmatprep.subr.mxu0 0.0
        %4323 = vmatpush1.xpose.msra.mxu0 0.0
        %4324 = vmatprep.subr.mxu0 0.0
        %4325 = vmatpush1.xpose.msra.mxu0 0.0
        %4326 = vmatprep.subr.mxu0 0.0
        %4327 = vmatpush1.xpose.msra.mxu0 0.0
        %4328 = vmatprep.subr.mxu0 0.0
        %4329 = vmatpush1.xpose.msra.mxu0 0.0
        %4330 = vmatprep.subr.mxu0 0.0
        %4331 = vmatpush1.xpose.msra.mxu0 0.0
        %4332 = vmatprep.subr.mxu0 0.0
        %4333 = vmatpush1.xpose.msra.mxu0 0.0
        %4334 = vmatprep.subr.mxu0 0.0
        %4335 = vmatpush1.xpose.msra.mxu0 0.0
        %4336 = vmatprep.subr.mxu0 0.0
        %4337 = vmatpush1.xpose.msra.mxu0 0.0
        %4338 = vmatprep.subr.mxu0 0.0
        %4339 = vmatpush1.xpose.msra.mxu0 0.0
        %4340 = vmatprep.subr.mxu0 0.0
        %4341 = vmatpush1.xpose.msra.mxu0 0.0
        %4342 = vmatprep.subr.mxu0 0.0
        %4343 = vmatpush1.xpose.msra.mxu0 0.0
        %4344 = vmatprep.subr.mxu0 0.0
        %4345 = vmatpush1.xpose.msra.mxu0 0.0
        %4346 = vmatprep.subr.mxu0 0.0
        %4347 = vmatpush1.xpose.msra.mxu0 0.0
        %4348 = vmatprep.subr.mxu0 0.0
        %4349 = vmatpush1.xpose.msra.mxu0 0.0
        %4350 = vmatprep.subr.mxu0 0.0
        %4351 = vmatpush1.xpose.msra.mxu0 0.0
        %4352 = vmatprep.subr.mxu0 0.0
        %4353 = vmatpush1.xpose.msra.mxu0 0.0
        %4354 = vmatprep.subr.mxu0 0.0
        %4355 = vmatpush1.xpose.msra.mxu0 0.0
        %4356 = vmatprep.subr.mxu0 0.0
        %4357 = vmatpush1.xpose.msra.mxu0 0.0
        %4358 = vmatprep.subr.mxu0 0.0
        %4359 = vmatpush1.xpose.msra.mxu0 0.0
        %4360 = vmatprep.subr.mxu0 0.0
        %4361 = vmatpush1.xpose.msra.mxu0 0.0
        %4362 = vmatprep.subr.mxu0 0.0
        %4363 = vmatpush1.xpose.msra.mxu0 0.0
        %4364 = vmatprep.subr.mxu0 0.0
        %4365 = vmatpush1.xpose.msra.mxu0 0.0
        %4366 = vmatprep.subr.mxu0 0.0
        %4367 = vmatpush1.xpose.msra.mxu0 0.0
        %4368 = vmatprep.subr.mxu0 0.0
        %4369 = vmatpush1.xpose.msra.mxu0 0.0
        %4370 = vmatprep.subr.mxu0 0.0
        %4371 = vmatpush1.xpose.msra.mxu0 0.0
        %4372 = vmatprep.mubr.f32.mxu0 0.0
        %v4373 = vand.u32 %v4016, 4294901760
        %v4374 = vsub.f32 %v4016, %v4373
        %4375 = vmatmul.mubr.f32.gmra.mrb[0].mxu0 %v4374
        %v4376 = vpop.f32.mrb[0].mxu0
        %v4377 = vadd.f32 %v4261, %v4376
        %v4378 = vpop.f32.mrb[0].mxu0
        %4379 = vmatprep.mubr.f32.mxu0 0.0
        %v4380 = vand.u32 %v4019, 4294901760
        %v4381 = vsub.f32 %v4019, %v4380
        %4382 = vmatmul.mubr.f32.gmra.mrb[0].mxu0 %v4381
        %v4383 = vpop.f32.mrb[0].mxu0
        %v4384 = vadd.f32 %v4267, %v4383
        %v4385 = vpop.f32.mrb[0].mxu0
        %4386 = vmatprep.mubr.f32.mxu0 0.0
        %v4387 = vand.u32 %v4022, 4294901760
        %v4388 = vsub.f32 %v4022, %v4387
        %4389 = vmatmul.mubr.f32.gmra.mrb[0].mxu0 %v4388
        %v4390 = vpop.f32.mrb[0].mxu0
        %v4391 = vadd.f32 %v4273, %v4390
        %v4392 = vpop.f32.mrb[0].mxu0
        %4393 = vmatprep.mubr.f32.mxu0 0.0
        %v4394 = vand.u32 %v4025, 4294901760
        %v4395 = vsub.f32 %v4025, %v4394
        %4396 = vmatmul.mubr.f32.gmra.mrb[0].mxu0 %v4395
        %v4397 = vpop.f32.mrb[0].mxu0
        %v4398 = vadd.f32 %v4279, %v4397
        %v4399 = vpop.f32.mrb[0].mxu0
        %4400 = vmatprep.mubr.f32.mxu0 0.0
        %v4401 = vand.u32 %v4028, 4294901760
        %v4402 = vsub.f32 %v4028, %v4401
        %4403 = vmatmul.mubr.f32.gmra.mrb[0].mxu0 %v4402
        %v4404 = vpop.f32.mrb[0].mxu0
        %v4405 = vadd.f32 %v4285, %v4404
        %v4406 = vpop.f32.mrb[0].mxu0
        %4407 = vmatprep.mubr.f32.mxu0 0.0
        %v4408 = vand.u32 %v4031, 4294901760
        %v4409 = vsub.f32 %v4031, %v4408
        %4410 = vmatmul.mubr.f32.gmra.mrb[0].mxu0 %v4409
        %v4411 = vpop.f32.mrb[0].mxu0
        %v4412 = vadd.f32 %v4291, %v4411
        %v4413 = vpop.f32.mrb[0].mxu0
        %4414 = vmatprep.mubr.f32.mxu0 0.0
        %v4415 = vand.u32 %v4034, 4294901760
        %v4416 = vsub.f32 %v4034, %v4415
        %4417 = vmatmul.mubr.f32.gmra.mrb[0].mxu0 %v4416
        %v4418 = vpop.f32.mrb[0].mxu0
        %v4419 = vadd.f32 %v4297, %v4418
        %v4420 = vpop.f32.mrb[0].mxu0
        %4421 = vmatprep.mubr.f32.mxu0 0.0
        %v4422 = vand.u32 %v4037, 4294901760
        %v4423 = vsub.f32 %v4037, %v4422
        %4424 = vmatmul.mubr.f32.gmra.mrb[0].mxu0 %v4423
        %v4425 = vpop.f32.mrb[0].mxu0
        %v4426 = vadd.f32 %v4303, %v4425
        %v4427 = vpop.f32.mrb[0].mxu0
        %4428 = vdwg.mxu0
        %4429 = vmatprep.subr.mxu0 0.0
        %v4430 = vand.u32 %v4040, 4294901760
        %4431 = vmatpush1.xpose.msra.mxu0 %v4430
        %4432 = vmatprep.subr.mxu0 0.0
        %4433 = vmatpush1.xpose.msra.mxu0 0.0
        %4434 = vmatprep.subr.mxu0 0.0
        %4435 = vmatpush1.xpose.msra.mxu0 0.0
        %4436 = vmatprep.subr.mxu0 0.0
        %4437 = vmatpush1.xpose.msra.mxu0 0.0
        %4438 = vmatprep.subr.mxu0 0.0
        %4439 = vmatpush1.xpose.msra.mxu0 0.0
        %4440 = vmatprep.subr.mxu0 0.0
        %4441 = vmatpush1.xpose.msra.mxu0 0.0
        %4442 = vmatprep.subr.mxu0 0.0
        %4443 = vmatpush1.xpose.msra.mxu0 0.0
        %4444 = vmatprep.subr.mxu0 0.0
        %4445 = vmatpush1.xpose.msra.mxu0 0.0
        %4446 = vmatprep.subr.mxu0 0.0
        %4447 = vmatpush1.xpose.msra.mxu0 0.0
        %4448 = vmatprep.subr.mxu0 0.0
        %4449 = vmatpush1.xpose.msra.mxu0 0.0
        %4450 = vmatprep.subr.mxu0 0.0
        %4451 = vmatpush1.xpose.msra.mxu0 0.0
        %4452 = vmatprep.subr.mxu0 0.0
        %4453 = vmatpush1.xpose.msra.mxu0 0.0
        %4454 = vmatprep.subr.mxu0 0.0
        %4455 = vmatpush1.xpose.msra.mxu0 0.0
        %4456 = vmatprep.subr.mxu0 0.0
        %4457 = vmatpush1.xpose.msra.mxu0 0.0
        %4458 = vmatprep.subr.mxu0 0.0
        %4459 = vmatpush1.xpose.msra.mxu0 0.0
        %4460 = vmatprep.subr.mxu0 0.0
        %4461 = vmatpush1.xpose.msra.mxu0 0.0
        %4462 = vmatprep.subr.mxu0 0.0
        %4463 = vmatpush1.xpose.msra.mxu0 0.0
        %4464 = vmatprep.subr.mxu0 0.0
        %4465 = vmatpush1.xpose.msra.mxu0 0.0
        %4466 = vmatprep.subr.mxu0 0.0
        %4467 = vmatpush1.xpose.msra.mxu0 0.0
        %4468 = vmatprep.subr.mxu0 0.0
        %4469 = vmatpush1.xpose.msra.mxu0 0.0
        %4470 = vmatprep.subr.mxu0 0.0
        %4471 = vmatpush1.xpose.msra.mxu0 0.0
        %4472 = vmatprep.subr.mxu0 0.0
        %4473 = vmatpush1.xpose.msra.mxu0 0.0
        %4474 = vmatprep.subr.mxu0 0.0
        %4475 = vmatpush1.xpose.msra.mxu0 0.0
        %4476 = vmatprep.subr.mxu0 0.0
        %4477 = vmatpush1.xpose.msra.mxu0 0.0
        %4478 = vmatprep.subr.mxu0 0.0
        %4479 = vmatpush1.xpose.msra.mxu0 0.0
        %4480 = vmatprep.subr.mxu0 0.0
        %4481 = vmatpush1.xpose.msra.mxu0 0.0
        %4482 = vmatprep.subr.mxu0 0.0
        %4483 = vmatpush1.xpose.msra.mxu0 0.0
        %4484 = vmatprep.subr.mxu0 0.0
        %4485 = vmatpush1.xpose.msra.mxu0 0.0
        %4486 = vmatprep.subr.mxu0 0.0
        %4487 = vmatpush1.xpose.msra.mxu0 0.0
        %4488 = vmatprep.subr.mxu0 0.0
        %4489 = vmatpush1.xpose.msra.mxu0 0.0
        %4490 = vmatprep.subr.mxu0 0.0
        %4491 = vmatpush1.xpose.msra.mxu0 0.0
        %4492 = vmatprep.subr.mxu0 0.0
        %4493 = vmatpush1.xpose.msra.mxu0 0.0
        %4494 = vmatprep.mubr.f32.mxu0 0.0
        %v4495 = vand.u32 %v4016, 4294901760
        %v4496 = vsub.f32 %v4016, %v4495
        %v4497 = vand.u32 %v4496, 4294901760
        %4498 = vmatmul.mubr.f32.gmra.mrb[0].mxu0 %v4497
        %v4499 = vpop.f32.mrb[0].mxu0
        %v4500 = vadd.f32 %v4377, %v4499
        %v4501 = vpop.f32.mrb[0].mxu0
        %4502 = vmatprep.mubr.f32.mxu0 0.0
        %v4503 = vand.u32 %v4019, 4294901760
        %v4504 = vsub.f32 %v4019, %v4503
        %v4505 = vand.u32 %v4504, 4294901760
        %4506 = vmatmul.mubr.f32.gmra.mrb[0].mxu0 %v4505
        %v4507 = vpop.f32.mrb[0].mxu0
        %v4508 = vadd.f32 %v4384, %v4507
        %v4509 = vpop.f32.mrb[0].mxu0
        %4510 = vmatprep.mubr.f32.mxu0 0.0
        %v4511 = vand.u32 %v4022, 4294901760
        %v4512 = vsub.f32 %v4022, %v4511
        %v4513 = vand.u32 %v4512, 4294901760
        %4514 = vmatmul.mubr.f32.gmra.mrb[0].mxu0 %v4513
        %v4515 = vpop.f32.mrb[0].mxu0
        %v4516 = vadd.f32 %v4391, %v4515
        %v4517 = vpop.f32.mrb[0].mxu0
        %4518 = vmatprep.mubr.f32.mxu0 0.0
        %v4519 = vand.u32 %v4025, 4294901760
        %v4520 = vsub.f32 %v4025, %v4519
        %v4521 = vand.u32 %v4520, 4294901760
        %4522 = vmatmul.mubr.f32.gmra.mrb[0].mxu0 %v4521
        %v4523 = vpop.f32.mrb[0].mxu0
        %v4524 = vadd.f32 %v4398, %v4523
        %v4525 = vpop.f32.mrb[0].mxu0
        %4526 = vmatprep.mubr.f32.mxu0 0.0
        %v4527 = vand.u32 %v4028, 4294901760
        %v4528 = vsub.f32 %v4028, %v4527
        %v4529 = vand.u32 %v4528, 4294901760
        %4530 = vmatmul.mubr.f32.gmra.mrb[0].mxu0 %v4529
        %v4531 = vpop.f32.mrb[0].mxu0
        %v4532 = vadd.f32 %v4405, %v4531
        %v4533 = vpop.f32.mrb[0].mxu0
        %4534 = vmatprep.mubr.f32.mxu0 0.0
        %v4535 = vand.u32 %v4031, 4294901760
        %v4536 = vsub.f32 %v4031, %v4535
        %v4537 = vand.u32 %v4536, 4294901760
        %4538 = vmatmul.mubr.f32.gmra.mrb[0].mxu0 %v4537
        %v4539 = vpop.f32.mrb[0].mxu0
        %v4540 = vadd.f32 %v4412, %v4539
        %v4541 = vpop.f32.mrb[0].mxu0
        %4542 = vmatprep.mubr.f32.mxu0 0.0
        %v4543 = vand.u32 %v4034, 4294901760
        %v4544 = vsub.f32 %v4034, %v4543
        %v4545 = vand.u32 %v4544, 4294901760
        %4546 = vmatmul.mubr.f32.gmra.mrb[0].mxu0 %v4545
        %v4547 = vpop.f32.mrb[0].mxu0
        %v4548 = vadd.f32 %v4419, %v4547
        %v4549 = vpop.f32.mrb[0].mxu0
        %4550 = vmatprep.mubr.f32.mxu0 0.0
        %v4551 = vand.u32 %v4037, 4294901760
        %v4552 = vsub.f32 %v4037, %v4551
        %v4553 = vand.u32 %v4552, 4294901760
        %4554 = vmatmul.mubr.f32.gmra.mrb[0].mxu0 %v4553
        %v4555 = vpop.f32.mrb[0].mxu0
        %v4556 = vadd.f32 %v4426, %v4555
        %v4557 = vpop.f32.mrb[0].mxu0
        %4558 = vdwg.mxu0
        %4559 = vmatprep.subr.mxu0 0.0
        %v4560 = vand.u32 %v4040, 4294901760
        %v4561 = vsub.f32 %v4040, %v4560
        %v4562 = vand.u32 %v4561, 4294901760
        %4563 = vmatpush1.xpose.msra.mxu0 %v4562
        %4564 = vmatprep.subr.mxu0 0.0
        %4565 = vmatpush1.xpose.msra.mxu0 0.0
        %4566 = vmatprep.subr.mxu0 0.0
        %4567 = vmatpush1.xpose.msra.mxu0 0.0
        %4568 = vmatprep.subr.mxu0 0.0
        %4569 = vmatpush1.xpose.msra.mxu0 0.0
        %4570 = vmatprep.subr.mxu0 0.0
        %4571 = vmatpush1.xpose.msra.mxu0 0.0
        %4572 = vmatprep.subr.mxu0 0.0
        %4573 = vmatpush1.xpose.msra.mxu0 0.0
        %4574 = vmatprep.subr.mxu0 0.0
        %4575 = vmatpush1.xpose.msra.mxu0 0.0
        %4576 = vmatprep.subr.mxu0 0.0
        %4577 = vmatpush1.xpose.msra.mxu0 0.0
        %4578 = vmatprep.subr.mxu0 0.0
        %4579 = vmatpush1.xpose.msra.mxu0 0.0
        %4580 = vmatprep.subr.mxu0 0.0
        %4581 = vmatpush1.xpose.msra.mxu0 0.0
        %4582 = vmatprep.subr.mxu0 0.0
        %4583 = vmatpush1.xpose.msra.mxu0 0.0
        %4584 = vmatprep.subr.mxu0 0.0
        %4585 = vmatpush1.xpose.msra.mxu0 0.0
        %4586 = vmatprep.subr.mxu0 0.0
        %4587 = vmatpush1.xpose.msra.mxu0 0.0
        %4588 = vmatprep.subr.mxu0 0.0
        %4589 = vmatpush1.xpose.msra.mxu0 0.0
        %4590 = vmatprep.subr.mxu0 0.0
        %4591 = vmatpush1.xpose.msra.mxu0 0.0
        %4592 = vmatprep.subr.mxu0 0.0
        %4593 = vmatpush1.xpose.msra.mxu0 0.0
        %4594 = vmatprep.subr.mxu0 0.0
        %4595 = vmatpush1.xpose.msra.mxu0 0.0
        %4596 = vmatprep.subr.mxu0 0.0
        %4597 = vmatpush1.xpose.msra.mxu0 0.0
        %4598 = vmatprep.subr.mxu0 0.0
        %4599 = vmatpush1.xpose.msra.mxu0 0.0
        %4600 = vmatprep.subr.mxu0 0.0
        %4601 = vmatpush1.xpose.msra.mxu0 0.0
        %4602 = vmatprep.subr.mxu0 0.0
        %4603 = vmatpush1.xpose.msra.mxu0 0.0
        %4604 = vmatprep.subr.mxu0 0.0
        %4605 = vmatpush1.xpose.msra.mxu0 0.0
        %4606 = vmatprep.subr.mxu0 0.0
        %4607 = vmatpush1.xpose.msra.mxu0 0.0
        %4608 = vmatprep.subr.mxu0 0.0
        %4609 = vmatpush1.xpose.msra.mxu0 0.0
        %4610 = vmatprep.subr.mxu0 0.0
        %4611 = vmatpush1.xpose.msra.mxu0 0.0
        %4612 = vmatprep.subr.mxu0 0.0
        %4613 = vmatpush1.xpose.msra.mxu0 0.0
        %4614 = vmatprep.subr.mxu0 0.0
        %4615 = vmatpush1.xpose.msra.mxu0 0.0
        %4616 = vmatprep.subr.mxu0 0.0
        %4617 = vmatpush1.xpose.msra.mxu0 0.0
        %4618 = vmatprep.subr.mxu0 0.0
        %4619 = vmatpush1.xpose.msra.mxu0 0.0
        %4620 = vmatprep.subr.mxu0 0.0
        %4621 = vmatpush1.xpose.msra.mxu0 0.0
        %4622 = vmatprep.subr.mxu0 0.0
        %4623 = vmatpush1.xpose.msra.mxu0 0.0
        %4624 = vmatprep.subr.mxu0 0.0
        %4625 = vmatpush1.xpose.msra.mxu0 0.0
        %4626 = vmatprep.mubr.f32.mxu0 0.0
        %v4627 = vand.u32 %v4016, 4294901760
        %4628 = vmatmul.mubr.f32.gmra.mrb[0].mxu0 %v4627
        %v4629 = vpop.f32.mrb[0].mxu0
        %v4630 = vadd.f32 %v4500, %v4629
        %v4631 = vpop.f32.mrb[0].mxu0
        %4632 = vmatprep.mubr.f32.mxu0 0.0
        %v4633 = vand.u32 %v4019, 4294901760
        %4634 = vmatmul.mubr.f32.gmra.mrb[0].mxu0 %v4633
        %v4635 = vpop.f32.mrb[0].mxu0
        %v4636 = vadd.f32 %v4508, %v4635
        %v4637 = vpop.f32.mrb[0].mxu0
        %4638 = vmatprep.mubr.f32.mxu0 0.0
        %v4639 = vand.u32 %v4022, 4294901760
        %4640 = vmatmul.mubr.f32.gmra.mrb[0].mxu0 %v4639
        %v4641 = vpop.f32.mrb[0].mxu0
        %v4642 = vadd.f32 %v4516, %v4641
        %v4643 = vpop.f32.mrb[0].mxu0
        %4644 = vmatprep.mubr.f32.mxu0 0.0
        %v4645 = vand.u32 %v4025, 4294901760
        %4646 = vmatmul.mubr.f32.gmra.mrb[0].mxu0 %v4645
        %v4647 = vpop.f32.mrb[0].mxu0
        %v4648 = vadd.f32 %v4524, %v4647
        %v4649 = vpop.f32.mrb[0].mxu0
        %4650 = vmatprep.mubr.f32.mxu0 0.0
        %v4651 = vand.u32 %v4028, 4294901760
        %4652 = vmatmul.mubr.f32.gmra.mrb[0].mxu0 %v4651
        %v4653 = vpop.f32.mrb[0].mxu0
        %v4654 = vadd.f32 %v4532, %v4653
        %v4655 = vpop.f32.mrb[0].mxu0
        %4656 = vmatprep.mubr.f32.mxu0 0.0
        %v4657 = vand.u32 %v4031, 4294901760
        %4658 = vmatmul.mubr.f32.gmra.mrb[0].mxu0 %v4657
        %v4659 = vpop.f32.mrb[0].mxu0
        %v4660 = vadd.f32 %v4540, %v4659
        %v4661 = vpop.f32.mrb[0].mxu0
        %4662 = vmatprep.mubr.f32.mxu0 0.0
        %v4663 = vand.u32 %v4034, 4294901760
        %4664 = vmatmul.mubr.f32.gmra.mrb[0].mxu0 %v4663
        %v4665 = vpop.f32.mrb[0].mxu0
        %v4666 = vadd.f32 %v4548, %v4665
        %v4667 = vpop.f32.mrb[0].mxu0
        %4668 = vmatprep.mubr.f32.mxu0 0.0
        %v4669 = vand.u32 %v4037, 4294901760
        %4670 = vmatmul.mubr.f32.gmra.mrb[0].mxu0 %v4669
        %v4671 = vpop.f32.mrb[0].mxu0
        %v4672 = vadd.f32 %v4556, %v4671
        %v4673 = vpop.f32.mrb[0].mxu0
        %4674 = vdwg.mxu0
        %4675 = vmatprep.subr.mxu0 0.0
        %v4676 = vand.u32 %v4040, 4294901760
        %4677 = vmatpush1.xpose.msra.mxu0 %v4676
        %4678 = vmatprep.subr.mxu0 0.0
        %4679 = vmatpush1.xpose.msra.mxu0 0.0
        %4680 = vmatprep.subr.mxu0 0.0
        %4681 = vmatpush1.xpose.msra.mxu0 0.0
        %4682 = vmatprep.subr.mxu0 0.0
        %4683 = vmatpush1.xpose.msra.mxu0 0.0
        %4684 = vmatprep.subr.mxu0 0.0
        %4685 = vmatpush1.xpose.msra.mxu0 0.0
        %4686 = vmatprep.subr.mxu0 0.0
        %4687 = vmatpush1.xpose.msra.mxu0 0.0
        %4688 = vmatprep.subr.mxu0 0.0
        %4689 = vmatpush1.xpose.msra.mxu0 0.0
        %4690 = vmatprep.subr.mxu0 0.0
        %4691 = vmatpush1.xpose.msra.mxu0 0.0
        %4692 = vmatprep.subr.mxu0 0.0
        %4693 = vmatpush1.xpose.msra.mxu0 0.0
        %4694 = vmatprep.subr.mxu0 0.0
        %4695 = vmatpush1.xpose.msra.mxu0 0.0
        %4696 = vmatprep.subr.mxu0 0.0
        %4697 = vmatpush1.xpose.msra.mxu0 0.0
        %4698 = vmatprep.subr.mxu0 0.0
        %4699 = vmatpush1.xpose.msra.mxu0 0.0
        %4700 = vmatprep.subr.mxu0 0.0
        %4701 = vmatpush1.xpose.msra.mxu0 0.0
        %4702 = vmatprep.subr.mxu0 0.0
        %4703 = vmatpush1.xpose.msra.mxu0 0.0
        %4704 = vmatprep.subr.mxu0 0.0
        %4705 = vmatpush1.xpose.msra.mxu0 0.0
        %4706 = vmatprep.subr.mxu0 0.0
        %4707 = vmatpush1.xpose.msra.mxu0 0.0
        %4708 = vmatprep.subr.mxu0 0.0
        %4709 = vmatpush1.xpose.msra.mxu0 0.0
        %4710 = vmatprep.subr.mxu0 0.0
        %4711 = vmatpush1.xpose.msra.mxu0 0.0
        %4712 = vmatprep.subr.mxu0 0.0
        %4713 = vmatpush1.xpose.msra.mxu0 0.0
        %4714 = vmatprep.subr.mxu0 0.0
        %4715 = vmatpush1.xpose.msra.mxu0 0.0
        %4716 = vmatprep.subr.mxu0 0.0
        %4717 = vmatpush1.xpose.msra.mxu0 0.0
        %4718 = vmatprep.subr.mxu0 0.0
        %4719 = vmatpush1.xpose.msra.mxu0 0.0
        %4720 = vmatprep.subr.mxu0 0.0
        %4721 = vmatpush1.xpose.msra.mxu0 0.0
        %4722 = vmatprep.subr.mxu0 0.0
        %4723 = vmatpush1.xpose.msra.mxu0 0.0
        %4724 = vmatprep.subr.mxu0 0.0
        %4725 = vmatpush1.xpose.msra.mxu0 0.0
        %4726 = vmatprep.subr.mxu0 0.0
        %4727 = vmatpush1.xpose.msra.mxu0 0.0
        %4728 = vmatprep.subr.mxu0 0.0
        %4729 = vmatpush1.xpose.msra.mxu0 0.0
        %4730 = vmatprep.subr.mxu0 0.0
        %4731 = vmatpush1.xpose.msra.mxu0 0.0
        %4732 = vmatprep.subr.mxu0 0.0
        %4733 = vmatpush1.xpose.msra.mxu0 0.0
        %4734 = vmatprep.subr.mxu0 0.0
        %4735 = vmatpush1.xpose.msra.mxu0 0.0
        %4736 = vmatprep.subr.mxu0 0.0
        %4737 = vmatpush1.xpose.msra.mxu0 0.0
        %4738 = vmatprep.subr.mxu0 0.0
        %4739 = vmatpush1.xpose.msra.mxu0 0.0
        %4740 = vmatprep.mubr.f32.mxu0 0.0
        %v4741 = vand.u32 %v4016, 4294901760
        %4742 = vmatmul.mubr.f32.gmra.mrb[0].mxu0 %v4741
        %v4743 = vpop.f32.mrb[0].mxu0
        %v4744 = vadd.f32 %v4630, %v4743
        %v4745 = vpop.f32.mrb[0].mxu0
        %4746 = vmatprep.mubr.f32.mxu0 0.0
        %v4747 = vand.u32 %v4019, 4294901760
        %4748 = vmatmul.mubr.f32.gmra.mrb[0].mxu0 %v4747
        %v4749 = vpop.f32.mrb[0].mxu0
        %v4750 = vadd.f32 %v4636, %v4749
        %v4751 = vpop.f32.mrb[0].mxu0
        %4752 = vmatprep.mubr.f32.mxu0 0.0
        %v4753 = vand.u32 %v4022, 4294901760
        %4754 = vmatmul.mubr.f32.gmra.mrb[0].mxu0 %v4753
        %v4755 = vpop.f32.mrb[0].mxu0
        %v4756 = vadd.f32 %v4642, %v4755
        %v4757 = vpop.f32.mrb[0].mxu0
        %4758 = vmatprep.mubr.f32.mxu0 0.0
        %v4759 = vand.u32 %v4025, 4294901760
        %4760 = vmatmul.mubr.f32.gmra.mrb[0].mxu0 %v4759
        %v4761 = vpop.f32.mrb[0].mxu0
        %v4762 = vadd.f32 %v4648, %v4761
        %v4763 = vpop.f32.mrb[0].mxu0
        %4764 = vmatprep.mubr.f32.mxu0 0.0
        %v4765 = vand.u32 %v4028, 4294901760
        %4766 = vmatmul.mubr.f32.gmra.mrb[0].mxu0 %v4765
        %v4767 = vpop.f32.mrb[0].mxu0
        %v4768 = vadd.f32 %v4654, %v4767
        %v4769 = vpop.f32.mrb[0].mxu0
        %4770 = vmatprep.mubr.f32.mxu0 0.0
        %v4771 = vand.u32 %v4031, 4294901760
        %4772 = vmatmul.mubr.f32.gmra.mrb[0].mxu0 %v4771
        %v4773 = vpop.f32.mrb[0].mxu0
        %v4774 = vadd.f32 %v4660, %v4773
        %v4775 = vpop.f32.mrb[0].mxu0
        %4776 = vmatprep.mubr.f32.mxu0 0.0
        %v4777 = vand.u32 %v4034, 4294901760
        %4778 = vmatmul.mubr.f32.gmra.mrb[0].mxu0 %v4777
        %v4779 = vpop.f32.mrb[0].mxu0
        %v4780 = vadd.f32 %v4666, %v4779
        %v4781 = vpop.f32.mrb[0].mxu0
        %4782 = vmatprep.mubr.f32.mxu0 0.0
        %v4783 = vand.u32 %v4037, 4294901760
        %4784 = vmatmul.mubr.f32.gmra.mrb[0].mxu0 %v4783
        %v4785 = vpop.f32.mrb[0].mxu0
        %v4786 = vadd.f32 %v4672, %v4785
        %v4787 = vpop.f32.mrb[0].mxu0
        %4788 = vdwg.mxu0
        %v4789 = vsel %vm390, %v4744, -inf
        %4790 = vmax.xlane.f32.xlu0 %v4789
        %v4791 = vpop.xlane.xlu0 %4790
        %v4792 = vsel %vm390, %v4750, -inf
        %4793 = vmax.xlane.f32.xlu0 %v4792
        %v4794 = vpop.xlane.xlu0 %4793
        %v4795 = vsel %vm390, %v4756, -inf
        %4796 = vmax.xlane.f32.xlu0 %v4795
        %v4797 = vpop.xlane.xlu0 %4796
        %v4798 = vsel %vm390, %v4762, -inf
        %4799 = vmax.xlane.f32.xlu0 %v4798
        %v4800 = vpop.xlane.xlu0 %4799
        %v4801 = vsel %vm390, %v4768, -inf
        %4802 = vmax.xlane.f32.xlu0 %v4801
        %v4803 = vpop.xlane.xlu0 %4802
        %v4804 = vsel %vm390, %v4774, -inf
        %4805 = vmax.xlane.f32.xlu0 %v4804
        %v4806 = vpop.xlane.xlu0 %4805
        %v4807 = vsel %vm390, %v4780, -inf
        %4808 = vmax.xlane.f32.xlu0 %v4807
        %v4809 = vpop.xlane.xlu0 %4808
        %v4810 = vsel %vm390, %v4786, -inf
        %4811 = vmax.xlane.f32.xlu0 %v4810
        %v4812 = vpop.xlane.xlu0 %4811
        %v4813 = vsub.f32 %v4744, %v4791
        %v4814 = vsub.f32 %v4750, %v4794
        %v4815 = vsub.f32 %v4756, %v4797
        %v4816 = vsub.f32 %v4762, %v4800
        %v4817 = vsub.f32 %v4768, %v4803
        %v4818 = vsub.f32 %v4774, %v4806
        %v4819 = vsub.f32 %v4780, %v4809
        %v4820 = vsub.f32 %v4786, %v4812
        %v4821 = vmul.f32 %v4813, 1.442695
        %v4822 = vpow.pop %v4821
        %v4823 = vmul.f32 %v4814, 1.442695
        %v4824 = vpow.pop %v4823
        %v4825 = vmul.f32 %v4815, 1.442695
        %v4826 = vpow.pop %v4825
        %v4827 = vmul.f32 %v4816, 1.442695
        %v4828 = vpow.pop %v4827
        %v4829 = vmul.f32 %v4817, 1.442695
        %v4830 = vpow.pop %v4829
        %v4831 = vmul.f32 %v4818, 1.442695
        %v4832 = vpow.pop %v4831
        %v4833 = vmul.f32 %v4819, 1.442695
        %v4834 = vpow.pop %v4833
        %v4835 = vmul.f32 %v4820, 1.442695
        %v4836 = vpow.pop %v4835
        %v4837 = vsel %vm390, %v4822, 0.0
        %4838 = vadd.xlane.f32.xlu0 %v4837
        %v4839 = vpop.xlane.xlu0 %4838
        %v4840 = vsel %vm390, %v4824, 0.0
        %4841 = vadd.xlane.f32.xlu0 %v4840
        %v4842 = vpop.xlane.xlu0 %4841
        %v4843 = vsel %vm390, %v4826, 0.0
        %4844 = vadd.xlane.f32.xlu0 %v4843
        %v4845 = vpop.xlane.xlu0 %4844
        %v4846 = vsel %vm390, %v4828, 0.0
        %4847 = vadd.xlane.f32.xlu0 %v4846
        %v4848 = vpop.xlane.xlu0 %4847
        %v4849 = vsel %vm390, %v4830, 0.0
        %4850 = vadd.xlane.f32.xlu0 %v4849
        %v4851 = vpop.xlane.xlu0 %4850
        %v4852 = vsel %vm390, %v4832, 0.0
        %4853 = vadd.xlane.f32.xlu0 %v4852
        %v4854 = vpop.xlane.xlu0 %4853
        %v4855 = vsel %vm390, %v4834, 0.0
        %4856 = vadd.xlane.f32.xlu0 %v4855
        %v4857 = vpop.xlane.xlu0 %4856
        %v4858 = vsel %vm390, %v4836, 0.0
        %4859 = vadd.xlane.f32.xlu0 %v4858
        %v4860 = vpop.xlane.xlu0 %4859
        %v4861 = vrcp.pop %v4839
        %v4862 = vrcp.pop %v4842
        %v4863 = vrcp.pop %v4845
        %v4864 = vrcp.pop %v4848
        %v4865 = vrcp.pop %v4851
        %v4866 = vrcp.pop %v4854
        %v4867 = vrcp.pop %v4857
        %v4868 = vrcp.pop %v4860
        %v4869 = vmul.f32 %v4822, %v4861
        %v4870 = vmul.f32 %v4824, %v4862
        %v4871 = vmul.f32 %v4826, %v4863
        %v4872 = vmul.f32 %v4828, %v4864
        %v4873 = vmul.f32 %v4830, %v4865
        %v4874 = vmul.f32 %v4832, %v4866
        %v4875 = vmul.f32 %v4834, %v4867
        %v4876 = vmul.f32 %v4836, %v4868
        %v4877 = vadd.f32 %v4869, %v2325
        %v4878 = vadd.f32 %v4870, %v2326
        %v4879 = vadd.f32 %v4871, %v2327
        %v4880 = vadd.f32 %v4872, %v2328
        %v4881 = vadd.f32 %v4873, %v2329
        %v4882 = vadd.f32 %v4874, %v2330
        %v4883 = vadd.f32 %v4875, %v2331
        %v4884 = vadd.f32 %v4876, %v2332
        %v4886 = vsel %vm390, %v4877, 0
        %v4889 = vsel %vm390, %v4878, 0
        %v4892 = vsel %vm390, %v4879, 0
        %v4895 = vsel %vm390, %v4880, 0
        %v4898 = vsel %vm390, %v4881, 0
        %v4901 = vsel %vm390, %v4882, 0
        %v4904 = vsel %vm390, %v4883, 0
        %v4907 = vsel %vm390, %v4884, 0
        %4909 = vmatprep.subr.mxu0 0.0
        %v4910 = vand.u32 %v4006, 4294901760
        %4911 = vmatpush1.msra.mxu0 %v4910
        %4912 = vmatprep.subr.mxu0 0.0
        %4913 = vmatpush1.msra.mxu0 0.0
        %4914 = vmatprep.subr.mxu0 0.0
        %4915 = vmatpush1.msra.mxu0 0.0
        %4916 = vmatprep.subr.mxu0 0.0
        %4917 = vmatpush1.msra.mxu0 0.0
        %4918 = vmatprep.subr.mxu0 0.0
        %4919 = vmatpush1.msra.mxu0 0.0
        %4920 = vmatprep.subr.mxu0 0.0
        %4921 = vmatpush1.msra.mxu0 0.0
        %4922 = vmatprep.subr.mxu0 0.0
        %4923 = vmatpush1.msra.mxu0 0.0
        %4924 = vmatprep.subr.mxu0 0.0
        %4925 = vmatpush1.msra.mxu0 0.0
        %4926 = vmatprep.subr.mxu0 0.0
        %4927 = vmatpush1.msra.mxu0 0.0
        %4928 = vmatprep.subr.mxu0 0.0
        %4929 = vmatpush1.msra.mxu0 0.0
        %4930 = vmatprep.subr.mxu0 0.0
        %4931 = vmatpush1.msra.mxu0 0.0
        %4932 = vmatprep.subr.mxu0 0.0
        %4933 = vmatpush1.msra.mxu0 0.0
        %4934 = vmatprep.subr.mxu0 0.0
        %4935 = vmatpush1.msra.mxu0 0.0
        %4936 = vmatprep.subr.mxu0 0.0
        %4937 = vmatpush1.msra.mxu0 0.0
        %4938 = vmatprep.subr.mxu0 0.0
        %4939 = vmatpush1.msra.mxu0 0.0
        %4940 = vmatprep.subr.mxu0 0.0
        %4941 = vmatpush1.msra.mxu0 0.0
        %4942 = vmatprep.subr.mxu0 0.0
        %4943 = vmatpush1.msra.mxu0 0.0
        %4944 = vmatprep.subr.mxu0 0.0
        %4945 = vmatpush1.msra.mxu0 0.0
        %4946 = vmatprep.subr.mxu0 0.0
        %4947 = vmatpush1.msra.mxu0 0.0
        %4948 = vmatprep.subr.mxu0 0.0
        %4949 = vmatpush1.msra.mxu0 0.0
        %4950 = vmatprep.subr.mxu0 0.0
        %4951 = vmatpush1.msra.mxu0 0.0
        %4952 = vmatprep.subr.mxu0 0.0
        %4953 = vmatpush1.msra.mxu0 0.0
        %4954 = vmatprep.subr.mxu0 0.0
        %4955 = vmatpush1.msra.mxu0 0.0
        %4956 = vmatprep.subr.mxu0 0.0
        %4957 = vmatpush1.msra.mxu0 0.0
        %4958 = vmatprep.subr.mxu0 0.0
        %4959 = vmatpush1.msra.mxu0 0.0
        %4960 = vmatprep.subr.mxu0 0.0
        %4961 = vmatpush1.msra.mxu0 0.0
        %4962 = vmatprep.subr.mxu0 0.0
        %4963 = vmatpush1.msra.mxu0 0.0
        %4964 = vmatprep.subr.mxu0 0.0
        %4965 = vmatpush1.msra.mxu0 0.0
        %4966 = vmatprep.subr.mxu0 0.0
        %4967 = vmatpush1.msra.mxu0 0.0
        %4968 = vmatprep.subr.mxu0 0.0
        %4969 = vmatpush1.msra.mxu0 0.0
        %4970 = vmatprep.subr.mxu0 0.0
        %4971 = vmatpush1.msra.mxu0 0.0
        %4972 = vmatprep.subr.mxu0 0.0
        %4973 = vmatpush1.msra.mxu0 0.0
        %4974 = vmatprep.mubr.f32.mxu0 0.0
        %v4975 = vand.u32 %v4886, 4294901760
        %v4976 = vsub.f32 %v4886, %v4975
        %v4977 = vand.u32 %v4976, 4294901760
        %v4978 = vsub.f32 %v4976, %v4977
        %v4979 = vand.u32 %v4978, 4294901760
        %4980 = vmatmul.mubr.f32.gmra.mrb[0].mxu0 %v4979
        %v4981 = vpop.f32.mrb[0].mxu0
        %v4982 = vadd.f32 0.0, %v4981
        %v4983 = vpop.f32.mrb[0].mxu0
        %4984 = vmatprep.mubr.f32.mxu0 0.0
        %v4985 = vand.u32 %v4889, 4294901760
        %v4986 = vsub.f32 %v4889, %v4985
        %v4987 = vand.u32 %v4986, 4294901760
        %v4988 = vsub.f32 %v4986, %v4987
        %v4989 = vand.u32 %v4988, 4294901760
        %4990 = vmatmul.mubr.f32.gmra.mrb[0].mxu0 %v4989
        %v4991 = vpop.f32.mrb[0].mxu0
        %v4992 = vadd.f32 0.0, %v4991
        %v4993 = vpop.f32.mrb[0].mxu0
        %4994 = vmatprep.mubr.f32.mxu0 0.0
        %v4995 = vand.u32 %v4892, 4294901760
        %v4996 = vsub.f32 %v4892, %v4995
        %v4997 = vand.u32 %v4996, 4294901760
        %v4998 = vsub.f32 %v4996, %v4997
        %v4999 = vand.u32 %v4998, 4294901760
        %5000 = vmatmul.mubr.f32.gmra.mrb[0].mxu0 %v4999
        %v5001 = vpop.f32.mrb[0].mxu0
        %v5002 = vadd.f32 0.0, %v5001
        %v5003 = vpop.f32.mrb[0].mxu0
        %5004 = vmatprep.mubr.f32.mxu0 0.0
        %v5005 = vand.u32 %v4895, 4294901760
        %v5006 = vsub.f32 %v4895, %v5005
        %v5007 = vand.u32 %v5006, 4294901760
        %v5008 = vsub.f32 %v5006, %v5007
        %v5009 = vand.u32 %v5008, 4294901760
        %5010 = vmatmul.mubr.f32.gmra.mrb[0].mxu0 %v5009
        %v5011 = vpop.f32.mrb[0].mxu0
        %v5012 = vadd.f32 0.0, %v5011
        %v5013 = vpop.f32.mrb[0].mxu0
        %5014 = vmatprep.mubr.f32.mxu0 0.0
        %v5015 = vand.u32 %v4898, 4294901760
        %v5016 = vsub.f32 %v4898, %v5015
        %v5017 = vand.u32 %v5016, 4294901760
        %v5018 = vsub.f32 %v5016, %v5017
        %v5019 = vand.u32 %v5018, 4294901760
        %5020 = vmatmul.mubr.f32.gmra.mrb[0].mxu0 %v5019
        %v5021 = vpop.f32.mrb[0].mxu0
        %v5022 = vadd.f32 0.0, %v5021
        %v5023 = vpop.f32.mrb[0].mxu0
        %5024 = vmatprep.mubr.f32.mxu0 0.0
        %v5025 = vand.u32 %v4901, 4294901760
        %v5026 = vsub.f32 %v4901, %v5025
        %v5027 = vand.u32 %v5026, 4294901760
        %v5028 = vsub.f32 %v5026, %v5027
        %v5029 = vand.u32 %v5028, 4294901760
        %5030 = vmatmul.mubr.f32.gmra.mrb[0].mxu0 %v5029
        %v5031 = vpop.f32.mrb[0].mxu0
        %v5032 = vadd.f32 0.0, %v5031
        %v5033 = vpop.f32.mrb[0].mxu0
        %5034 = vmatprep.mubr.f32.mxu0 0.0
        %v5035 = vand.u32 %v4904, 4294901760
        %v5036 = vsub.f32 %v4904, %v5035
        %v5037 = vand.u32 %v5036, 4294901760
        %v5038 = vsub.f32 %v5036, %v5037
        %v5039 = vand.u32 %v5038, 4294901760
        %5040 = vmatmul.mubr.f32.gmra.mrb[0].mxu0 %v5039
        %v5041 = vpop.f32.mrb[0].mxu0
        %v5042 = vadd.f32 0.0, %v5041
        %v5043 = vpop.f32.mrb[0].mxu0
        %5044 = vmatprep.mubr.f32.mxu0 0.0
        %v5045 = vand.u32 %v4907, 4294901760
        %v5046 = vsub.f32 %v4907, %v5045
        %v5047 = vand.u32 %v5046, 4294901760
        %v5048 = vsub.f32 %v5046, %v5047
        %v5049 = vand.u32 %v5048, 4294901760
        %5050 = vmatmul.mubr.f32.gmra.mrb[0].mxu0 %v5049
        %v5051 = vpop.f32.mrb[0].mxu0
        %v5052 = vadd.f32 0.0, %v5051
        %v5053 = vpop.f32.mrb[0].mxu0
        %5054 = vdwg.mxu0
        %5055 = vmatprep.subr.mxu0 0.0
        %v5056 = vand.u32 %v4006, 4294901760
        %v5057 = vsub.f32 %v4006, %v5056
        %v5058 = vand.u32 %v5057, 4294901760
        %v5059 = vsub.f32 %v5057, %v5058
        %v5060 = vand.u32 %v5059, 4294901760
        %5061 = vmatpush1.msra.mxu0 %v5060
        %5062 = vmatprep.subr.mxu0 0.0
        %5063 = vmatpush1.msra.mxu0 0.0
        %5064 = vmatprep.subr.mxu0 0.0
        %5065 = vmatpush1.msra.mxu0 0.0
        %5066 = vmatprep.subr.mxu0 0.0
        %5067 = vmatpush1.msra.mxu0 0.0
        %5068 = vmatprep.subr.mxu0 0.0
        %5069 = vmatpush1.msra.mxu0 0.0
        %5070 = vmatprep.subr.mxu0 0.0
        %5071 = vmatpush1.msra.mxu0 0.0
        %5072 = vmatprep.subr.mxu0 0.0
        %5073 = vmatpush1.msra.mxu0 0.0
        %5074 = vmatprep.subr.mxu0 0.0
        %5075 = vmatpush1.msra.mxu0 0.0
        %5076 = vmatprep.subr.mxu0 0.0
        %5077 = vmatpush1.msra.mxu0 0.0
        %5078 = vmatprep.subr.mxu0 0.0
        %5079 = vmatpush1.msra.mxu0 0.0
        %5080 = vmatprep.subr.mxu0 0.0
        %5081 = vmatpush1.msra.mxu0 0.0
        %5082 = vmatprep.subr.mxu0 0.0
        %5083 = vmatpush1.msra.mxu0 0.0
        %5084 = vmatprep.subr.mxu0 0.0
        %5085 = vmatpush1.msra.mxu0 0.0
        %5086 = vmatprep.subr.mxu0 0.0
        %5087 = vmatpush1.msra.mxu0 0.0
        %5088 = vmatprep.subr.mxu0 0.0
        %5089 = vmatpush1.msra.mxu0 0.0
        %5090 = vmatprep.subr.mxu0 0.0
        %5091 = vmatpush1.msra.mxu0 0.0
        %5092 = vmatprep.subr.mxu0 0.0
        %5093 = vmatpush1.msra.mxu0 0.0
        %5094 = vmatprep.subr.mxu0 0.0
        %5095 = vmatpush1.msra.mxu0 0.0
        %5096 = vmatprep.subr.mxu0 0.0
        %5097 = vmatpush1.msra.mxu0 0.0
        %5098 = vmatprep.subr.mxu0 0.0
        %5099 = vmatpush1.msra.mxu0 0.0
        %5100 = vmatprep.subr.mxu0 0.0
        %5101 = vmatpush1.msra.mxu0 0.0
        %5102 = vmatprep.subr.mxu0 0.0
        %5103 = vmatpush1.msra.mxu0 0.0
        %5104 = vmatprep.subr.mxu0 0.0
        %5105 = vmatpush1.msra.mxu0 0.0
        %5106 = vmatprep.subr.mxu0 0.0
        %5107 = vmatpush1.msra.mxu0 0.0
        %5108 = vmatprep.subr.mxu0 0.0
        %5109 = vmatpush1.msra.mxu0 0.0
        %5110 = vmatprep.subr.mxu0 0.0
        %5111 = vmatpush1.msra.mxu0 0.0
        %5112 = vmatprep.subr.mxu0 0.0
        %5113 = vmatpush1.msra.mxu0 0.0
        %5114 = vmatprep.subr.mxu0 0.0
        %5115 = vmatpush1.msra.mxu0 0.0
        %5116 = vmatprep.subr.mxu0 0.0
        %5117 = vmatpush1.msra.mxu0 0.0
        %5118 = vmatprep.subr.mxu0 0.0
        %5119 = vmatpush1.msra.mxu0 0.0
        %5120 = vmatprep.subr.mxu0 0.0
        %5121 = vmatpush1.msra.mxu0 0.0
        %5122 = vmatprep.subr.mxu0 0.0
        %5123 = vmatpush1.msra.mxu0 0.0
        %5124 = vmatprep.mubr.f32.mxu0 0.0
        %v5125 = vand.u32 %v4886, 4294901760
        %5126 = vmatmul.mubr.f32.gmra.mrb[0].mxu0 %v5125
        %v5127 = vpop.f32.mrb[0].mxu0
        %v5128 = vadd.f32 %v4982, %v5127
        %v5129 = vpop.f32.mrb[0].mxu0
        %5130 = vmatprep.mubr.f32.mxu0 0.0
        %v5131 = vand.u32 %v4889, 4294901760
        %5132 = vmatmul.mubr.f32.gmra.mrb[0].mxu0 %v5131
        %v5133 = vpop.f32.mrb[0].mxu0
        %v5134 = vadd.f32 %v4992, %v5133
        %v5135 = vpop.f32.mrb[0].mxu0
        %5136 = vmatprep.mubr.f32.mxu0 0.0
        %v5137 = vand.u32 %v4892, 4294901760
        %5138 = vmatmul.mubr.f32.gmra.mrb[0].mxu0 %v5137
        %v5139 = vpop.f32.mrb[0].mxu0
        %v5140 = vadd.f32 %v5002, %v5139
        %v5141 = vpop.f32.mrb[0].mxu0
        %5142 = vmatprep.mubr.f32.mxu0 0.0
        %v5143 = vand.u32 %v4895, 4294901760
        %5144 = vmatmul.mubr.f32.gmra.mrb[0].mxu0 %v5143
        %v5145 = vpop.f32.mrb[0].mxu0
        %v5146 = vadd.f32 %v5012, %v5145
        %v5147 = vpop.f32.mrb[0].mxu0
        %5148 = vmatprep.mubr.f32.mxu0 0.0
        %v5149 = vand.u32 %v4898, 4294901760
        %5150 = vmatmul.mubr.f32.gmra.mrb[0].mxu0 %v5149
        %v5151 = vpop.f32.mrb[0].mxu0
        %v5152 = vadd.f32 %v5022, %v5151
        %v5153 = vpop.f32.mrb[0].mxu0
        %5154 = vmatprep.mubr.f32.mxu0 0.0
        %v5155 = vand.u32 %v4901, 4294901760
        %5156 = vmatmul.mubr.f32.gmra.mrb[0].mxu0 %v5155
        %v5157 = vpop.f32.mrb[0].mxu0
        %v5158 = vadd.f32 %v5032, %v5157
        %v5159 = vpop.f32.mrb[0].mxu0
        %5160 = vmatprep.mubr.f32.mxu0 0.0
        %v5161 = vand.u32 %v4904, 4294901760
        %5162 = vmatmul.mubr.f32.gmra.mrb[0].mxu0 %v5161
        %v5163 = vpop.f32.mrb[0].mxu0
        %v5164 = vadd.f32 %v5042, %v5163
        %v5165 = vpop.f32.mrb[0].mxu0
        %5166 = vmatprep.mubr.f32.mxu0 0.0
        %v5167 = vand.u32 %v4907, 4294901760
        %5168 = vmatmul.mubr.f32.gmra.mrb[0].mxu0 %v5167
        %v5169 = vpop.f32.mrb[0].mxu0
        %v5170 = vadd.f32 %v5052, %v5169
        %v5171 = vpop.f32.mrb[0].mxu0
        %5172 = vdwg.mxu0
        %5173 = vmatprep.subr.mxu0 0.0
        %v5174 = vand.u32 %v4006, 4294901760
        %v5175 = vsub.f32 %v4006, %v5174
        %5176 = vmatpush1.msra.mxu0 %v5175
        %5177 = vmatprep.subr.mxu0 0.0
        %5178 = vmatpush1.msra.mxu0 0.0
        %5179 = vmatprep.subr.mxu0 0.0
        %5180 = vmatpush1.msra.mxu0 0.0
        %5181 = vmatprep.subr.mxu0 0.0
        %5182 = vmatpush1.msra.mxu0 0.0
        %5183 = vmatprep.subr.mxu0 0.0
        %5184 = vmatpush1.msra.mxu0 0.0
        %5185 = vmatprep.subr.mxu0 0.0
        %5186 = vmatpush1.msra.mxu0 0.0
        %5187 = vmatprep.subr.mxu0 0.0
        %5188 = vmatpush1.msra.mxu0 0.0
        %5189 = vmatprep.subr.mxu0 0.0
        %5190 = vmatpush1.msra.mxu0 0.0
        %5191 = vmatprep.subr.mxu0 0.0
        %5192 = vmatpush1.msra.mxu0 0.0
        %5193 = vmatprep.subr.mxu0 0.0
        %5194 = vmatpush1.msra.mxu0 0.0
        %5195 = vmatprep.subr.mxu0 0.0
        %5196 = vmatpush1.msra.mxu0 0.0
        %5197 = vmatprep.subr.mxu0 0.0
        %5198 = vmatpush1.msra.mxu0 0.0
        %5199 = vmatprep.subr.mxu0 0.0
        %5200 = vmatpush1.msra.mxu0 0.0
        %5201 = vmatprep.subr.mxu0 0.0
        %5202 = vmatpush1.msra.mxu0 0.0
        %5203 = vmatprep.subr.mxu0 0.0
        %5204 = vmatpush1.msra.mxu0 0.0
        %5205 = vmatprep.subr.mxu0 0.0
        %5206 = vmatpush1.msra.mxu0 0.0
        %5207 = vmatprep.subr.mxu0 0.0
        %5208 = vmatpush1.msra.mxu0 0.0
        %5209 = vmatprep.subr.mxu0 0.0
        %5210 = vmatpush1.msra.mxu0 0.0
        %5211 = vmatprep.subr.mxu0 0.0
        %5212 = vmatpush1.msra.mxu0 0.0
        %5213 = vmatprep.subr.mxu0 0.0
        %5214 = vmatpush1.msra.mxu0 0.0
        %5215 = vmatprep.subr.mxu0 0.0
        %5216 = vmatpush1.msra.mxu0 0.0
        %5217 = vmatprep.subr.mxu0 0.0
        %5218 = vmatpush1.msra.mxu0 0.0
        %5219 = vmatprep.subr.mxu0 0.0
        %5220 = vmatpush1.msra.mxu0 0.0
        %5221 = vmatprep.subr.mxu0 0.0
        %5222 = vmatpush1.msra.mxu0 0.0
        %5223 = vmatprep.subr.mxu0 0.0
        %5224 = vmatpush1.msra.mxu0 0.0
        %5225 = vmatprep.subr.mxu0 0.0
        %5226 = vmatpush1.msra.mxu0 0.0
        %5227 = vmatprep.subr.mxu0 0.0
        %5228 = vmatpush1.msra.mxu0 0.0
        %5229 = vmatprep.subr.mxu0 0.0
        %5230 = vmatpush1.msra.mxu0 0.0
        %5231 = vmatprep.subr.mxu0 0.0
        %5232 = vmatpush1.msra.mxu0 0.0
        %5233 = vmatprep.subr.mxu0 0.0
        %5234 = vmatpush1.msra.mxu0 0.0
        %5235 = vmatprep.subr.mxu0 0.0
        %5236 = vmatpush1.msra.mxu0 0.0
        %5237 = vmatprep.subr.mxu0 0.0
        %5238 = vmatpush1.msra.mxu0 0.0
        %5239 = vmatprep.mubr.f32.mxu0 0.0
        %v5240 = vand.u32 %v4886, 4294901760
        %v5241 = vsub.f32 %v4886, %v5240
        %5242 = vmatmul.mubr.f32.gmra.mrb[0].mxu0 %v5241
        %v5243 = vpop.f32.mrb[0].mxu0
        %v5244 = vadd.f32 %v5128, %v5243
        %v5245 = vpop.f32.mrb[0].mxu0
        %5246 = vmatprep.mubr.f32.mxu0 0.0
        %v5247 = vand.u32 %v4889, 4294901760
        %v5248 = vsub.f32 %v4889, %v5247
        %5249 = vmatmul.mubr.f32.gmra.mrb[0].mxu0 %v5248
        %v5250 = vpop.f32.mrb[0].mxu0
        %v5251 = vadd.f32 %v5134, %v5250
        %v5252 = vpop.f32.mrb[0].mxu0
        %5253 = vmatprep.mubr.f32.mxu0 0.0
        %v5254 = vand.u32 %v4892, 4294901760
        %v5255 = vsub.f32 %v4892, %v5254
        %5256 = vmatmul.mubr.f32.gmra.mrb[0].mxu0 %v5255
        %v5257 = vpop.f32.mrb[0].mxu0
        %v5258 = vadd.f32 %v5140, %v5257
        %v5259 = vpop.f32.mrb[0].mxu0
        %5260 = vmatprep.mubr.f32.mxu0 0.0
        %v5261 = vand.u32 %v4895, 4294901760
        %v5262 = vsub.f32 %v4895, %v5261
        %5263 = vmatmul.mubr.f32.gmra.mrb[0].mxu0 %v5262
        %v5264 = vpop.f32.mrb[0].mxu0
        %v5265 = vadd.f32 %v5146, %v5264
        %v5266 = vpop.f32.mrb[0].mxu0
        %5267 = vmatprep.mubr.f32.mxu0 0.0
        %v5268 = vand.u32 %v4898, 4294901760
        %v5269 = vsub.f32 %v4898, %v5268
        %5270 = vmatmul.mubr.f32.gmra.mrb[0].mxu0 %v5269
        %v5271 = vpop.f32.mrb[0].mxu0
        %v5272 = vadd.f32 %v5152, %v5271
        %v5273 = vpop.f32.mrb[0].mxu0
        %5274 = vmatprep.mubr.f32.mxu0 0.0
        %v5275 = vand.u32 %v4901, 4294901760
        %v5276 = vsub.f32 %v4901, %v5275
        %5277 = vmatmul.mubr.f32.gmra.mrb[0].mxu0 %v5276
        %v5278 = vpop.f32.mrb[0].mxu0
        %v5279 = vadd.f32 %v5158, %v5278
        %v5280 = vpop.f32.mrb[0].mxu0
        %5281 = vmatprep.mubr.f32.mxu0 0.0
        %v5282 = vand.u32 %v4904, 4294901760
        %v5283 = vsub.f32 %v4904, %v5282
        %5284 = vmatmul.mubr.f32.gmra.mrb[0].mxu0 %v5283
        %v5285 = vpop.f32.mrb[0].mxu0
        %v5286 = vadd.f32 %v5164, %v5285
        %v5287 = vpop.f32.mrb[0].mxu0
        %5288 = vmatprep.mubr.f32.mxu0 0.0
        %v5289 = vand.u32 %v4907, 4294901760
        %v5290 = vsub.f32 %v4907, %v5289
        %5291 = vmatmul.mubr.f32.gmra.mrb[0].mxu0 %v5290
        %v5292 = vpop.f32.mrb[0].mxu0
        %v5293 = vadd.f32 %v5170, %v5292
        %v5294 = vpop.f32.mrb[0].mxu0
        %5295 = vdwg.mxu0
        %5296 = vmatprep.subr.mxu0 0.0
        %v5297 = vand.u32 %v4006, 4294901760
        %5298 = vmatpush1.msra.mxu0 %v5297
        %5299 = vmatprep.subr.mxu0 0.0
        %5300 = vmatpush1.msra.mxu0 0.0
        %5301 = vmatprep.subr.mxu0 0.0
        %5302 = vmatpush1.msra.mxu0 0.0
        %5303 = vmatprep.subr.mxu0 0.0
        %5304 = vmatpush1.msra.mxu0 0.0
        %5305 = vmatprep.subr.mxu0 0.0
        %5306 = vmatpush1.msra.mxu0 0.0
        %5307 = vmatprep.subr.mxu0 0.0
        %5308 = vmatpush1.msra.mxu0 0.0
        %5309 = vmatprep.subr.mxu0 0.0
        %5310 = vmatpush1.msra.mxu0 0.0
        %5311 = vmatprep.subr.mxu0 0.0
        %5312 = vmatpush1.msra.mxu0 0.0
        %5313 = vmatprep.subr.mxu0 0.0
        %5314 = vmatpush1.msra.mxu0 0.0
        %5315 = vmatprep.subr.mxu0 0.0
        %5316 = vmatpush1.msra.mxu0 0.0
        %5317 = vmatprep.subr.mxu0 0.0
        %5318 = vmatpush1.msra.mxu0 0.0
        %5319 = vmatprep.subr.mxu0 0.0
        %5320 = vmatpush1.msra.mxu0 0.0
        %5321 = vmatprep.subr.mxu0 0.0
        %5322 = vmatpush1.msra.mxu0 0.0
        %5323 = vmatprep.subr.mxu0 0.0
        %5324 = vmatpush1.msra.mxu0 0.0
        %5325 = vmatprep.subr.mxu0 0.0
        %5326 = vmatpush1.msra.mxu0 0.0
        %5327 = vmatprep.subr.mxu0 0.0
        %5328 = vmatpush1.msra.mxu0 0.0
        %5329 = vmatprep.subr.mxu0 0.0
        %5330 = vmatpush1.msra.mxu0 0.0
        %5331 = vmatprep.subr.mxu0 0.0
        %5332 = vmatpush1.msra.mxu0 0.0
        %5333 = vmatprep.subr.mxu0 0.0
        %5334 = vmatpush1.msra.mxu0 0.0
        %5335 = vmatprep.subr.mxu0 0.0
        %5336 = vmatpush1.msra.mxu0 0.0
        %5337 = vmatprep.subr.mxu0 0.0
        %5338 = vmatpush1.msra.mxu0 0.0
        %5339 = vmatprep.subr.mxu0 0.0
        %5340 = vmatpush1.msra.mxu0 0.0
        %5341 = vmatprep.subr.mxu0 0.0
        %5342 = vmatpush1.msra.mxu0 0.0
        %5343 = vmatprep.subr.mxu0 0.0
        %5344 = vmatpush1.msra.mxu0 0.0
        %5345 = vmatprep.subr.mxu0 0.0
        %5346 = vmatpush1.msra.mxu0 0.0
        %5347 = vmatprep.subr.mxu0 0.0
        %5348 = vmatpush1.msra.mxu0 0.0
        %5349 = vmatprep.subr.mxu0 0.0
        %5350 = vmatpush1.msra.mxu0 0.0
        %5351 = vmatprep.subr.mxu0 0.0
        %5352 = vmatpush1.msra.mxu0 0.0
        %5353 = vmatprep.subr.mxu0 0.0
        %5354 = vmatpush1.msra.mxu0 0.0
        %5355 = vmatprep.subr.mxu0 0.0
        %5356 = vmatpush1.msra.mxu0 0.0
        %5357 = vmatprep.subr.mxu0 0.0
        %5358 = vmatpush1.msra.mxu0 0.0
        %5359 = vmatprep.subr.mxu0 0.0
        %5360 = vmatpush1.msra.mxu0 0.0
        %5361 = vmatprep.mubr.f32.mxu0 0.0
        %v5362 = vand.u32 %v4886, 4294901760
        %v5363 = vsub.f32 %v4886, %v5362
        %v5364 = vand.u32 %v5363, 4294901760
        %5365 = vmatmul.mubr.f32.gmra.mrb[0].mxu0 %v5364
        %v5366 = vpop.f32.mrb[0].mxu0
        %v5367 = vadd.f32 %v5244, %v5366
        %v5368 = vpop.f32.mrb[0].mxu0
        %5369 = vmatprep.mubr.f32.mxu0 0.0
        %v5370 = vand.u32 %v4889, 4294901760
        %v5371 = vsub.f32 %v4889, %v5370
        %v5372 = vand.u32 %v5371, 4294901760
        %5373 = vmatmul.mubr.f32.gmra.mrb[0].mxu0 %v5372
        %v5374 = vpop.f32.mrb[0].mxu0
        %v5375 = vadd.f32 %v5251, %v5374
        %v5376 = vpop.f32.mrb[0].mxu0
        %5377 = vmatprep.mubr.f32.mxu0 0.0
        %v5378 = vand.u32 %v4892, 4294901760
        %v5379 = vsub.f32 %v4892, %v5378
        %v5380 = vand.u32 %v5379, 4294901760
        %5381 = vmatmul.mubr.f32.gmra.mrb[0].mxu0 %v5380
        %v5382 = vpop.f32.mrb[0].mxu0
        %v5383 = vadd.f32 %v5258, %v5382
        %v5384 = vpop.f32.mrb[0].mxu0
        %5385 = vmatprep.mubr.f32.mxu0 0.0
        %v5386 = vand.u32 %v4895, 4294901760
        %v5387 = vsub.f32 %v4895, %v5386
        %v5388 = vand.u32 %v5387, 4294901760
        %5389 = vmatmul.mubr.f32.gmra.mrb[0].mxu0 %v5388
        %v5390 = vpop.f32.mrb[0].mxu0
        %v5391 = vadd.f32 %v5265, %v5390
        %v5392 = vpop.f32.mrb[0].mxu0
        %5393 = vmatprep.mubr.f32.mxu0 0.0
        %v5394 = vand.u32 %v4898, 4294901760
        %v5395 = vsub.f32 %v4898, %v5394
        %v5396 = vand.u32 %v5395, 4294901760
        %5397 = vmatmul.mubr.f32.gmra.mrb[0].mxu0 %v5396
        %v5398 = vpop.f32.mrb[0].mxu0
        %v5399 = vadd.f32 %v5272, %v5398
        %v5400 = vpop.f32.mrb[0].mxu0
        %5401 = vmatprep.mubr.f32.mxu0 0.0
        %v5402 = vand.u32 %v4901, 4294901760
        %v5403 = vsub.f32 %v4901, %v5402
        %v5404 = vand.u32 %v5403, 4294901760
        %5405 = vmatmul.mubr.f32.gmra.mrb[0].mxu0 %v5404
        %v5406 = vpop.f32.mrb[0].mxu0
        %v5407 = vadd.f32 %v5279, %v5406
        %v5408 = vpop.f32.mrb[0].mxu0
        %5409 = vmatprep.mubr.f32.mxu0 0.0
        %v5410 = vand.u32 %v4904, 4294901760
        %v5411 = vsub.f32 %v4904, %v5410
        %v5412 = vand.u32 %v5411, 4294901760
        %5413 = vmatmul.mubr.f32.gmra.mrb[0].mxu0 %v5412
        %v5414 = vpop.f32.mrb[0].mxu0
        %v5415 = vadd.f32 %v5286, %v5414
        %v5416 = vpop.f32.mrb[0].mxu0
        %5417 = vmatprep.mubr.f32.mxu0 0.0
        %v5418 = vand.u32 %v4907, 4294901760
        %v5419 = vsub.f32 %v4907, %v5418
        %v5420 = vand.u32 %v5419, 4294901760
        %5421 = vmatmul.mubr.f32.gmra.mrb[0].mxu0 %v5420
        %v5422 = vpop.f32.mrb[0].mxu0
        %v5423 = vadd.f32 %v5293, %v5422
        %v5424 = vpop.f32.mrb[0].mxu0
        %5425 = vdwg.mxu0
        %5426 = vmatprep.subr.mxu0 0.0
        %v5427 = vand.u32 %v4006, 4294901760
        %v5428 = vsub.f32 %v4006, %v5427
        %v5429 = vand.u32 %v5428, 4294901760
        %5430 = vmatpush1.msra.mxu0 %v5429
        %5431 = vmatprep.subr.mxu0 0.0
        %5432 = vmatpush1.msra.mxu0 0.0
        %5433 = vmatprep.subr.mxu0 0.0
        %5434 = vmatpush1.msra.mxu0 0.0
        %5435 = vmatprep.subr.mxu0 0.0
        %5436 = vmatpush1.msra.mxu0 0.0
        %5437 = vmatprep.subr.mxu0 0.0
        %5438 = vmatpush1.msra.mxu0 0.0
        %5439 = vmatprep.subr.mxu0 0.0
        %5440 = vmatpush1.msra.mxu0 0.0
        %5441 = vmatprep.subr.mxu0 0.0
        %5442 = vmatpush1.msra.mxu0 0.0
        %5443 = vmatprep.subr.mxu0 0.0
        %5444 = vmatpush1.msra.mxu0 0.0
        %5445 = vmatprep.subr.mxu0 0.0
        %5446 = vmatpush1.msra.mxu0 0.0
        %5447 = vmatprep.subr.mxu0 0.0
        %5448 = vmatpush1.msra.mxu0 0.0
        %5449 = vmatprep.subr.mxu0 0.0
        %5450 = vmatpush1.msra.mxu0 0.0
        %5451 = vmatprep.subr.mxu0 0.0
        %5452 = vmatpush1.msra.mxu0 0.0
        %5453 = vmatprep.subr.mxu0 0.0
        %5454 = vmatpush1.msra.mxu0 0.0
        %5455 = vmatprep.subr.mxu0 0.0
        %5456 = vmatpush1.msra.mxu0 0.0
        %5457 = vmatprep.subr.mxu0 0.0
        %5458 = vmatpush1.msra.mxu0 0.0
        %5459 = vmatprep.subr.mxu0 0.0
        %5460 = vmatpush1.msra.mxu0 0.0
        %5461 = vmatprep.subr.mxu0 0.0
        %5462 = vmatpush1.msra.mxu0 0.0
        %5463 = vmatprep.subr.mxu0 0.0
        %5464 = vmatpush1.msra.mxu0 0.0
        %5465 = vmatprep.subr.mxu0 0.0
        %5466 = vmatpush1.msra.mxu0 0.0
        %5467 = vmatprep.subr.mxu0 0.0
        %5468 = vmatpush1.msra.mxu0 0.0
        %5469 = vmatprep.subr.mxu0 0.0
        %5470 = vmatpush1.msra.mxu0 0.0
        %5471 = vmatprep.subr.mxu0 0.0
        %5472 = vmatpush1.msra.mxu0 0.0
        %5473 = vmatprep.subr.mxu0 0.0
        %5474 = vmatpush1.msra.mxu0 0.0
        %5475 = vmatprep.subr.mxu0 0.0
        %5476 = vmatpush1.msra.mxu0 0.0
        %5477 = vmatprep.subr.mxu0 0.0
        %5478 = vmatpush1.msra.mxu0 0.0
        %5479 = vmatprep.subr.mxu0 0.0
        %5480 = vmatpush1.msra.mxu0 0.0
        %5481 = vmatprep.subr.mxu0 0.0
        %5482 = vmatpush1.msra.mxu0 0.0
        %5483 = vmatprep.subr.mxu0 0.0
        %5484 = vmatpush1.msra.mxu0 0.0
        %5485 = vmatprep.subr.mxu0 0.0
        %5486 = vmatpush1.msra.mxu0 0.0
        %5487 = vmatprep.subr.mxu0 0.0
        %5488 = vmatpush1.msra.mxu0 0.0
        %5489 = vmatprep.subr.mxu0 0.0
        %5490 = vmatpush1.msra.mxu0 0.0
        %5491 = vmatprep.subr.mxu0 0.0
        %5492 = vmatpush1.msra.mxu0 0.0
        %5493 = vmatprep.mubr.f32.mxu0 0.0
        %v5494 = vand.u32 %v4886, 4294901760
        %5495 = vmatmul.mubr.f32.gmra.mrb[0].mxu0 %v5494
        %v5496 = vpop.f32.mrb[0].mxu0
        %v5497 = vadd.f32 %v5367, %v5496
        %v5498 = vpop.f32.mrb[0].mxu0
        %5499 = vmatprep.mubr.f32.mxu0 0.0
        %v5500 = vand.u32 %v4889, 4294901760
        %5501 = vmatmul.mubr.f32.gmra.mrb[0].mxu0 %v5500
        %v5502 = vpop.f32.mrb[0].mxu0
        %v5503 = vadd.f32 %v5375, %v5502
        %v5504 = vpop.f32.mrb[0].mxu0
        %5505 = vmatprep.mubr.f32.mxu0 0.0
        %v5506 = vand.u32 %v4892, 4294901760
        %5507 = vmatmul.mubr.f32.gmra.mrb[0].mxu0 %v5506
        %v5508 = vpop.f32.mrb[0].mxu0
        %v5509 = vadd.f32 %v5383, %v5508
        %v5510 = vpop.f32.mrb[0].mxu0
        %5511 = vmatprep.mubr.f32.mxu0 0.0
        %v5512 = vand.u32 %v4895, 4294901760
        %5513 = vmatmul.mubr.f32.gmra.mrb[0].mxu0 %v5512
        %v5514 = vpop.f32.mrb[0].mxu0
        %v5515 = vadd.f32 %v5391, %v5514
        %v5516 = vpop.f32.mrb[0].mxu0
        %5517 = vmatprep.mubr.f32.mxu0 0.0
        %v5518 = vand.u32 %v4898, 4294901760
        %5519 = vmatmul.mubr.f32.gmra.mrb[0].mxu0 %v5518
        %v5520 = vpop.f32.mrb[0].mxu0
        %v5521 = vadd.f32 %v5399, %v5520
        %v5522 = vpop.f32.mrb[0].mxu0
        %5523 = vmatprep.mubr.f32.mxu0 0.0
        %v5524 = vand.u32 %v4901, 4294901760
        %5525 = vmatmul.mubr.f32.gmra.mrb[0].mxu0 %v5524
        %v5526 = vpop.f32.mrb[0].mxu0
        %v5527 = vadd.f32 %v5407, %v5526
        %v5528 = vpop.f32.mrb[0].mxu0
        %5529 = vmatprep.mubr.f32.mxu0 0.0
        %v5530 = vand.u32 %v4904, 4294901760
        %5531 = vmatmul.mubr.f32.gmra.mrb[0].mxu0 %v5530
        %v5532 = vpop.f32.mrb[0].mxu0
        %v5533 = vadd.f32 %v5415, %v5532
        %v5534 = vpop.f32.mrb[0].mxu0
        %5535 = vmatprep.mubr.f32.mxu0 0.0
        %v5536 = vand.u32 %v4907, 4294901760
        %5537 = vmatmul.mubr.f32.gmra.mrb[0].mxu0 %v5536
        %v5538 = vpop.f32.mrb[0].mxu0
        %v5539 = vadd.f32 %v5423, %v5538
        %v5540 = vpop.f32.mrb[0].mxu0
        %5541 = vdwg.mxu0
        %5542 = vmatprep.subr.mxu0 0.0
        %v5543 = vand.u32 %v4006, 4294901760
        %5544 = vmatpush1.msra.mxu0 %v5543
        %5545 = vmatprep.subr.mxu0 0.0
        %5546 = vmatpush1.msra.mxu0 0.0
        %5547 = vmatprep.subr.mxu0 0.0
        %5548 = vmatpush1.msra.mxu0 0.0
        %5549 = vmatprep.subr.mxu0 0.0
        %5550 = vmatpush1.msra.mxu0 0.0
        %5551 = vmatprep.subr.mxu0 0.0
        %5552 = vmatpush1.msra.mxu0 0.0
        %5553 = vmatprep.subr.mxu0 0.0
        %5554 = vmatpush1.msra.mxu0 0.0
        %5555 = vmatprep.subr.mxu0 0.0
        %5556 = vmatpush1.msra.mxu0 0.0
        %5557 = vmatprep.subr.mxu0 0.0
        %5558 = vmatpush1.msra.mxu0 0.0
        %5559 = vmatprep.subr.mxu0 0.0
        %5560 = vmatpush1.msra.mxu0 0.0
        %5561 = vmatprep.subr.mxu0 0.0
        %5562 = vmatpush1.msra.mxu0 0.0
        %5563 = vmatprep.subr.mxu0 0.0
        %5564 = vmatpush1.msra.mxu0 0.0
        %5565 = vmatprep.subr.mxu0 0.0
        %5566 = vmatpush1.msra.mxu0 0.0
        %5567 = vmatprep.subr.mxu0 0.0
        %5568 = vmatpush1.msra.mxu0 0.0
        %5569 = vmatprep.subr.mxu0 0.0
        %5570 = vmatpush1.msra.mxu0 0.0
        %5571 = vmatprep.subr.mxu0 0.0
        %5572 = vmatpush1.msra.mxu0 0.0
        %5573 = vmatprep.subr.mxu0 0.0
        %5574 = vmatpush1.msra.mxu0 0.0
        %5575 = vmatprep.subr.mxu0 0.0
        %5576 = vmatpush1.msra.mxu0 0.0
        %5577 = vmatprep.subr.mxu0 0.0
        %5578 = vmatpush1.msra.mxu0 0.0
        %5579 = vmatprep.subr.mxu0 0.0
        %5580 = vmatpush1.msra.mxu0 0.0
        %5581 = vmatprep.subr.mxu0 0.0
        %5582 = vmatpush1.msra.mxu0 0.0
        %5583 = vmatprep.subr.mxu0 0.0
        %5584 = vmatpush1.msra.mxu0 0.0
        %5585 = vmatprep.subr.mxu0 0.0
        %5586 = vmatpush1.msra.mxu0 0.0
        %5587 = vmatprep.subr.mxu0 0.0
        %5588 = vmatpush1.msra.mxu0 0.0
        %5589 = vmatprep.subr.mxu0 0.0
        %5590 = vmatpush1.msra.mxu0 0.0
        %5591 = vmatprep.subr.mxu0 0.0
        %5592 = vmatpush1.msra.mxu0 0.0
        %5593 = vmatprep.subr.mxu0 0.0
        %5594 = vmatpush1.msra.mxu0 0.0
        %5595 = vmatprep.subr.mxu0 0.0
        %5596 = vmatpush1.msra.mxu0 0.0
        %5597 = vmatprep.subr.mxu0 0.0
        %5598 = vmatpush1.msra.mxu0 0.0
        %5599 = vmatprep.subr.mxu0 0.0
        %5600 = vmatpush1.msra.mxu0 0.0
        %5601 = vmatprep.subr.mxu0 0.0
        %5602 = vmatpush1.msra.mxu0 0.0
        %5603 = vmatprep.subr.mxu0 0.0
        %5604 = vmatpush1.msra.mxu0 0.0
        %5605 = vmatprep.subr.mxu0 0.0
        %5606 = vmatpush1.msra.mxu0 0.0
        %5607 = vmatprep.mubr.f32.mxu0 0.0
        %v5608 = vand.u32 %v4886, 4294901760
        %5609 = vmatmul.mubr.f32.gmra.mrb[0].mxu0 %v5608
        %v5610 = vpop.f32.mrb[0].mxu0
        %v5611 = vadd.f32 %v5497, %v5610
        %v5612 = vpop.f32.mrb[0].mxu0
        %5613 = vmatprep.mubr.f32.mxu0 0.0
        %v5614 = vand.u32 %v4889, 4294901760
        %5615 = vmatmul.mubr.f32.gmra.mrb[0].mxu0 %v5614
        %v5616 = vpop.f32.mrb[0].mxu0
        %v5617 = vadd.f32 %v5503, %v5616
        %v5618 = vpop.f32.mrb[0].mxu0
        %5619 = vmatprep.mubr.f32.mxu0 0.0
        %v5620 = vand.u32 %v4892, 4294901760
        %5621 = vmatmul.mubr.f32.gmra.mrb[0].mxu0 %v5620
        %v5622 = vpop.f32.mrb[0].mxu0
        %v5623 = vadd.f32 %v5509, %v5622
        %v5624 = vpop.f32.mrb[0].mxu0
        %5625 = vmatprep.mubr.f32.mxu0 0.0
        %v5626 = vand.u32 %v4895, 4294901760
        %5627 = vmatmul.mubr.f32.gmra.mrb[0].mxu0 %v5626
        %v5628 = vpop.f32.mrb[0].mxu0
        %v5629 = vadd.f32 %v5515, %v5628
        %v5630 = vpop.f32.mrb[0].mxu0
        %5631 = vmatprep.mubr.f32.mxu0 0.0
        %v5632 = vand.u32 %v4898, 4294901760
        %5633 = vmatmul.mubr.f32.gmra.mrb[0].mxu0 %v5632
        %v5634 = vpop.f32.mrb[0].mxu0
        %v5635 = vadd.f32 %v5521, %v5634
        %v5636 = vpop.f32.mrb[0].mxu0
        %5637 = vmatprep.mubr.f32.mxu0 0.0
        %v5638 = vand.u32 %v4901, 4294901760
        %5639 = vmatmul.mubr.f32.gmra.mrb[0].mxu0 %v5638
        %v5640 = vpop.f32.mrb[0].mxu0
        %v5641 = vadd.f32 %v5527, %v5640
        %v5642 = vpop.f32.mrb[0].mxu0
        %5643 = vmatprep.mubr.f32.mxu0 0.0
        %v5644 = vand.u32 %v4904, 4294901760
        %5645 = vmatmul.mubr.f32.gmra.mrb[0].mxu0 %v5644
        %v5646 = vpop.f32.mrb[0].mxu0
        %v5647 = vadd.f32 %v5533, %v5646
        %v5648 = vpop.f32.mrb[0].mxu0
        %5649 = vmatprep.mubr.f32.mxu0 0.0
        %v5650 = vand.u32 %v4907, 4294901760
        %5651 = vmatmul.mubr.f32.gmra.mrb[0].mxu0 %v5650
        %v5652 = vpop.f32.mrb[0].mxu0
        %v5653 = vadd.f32 %v5539, %v5652
        %v5654 = vpop.f32.mrb[0].mxu0
        %5655 = vdwg.mxu0
        %v5656 = vmul.f32 %v5611, %v2289
        %v5657 = vmul.f32 %v5617, %v2294
        %v5658 = vmul.f32 %v5623, %v2299
        %v5659 = vmul.f32 %v5629, %v2304
        %v5660 = vmul.f32 %v5635, %v2309
        %v5661 = vmul.f32 %v5641, %v2314
        %v5662 = vmul.f32 %v5647, %v2319
        %v5663 = vmul.f32 %v5653, %v2324
        %v5664 = vadd.f32 %v5656, %v5657
        %v5665 = vadd.f32 %v5664, %v5658
        %v5666 = vadd.f32 %v5665, %v5659
        %v5667 = vadd.f32 %v5666, %v5660
        %v5668 = vadd.f32 %v5667, %v5661
        %v5669 = vadd.f32 %v5668, %v5662
        %v5670 = vadd.f32 %v5669, %v5663
        %s5671 = scalar_lea.vmem [#allocation5], 8
        %5672 = vst.msk [vmem:[%s5671] sm:$0xff] %vm1730, %v5670
        %v5673 = vld [vmem:[#allocation5] sm:$0xff]
        %v5674 = vld [vmem:[#allocation5 + $0x8] sm:$0xff]
        %v5675 = vld [vmem:[%s8 + $0x2] sm:$0x1]
        %v5676 = vld [vmem:[%s8 + $0x3] sm:$0x1]
        %v5677 = vsel %vm1730, %v5673, 0.0
        %5678 = vadd.xlane.f32.xlu0 %v5677
        %v5679 = vpop.xlane.xlu0 %5678
        %v5680 = vsel %vm1730, %v5674, 0.0
        %5681 = vadd.xlane.f32.xlu0 %v5680
        %v5682 = vpop.xlane.xlu0 %5681
        %v5683 = vrcp.pop 32.0
        %v5684 = vmul.f32 %v5679, %v5683
        %v5685 = vmul.f32 %v5682, %v5683
        %v5686 = vsub.f32 %v5673, %v5684
        %v5687 = vsub.f32 %v5674, %v5685
        %v5688 = vmul.f32 %v5686, %v5686
        %v5689 = vmul.f32 %v5687, %v5687
        %v5690 = vsel %vm1730, %v5688, 0.0
        %5691 = vadd.xlane.f32.xlu0 %v5690
        %v5692 = vpop.xlane.xlu0 %5691
        %v5693 = vsel %vm1730, %v5689, 0.0
        %5694 = vadd.xlane.f32.xlu0 %v5693
        %v5695 = vpop.xlane.xlu0 %5694
        %v5696 = vmul.f32 %v5692, %v5683
        %v5697 = vmul.f32 %v5695, %v5683
        %v5698 = vadd.f32 %v5696, 1e-05
        %v5699 = vadd.f32 %v5697, 1e-05
        %v5700 = vrsqrt.pop %v5698
        %v5701 = vmul.f32 %v5698, %v5700
        %vm5702 = vcmp.eq.f32.partialorder %v5698, inf
        %v5703 = vsel %vm5702, %v5698, %v5701
        %vm5704 = vcmp.eq.f32.partialorder %v5698, 0.0
        %v5705 = vand.u32 %v5698, 2147483648
        %v5706 = vsel %vm5704, %v5705, %v5703
        %v5707 = vrsqrt.pop %v5699
        %v5708 = vmul.f32 %v5699, %v5707
        %vm5709 = vcmp.eq.f32.partialorder %v5699, inf
        %v5710 = vsel %vm5709, %v5699, %v5708
        %vm5711 = vcmp.eq.f32.partialorder %v5699, 0.0
        %v5712 = vand.u32 %v5699, 2147483648
        %v5713 = vsel %vm5711, %v5712, %v5710
        %v5714 = vrcp.pop %v5706
        %v5715 = vmul.f32 %v5686, %v5714
        %v5716 = vrcp.pop %v5713
        %v5717 = vmul.f32 %v5687, %v5716
        %v5718 = vlaneseq
        %v5719 = vshrl.u32 %v5718, 7
        %v5720 = vsub.s32 0, %v5719
        %v5721 = vrot.slane %v5675, %v5720
        %v5722 = vmul.f32 %v5715, %v5721
        %v5723 = vmul.f32 %v5717, %v5721
        %v5724 = vlaneseq
        %v5725 = vshrl.u32 %v5724, 7
        %v5726 = vsub.s32 0, %v5725
        %v5727 = vrot.slane %v5676, %v5726
        %v5728 = vadd.f32 %v5722, %v5727
        %v5729 = vadd.f32 %v5723, %v5727
        %v5730 = vadd.f32 %v1724, %v5728
        %v5731 = vadd.f32 %v1725, %v5729
        %v5732 = vld [vmem:[%s8 + $0x4] sm:$0x1]
        %v5733 = vld [vmem:[%s8 + $0x5] sm:$0x1]
        %v5734 = vsel %vm1730, %v5730, 0.0
        %5735 = vadd.xlane.f32.xlu0 %v5734
        %v5736 = vpop.xlane.xlu0 %5735
        %v5737 = vsel %vm1730, %v5731, 0.0
        %5738 = vadd.xlane.f32.xlu0 %v5737
        %v5739 = vpop.xlane.xlu0 %5738
        %v5740 = vmul.f32 %v5736, %v5683
        %v5741 = vmul.f32 %v5739, %v5683
        %v5742 = vsub.f32 %v5730, %v5740
        %v5743 = vsub.f32 %v5731, %v5741
        %v5744 = vmul.f32 %v5742, %v5742
        %v5745 = vmul.f32 %v5743, %v5743
        %v5746 = vsel %vm1730, %v5744, 0.0
        %5747 = vadd.xlane.f32.xlu0 %v5746
        %v5748 = vpop.xlane.xlu0 %5747
        %v5749 = vsel %vm1730, %v5745, 0.0
        %5750 = vadd.xlane.f32.xlu0 %v5749
        %v5751 = vpop.xlane.xlu0 %5750
        %v5752 = vmul.f32 %v5748, %v5683
        %v5753 = vmul.f32 %v5751, %v5683
        %v5754 = vadd.f32 %v5752, 1e-05
        %v5755 = vadd.f32 %v5753, 1e-05
        %v5756 = vrsqrt.pop %v5754
        %v5757 = vmul.f32 %v5754, %v5756
        %vm5758 = vcmp.eq.f32.partialorder %v5754, inf
        %v5759 = vsel %vm5758, %v5754, %v5757
        %vm5760 = vcmp.eq.f32.partialorder %v5754, 0.0
        %v5761 = vand.u32 %v5754, 2147483648
        %v5762 = vsel %vm5760, %v5761, %v5759
        %v5763 = vrsqrt.pop %v5755
        %v5764 = vmul.f32 %v5755, %v5763
        %vm5765 = vcmp.eq.f32.partialorder %v5755, inf
        %v5766 = vsel %vm5765, %v5755, %v5764
        %vm5767 = vcmp.eq.f32.partialorder %v5755, 0.0
        %v5768 = vand.u32 %v5755, 2147483648
        %v5769 = vsel %vm5767, %v5768, %v5766
        %v5770 = vrcp.pop %v5762
        %v5771 = vmul.f32 %v5742, %v5770
        %v5772 = vrcp.pop %v5769
        %v5773 = vmul.f32 %v5743, %v5772
        %v5774 = vlaneseq
        %v5775 = vshrl.u32 %v5774, 7
        %v5776 = vsub.s32 0, %v5775
        %v5777 = vrot.slane %v5732, %v5776
        %v5778 = vmul.f32 %v5771, %v5777
        %v5779 = vmul.f32 %v5773, %v5777
        %v5780 = vlaneseq
        %v5781 = vshrl.u32 %v5780, 7
        %v5782 = vsub.s32 0, %v5781
        %v5783 = vrot.slane %v5733, %v5782
        %v5784 = vadd.f32 %v5778, %v5783
        %v5785 = vadd.f32 %v5779, %v5783
        %v5786 = vld [vmem:[%s4] sm:$0xff]
        %v5787 = vld [vmem:[%s4 + $0x8] sm:$0xff]
        %v5788 = vld [vmem:[%s4 + $0x10] sm:$0xff]
        %v5789 = vld [vmem:[%s4 + $0x18] sm:$0xff]
        %v5790 = vld [vmem:[%s8 + $0x6] sm:$0x1]
        %v5791 = vlaneseq
        %v5792 = vshrl.u32 %v5791, 7
        %v5793 = vsub.s32 0, %v5792
        %v5794 = vrot.slane %v5790, %v5793
        %v5796 = vsel %vm1730, %v5784, 0
        %v5799 = vsel %vm1730, %v5785, 0
        %5801 = vmatprep.subr.mxu0 0.0
        %v5802 = vand.u32 %v5786, 4294901760
        %5803 = vmatpush1.msra.mxu0 %v5802
        %5804 = vmatprep.subr.mxu0 0.0
        %v5805 = vand.u32 %v5787, 4294901760
        %5806 = vmatpush1.msra.mxu0 %v5805
        %5807 = vmatprep.subr.mxu0 0.0
        %v5808 = vand.u32 %v5788, 4294901760
        %5809 = vmatpush1.msra.mxu0 %v5808
        %5810 = vmatprep.subr.mxu0 0.0
        %v5811 = vand.u32 %v5789, 4294901760
        %5812 = vmatpush1.msra.mxu0 %v5811
        %5813 = vmatprep.subr.mxu0 0.0
        %5814 = vmatpush1.msra.mxu0 0.0
        %5815 = vmatprep.subr.mxu0 0.0
        %5816 = vmatpush1.msra.mxu0 0.0
        %5817 = vmatprep.subr.mxu0 0.0
        %5818 = vmatpush1.msra.mxu0 0.0
        %5819 = vmatprep.subr.mxu0 0.0
        %5820 = vmatpush1.msra.mxu0 0.0
        %5821 = vmatprep.subr.mxu0 0.0
        %5822 = vmatpush1.msra.mxu0 0.0
        %5823 = vmatprep.subr.mxu0 0.0
        %5824 = vmatpush1.msra.mxu0 0.0
        %5825 = vmatprep.subr.mxu0 0.0
        %5826 = vmatpush1.msra.mxu0 0.0
        %5827 = vmatprep.subr.mxu0 0.0
        %5828 = vmatpush1.msra.mxu0 0.0
        %5829 = vmatprep.subr.mxu0 0.0
        %5830 = vmatpush1.msra.mxu0 0.0
        %5831 = vmatprep.subr.mxu0 0.0
        %5832 = vmatpush1.msra.mxu0 0.0
        %5833 = vmatprep.subr.mxu0 0.0
        %5834 = vmatpush1.msra.mxu0 0.0
        %5835 = vmatprep.subr.mxu0 0.0
        %5836 = vmatpush1.msra.mxu0 0.0
        %5837 = vmatprep.subr.mxu0 0.0
        %5838 = vmatpush1.msra.mxu0 0.0
        %5839 = vmatprep.subr.mxu0 0.0
        %5840 = vmatpush1.msra.mxu0 0.0
        %5841 = vmatprep.subr.mxu0 0.0
        %5842 = vmatpush1.msra.mxu0 0.0
        %5843 = vmatprep.subr.mxu0 0.0
        %5844 = vmatpush1.msra.mxu0 0.0
        %5845 = vmatprep.subr.mxu0 0.0
        %5846 = vmatpush1.msra.mxu0 0.0
        %5847 = vmatprep.subr.mxu0 0.0
        %5848 = vmatpush1.msra.mxu0 0.0
        %5849 = vmatprep.subr.mxu0 0.0
        %5850 = vmatpush1.msra.mxu0 0.0
        %5851 = vmatprep.subr.mxu0 0.0
        %5852 = vmatpush1.msra.mxu0 0.0
        %5853 = vmatprep.subr.mxu0 0.0
        %5854 = vmatpush1.msra.mxu0 0.0
        %5855 = vmatprep.subr.mxu0 0.0
        %5856 = vmatpush1.msra.mxu0 0.0
        %5857 = vmatprep.subr.mxu0 0.0
        %5858 = vmatpush1.msra.mxu0 0.0
        %5859 = vmatprep.subr.mxu0 0.0
        %5860 = vmatpush1.msra.mxu0 0.0
        %5861 = vmatprep.subr.mxu0 0.0
        %5862 = vmatpush1.msra.mxu0 0.0
        %5863 = vmatprep.subr.mxu0 0.0
        %5864 = vmatpush1.msra.mxu0 0.0
        %5865 = vmatprep.subr.mxu0 0.0
        %5866 = vmatpush1.msra.mxu0 0.0
        %5867 = vmatprep.subr.mxu0 0.0
        %5868 = vmatpush1.msra.mxu0 0.0
        %5869 = vmatprep.mubr.f32.mxu0 0.0
        %v5870 = vand.u32 %v5796, 4294901760
        %v5871 = vsub.f32 %v5796, %v5870
        %v5872 = vand.u32 %v5871, 4294901760
        %v5873 = vsub.f32 %v5871, %v5872
        %v5874 = vand.u32 %v5873, 4294901760
        %5875 = vmatmul.mubr.f32.gmra.mrb[0].mxu0 %v5874
        %v5876 = vpop.f32.mrb[0].mxu0
        %v5877 = vadd.f32 %v5794, %v5876
        %v5878 = vpop.f32.mrb[0].mxu0
        %5879 = vmatprep.mubr.f32.mxu0 0.0
        %v5880 = vand.u32 %v5799, 4294901760
        %v5881 = vsub.f32 %v5799, %v5880
        %v5882 = vand.u32 %v5881, 4294901760
        %v5883 = vsub.f32 %v5881, %v5882
        %v5884 = vand.u32 %v5883, 4294901760
        %5885 = vmatmul.mubr.f32.gmra.mrb[0].mxu0 %v5884
        %v5886 = vpop.f32.mrb[0].mxu0
        %v5887 = vadd.f32 %v5794, %v5886
        %v5888 = vpop.f32.mrb[0].mxu0
        %5889 = vdwg.mxu0
        %5890 = vmatprep.subr.mxu0 0.0
        %v5891 = vand.u32 %v5786, 4294901760
        %v5892 = vsub.f32 %v5786, %v5891
        %v5893 = vand.u32 %v5892, 4294901760
        %v5894 = vsub.f32 %v5892, %v5893
        %v5895 = vand.u32 %v5894, 4294901760
        %5896 = vmatpush1.msra.mxu0 %v5895
        %5897 = vmatprep.subr.mxu0 0.0
        %v5898 = vand.u32 %v5787, 4294901760
        %v5899 = vsub.f32 %v5787, %v5898
        %v5900 = vand.u32 %v5899, 4294901760
        %v5901 = vsub.f32 %v5899, %v5900
        %v5902 = vand.u32 %v5901, 4294901760
        %5903 = vmatpush1.msra.mxu0 %v5902
        %5904 = vmatprep.subr.mxu0 0.0
        %v5905 = vand.u32 %v5788, 4294901760
        %v5906 = vsub.f32 %v5788, %v5905
        %v5907 = vand.u32 %v5906, 4294901760
        %v5908 = vsub.f32 %v5906, %v5907
        %v5909 = vand.u32 %v5908, 4294901760
        %5910 = vmatpush1.msra.mxu0 %v5909
        %5911 = vmatprep.subr.mxu0 0.0
        %v5912 = vand.u32 %v5789, 4294901760
        %v5913 = vsub.f32 %v5789, %v5912
        %v5914 = vand.u32 %v5913, 4294901760
        %v5915 = vsub.f32 %v5913, %v5914
        %v5916 = vand.u32 %v5915, 4294901760
        %5917 = vmatpush1.msra.mxu0 %v5916
        %5918 = vmatprep.subr.mxu0 0.0
        %5919 = vmatpush1.msra.mxu0 0.0
        %5920 = vmatprep.subr.mxu0 0.0
        %5921 = vmatpush1.msra.mxu0 0.0
        %5922 = vmatprep.subr.mxu0 0.0
        %5923 = vmatpush1.msra.mxu0 0.0
        %5924 = vmatprep.subr.mxu0 0.0
        %5925 = vmatpush1.msra.mxu0 0.0
        %5926 = vmatprep.subr.mxu0 0.0
        %5927 = vmatpush1.msra.mxu0 0.0
        %5928 = vmatprep.subr.mxu0 0.0
        %5929 = vmatpush1.msra.mxu0 0.0
        %5930 = vmatprep.subr.mxu0 0.0
        %5931 = vmatpush1.msra.mxu0 0.0
        %5932 = vmatprep.subr.mxu0 0.0
        %5933 = vmatpush1.msra.mxu0 0.0
        %5934 = vmatprep.subr.mxu0 0.0
        %5935 = vmatpush1.msra.mxu0 0.0
        %5936 = vmatprep.subr.mxu0 0.0
        %5937 = vmatpush1.msra.mxu0 0.0
        %5938 = vmatprep.subr.mxu0 0.0
        %5939 = vmatpush1.msra.mxu0 0.0
        %5940 = vmatprep.subr.mxu0 0.0
        %5941 = vmatpush1.msra.mxu0 0.0
        %5942 = vmatprep.subr.mxu0 0.0
        %5943 = vmatpush1.msra.mxu0 0.0
        %5944 = vmatprep.subr.mxu0 0.0
        %5945 = vmatpush1.msra.mxu0 0.0
        %5946 = vmatprep.subr.mxu0 0.0
        %5947 = vmatpush1.msra.mxu0 0.0
        %5948 = vmatprep.subr.mxu0 0.0
        %5949 = vmatpush1.msra.mxu0 0.0
        %5950 = vmatprep.subr.mxu0 0.0
        %5951 = vmatpush1.msra.mxu0 0.0
        %5952 = vmatprep.subr.mxu0 0.0
        %5953 = vmatpush1.msra.mxu0 0.0
        %5954 = vmatprep.subr.mxu0 0.0
        %5955 = vmatpush1.msra.mxu0 0.0
        %5956 = vmatprep.subr.mxu0 0.0
        %5957 = vmatpush1.msra.mxu0 0.0
        %5958 = vmatprep.subr.mxu0 0.0
        %5959 = vmatpush1.msra.mxu0 0.0
        %5960 = vmatprep.subr.mxu0 0.0
        %5961 = vmatpush1.msra.mxu0 0.0
        %5962 = vmatprep.subr.mxu0 0.0
        %5963 = vmatpush1.msra.mxu0 0.0
        %5964 = vmatprep.subr.mxu0 0.0
        %5965 = vmatpush1.msra.mxu0 0.0
        %5966 = vmatprep.subr.mxu0 0.0
        %5967 = vmatpush1.msra.mxu0 0.0
        %5968 = vmatprep.subr.mxu0 0.0
        %5969 = vmatpush1.msra.mxu0 0.0
        %5970 = vmatprep.subr.mxu0 0.0
        %5971 = vmatpush1.msra.mxu0 0.0
        %5972 = vmatprep.subr.mxu0 0.0
        %5973 = vmatpush1.msra.mxu0 0.0
        %5974 = vmatprep.mubr.f32.mxu0 0.0
        %v5975 = vand.u32 %v5796, 4294901760
        %5976 = vmatmul.mubr.f32.gmra.mrb[0].mxu0 %v5975
        %v5977 = vpop.f32.mrb[0].mxu0
        %v5978 = vadd.f32 %v5877, %v5977
        %v5979 = vpop.f32.mrb[0].mxu0
        %5980 = vmatprep.mubr.f32.mxu0 0.0
        %v5981 = vand.u32 %v5799, 4294901760
        %5982 = vmatmul.mubr.f32.gmra.mrb[0].mxu0 %v5981
        %v5983 = vpop.f32.mrb[0].mxu0
        %v5984 = vadd.f32 %v5887, %v5983
        %v5985 = vpop.f32.mrb[0].mxu0
        %5986 = vdwg.mxu0
        %5987 = vmatprep.subr.mxu0 0.0
        %v5988 = vand.u32 %v5786, 4294901760
        %v5989 = vsub.f32 %v5786, %v5988
        %5990 = vmatpush1.msra.mxu0 %v5989
        %5991 = vmatprep.subr.mxu0 0.0
        %v5992 = vand.u32 %v5787, 4294901760
        %v5993 = vsub.f32 %v5787, %v5992
        %5994 = vmatpush1.msra.mxu0 %v5993
        %5995 = vmatprep.subr.mxu0 0.0
        %v5996 = vand.u32 %v5788, 4294901760
        %v5997 = vsub.f32 %v5788, %v5996
        %5998 = vmatpush1.msra.mxu0 %v5997
        %5999 = vmatprep.subr.mxu0 0.0
        %v6000 = vand.u32 %v5789, 4294901760
        %v6001 = vsub.f32 %v5789, %v6000
        %6002 = vmatpush1.msra.mxu0 %v6001
        %6003 = vmatprep.subr.mxu0 0.0
        %6004 = vmatpush1.msra.mxu0 0.0
        %6005 = vmatprep.subr.mxu0 0.0
        %6006 = vmatpush1.msra.mxu0 0.0
        %6007 = vmatprep.subr.mxu0 0.0
        %6008 = vmatpush1.msra.mxu0 0.0
        %6009 = vmatprep.subr.mxu0 0.0
        %6010 = vmatpush1.msra.mxu0 0.0
        %6011 = vmatprep.subr.mxu0 0.0
        %6012 = vmatpush1.msra.mxu0 0.0
        %6013 = vmatprep.subr.mxu0 0.0
        %6014 = vmatpush1.msra.mxu0 0.0
        %6015 = vmatprep.subr.mxu0 0.0
        %6016 = vmatpush1.msra.mxu0 0.0
        %6017 = vmatprep.subr.mxu0 0.0
        %6018 = vmatpush1.msra.mxu0 0.0
        %6019 = vmatprep.subr.mxu0 0.0
        %6020 = vmatpush1.msra.mxu0 0.0
        %6021 = vmatprep.subr.mxu0 0.0
        %6022 = vmatpush1.msra.mxu0 0.0
        %6023 = vmatprep.subr.mxu0 0.0
        %6024 = vmatpush1.msra.mxu0 0.0
        %6025 = vmatprep.subr.mxu0 0.0
        %6026 = vmatpush1.msra.mxu0 0.0
        %6027 = vmatprep.subr.mxu0 0.0
        %6028 = vmatpush1.msra.mxu0 0.0
        %6029 = vmatprep.subr.mxu0 0.0
        %6030 = vmatpush1.msra.mxu0 0.0
        %6031 = vmatprep.subr.mxu0 0.0
        %6032 = vmatpush1.msra.mxu0 0.0
        %6033 = vmatprep.subr.mxu0 0.0
        %6034 = vmatpush1.msra.mxu0 0.0
        %6035 = vmatprep.subr.mxu0 0.0
        %6036 = vmatpush1.msra.mxu0 0.0
        %6037 = vmatprep.subr.mxu0 0.0
        %6038 = vmatpush1.msra.mxu0 0.0
        %6039 = vmatprep.subr.mxu0 0.0
        %6040 = vmatpush1.msra.mxu0 0.0
        %6041 = vmatprep.subr.mxu0 0.0
        %6042 = vmatpush1.msra.mxu0 0.0
        %6043 = vmatprep.subr.mxu0 0.0
        %6044 = vmatpush1.msra.mxu0 0.0
        %6045 = vmatprep.subr.mxu0 0.0
        %6046 = vmatpush1.msra.mxu0 0.0
        %6047 = vmatprep.subr.mxu0 0.0
        %6048 = vmatpush1.msra.mxu0 0.0
        %6049 = vmatprep.subr.mxu0 0.0
        %6050 = vmatpush1.msra.mxu0 0.0
        %6051 = vmatprep.subr.mxu0 0.0
        %6052 = vmatpush1.msra.mxu0 0.0
        %6053 = vmatprep.subr.mxu0 0.0
        %6054 = vmatpush1.msra.mxu0 0.0
        %6055 = vmatprep.subr.mxu0 0.0
        %6056 = vmatpush1.msra.mxu0 0.0
        %6057 = vmatprep.subr.mxu0 0.0
        %6058 = vmatpush1.msra.mxu0 0.0
        %6059 = vmatprep.mubr.f32.mxu0 0.0
        %v6060 = vand.u32 %v5796, 4294901760
        %v6061 = vsub.f32 %v5796, %v6060
        %6062 = vmatmul.mubr.f32.gmra.mrb[0].mxu0 %v6061
        %v6063 = vpop.f32.mrb[0].mxu0
        %v6064 = vadd.f32 %v5978, %v6063
        %v6065 = vpop.f32.mrb[0].mxu0
        %6066 = vmatprep.mubr.f32.mxu0 0.0
        %v6067 = vand.u32 %v5799, 4294901760
        %v6068 = vsub.f32 %v5799, %v6067
        %6069 = vmatmul.mubr.f32.gmra.mrb[0].mxu0 %v6068
        %v6070 = vpop.f32.mrb[0].mxu0
        %v6071 = vadd.f32 %v5984, %v6070
        %v6072 = vpop.f32.mrb[0].mxu0
        %6073 = vdwg.mxu0
        %6074 = vmatprep.subr.mxu0 0.0
        %v6075 = vand.u32 %v5786, 4294901760
        %6076 = vmatpush1.msra.mxu0 %v6075
        %6077 = vmatprep.subr.mxu0 0.0
        %v6078 = vand.u32 %v5787, 4294901760
        %6079 = vmatpush1.msra.mxu0 %v6078
        %6080 = vmatprep.subr.mxu0 0.0
        %v6081 = vand.u32 %v5788, 4294901760
        %6082 = vmatpush1.msra.mxu0 %v6081
        %6083 = vmatprep.subr.mxu0 0.0
        %v6084 = vand.u32 %v5789, 4294901760
        %6085 = vmatpush1.msra.mxu0 %v6084
        %6086 = vmatprep.subr.mxu0 0.0
        %6087 = vmatpush1.msra.mxu0 0.0
        %6088 = vmatprep.subr.mxu0 0.0
        %6089 = vmatpush1.msra.mxu0 0.0
        %6090 = vmatprep.subr.mxu0 0.0
        %6091 = vmatpush1.msra.mxu0 0.0
        %6092 = vmatprep.subr.mxu0 0.0
        %6093 = vmatpush1.msra.mxu0 0.0
        %6094 = vmatprep.subr.mxu0 0.0
        %6095 = vmatpush1.msra.mxu0 0.0
        %6096 = vmatprep.subr.mxu0 0.0
        %6097 = vmatpush1.msra.mxu0 0.0
        %6098 = vmatprep.subr.mxu0 0.0
        %6099 = vmatpush1.msra.mxu0 0.0
        %6100 = vmatprep.subr.mxu0 0.0
        %6101 = vmatpush1.msra.mxu0 0.0
        %6102 = vmatprep.subr.mxu0 0.0
        %6103 = vmatpush1.msra.mxu0 0.0
        %6104 = vmatprep.subr.mxu0 0.0
        %6105 = vmatpush1.msra.mxu0 0.0
        %6106 = vmatprep.subr.mxu0 0.0
        %6107 = vmatpush1.msra.mxu0 0.0
        %6108 = vmatprep.subr.mxu0 0.0
        %6109 = vmatpush1.msra.mxu0 0.0
        %6110 = vmatprep.subr.mxu0 0.0
        %6111 = vmatpush1.msra.mxu0 0.0
        %6112 = vmatprep.subr.mxu0 0.0
        %6113 = vmatpush1.msra.mxu0 0.0
        %6114 = vmatprep.subr.mxu0 0.0
        %6115 = vmatpush1.msra.mxu0 0.0
        %6116 = vmatprep.subr.mxu0 0.0
        %6117 = vmatpush1.msra.mxu0 0.0
        %6118 = vmatprep.subr.mxu0 0.0
        %6119 = vmatpush1.msra.mxu0 0.0
        %6120 = vmatprep.subr.mxu0 0.0
        %6121 = vmatpush1.msra.mxu0 0.0
        %6122 = vmatprep.subr.mxu0 0.0
        %6123 = vmatpush1.msra.mxu0 0.0
        %6124 = vmatprep.subr.mxu0 0.0
        %6125 = vmatpush1.msra.mxu0 0.0
        %6126 = vmatprep.subr.mxu0 0.0
        %6127 = vmatpush1.msra.mxu0 0.0
        %6128 = vmatprep.subr.mxu0 0.0
        %6129 = vmatpush1.msra.mxu0 0.0
        %6130 = vmatprep.subr.mxu0 0.0
        %6131 = vmatpush1.msra.mxu0 0.0
        %6132 = vmatprep.subr.mxu0 0.0
        %6133 = vmatpush1.msra.mxu0 0.0
        %6134 = vmatprep.subr.mxu0 0.0
        %6135 = vmatpush1.msra.mxu0 0.0
        %6136 = vmatprep.subr.mxu0 0.0
        %6137 = vmatpush1.msra.mxu0 0.0
        %6138 = vmatprep.subr.mxu0 0.0
        %6139 = vmatpush1.msra.mxu0 0.0
        %6140 = vmatprep.subr.mxu0 0.0
        %6141 = vmatpush1.msra.mxu0 0.0
        %6142 = vmatprep.mubr.f32.mxu0 0.0
        %v6143 = vand.u32 %v5796, 4294901760
        %v6144 = vsub.f32 %v5796, %v6143
        %v6145 = vand.u32 %v6144, 4294901760
        %6146 = vmatmul.mubr.f32.gmra.mrb[0].mxu0 %v6145
        %v6147 = vpop.f32.mrb[0].mxu0
        %v6148 = vadd.f32 %v6064, %v6147
        %v6149 = vpop.f32.mrb[0].mxu0
        %6150 = vmatprep.mubr.f32.mxu0 0.0
        %v6151 = vand.u32 %v5799, 4294901760
        %v6152 = vsub.f32 %v5799, %v6151
        %v6153 = vand.u32 %v6152, 4294901760
        %6154 = vmatmul.mubr.f32.gmra.mrb[0].mxu0 %v6153
        %v6155 = vpop.f32.mrb[0].mxu0
        %v6156 = vadd.f32 %v6071, %v6155
        %v6157 = vpop.f32.mrb[0].mxu0
        %6158 = vdwg.mxu0
        %6159 = vmatprep.subr.mxu0 0.0
        %v6160 = vand.u32 %v5786, 4294901760
        %v6161 = vsub.f32 %v5786, %v6160
        %v6162 = vand.u32 %v6161, 4294901760
        %6163 = vmatpush1.msra.mxu0 %v6162
        %6164 = vmatprep.subr.mxu0 0.0
        %v6165 = vand.u32 %v5787, 4294901760
        %v6166 = vsub.f32 %v5787, %v6165
        %v6167 = vand.u32 %v6166, 4294901760
        %6168 = vmatpush1.msra.mxu0 %v6167
        %6169 = vmatprep.subr.mxu0 0.0
        %v6170 = vand.u32 %v5788, 4294901760
        %v6171 = vsub.f32 %v5788, %v6170
        %v6172 = vand.u32 %v6171, 4294901760
        %6173 = vmatpush1.msra.mxu0 %v6172
        %6174 = vmatprep.subr.mxu0 0.0
        %v6175 = vand.u32 %v5789, 4294901760
        %v6176 = vsub.f32 %v5789, %v6175
        %v6177 = vand.u32 %v6176, 4294901760
        %6178 = vmatpush1.msra.mxu0 %v6177
        %6179 = vmatprep.subr.mxu0 0.0
        %6180 = vmatpush1.msra.mxu0 0.0
        %6181 = vmatprep.subr.mxu0 0.0
        %6182 = vmatpush1.msra.mxu0 0.0
        %6183 = vmatprep.subr.mxu0 0.0
        %6184 = vmatpush1.msra.mxu0 0.0
        %6185 = vmatprep.subr.mxu0 0.0
        %6186 = vmatpush1.msra.mxu0 0.0
        %6187 = vmatprep.subr.mxu0 0.0
        %6188 = vmatpush1.msra.mxu0 0.0
        %6189 = vmatprep.subr.mxu0 0.0
        %6190 = vmatpush1.msra.mxu0 0.0
        %6191 = vmatprep.subr.mxu0 0.0
        %6192 = vmatpush1.msra.mxu0 0.0
        %6193 = vmatprep.subr.mxu0 0.0
        %6194 = vmatpush1.msra.mxu0 0.0
        %6195 = vmatprep.subr.mxu0 0.0
        %6196 = vmatpush1.msra.mxu0 0.0
        %6197 = vmatprep.subr.mxu0 0.0
        %6198 = vmatpush1.msra.mxu0 0.0
        %6199 = vmatprep.subr.mxu0 0.0
        %6200 = vmatpush1.msra.mxu0 0.0
        %6201 = vmatprep.subr.mxu0 0.0
        %6202 = vmatpush1.msra.mxu0 0.0
        %6203 = vmatprep.subr.mxu0 0.0
        %6204 = vmatpush1.msra.mxu0 0.0
        %6205 = vmatprep.subr.mxu0 0.0
        %6206 = vmatpush1.msra.mxu0 0.0
        %6207 = vmatprep.subr.mxu0 0.0
        %6208 = vmatpush1.msra.mxu0 0.0
        %6209 = vmatprep.subr.mxu0 0.0
        %6210 = vmatpush1.msra.mxu0 0.0
        %6211 = vmatprep.subr.mxu0 0.0
        %6212 = vmatpush1.msra.mxu0 0.0
        %6213 = vmatprep.subr.mxu0 0.0
        %6214 = vmatpush1.msra.mxu0 0.0
        %6215 = vmatprep.subr.mxu0 0.0
        %6216 = vmatpush1.msra.mxu0 0.0
        %6217 = vmatprep.subr.mxu0 0.0
        %6218 = vmatpush1.msra.mxu0 0.0
        %6219 = vmatprep.subr.mxu0 0.0
        %6220 = vmatpush1.msra.mxu0 0.0
        %6221 = vmatprep.subr.mxu0 0.0
        %6222 = vmatpush1.msra.mxu0 0.0
        %6223 = vmatprep.subr.mxu0 0.0
        %6224 = vmatpush1.msra.mxu0 0.0
        %6225 = vmatprep.subr.mxu0 0.0
        %6226 = vmatpush1.msra.mxu0 0.0
        %6227 = vmatprep.subr.mxu0 0.0
        %6228 = vmatpush1.msra.mxu0 0.0
        %6229 = vmatprep.subr.mxu0 0.0
        %6230 = vmatpush1.msra.mxu0 0.0
        %6231 = vmatprep.subr.mxu0 0.0
        %6232 = vmatpush1.msra.mxu0 0.0
        %6233 = vmatprep.subr.mxu0 0.0
        %6234 = vmatpush1.msra.mxu0 0.0
        %6235 = vmatprep.mubr.f32.mxu0 0.0
        %v6236 = vand.u32 %v5796, 4294901760
        %6237 = vmatmul.mubr.f32.gmra.mrb[0].mxu0 %v6236
        %v6238 = vpop.f32.mrb[0].mxu0
        %v6239 = vadd.f32 %v6148, %v6238
        %v6240 = vpop.f32.mrb[0].mxu0
        %6241 = vmatprep.mubr.f32.mxu0 0.0
        %v6242 = vand.u32 %v5799, 4294901760
        %6243 = vmatmul.mubr.f32.gmra.mrb[0].mxu0 %v6242
        %v6244 = vpop.f32.mrb[0].mxu0
        %v6245 = vadd.f32 %v6156, %v6244
        %v6246 = vpop.f32.mrb[0].mxu0
        %6247 = vdwg.mxu0
        %6248 = vmatprep.subr.mxu0 0.0
        %v6249 = vand.u32 %v5786, 4294901760
        %6250 = vmatpush1.msra.mxu0 %v6249
        %6251 = vmatprep.subr.mxu0 0.0
        %v6252 = vand.u32 %v5787, 4294901760
        %6253 = vmatpush1.msra.mxu0 %v6252
        %6254 = vmatprep.subr.mxu0 0.0
        %v6255 = vand.u32 %v5788, 4294901760
        %6256 = vmatpush1.msra.mxu0 %v6255
        %6257 = vmatprep.subr.mxu0 0.0
        %v6258 = vand.u32 %v5789, 4294901760
        %6259 = vmatpush1.msra.mxu0 %v6258
        %6260 = vmatprep.subr.mxu0 0.0
        %6261 = vmatpush1.msra.mxu0 0.0
        %6262 = vmatprep.subr.mxu0 0.0
        %6263 = vmatpush1.msra.mxu0 0.0
        %6264 = vmatprep.subr.mxu0 0.0
        %6265 = vmatpush1.msra.mxu0 0.0
        %6266 = vmatprep.subr.mxu0 0.0
        %6267 = vmatpush1.msra.mxu0 0.0
        %6268 = vmatprep.subr.mxu0 0.0
        %6269 = vmatpush1.msra.mxu0 0.0
        %6270 = vmatprep.subr.mxu0 0.0
        %6271 = vmatpush1.msra.mxu0 0.0
        %6272 = vmatprep.subr.mxu0 0.0
        %6273 = vmatpush1.msra.mxu0 0.0
        %6274 = vmatprep.subr.mxu0 0.0
        %6275 = vmatpush1.msra.mxu0 0.0
        %6276 = vmatprep.subr.mxu0 0.0
        %6277 = vmatpush1.msra.mxu0 0.0
        %6278 = vmatprep.subr.mxu0 0.0
        %6279 = vmatpush1.msra.mxu0 0.0
        %6280 = vmatprep.subr.mxu0 0.0
        %6281 = vmatpush1.msra.mxu0 0.0
        %6282 = vmatprep.subr.mxu0 0.0
        %6283 = vmatpush1.msra.mxu0 0.0
        %6284 = vmatprep.subr.mxu0 0.0
        %6285 = vmatpush1.msra.mxu0 0.0
        %6286 = vmatprep.subr.mxu0 0.0
        %6287 = vmatpush1.msra.mxu0 0.0
        %6288 = vmatprep.subr.mxu0 0.0
        %6289 = vmatpush1.msra.mxu0 0.0
        %6290 = vmatprep.subr.mxu0 0.0
        %6291 = vmatpush1.msra.mxu0 0.0
        %6292 = vmatprep.subr.mxu0 0.0
        %6293 = vmatpush1.msra.mxu0 0.0
        %6294 = vmatprep.subr.mxu0 0.0
        %6295 = vmatpush1.msra.mxu0 0.0
        %6296 = vmatprep.subr.mxu0 0.0
        %6297 = vmatpush1.msra.mxu0 0.0
        %6298 = vmatprep.subr.mxu0 0.0
        %6299 = vmatpush1.msra.mxu0 0.0
        %6300 = vmatprep.subr.mxu0 0.0
        %6301 = vmatpush1.msra.mxu0 0.0
        %6302 = vmatprep.subr.mxu0 0.0
        %6303 = vmatpush1.msra.mxu0 0.0
        %6304 = vmatprep.subr.mxu0 0.0
        %6305 = vmatpush1.msra.mxu0 0.0
        %6306 = vmatprep.subr.mxu0 0.0
        %6307 = vmatpush1.msra.mxu0 0.0
        %6308 = vmatprep.subr.mxu0 0.0
        %6309 = vmatpush1.msra.mxu0 0.0
        %6310 = vmatprep.subr.mxu0 0.0
        %6311 = vmatpush1.msra.mxu0 0.0
        %6312 = vmatprep.subr.mxu0 0.0
        %6313 = vmatpush1.msra.mxu0 0.0
        %6314 = vmatprep.subr.mxu0 0.0
        %6315 = vmatpush1.msra.mxu0 0.0
        %6316 = vmatprep.mubr.f32.mxu0 0.0
        %v6317 = vand.u32 %v5796, 4294901760
        %6318 = vmatmul.mubr.f32.gmra.mrb[0].mxu0 %v6317
        %v6319 = vpop.f32.mrb[0].mxu0
        %v6320 = vadd.f32 %v6239, %v6319
        %v6321 = vpop.f32.mrb[0].mxu0
        %6322 = vmatprep.mubr.f32.mxu0 0.0
        %v6323 = vand.u32 %v5799, 4294901760
        %6324 = vmatmul.mubr.f32.gmra.mrb[0].mxu0 %v6323
        %v6325 = vpop.f32.mrb[0].mxu0
        %v6326 = vadd.f32 %v6245, %v6325
        %v6327 = vpop.f32.mrb[0].mxu0
        %6328 = vdwg.mxu0
        %v6329 = vmax.f32 %v6320, 0.0
        %v6330 = vmax.f32 %v6326, 0.0
        %v6331 = vld [vmem:[%s5] sm:$0xff]
        %v6332 = vld [vmem:[%s5 + $0x8] sm:$0xff]
        %v6333 = vld [vmem:[%s5 + $0x10] sm:$0xff]
        %v6334 = vld [vmem:[%s5 + $0x18] sm:$0xff]
        %v6335 = vld [vmem:[%s9] sm:$0x1]
        %v6336 = vlaneseq
        %v6337 = vshrl.u32 %v6336, 7
        %v6338 = vsub.s32 0, %v6337
        %v6339 = vrot.slane %v6335, %v6338
        %v6341 = vsel %vm1730, %v6329, 0
        %v6344 = vsel %vm1730, %v6330, 0
        %6346 = vmatprep.subr.mxu0 0.0
        %v6347 = vand.u32 %v6331, 4294901760
        %6348 = vmatpush1.msra.mxu0 %v6347
        %6349 = vmatprep.subr.mxu0 0.0
        %v6350 = vand.u32 %v6332, 4294901760
        %6351 = vmatpush1.msra.mxu0 %v6350
        %6352 = vmatprep.subr.mxu0 0.0
        %v6353 = vand.u32 %v6333, 4294901760
        %6354 = vmatpush1.msra.mxu0 %v6353
        %6355 = vmatprep.subr.mxu0 0.0
        %v6356 = vand.u32 %v6334, 4294901760
        %6357 = vmatpush1.msra.mxu0 %v6356
        %6358 = vmatprep.subr.mxu0 0.0
        %6359 = vmatpush1.msra.mxu0 0.0
        %6360 = vmatprep.subr.mxu0 0.0
        %6361 = vmatpush1.msra.mxu0 0.0
        %6362 = vmatprep.subr.mxu0 0.0
        %6363 = vmatpush1.msra.mxu0 0.0
        %6364 = vmatprep.subr.mxu0 0.0
        %6365 = vmatpush1.msra.mxu0 0.0
        %6366 = vmatprep.subr.mxu0 0.0
        %6367 = vmatpush1.msra.mxu0 0.0
        %6368 = vmatprep.subr.mxu0 0.0
        %6369 = vmatpush1.msra.mxu0 0.0
        %6370 = vmatprep.subr.mxu0 0.0
        %6371 = vmatpush1.msra.mxu0 0.0
        %6372 = vmatprep.subr.mxu0 0.0
        %6373 = vmatpush1.msra.mxu0 0.0
        %6374 = vmatprep.subr.mxu0 0.0
        %6375 = vmatpush1.msra.mxu0 0.0
        %6376 = vmatprep.subr.mxu0 0.0
        %6377 = vmatpush1.msra.mxu0 0.0
        %6378 = vmatprep.subr.mxu0 0.0
        %6379 = vmatpush1.msra.mxu0 0.0
        %6380 = vmatprep.subr.mxu0 0.0
        %6381 = vmatpush1.msra.mxu0 0.0
        %6382 = vmatprep.subr.mxu0 0.0
        %6383 = vmatpush1.msra.mxu0 0.0
        %6384 = vmatprep.subr.mxu0 0.0
        %6385 = vmatpush1.msra.mxu0 0.0
        %6386 = vmatprep.subr.mxu0 0.0
        %6387 = vmatpush1.msra.mxu0 0.0
        %6388 = vmatprep.subr.mxu0 0.0
        %6389 = vmatpush1.msra.mxu0 0.0
        %6390 = vmatprep.subr.mxu0 0.0
        %6391 = vmatpush1.msra.mxu0 0.0
        %6392 = vmatprep.subr.mxu0 0.0
        %6393 = vmatpush1.msra.mxu0 0.0
        %6394 = vmatprep.subr.mxu0 0.0
        %6395 = vmatpush1.msra.mxu0 0.0
        %6396 = vmatprep.subr.mxu0 0.0
        %6397 = vmatpush1.msra.mxu0 0.0
        %6398 = vmatprep.subr.mxu0 0.0
        %6399 = vmatpush1.msra.mxu0 0.0
        %6400 = vmatprep.subr.mxu0 0.0
        %6401 = vmatpush1.msra.mxu0 0.0
        %6402 = vmatprep.subr.mxu0 0.0
        %6403 = vmatpush1.msra.mxu0 0.0
        %6404 = vmatprep.subr.mxu0 0.0
        %6405 = vmatpush1.msra.mxu0 0.0
        %6406 = vmatprep.subr.mxu0 0.0
        %6407 = vmatpush1.msra.mxu0 0.0
        %6408 = vmatprep.subr.mxu0 0.0
        %6409 = vmatpush1.msra.mxu0 0.0
        %6410 = vmatprep.subr.mxu0 0.0
        %6411 = vmatpush1.msra.mxu0 0.0
        %6412 = vmatprep.subr.mxu0 0.0
        %6413 = vmatpush1.msra.mxu0 0.0
        %6414 = vmatprep.mubr.f32.mxu0 0.0
        %v6415 = vand.u32 %v6341, 4294901760
        %v6416 = vsub.f32 %v6341, %v6415
        %v6417 = vand.u32 %v6416, 4294901760
        %v6418 = vsub.f32 %v6416, %v6417
        %v6419 = vand.u32 %v6418, 4294901760
        %6420 = vmatmul.mubr.f32.gmra.mrb[0].mxu0 %v6419
        %v6421 = vpop.f32.mrb[0].mxu0
        %v6422 = vadd.f32 %v6339, %v6421
        %v6423 = vpop.f32.mrb[0].mxu0
        %6424 = vmatprep.mubr.f32.mxu0 0.0
        %v6425 = vand.u32 %v6344, 4294901760
        %v6426 = vsub.f32 %v6344, %v6425
        %v6427 = vand.u32 %v6426, 4294901760
        %v6428 = vsub.f32 %v6426, %v6427
        %v6429 = vand.u32 %v6428, 4294901760
        %6430 = vmatmul.mubr.f32.gmra.mrb[0].mxu0 %v6429
        %v6431 = vpop.f32.mrb[0].mxu0
        %v6432 = vadd.f32 %v6339, %v6431
        %v6433 = vpop.f32.mrb[0].mxu0
        %6434 = vdwg.mxu0
        %6435 = vmatprep.subr.mxu0 0.0
        %v6436 = vand.u32 %v6331, 4294901760
        %v6437 = vsub.f32 %v6331, %v6436
        %v6438 = vand.u32 %v6437, 4294901760
        %v6439 = vsub.f32 %v6437, %v6438
        %v6440 = vand.u32 %v6439, 4294901760
        %6441 = vmatpush1.msra.mxu0 %v6440
        %6442 = vmatprep.subr.mxu0 0.0
        %v6443 = vand.u32 %v6332, 4294901760
        %v6444 = vsub.f32 %v6332, %v6443
        %v6445 = vand.u32 %v6444, 4294901760
        %v6446 = vsub.f32 %v6444, %v6445
        %v6447 = vand.u32 %v6446, 4294901760
        %6448 = vmatpush1.msra.mxu0 %v6447
        %6449 = vmatprep.subr.mxu0 0.0
        %v6450 = vand.u32 %v6333, 4294901760
        %v6451 = vsub.f32 %v6333, %v6450
        %v6452 = vand.u32 %v6451, 4294901760
        %v6453 = vsub.f32 %v6451, %v6452
        %v6454 = vand.u32 %v6453, 4294901760
        %6455 = vmatpush1.msra.mxu0 %v6454
        %6456 = vmatprep.subr.mxu0 0.0
        %v6457 = vand.u32 %v6334, 4294901760
        %v6458 = vsub.f32 %v6334, %v6457
        %v6459 = vand.u32 %v6458, 4294901760
        %v6460 = vsub.f32 %v6458, %v6459
        %v6461 = vand.u32 %v6460, 4294901760
        %6462 = vmatpush1.msra.mxu0 %v6461
        %6463 = vmatprep.subr.mxu0 0.0
        %6464 = vmatpush1.msra.mxu0 0.0
        %6465 = vmatprep.subr.mxu0 0.0
        %6466 = vmatpush1.msra.mxu0 0.0
        %6467 = vmatprep.subr.mxu0 0.0
        %6468 = vmatpush1.msra.mxu0 0.0
        %6469 = vmatprep.subr.mxu0 0.0
        %6470 = vmatpush1.msra.mxu0 0.0
        %6471 = vmatprep.subr.mxu0 0.0
        %6472 = vmatpush1.msra.mxu0 0.0
        %6473 = vmatprep.subr.mxu0 0.0
        %6474 = vmatpush1.msra.mxu0 0.0
        %6475 = vmatprep.subr.mxu0 0.0
        %6476 = vmatpush1.msra.mxu0 0.0
        %6477 = vmatprep.subr.mxu0 0.0
        %6478 = vmatpush1.msra.mxu0 0.0
        %6479 = vmatprep.subr.mxu0 0.0
        %6480 = vmatpush1.msra.mxu0 0.0
        %6481 = vmatprep.subr.mxu0 0.0
        %6482 = vmatpush1.msra.mxu0 0.0
        %6483 = vmatprep.subr.mxu0 0.0
        %6484 = vmatpush1.msra.mxu0 0.0
        %6485 = vmatprep.subr.mxu0 0.0
        %6486 = vmatpush1.msra.mxu0 0.0
        %6487 = vmatprep.subr.mxu0 0.0
        %6488 = vmatpush1.msra.mxu0 0.0
        %6489 = vmatprep.subr.mxu0 0.0
        %6490 = vmatpush1.msra.mxu0 0.0
        %6491 = vmatprep.subr.mxu0 0.0
        %6492 = vmatpush1.msra.mxu0 0.0
        %6493 = vmatprep.subr.mxu0 0.0
        %6494 = vmatpush1.msra.mxu0 0.0
        %6495 = vmatprep.subr.mxu0 0.0
        %6496 = vmatpush1.msra.mxu0 0.0
        %6497 = vmatprep.subr.mxu0 0.0
        %6498 = vmatpush1.msra.mxu0 0.0
        %6499 = vmatprep.subr.mxu0 0.0
        %6500 = vmatpush1.msra.mxu0 0.0
        %6501 = vmatprep.subr.mxu0 0.0
        %6502 = vmatpush1.msra.mxu0 0.0
        %6503 = vmatprep.subr.mxu0 0.0
        %6504 = vmatpush1.msra.mxu0 0.0
        %6505 = vmatprep.subr.mxu0 0.0
        %6506 = vmatpush1.msra.mxu0 0.0
        %6507 = vmatprep.subr.mxu0 0.0
        %6508 = vmatpush1.msra.mxu0 0.0
        %6509 = vmatprep.subr.mxu0 0.0
        %6510 = vmatpush1.msra.mxu0 0.0
        %6511 = vmatprep.subr.mxu0 0.0
        %6512 = vmatpush1.msra.mxu0 0.0
        %6513 = vmatprep.subr.mxu0 0.0
        %6514 = vmatpush1.msra.mxu0 0.0
        %6515 = vmatprep.subr.mxu0 0.0
        %6516 = vmatpush1.msra.mxu0 0.0
        %6517 = vmatprep.subr.mxu0 0.0
        %6518 = vmatpush1.msra.mxu0 0.0
        %6519 = vmatprep.mubr.f32.mxu0 0.0
        %v6520 = vand.u32 %v6341, 4294901760
        %6521 = vmatmul.mubr.f32.gmra.mrb[0].mxu0 %v6520
        %v6522 = vpop.f32.mrb[0].mxu0
        %v6523 = vadd.f32 %v6422, %v6522
        %v6524 = vpop.f32.mrb[0].mxu0
        %6525 = vmatprep.mubr.f32.mxu0 0.0
        %v6526 = vand.u32 %v6344, 4294901760
        %6527 = vmatmul.mubr.f32.gmra.mrb[0].mxu0 %v6526
        %v6528 = vpop.f32.mrb[0].mxu0
        %v6529 = vadd.f32 %v6432, %v6528
        %v6530 = vpop.f32.mrb[0].mxu0
        %6531 = vdwg.mxu0
        %6532 = vmatprep.subr.mxu0 0.0
        %v6533 = vand.u32 %v6331, 4294901760
        %v6534 = vsub.f32 %v6331, %v6533
        %6535 = vmatpush1.msra.mxu0 %v6534
        %6536 = vmatprep.subr.mxu0 0.0
        %v6537 = vand.u32 %v6332, 4294901760
        %v6538 = vsub.f32 %v6332, %v6537
        %6539 = vmatpush1.msra.mxu0 %v6538
        %6540 = vmatprep.subr.mxu0 0.0
        %v6541 = vand.u32 %v6333, 4294901760
        %v6542 = vsub.f32 %v6333, %v6541
        %6543 = vmatpush1.msra.mxu0 %v6542
        %6544 = vmatprep.subr.mxu0 0.0
        %v6545 = vand.u32 %v6334, 4294901760
        %v6546 = vsub.f32 %v6334, %v6545
        %6547 = vmatpush1.msra.mxu0 %v6546
        %6548 = vmatprep.subr.mxu0 0.0
        %6549 = vmatpush1.msra.mxu0 0.0
        %6550 = vmatprep.subr.mxu0 0.0
        %6551 = vmatpush1.msra.mxu0 0.0
        %6552 = vmatprep.subr.mxu0 0.0
        %6553 = vmatpush1.msra.mxu0 0.0
        %6554 = vmatprep.subr.mxu0 0.0
        %6555 = vmatpush1.msra.mxu0 0.0
        %6556 = vmatprep.subr.mxu0 0.0
        %6557 = vmatpush1.msra.mxu0 0.0
        %6558 = vmatprep.subr.mxu0 0.0
        %6559 = vmatpush1.msra.mxu0 0.0
        %6560 = vmatprep.subr.mxu0 0.0
        %6561 = vmatpush1.msra.mxu0 0.0
        %6562 = vmatprep.subr.mxu0 0.0
        %6563 = vmatpush1.msra.mxu0 0.0
        %6564 = vmatprep.subr.mxu0 0.0
        %6565 = vmatpush1.msra.mxu0 0.0
        %6566 = vmatprep.subr.mxu0 0.0
        %6567 = vmatpush1.msra.mxu0 0.0
        %6568 = vmatprep.subr.mxu0 0.0
        %6569 = vmatpush1.msra.mxu0 0.0
        %6570 = vmatprep.subr.mxu0 0.0
        %6571 = vmatpush1.msra.mxu0 0.0
        %6572 = vmatprep.subr.mxu0 0.0
        %6573 = vmatpush1.msra.mxu0 0.0
        %6574 = vmatprep.subr.mxu0 0.0
        %6575 = vmatpush1.msra.mxu0 0.0
        %6576 = vmatprep.subr.mxu0 0.0
        %6577 = vmatpush1.msra.mxu0 0.0
        %6578 = vmatprep.subr.mxu0 0.0
        %6579 = vmatpush1.msra.mxu0 0.0
        %6580 = vmatprep.subr.mxu0 0.0
        %6581 = vmatpush1.msra.mxu0 0.0
        %6582 = vmatprep.subr.mxu0 0.0
        %6583 = vmatpush1.msra.mxu0 0.0
        %6584 = vmatprep.subr.mxu0 0.0
        %6585 = vmatpush1.msra.mxu0 0.0
        %6586 = vmatprep.subr.mxu0 0.0
        %6587 = vmatpush1.msra.mxu0 0.0
        %6588 = vmatprep.subr.mxu0 0.0
        %6589 = vmatpush1.msra.mxu0 0.0
        %6590 = vmatprep.subr.mxu0 0.0
        %6591 = vmatpush1.msra.mxu0 0.0
        %6592 = vmatprep.subr.mxu0 0.0
        %6593 = vmatpush1.msra.mxu0 0.0
        %6594 = vmatprep.subr.mxu0 0.0
        %6595 = vmatpush1.msra.mxu0 0.0
        %6596 = vmatprep.subr.mxu0 0.0
        %6597 = vmatpush1.msra.mxu0 0.0
        %6598 = vmatprep.subr.mxu0 0.0
        %6599 = vmatpush1.msra.mxu0 0.0
        %6600 = vmatprep.subr.mxu0 0.0
        %6601 = vmatpush1.msra.mxu0 0.0
        %6602 = vmatprep.subr.mxu0 0.0
        %6603 = vmatpush1.msra.mxu0 0.0
        %6604 = vmatprep.mubr.f32.mxu0 0.0
        %v6605 = vand.u32 %v6341, 4294901760
        %v6606 = vsub.f32 %v6341, %v6605
        %6607 = vmatmul.mubr.f32.gmra.mrb[0].mxu0 %v6606
        %v6608 = vpop.f32.mrb[0].mxu0
        %v6609 = vadd.f32 %v6523, %v6608
        %v6610 = vpop.f32.mrb[0].mxu0
        %6611 = vmatprep.mubr.f32.mxu0 0.0
        %v6612 = vand.u32 %v6344, 4294901760
        %v6613 = vsub.f32 %v6344, %v6612
        %6614 = vmatmul.mubr.f32.gmra.mrb[0].mxu0 %v6613
        %v6615 = vpop.f32.mrb[0].mxu0
        %v6616 = vadd.f32 %v6529, %v6615
        %v6617 = vpop.f32.mrb[0].mxu0
        %6618 = vdwg.mxu0
        %6619 = vmatprep.subr.mxu0 0.0
        %v6620 = vand.u32 %v6331, 4294901760
        %6621 = vmatpush1.msra.mxu0 %v6620
        %6622 = vmatprep.subr.mxu0 0.0
        %v6623 = vand.u32 %v6332, 4294901760
        %6624 = vmatpush1.msra.mxu0 %v6623
        %6625 = vmatprep.subr.mxu0 0.0
        %v6626 = vand.u32 %v6333, 4294901760
        %6627 = vmatpush1.msra.mxu0 %v6626
        %6628 = vmatprep.subr.mxu0 0.0
        %v6629 = vand.u32 %v6334, 4294901760
        %6630 = vmatpush1.msra.mxu0 %v6629
        %6631 = vmatprep.subr.mxu0 0.0
        %6632 = vmatpush1.msra.mxu0 0.0
        %6633 = vmatprep.subr.mxu0 0.0
        %6634 = vmatpush1.msra.mxu0 0.0
        %6635 = vmatprep.subr.mxu0 0.0
        %6636 = vmatpush1.msra.mxu0 0.0
        %6637 = vmatprep.subr.mxu0 0.0
        %6638 = vmatpush1.msra.mxu0 0.0
        %6639 = vmatprep.subr.mxu0 0.0
        %6640 = vmatpush1.msra.mxu0 0.0
        %6641 = vmatprep.subr.mxu0 0.0
        %6642 = vmatpush1.msra.mxu0 0.0
        %6643 = vmatprep.subr.mxu0 0.0
        %6644 = vmatpush1.msra.mxu0 0.0
        %6645 = vmatprep.subr.mxu0 0.0
        %6646 = vmatpush1.msra.mxu0 0.0
        %6647 = vmatprep.subr.mxu0 0.0
        %6648 = vmatpush1.msra.mxu0 0.0
        %6649 = vmatprep.subr.mxu0 0.0
        %6650 = vmatpush1.msra.mxu0 0.0
        %6651 = vmatprep.subr.mxu0 0.0
        %6652 = vmatpush1.msra.mxu0 0.0
        %6653 = vmatprep.subr.mxu0 0.0
        %6654 = vmatpush1.msra.mxu0 0.0
        %6655 = vmatprep.subr.mxu0 0.0
        %6656 = vmatpush1.msra.mxu0 0.0
        %6657 = vmatprep.subr.mxu0 0.0
        %6658 = vmatpush1.msra.mxu0 0.0
        %6659 = vmatprep.subr.mxu0 0.0
        %6660 = vmatpush1.msra.mxu0 0.0
        %6661 = vmatprep.subr.mxu0 0.0
        %6662 = vmatpush1.msra.mxu0 0.0
        %6663 = vmatprep.subr.mxu0 0.0
        %6664 = vmatpush1.msra.mxu0 0.0
        %6665 = vmatprep.subr.mxu0 0.0
        %6666 = vmatpush1.msra.mxu0 0.0
        %6667 = vmatprep.subr.mxu0 0.0
        %6668 = vmatpush1.msra.mxu0 0.0
        %6669 = vmatprep.subr.mxu0 0.0
        %6670 = vmatpush1.msra.mxu0 0.0
        %6671 = vmatprep.subr.mxu0 0.0
        %6672 = vmatpush1.msra.mxu0 0.0
        %6673 = vmatprep.subr.mxu0 0.0
        %6674 = vmatpush1.msra.mxu0 0.0
        %6675 = vmatprep.subr.mxu0 0.0
        %6676 = vmatpush1.msra.mxu0 0.0
        %6677 = vmatprep.subr.mxu0 0.0
        %6678 = vmatpush1.msra.mxu0 0.0
        %6679 = vmatprep.subr.mxu0 0.0
        %6680 = vmatpush1.msra.mxu0 0.0
        %6681 = vmatprep.subr.mxu0 0.0
        %6682 = vmatpush1.msra.mxu0 0.0
        %6683 = vmatprep.subr.mxu0 0.0
        %6684 = vmatpush1.msra.mxu0 0.0
        %6685 = vmatprep.subr.mxu0 0.0
        %6686 = vmatpush1.msra.mxu0 0.0
        %6687 = vmatprep.mubr.f32.mxu0 0.0
        %v6688 = vand.u32 %v6341, 4294901760
        %v6689 = vsub.f32 %v6341, %v6688
        %v6690 = vand.u32 %v6689, 4294901760
        %6691 = vmatmul.mubr.f32.gmra.mrb[0].mxu0 %v6690
        %v6692 = vpop.f32.mrb[0].mxu0
        %v6693 = vadd.f32 %v6609, %v6692
        %v6694 = vpop.f32.mrb[0].mxu0
        %6695 = vmatprep.mubr.f32.mxu0 0.0
        %v6696 = vand.u32 %v6344, 4294901760
        %v6697 = vsub.f32 %v6344, %v6696
        %v6698 = vand.u32 %v6697, 4294901760
        %6699 = vmatmul.mubr.f32.gmra.mrb[0].mxu0 %v6698
        %v6700 = vpop.f32.mrb[0].mxu0
        %v6701 = vadd.f32 %v6616, %v6700
        %v6702 = vpop.f32.mrb[0].mxu0
        %6703 = vdwg.mxu0
        %6704 = vmatprep.subr.mxu0 0.0
        %v6705 = vand.u32 %v6331, 4294901760
        %v6706 = vsub.f32 %v6331, %v6705
        %v6707 = vand.u32 %v6706, 4294901760
        %6708 = vmatpush1.msra.mxu0 %v6707
        %6709 = vmatprep.subr.mxu0 0.0
        %v6710 = vand.u32 %v6332, 4294901760
        %v6711 = vsub.f32 %v6332, %v6710
        %v6712 = vand.u32 %v6711, 4294901760
        %6713 = vmatpush1.msra.mxu0 %v6712
        %6714 = vmatprep.subr.mxu0 0.0
        %v6715 = vand.u32 %v6333, 4294901760
        %v6716 = vsub.f32 %v6333, %v6715
        %v6717 = vand.u32 %v6716, 4294901760
        %6718 = vmatpush1.msra.mxu0 %v6717
        %6719 = vmatprep.subr.mxu0 0.0
        %v6720 = vand.u32 %v6334, 4294901760
        %v6721 = vsub.f32 %v6334, %v6720
        %v6722 = vand.u32 %v6721, 4294901760
        %6723 = vmatpush1.msra.mxu0 %v6722
        %6724 = vmatprep.subr.mxu0 0.0
        %6725 = vmatpush1.msra.mxu0 0.0
        %6726 = vmatprep.subr.mxu0 0.0
        %6727 = vmatpush1.msra.mxu0 0.0
        %6728 = vmatprep.subr.mxu0 0.0
        %6729 = vmatpush1.msra.mxu0 0.0
        %6730 = vmatprep.subr.mxu0 0.0
        %6731 = vmatpush1.msra.mxu0 0.0
        %6732 = vmatprep.subr.mxu0 0.0
        %6733 = vmatpush1.msra.mxu0 0.0
        %6734 = vmatprep.subr.mxu0 0.0
        %6735 = vmatpush1.msra.mxu0 0.0
        %6736 = vmatprep.subr.mxu0 0.0
        %6737 = vmatpush1.msra.mxu0 0.0
        %6738 = vmatprep.subr.mxu0 0.0
        %6739 = vmatpush1.msra.mxu0 0.0
        %6740 = vmatprep.subr.mxu0 0.0
        %6741 = vmatpush1.msra.mxu0 0.0
        %6742 = vmatprep.subr.mxu0 0.0
        %6743 = vmatpush1.msra.mxu0 0.0
        %6744 = vmatprep.subr.mxu0 0.0
        %6745 = vmatpush1.msra.mxu0 0.0
        %6746 = vmatprep.subr.mxu0 0.0
        %6747 = vmatpush1.msra.mxu0 0.0
        %6748 = vmatprep.subr.mxu0 0.0
        %6749 = vmatpush1.msra.mxu0 0.0
        %6750 = vmatprep.subr.mxu0 0.0
        %6751 = vmatpush1.msra.mxu0 0.0
        %6752 = vmatprep.subr.mxu0 0.0
        %6753 = vmatpush1.msra.mxu0 0.0
        %6754 = vmatprep.subr.mxu0 0.0
        %6755 = vmatpush1.msra.mxu0 0.0
        %6756 = vmatprep.subr.mxu0 0.0
        %6757 = vmatpush1.msra.mxu0 0.0
        %6758 = vmatprep.subr.mxu0 0.0
        %6759 = vmatpush1.msra.mxu0 0.0
        %6760 = vmatprep.subr.mxu0 0.0
        %6761 = vmatpush1.msra.mxu0 0.0
        %6762 = vmatprep.subr.mxu0 0.0
        %6763 = vmatpush1.msra.mxu0 0.0
        %6764 = vmatprep.subr.mxu0 0.0
        %6765 = vmatpush1.msra.mxu0 0.0
        %6766 = vmatprep.subr.mxu0 0.0
        %6767 = vmatpush1.msra.mxu0 0.0
        %6768 = vmatprep.subr.mxu0 0.0
        %6769 = vmatpush1.msra.mxu0 0.0
        %6770 = vmatprep.subr.mxu0 0.0
        %6771 = vmatpush1.msra.mxu0 0.0
        %6772 = vmatprep.subr.mxu0 0.0
        %6773 = vmatpush1.msra.mxu0 0.0
        %6774 = vmatprep.subr.mxu0 0.0
        %6775 = vmatpush1.msra.mxu0 0.0
        %6776 = vmatprep.subr.mxu0 0.0
        %6777 = vmatpush1.msra.mxu0 0.0
        %6778 = vmatprep.subr.mxu0 0.0
        %6779 = vmatpush1.msra.mxu0 0.0
        %6780 = vmatprep.mubr.f32.mxu0 0.0
        %v6781 = vand.u32 %v6341, 4294901760
        %6782 = vmatmul.mubr.f32.gmra.mrb[0].mxu0 %v6781
        %v6783 = vpop.f32.mrb[0].mxu0
        %v6784 = vadd.f32 %v6693, %v6783
        %v6785 = vpop.f32.mrb[0].mxu0
        %6786 = vmatprep.mubr.f32.mxu0 0.0
        %v6787 = vand.u32 %v6344, 4294901760
        %6788 = vmatmul.mubr.f32.gmra.mrb[0].mxu0 %v6787
        %v6789 = vpop.f32.mrb[0].mxu0
        %v6790 = vadd.f32 %v6701, %v6789
        %v6791 = vpop.f32.mrb[0].mxu0
        %6792 = vdwg.mxu0
        %6793 = vmatprep.subr.mxu0 0.0
        %v6794 = vand.u32 %v6331, 4294901760
        %6795 = vmatpush1.msra.mxu0 %v6794
        %6796 = vmatprep.subr.mxu0 0.0
        %v6797 = vand.u32 %v6332, 4294901760
        %6798 = vmatpush1.msra.mxu0 %v6797
        %6799 = vmatprep.subr.mxu0 0.0
        %v6800 = vand.u32 %v6333, 4294901760
        %6801 = vmatpush1.msra.mxu0 %v6800
        %6802 = vmatprep.subr.mxu0 0.0
        %v6803 = vand.u32 %v6334, 4294901760
        %6804 = vmatpush1.msra.mxu0 %v6803
        %6805 = vmatprep.subr.mxu0 0.0
        %6806 = vmatpush1.msra.mxu0 0.0
        %6807 = vmatprep.subr.mxu0 0.0
        %6808 = vmatpush1.msra.mxu0 0.0
        %6809 = vmatprep.subr.mxu0 0.0
        %6810 = vmatpush1.msra.mxu0 0.0
        %6811 = vmatprep.subr.mxu0 0.0
        %6812 = vmatpush1.msra.mxu0 0.0
        %6813 = vmatprep.subr.mxu0 0.0
        %6814 = vmatpush1.msra.mxu0 0.0
        %6815 = vmatprep.subr.mxu0 0.0
        %6816 = vmatpush1.msra.mxu0 0.0
        %6817 = vmatprep.subr.mxu0 0.0
        %6818 = vmatpush1.msra.mxu0 0.0
        %6819 = vmatprep.subr.mxu0 0.0
        %6820 = vmatpush1.msra.mxu0 0.0
        %6821 = vmatprep.subr.mxu0 0.0
        %6822 = vmatpush1.msra.mxu0 0.0
        %6823 = vmatprep.subr.mxu0 0.0
        %6824 = vmatpush1.msra.mxu0 0.0
        %6825 = vmatprep.subr.mxu0 0.0
        %6826 = vmatpush1.msra.mxu0 0.0
        %6827 = vmatprep.subr.mxu0 0.0
        %6828 = vmatpush1.msra.mxu0 0.0
        %6829 = vmatprep.subr.mxu0 0.0
        %6830 = vmatpush1.msra.mxu0 0.0
        %6831 = vmatprep.subr.mxu0 0.0
        %6832 = vmatpush1.msra.mxu0 0.0
        %6833 = vmatprep.subr.mxu0 0.0
        %6834 = vmatpush1.msra.mxu0 0.0
        %6835 = vmatprep.subr.mxu0 0.0
        %6836 = vmatpush1.msra.mxu0 0.0
        %6837 = vmatprep.subr.mxu0 0.0
        %6838 = vmatpush1.msra.mxu0 0.0
        %6839 = vmatprep.subr.mxu0 0.0
        %6840 = vmatpush1.msra.mxu0 0.0
        %6841 = vmatprep.subr.mxu0 0.0
        %6842 = vmatpush1.msra.mxu0 0.0
        %6843 = vmatprep.subr.mxu0 0.0
        %6844 = vmatpush1.msra.mxu0 0.0
        %6845 = vmatprep.subr.mxu0 0.0
        %6846 = vmatpush1.msra.mxu0 0.0
        %6847 = vmatprep.subr.mxu0 0.0
        %6848 = vmatpush1.msra.mxu0 0.0
        %6849 = vmatprep.subr.mxu0 0.0
        %6850 = vmatpush1.msra.mxu0 0.0
        %6851 = vmatprep.subr.mxu0 0.0
        %6852 = vmatpush1.msra.mxu0 0.0
        %6853 = vmatprep.subr.mxu0 0.0
        %6854 = vmatpush1.msra.mxu0 0.0
        %6855 = vmatprep.subr.mxu0 0.0
        %6856 = vmatpush1.msra.mxu0 0.0
        %6857 = vmatprep.subr.mxu0 0.0
        %6858 = vmatpush1.msra.mxu0 0.0
        %6859 = vmatprep.subr.mxu0 0.0
        %6860 = vmatpush1.msra.mxu0 0.0
        %6861 = vmatprep.mubr.f32.mxu0 0.0
        %v6862 = vand.u32 %v6341, 4294901760
        %6863 = vmatmul.mubr.f32.gmra.mrb[0].mxu0 %v6862
        %v6864 = vpop.f32.mrb[0].mxu0
        %v6865 = vadd.f32 %v6784, %v6864
        %v6866 = vpop.f32.mrb[0].mxu0
        %6867 = vmatprep.mubr.f32.mxu0 0.0
        %v6868 = vand.u32 %v6344, 4294901760
        %6869 = vmatmul.mubr.f32.gmra.mrb[0].mxu0 %v6868
        %v6870 = vpop.f32.mrb[0].mxu0
        %v6871 = vadd.f32 %v6790, %v6870
        %v6872 = vpop.f32.mrb[0].mxu0
        %6873 = vdwg.mxu0
        %v6874 = vld [vmem:[%s9 + $0x3] sm:$0x1]
        %6875 = vadd.xlane.f32.xlu0 %v6865
        %v6876 = vpop.xlane.xlu0 %6875
        %6877 = vadd.xlane.f32.xlu0 %v6871
        %v6878 = vpop.xlane.xlu0 %6877
        %v6879 = vmul.f32 %v6876, 0.0625
        %v6880 = vmul.f32 %v6878, 0.0625
        %v6881 = vsub.f32 %v6865, %v6879
        %v6882 = vsub.f32 %v6871, %v6880
        %v6883 = vlaneseq
        %v6884 = vshrl.u32 %v6883, 7
        %v6885 = vsub.s32 0, %v6884
        %v6886 = vrot.slane %v6874, %v6885
        %v6887 = vmul.f32 %v6881, %v6886
        %v6888 = vmul.f32 %v6882, %v6886
        %v6889 = vmul.f32 %v6887, %v6887
        %v6890 = vmul.f32 %v6888, %v6888
        %6891 = vadd.xlane.f32.xlu0 %v6889
        %v6892 = vpop.xlane.xlu0 %6891
        %6893 = vadd.xlane.f32.xlu0 %v6890
        %v6894 = vpop.xlane.xlu0 %6893
        %v6895 = vmul.f32 %v6892, 0.0625
        %v6896 = vmul.f32 %v6894, 0.0625
        %v6897 = vadd.f32 %v6895, 1e-05
        %v6898 = vadd.f32 %v6896, 1e-05
        %v6899 = vrsqrt.pop %v6897
        %v6900 = vrsqrt.pop %v6898
        %v6901 = vmul.f32 %v6887, %v6899
        %v6902 = vmul.f32 %v6888, %v6900
        %v6903 = vld [vmem:[%s9 + $0x1] sm:$0x1]
        %v6904 = vlaneseq
        %v6905 = vshrl.u32 %v6904, 7
        %v6906 = vsub.s32 0, %v6905
        %v6907 = vrot.slane %v6903, %v6906
        %v6908 = vmul.f32 %v6901, %v6907
        %v6909 = vmul.f32 %v6902, %v6907
        %v6910 = vld [vmem:[%s9 + $0x2] sm:$0x1]
        %v6911 = vlaneseq
        %v6912 = vshrl.u32 %v6911, 7
        %v6913 = vsub.s32 0, %v6912
        %v6914 = vrot.slane %v6910, %v6913
        %v6915 = vadd.f32 %v6908, %v6914
        %v6916 = vadd.f32 %v6909, %v6914
        %6917 = vst [vmem:[%s355] sm:$0xff] %v6915
        %6918 = vst [vmem:[%s355 + $0x8] sm:$0xff] %v6916
        %s6919 = sand.u32 %s247, 1
        %s6920 = scalar_lea.sflag [#allocation7], %s6919
        %s6921 = sand.u32 %s247, 1
        %s6922 = smul.addr %s6921, 16
        %s6923 = scalar_lea.vmem [#allocation6], %s6922
        // Predicated region
        $region61: #{tpu_custom_call.1} parent=59 // pred_check
          %p6924 = pneg %p257
        $region62: #{tpu_custom_call.1} parent=59 // pred_check_branch
          %6926 = sbr.rel (%p6924) target = $region64
        $region63: #{tpu_custom_call.1} parent=59 // pred_region
          %s6927 = smul.u32 2, %s24
          %s6929 = ssub.s32 256, 256
          %6930 = vsyncadd %s6920, %s6929
          %s6931 = smul.addr %s6927, 128
          %s6932 = scalar_lea.hbm %s10, %s6931
          %s6933 = sshll.u32 %s6923, 4
          %s6934 = int_to_ptr.vmem [resolvable:$true] %s6933
          %6939 = dma.vmem_to_hbm [thread:$0]  %s6934, 256, %s6932, %s6920, 128, 128, 8
        $region64: #{tpu_custom_call.1} parent=59 // pred_fallthru
          _
      $region60: #{tpu_custom_call.1} parent=5 // pred_fallthru
        _
      %p6940 = scmp.le.s32.totalorder 2, %s19
      // Predicated region
      $region65: #{tpu_custom_call.1} parent=5 // pred_check
        %p6941 = pneg %p6940
      $region66: #{tpu_custom_call.1} parent=5 // pred_check_branch
        %6943 = sbr.rel (%p6941) target = $region68
      $region67: #{tpu_custom_call.1} parent=5 // pred_region
        %s6944 = ssub.s32 %s19, 2
        // Predicated region
        $region69: #{tpu_custom_call.1} parent=67 // pred_check
          %p6945 = pneg %p263
        $region70: #{tpu_custom_call.1} parent=67 // pred_check_branch
          %6947 = sbr.rel (%p6945) target = $region72
        $region71: #{tpu_custom_call.1} parent=67 // pred_region
          %s6948 = sand.u32 %s248, 1
          %s6949 = scalar_lea.sflag [#allocation7], %s6948
          %s6950 = sand.u32 %s248, 1
          %s6951 = smul.addr %s6950, 16
          %s6952 = scalar_lea.vmem [#allocation6], %s6951
          %6953 = dma.done %s6949, 256
        $region72: #{tpu_custom_call.1} parent=67 // pred_fallthru
          _
      $region68: #{tpu_custom_call.1} parent=5 // pred_fallthru
        _
    $region6: #{tpu_custom_call.1} parent=1 // loop_footer
      %s23 = sadd.s32 1, %s19
    $region7: #{tpu_custom_call.1} parent=1 // loop_footer_branch
      %18 = sbr.rel target = $region3
    $region8: #{tpu_custom_call.1} parent=1 // loop_exit
      _
    %6954 = vsyncpa [#allocation7], 1
    %s6955 = scalar_lea.sflag [#allocation7], 1
    %6956 = vsyncpa %s6955, 1

</llo_original>
